<compile_context>
chip_gen: v5e
topology: v5e:2x2
jax: 0.10.0
libtpu: 0.0.40
codegen_flags: <defaults>
</compile_context>

<pallas_src>
import numpy as np
import jax
import jax.numpy as jnp
from jax.experimental import pallas as pl
from jax.experimental.pallas import tpu as pltpu

INPUT_SIZE = 27      # number of per-feature Conv1d / BatchNorm1d branches
KERNEL_SIZE = 5
HIDDEN_SIZE = 128    # LSTM hidden size (module default 1024; shrunk for the test)
FC_WIDTH = 1024      # hard-coded widths of fc_class1_ly1 / fc_class1_ly2
NUM_CLASSES = 17
NC_PAD = 128         # logits lane-padded to 128 for a dense output store
BN_EPS = 1e-5
MAX_UNROLL = 8       # fully unroll the recurrence up to this pooled length


def _dot(a, b):
    # MXU-native: bf16 operands, f32 accumulation (identical in kernel & ref).
    return jnp.dot(a.astype(jnp.bfloat16), b.astype(jnp.bfloat16),
                   preferred_element_type=jnp.float32)


def _sigmoid(z):
    # logistic via EUP tanh: 0.5*(tanh(z/2)+1) == 1/(1+exp(-z)); no f32 divide
    # on the LSTM's serial critical path.
    return 0.5 * jnp.tanh(0.5 * z) + 0.5


# ---------------------------------------------------------------------------
# Fused kernel: Conv1d-per-feature + BN(train) + ELU + MaxPool -> LSTM -> MLP
# ---------------------------------------------------------------------------
def make_fused_kernel(Tp, B, Bp, unrolled):
    """Builds the fused kernel for static (Tp, B, Bp) and recurrence style."""
    H = HIDDEN_SIZE
    K2 = FC_WIDTH // 2
    F = INPUT_SIZE
    T = 2 * Tp

    def kernel(xpad_ref, convw_ref, convb_ref, gamma_ref, beta_ref,
               wih_ref, whh_ref, lstmb_ref,
               w1_hbm, b1_ref, w2_hbm, b2_ref, w3_hbm, b3_ref,
               out_ref,
               w1_vmem, w2_vmem, w3_vmem, *rest):
        if unrolled:
            (dma_sem,) = rest
            xproj_ref = None
        else:
            xproj_ref, dma_sem = rest

        # ---- prefetch the FC-head weights HBM -> VMEM.  The DMAs overlap the
        # ---- feature stage + LSTM and are waited on per-layer inside the MLP.
        cp_w1 = pltpu.make_async_copy(w1_hbm, w1_vmem, dma_sem.at[0])
        cp_w2a = pltpu.make_async_copy(w2_hbm.at[0:K2], w2_vmem.at[0:K2],
                                       dma_sem.at[1])
        cp_w2b = pltpu.make_async_copy(w2_hbm.at[K2:FC_WIDTH],
                                       w2_vmem.at[K2:FC_WIDTH], dma_sem.at[2])
        cp_w3 = pltpu.make_async_copy(w3_hbm, w3_vmem, dma_sem.at[3])
        cp_w1.start()
        cp_w2a.start()
        cp_w2b.start()
        cp_w3.start()

        # ---- per-feature Conv1d (cross-correlation) along time; features on lanes
        xp = xpad_ref[...]                                   # (T+K-1, Bp, F) f32
        wc = convw_ref[...]                                  # (K, F)
        conv = xp[0:T] * wc[0:1, :][None]
        for k in range(1, KERNEL_SIZE):
            conv = conv + xp[k:k + T] * wc[k:k + 1, :][None]
        conv = conv + convb_ref[...][None]                   # + (1,1,F) bias

        # ---- BatchNorm1d (training mode): per-feature batch stats over
        # ---- (time, VALID batch rows), biased variance.
        stats_src = conv if B == Bp else conv[:, 0:B, :]
        mean = jnp.mean(stats_src, axis=(0, 1), keepdims=True)
        var = jnp.mean(jnp.square(stats_src - mean), axis=(0, 1), keepdims=True)
        y = (conv - mean) * jax.lax.rsqrt(var + BN_EPS)
        y = y * gamma_ref[...][None] + beta_ref[...][None]

        # ---- ELU (alpha=1); exp(min(y,0)) keeps the unselected branch finite
        e = jnp.where(y > 0, y, jnp.exp(jnp.minimum(y, 0.0)) - 1.0)

        # ---- MaxPool1d(2) over time (leading-dim split -> elementwise max)
        e4 = e.reshape(Tp, 2, Bp, F)
        pooled = jnp.maximum(e4[:, 0], e4[:, 1])             # (Tp, Bp, F)

        # ---- LSTM input projection: ONE matmul over all Tp*Bp rows, hoisted
        # ---- off the serial recurrence.  Bp is a multiple of 8, so this
        # ---- reshape is a pure leading-dim collapse (no relayout).
        lhs = pooled.reshape(Tp * Bp, F)
        proj = _dot(lhs, wih_ref[...]) + lstmb_ref[...]      # (Tp*Bp, 4H) f32

        def gate_math(gates, c):
            i = _sigmoid(gates[:, 0:H])
            f = _sigmoid(gates[:, H:2 * H])
            g = jnp.tanh(gates[:, 2 * H:3 * H])
            o = _sigmoid(gates[:, 3 * H:4 * H])
            c = f * c + i * g
            h = o * jnp.tanh(c)
            return h, c

        # TODO(synk): keep w_hh resident in MXU weight registers across the
        # recurrence (pltpu.matmul_push_rhs / matmul_acc_lhs / matmul_pop) to
        # drop the per-step RHS reload on the only truly serial chain.
        h = jnp.zeros((Bp, H), jnp.float32)
        c = jnp.zeros((Bp, H), jnp.float32)
        if unrolled:
            # Short sequence (this test): projection stays in vregs
            # (compiler-managed), no VMEM round trip on the recurrent chain.
            for t in range(Tp):
                gates = proj[t * Bp:(t + 1) * Bp, :] + _dot(h, whh_ref[...])
                h, c = gate_math(gates, c)
            h_last = h
        else:
            # Production Tp: spill the (time-parallel) projection once to a
            # bf16 VMEM scratch; only h @ w_hh + gate math stays serial.
            xproj_ref[...] = proj.reshape(Tp, Bp, 4 * H).astype(xproj_ref.dtype)

            def lstm_step(t, carry):
                hh, cc = carry
                gates = xproj_ref[t].astype(jnp.float32) + _dot(hh, whh_ref[...])
                return gate_math(gates, cc)

            h_last, _ = jax.lax.fori_loop(0, Tp, lstm_step, (h, c), unroll=8)

        # ---- FC head: weights were DMA'd while the above ran; waits are
        # ---- interleaved so the long-pole w2 copy overlaps the y1 matmul.
        cp_w1.wait()
        y1 = _dot(h_last, w1_vmem[...]) + b1_ref[...]
        cp_w2a.wait()
        y2 = _dot(y1[:, 0:K2], w2_vmem[0:K2]) + b2_ref[...]
        cp_w2b.wait()
        y2 = y2 + _dot(y1[:, K2:FC_WIDTH], w2_vmem[K2:FC_WIDTH])
        cp_w3.wait()
        out_ref[...] = _dot(y2, w3_vmem[...]) + b3_ref[...]   # (Bp, 128) dense

    return kernel


# ---------------------------------------------------------------------------
# Wrapper
# ---------------------------------------------------------------------------
def worker_act_net_forward(x, params):
    """x: (B, T, 27) float32, matching the PyTorch forward's x[:, :, i] usage."""
    B, T, F = x.shape
    assert F == INPUT_SIZE and T % 2 == 0
    Tp = T // 2
    pad = KERNEL_SIZE // 2
    Bp = ((B + 7) // 8) * 8          # sublane-pad the batch (free on VPU/MXU)
    unrolled = Tp <= MAX_UNROLL

    # layout glue (plain XLA): time-major (T, Bp, F); zero-pad batch + conv halo
    x_tm = jnp.transpose(x, (1, 0, 2))
    x_pad = jnp.pad(x_tm, ((pad, pad), (0, Bp - B), (0, 0)))

    bf16 = jnp.bfloat16
    # MXU operands pre-cast to bf16 (f32 accumulation happens on the MXU);
    # the last FC layer is lane-padded so the output store is dense.
    w_ih = params["w_ih"].astype(bf16)
    w_hh = params["w_hh"].astype(bf16)
    w1 = params["w1"].astype(bf16)
    w2 = params["w2"].astype(bf16)
    w3 = jnp.pad(params["w3"], ((0, 0), (0, NC_PAD - NUM_CLASSES))).astype(bf16)
    b3 = jnp.pad(params["b3"], ((0, 0), (0, NC_PAD - NUM_CLASSES)))

    def vmem_spec():
        return pl.BlockSpec(memory_space=pltpu.MemorySpace.VMEM)

    def hbm_spec():
        return pl.BlockSpec(memory_space=pl.ANY)

    in_specs = ([vmem_spec() for _ in range(8)]           # x_pad .. lstm_b
                + [hbm_spec(), vmem_spec(),                # w1 (HBM), b1
                   hbm_spec(), vmem_spec(),                # w2 (HBM), b2
                   hbm_spec(), vmem_spec()])               # w3 (HBM), b3

    scratch = [
        pltpu.VMEM((HIDDEN_SIZE, FC_WIDTH), bf16),         # w1 landing buffer
        pltpu.VMEM((FC_WIDTH, FC_WIDTH), bf16),            # w2 landing buffer
        pltpu.VMEM((FC_WIDTH, NC_PAD), bf16),              # w3 landing buffer
    ]
    if not unrolled:
        scratch.append(pltpu.VMEM((Tp, Bp, 4 * HIDDEN_SIZE), bf16))  # x-proj
    scratch.append(pltpu.SemaphoreType.DMA((4,)))

    # VMEM footprint -> vmem_limit_bytes (keeps us honest on v7x's 64 MiB)
    vmem_in = [x_pad, params["conv_w"], params["conv_b"], params["bn_gamma"],
               params["bn_beta"], w_ih, w_hh, params["lstm_b"],
               params["b1"], params["b2"], b3]
    foot = sum(int(np.prod(a.shape)) * a.dtype.itemsize for a in vmem_in)
    foot += (HIDDEN_SIZE * FC_WIDTH + FC_WIDTH * FC_WIDTH
             + FC_WIDTH * NC_PAD) * 2                      # bf16 landing bufs
    if not unrolled:
        foot += Tp * Bp * 4 * HIDDEN_SIZE * 2
    foot += Bp * NC_PAD * 4                                # output
    vmem_limit = int(min(64 << 20, max(16 << 20, 2 * foot + (8 << 20))))

    logits_padded = pl.pallas_call(
        make_fused_kernel(Tp, B, Bp, unrolled),
        out_shape=jax.ShapeDtypeStruct((Bp, NC_PAD), jnp.float32),
        in_specs=in_specs,
        out_specs=vmem_spec(),
        scratch_shapes=scratch,
        compiler_params=pltpu.CompilerParams(vmem_limit_bytes=vmem_limit),
    )(x_pad, params["conv_w"], params["conv_b"],
      params["bn_gamma"], params["bn_beta"],
      w_ih, w_hh, params["lstm_b"],
      w1, params["b1"], w2, params["b2"], w3, b3)

    return logits_padded[:B, :NUM_CLASSES]
    # TODO(synk): on v7x, split the batch-independent LSTM+MLP across the two
    # TensorCores (core_map / dimension_semantics) after a shared BN-stats
    # phase; kept gridless here because the test batch is tiny.


# ---------------------------------------------------------------------------
# Deterministic parameter init (PyTorch-like uniform fan-in init, synthetic)
# ---------------------------------------------------------------------------
def init_params(key):
    ks = jax.random.split(key, 10)

    def u(k, shape, fan_in):
        bound = 1.0 / np.sqrt(fan_in)
        return jax.random.uniform(k, shape, jnp.float32, -bound, bound)

    H, F = HIDDEN_SIZE, INPUT_SIZE
    return {
        # 27 independent Conv1d(1,1,5) weights/biases stacked: (K, F), (1, F)
        "conv_w": u(ks[0], (KERNEL_SIZE, F), KERNEL_SIZE),
        "conv_b": u(ks[1], (1, F), KERNEL_SIZE),
        # 27 BatchNorm1d(1): gamma=1, beta=0 (PyTorch default init)
        "bn_gamma": jnp.ones((1, F), jnp.float32),
        "bn_beta": jnp.zeros((1, F), jnp.float32),
        # LSTM (gate order i,f,g,o), weights stored transposed for lane-dense dots
        "w_ih": u(ks[2], (F, 4 * H), H),
        "w_hh": u(ks[3], (H, 4 * H), H),
        "lstm_b": u(ks[4], (1, 4 * H), H),       # b_ih + b_hh combined
        # FC head
        "w1": u(ks[5], (H, FC_WIDTH), H),
        "b1": u(ks[6], (1, FC_WIDTH), H),
        "w2": u(ks[7], (FC_WIDTH, FC_WIDTH), FC_WIDTH),
        "b2": u(ks[8], (1, FC_WIDTH), FC_WIDTH),
        "w3": u(ks[9], (FC_WIDTH, NUM_CLASSES), FC_WIDTH),
        "b3": jnp.zeros((1, NUM_CLASSES), jnp.float32),
    }


# ---------------------------------------------------------------------------
# Pure-JAX reference (same math & same bf16 matmul rounding, no Pallas)
# ---------------------------------------------------------------------------
def reference_forward(x, params):
    B, T, F = x.shape
    pad = KERNEL_SIZE // 2
    xpad = jnp.pad(x, ((0, 0), (pad, pad), (0, 0)))
    conv = jnp.zeros((B, T, F), jnp.float32)
    for k in range(KERNEL_SIZE):
        conv = conv + xpad[:, k:k + T, :] * params["conv_w"][k][None, None, :]
    conv = conv + params["conv_b"][0][None, None, :]
    mean = jnp.mean(conv, axis=(0, 1), keepdims=True)
    var = jnp.mean(jnp.square(conv - mean), axis=(0, 1), keepdims=True)
    y = (conv - mean) * jax.lax.rsqrt(var + BN_EPS)
    y = y * params["bn_gamma"][0] + params["bn_beta"][0]
    e = jnp.where(y > 0, y, jnp.exp(jnp.minimum(y, 0.0)) - 1.0)
    pooled = jnp.maximum(e[:, 0::2, :], e[:, 1::2, :])        # (B, Tp, F)

    H = HIDDEN_SIZE

    def step(carry, x_t):
        h, c = carry
        gates = _dot(x_t, params["w_ih"]) + params["lstm_b"] \
            + _dot(h, params["w_hh"])
        i = _sigmoid(gates[:, 0:H])
        f = _sigmoid(gates[:, H:2 * H])
        g = jnp.tanh(gates[:, 2 * H:3 * H])
        o = _sigmoid(gates[:, 3 * H:4 * H])
        c = f * c + i * g
        h = o * jnp.tanh(c)
        return (h, c), None

    h0 = jnp.zeros((B, H), jnp.float32)
    c0 = jnp.zeros((B, H), jnp.float32)
    (h, _), _ = jax.lax.scan(step, (h0, c0), jnp.transpose(pooled, (1, 0, 2)))

    y1 = _dot(h, params["w1"]) + params["b1"]
    y2 = _dot(y1, params["w2"]) + params["b2"]
    return _dot(y2, params["w3"]) + params["b3"]


if __name__ == "__main__":
    key = jax.random.PRNGKey(0)
    pkey, xkey = jax.random.split(key)
    params = init_params(pkey)

    B, T = 2, 16                                  # -> pooled sequence length 8
    x = jax.random.normal(xkey, (B, T, INPUT_SIZE), jnp.float32)

    logits = jax.jit(worker_act_net_forward)(x, params)
    logits = jax.block_until_ready(logits)

    ref = reference_forward(x, params)
    np.testing.assert_allclose(np.asarray(logits), np.asarray(ref),
                               rtol=2e-3, atol=2e-3)
    print("KERNEL_OK")
</pallas_src>

<mosaic_0001>
module attributes {stable_mosaic.version = 11 : i64} {
  func.func @kernel(%arg0: memref<20x8x27xf32, #tpu.memory_space<vmem>>, %arg1: memref<5x27xf32, #tpu.memory_space<vmem>>, %arg2: memref<1x27xf32, #tpu.memory_space<vmem>>, %arg3: memref<1x27xf32, #tpu.memory_space<vmem>>, %arg4: memref<1x27xf32, #tpu.memory_space<vmem>>, %arg5: memref<27x512xbf16, #tpu.memory_space<vmem>>, %arg6: memref<128x512xbf16, #tpu.memory_space<vmem>>, %arg7: memref<1x512xf32, #tpu.memory_space<vmem>>, %arg8: memref<128x1024xbf16, #tpu.memory_space<any>>, %arg9: memref<1x1024xf32, #tpu.memory_space<vmem>>, %arg10: memref<1024x1024xbf16, #tpu.memory_space<any>>, %arg11: memref<1x1024xf32, #tpu.memory_space<vmem>>, %arg12: memref<1024x128xbf16, #tpu.memory_space<any>>, %arg13: memref<1x128xf32, #tpu.memory_space<vmem>>, %arg14: memref<8x128xf32, #tpu.memory_space<vmem>>, %arg15: memref<128x1024xbf16, #tpu.memory_space<vmem>>, %arg16: memref<1024x1024xbf16, #tpu.memory_space<vmem>>, %arg17: memref<1024x128xbf16, #tpu.memory_space<vmem>>, %arg18: memref<4x!tpu.dma_semaphore, #tpu.memory_space<semaphore_mem>>) attributes {dimension_semantics = [], scalar_prefetch = 0 : i64, scratch_operands = 4 : i64, tpu.core_type = #tpu.core_type<tc>} {
    %c0_i32 = arith.constant 0 : i32
    %0 = tpu.memref_slice %arg18[%c0_i32] : memref<4x!tpu.dma_semaphore, #tpu.memory_space<semaphore_mem>> -> memref<1x!tpu.dma_semaphore, #tpu.memory_space<semaphore_mem>>
    %1 = tpu.memref_squeeze %0 : memref<1x!tpu.dma_semaphore, #tpu.memory_space<semaphore_mem>> -> memref<!tpu.dma_semaphore, #tpu.memory_space<semaphore_mem>>
    tpu.enqueue_dma source(%arg8 : memref<128x1024xbf16, #tpu.memory_space<any>>) target(%arg15 : memref<128x1024xbf16, #tpu.memory_space<vmem>>) target_semaphore(%1 : memref<!tpu.dma_semaphore, #tpu.memory_space<semaphore_mem>>)
    %c1_i32 = arith.constant 1 : i32
    %c0_i32_0 = arith.constant 0 : i32
    %c0_i32_1 = arith.constant 0 : i32
    %2 = tpu.memref_slice %arg10[%c0_i32_0, %c0_i32_1] : memref<1024x1024xbf16, #tpu.memory_space<any>> -> memref<512x1024xbf16, #tpu.memory_space<any>>
    %c0_i32_2 = arith.constant 0 : i32
    %c0_i32_3 = arith.constant 0 : i32
    %3 = tpu.memref_slice %arg16[%c0_i32_2, %c0_i32_3] : memref<1024x1024xbf16, #tpu.memory_space<vmem>> -> memref<512x1024xbf16, #tpu.memory_space<vmem>>
    %4 = tpu.memref_slice %arg18[%c1_i32] : memref<4x!tpu.dma_semaphore, #tpu.memory_space<semaphore_mem>> -> memref<1x!tpu.dma_semaphore, #tpu.memory_space<semaphore_mem>>
    %5 = tpu.memref_squeeze %4 : memref<1x!tpu.dma_semaphore, #tpu.memory_space<semaphore_mem>> -> memref<!tpu.dma_semaphore, #tpu.memory_space<semaphore_mem>>
    tpu.enqueue_dma source(%2 : memref<512x1024xbf16, #tpu.memory_space<any>>) target(%3 : memref<512x1024xbf16, #tpu.memory_space<vmem>>) target_semaphore(%5 : memref<!tpu.dma_semaphore, #tpu.memory_space<semaphore_mem>>)
    %c2_i32 = arith.constant 2 : i32
    %c512_i32 = arith.constant 512 : i32
    %c0_i32_4 = arith.constant 0 : i32
    %6 = tpu.memref_slice %arg10[%c512_i32, %c0_i32_4] : memref<1024x1024xbf16, #tpu.memory_space<any>> -> memref<512x1024xbf16, #tpu.memory_space<any>>
    %c512_i32_5 = arith.constant 512 : i32
    %c0_i32_6 = arith.constant 0 : i32
    %7 = tpu.memref_slice %arg16[%c512_i32_5, %c0_i32_6] : memref<1024x1024xbf16, #tpu.memory_space<vmem>> -> memref<512x1024xbf16, #tpu.memory_space<vmem>>
    %8 = tpu.memref_slice %arg18[%c2_i32] : memref<4x!tpu.dma_semaphore, #tpu.memory_space<semaphore_mem>> -> memref<1x!tpu.dma_semaphore, #tpu.memory_space<semaphore_mem>>
    %9 = tpu.memref_squeeze %8 : memref<1x!tpu.dma_semaphore, #tpu.memory_space<semaphore_mem>> -> memref<!tpu.dma_semaphore, #tpu.memory_space<semaphore_mem>>
    tpu.enqueue_dma source(%6 : memref<512x1024xbf16, #tpu.memory_space<any>>) target(%7 : memref<512x1024xbf16, #tpu.memory_space<vmem>>) target_semaphore(%9 : memref<!tpu.dma_semaphore, #tpu.memory_space<semaphore_mem>>)
    %c3_i32 = arith.constant 3 : i32
    %10 = tpu.memref_slice %arg18[%c3_i32] : memref<4x!tpu.dma_semaphore, #tpu.memory_space<semaphore_mem>> -> memref<1x!tpu.dma_semaphore, #tpu.memory_space<semaphore_mem>>
    %11 = tpu.memref_squeeze %10 : memref<1x!tpu.dma_semaphore, #tpu.memory_space<semaphore_mem>> -> memref<!tpu.dma_semaphore, #tpu.memory_space<semaphore_mem>>
    tpu.enqueue_dma source(%arg12 : memref<1024x128xbf16, #tpu.memory_space<any>>) target(%arg17 : memref<1024x128xbf16, #tpu.memory_space<vmem>>) target_semaphore(%11 : memref<!tpu.dma_semaphore, #tpu.memory_space<semaphore_mem>>)
    %c0 = arith.constant 0 : index
    %c0_7 = arith.constant 0 : index
    %c0_8 = arith.constant 0 : index
    %12 = vector.load %arg0[%c0, %c0_7, %c0_8] : memref<20x8x27xf32, #tpu.memory_space<vmem>>, vector<20x8x27xf32>
    %c0_9 = arith.constant 0 : index
    %c0_10 = arith.constant 0 : index
    %13 = vector.load %arg1[%c0_9, %c0_10] : memref<5x27xf32, #tpu.memory_space<vmem>>, vector<5x27xf32>
    %14 = vector.extract_strided_slice %12 {offsets = [0, 0, 0], sizes = [16, 8, 27], strides = [1, 1, 1]} : vector<20x8x27xf32> to vector<16x8x27xf32>
    %15 = vector.extract_strided_slice %13 {offsets = [0, 0], sizes = [1, 27], strides = [1, 1]} : vector<5x27xf32> to vector<1x27xf32>
    %16 = vector.shape_cast %15 : vector<1x27xf32> to vector<1x1x27xf32>
    %17 = vector.broadcast %16 : vector<1x1x27xf32> to vector<16x8x27xf32>
    %18 = arith.mulf %14, %17 : vector<16x8x27xf32>
    %19 = vector.extract_strided_slice %12 {offsets = [1, 0, 0], sizes = [16, 8, 27], strides = [1, 1, 1]} : vector<20x8x27xf32> to vector<16x8x27xf32>
    %20 = vector.extract_strided_slice %13 {offsets = [1, 0], sizes = [1, 27], strides = [1, 1]} : vector<5x27xf32> to vector<1x27xf32>
    %21 = vector.shape_cast %20 : vector<1x27xf32> to vector<1x1x27xf32>
    %22 = vector.broadcast %21 : vector<1x1x27xf32> to vector<16x8x27xf32>
    %23 = arith.mulf %19, %22 : vector<16x8x27xf32>
    %24 = arith.addf %18, %23 : vector<16x8x27xf32>
    %25 = vector.extract_strided_slice %12 {offsets = [2, 0, 0], sizes = [16, 8, 27], strides = [1, 1, 1]} : vector<20x8x27xf32> to vector<16x8x27xf32>
    %26 = vector.extract_strided_slice %13 {offsets = [2, 0], sizes = [1, 27], strides = [1, 1]} : vector<5x27xf32> to vector<1x27xf32>
    %27 = vector.shape_cast %26 : vector<1x27xf32> to vector<1x1x27xf32>
    %28 = vector.broadcast %27 : vector<1x1x27xf32> to vector<16x8x27xf32>
    %29 = arith.mulf %25, %28 : vector<16x8x27xf32>
    %30 = arith.addf %24, %29 : vector<16x8x27xf32>
    %31 = vector.extract_strided_slice %12 {offsets = [3, 0, 0], sizes = [16, 8, 27], strides = [1, 1, 1]} : vector<20x8x27xf32> to vector<16x8x27xf32>
    %32 = vector.extract_strided_slice %13 {offsets = [3, 0], sizes = [1, 27], strides = [1, 1]} : vector<5x27xf32> to vector<1x27xf32>
    %33 = vector.shape_cast %32 : vector<1x27xf32> to vector<1x1x27xf32>
    %34 = vector.broadcast %33 : vector<1x1x27xf32> to vector<16x8x27xf32>
    %35 = arith.mulf %31, %34 : vector<16x8x27xf32>
    %36 = arith.addf %30, %35 : vector<16x8x27xf32>
    %37 = vector.extract_strided_slice %12 {offsets = [4, 0, 0], sizes = [16, 8, 27], strides = [1, 1, 1]} : vector<20x8x27xf32> to vector<16x8x27xf32>
    %38 = vector.extract_strided_slice %13 {offsets = [4, 0], sizes = [1, 27], strides = [1, 1]} : vector<5x27xf32> to vector<1x27xf32>
    %39 = vector.shape_cast %38 : vector<1x27xf32> to vector<1x1x27xf32>
    %40 = vector.broadcast %39 : vector<1x1x27xf32> to vector<16x8x27xf32>
    %41 = arith.mulf %37, %40 : vector<16x8x27xf32>
    %42 = arith.addf %36, %41 : vector<16x8x27xf32>
    %c0_11 = arith.constant 0 : index
    %c0_12 = arith.constant 0 : index
    %43 = vector.load %arg2[%c0_11, %c0_12] : memref<1x27xf32, #tpu.memory_space<vmem>>, vector<1x27xf32>
    %44 = vector.shape_cast %43 : vector<1x27xf32> to vector<1x1x27xf32>
    %45 = vector.broadcast %44 : vector<1x1x27xf32> to vector<16x8x27xf32>
    %46 = arith.addf %42, %45 : vector<16x8x27xf32>
    %47 = vector.extract_strided_slice %46 {offsets = [0, 0, 0], sizes = [16, 2, 27], strides = [1, 1, 1]} : vector<16x8x27xf32> to vector<16x2x27xf32>
    %cst = arith.constant dense<0.000000e+00> : vector<27xf32>
    %48 = vector.multi_reduction <add>, %47, %cst [0, 1] : vector<16x2x27xf32> to vector<27xf32>
    %49 = vector.shape_cast %48 : vector<27xf32> to vector<1x1x27xf32>
    %cst_13 = arith.constant 3.200000e+01 : f32
    %50 = vector.broadcast %cst_13 : f32 to vector<1x1x27xf32>
    %51 = arith.divf %49, %50 : vector<1x1x27xf32>
    %52 = vector.broadcast %51 : vector<1x1x27xf32> to vector<16x2x27xf32>
    %53 = arith.subf %47, %52 : vector<16x2x27xf32>
    %54 = arith.mulf %53, %53 : vector<16x2x27xf32>
    %cst_14 = arith.constant dense<0.000000e+00> : vector<27xf32>
    %55 = vector.multi_reduction <add>, %54, %cst_14 [0, 1] : vector<16x2x27xf32> to vector<27xf32>
    %56 = vector.shape_cast %55 : vector<27xf32> to vector<1x1x27xf32>
    %cst_15 = arith.constant 3.200000e+01 : f32
    %57 = vector.broadcast %cst_15 : f32 to vector<1x1x27xf32>
    %58 = arith.divf %56, %57 : vector<1x1x27xf32>
    %59 = vector.broadcast %51 : vector<1x1x27xf32> to vector<16x8x27xf32>
    %60 = arith.subf %46, %59 : vector<16x8x27xf32>
    %cst_16 = arith.constant 9.99999974E-6 : f32
    %61 = vector.broadcast %cst_16 : f32 to vector<1x1x27xf32>
    %62 = arith.addf %58, %61 : vector<1x1x27xf32>
    %63 = math.rsqrt %62 : vector<1x1x27xf32>
    %64 = vector.broadcast %63 : vector<1x1x27xf32> to vector<16x8x27xf32>
    %65 = arith.mulf %60, %64 : vector<16x8x27xf32>
    %c0_17 = arith.constant 0 : index
    %c0_18 = arith.constant 0 : index
    %66 = vector.load %arg3[%c0_17, %c0_18] : memref<1x27xf32, #tpu.memory_space<vmem>>, vector<1x27xf32>
    %67 = vector.shape_cast %66 : vector<1x27xf32> to vector<1x1x27xf32>
    %68 = vector.broadcast %67 : vector<1x1x27xf32> to vector<16x8x27xf32>
    %69 = arith.mulf %65, %68 : vector<16x8x27xf32>
    %c0_19 = arith.constant 0 : index
    %c0_20 = arith.constant 0 : index
    %70 = vector.load %arg4[%c0_19, %c0_20] : memref<1x27xf32, #tpu.memory_space<vmem>>, vector<1x27xf32>
    %71 = vector.shape_cast %70 : vector<1x27xf32> to vector<1x1x27xf32>
    %72 = vector.broadcast %71 : vector<1x1x27xf32> to vector<16x8x27xf32>
    %73 = arith.addf %69, %72 : vector<16x8x27xf32>
    %cst_21 = arith.constant 0.000000e+00 : f32
    %74 = vector.broadcast %cst_21 : f32 to vector<16x8x27xf32>
    %75 = arith.cmpf ogt, %73, %74 : vector<16x8x27xf32>
    %cst_22 = arith.constant 0.000000e+00 : f32
    %76 = vector.broadcast %cst_22 : f32 to vector<16x8x27xf32>
    %77 = arith.minimumf %73, %76 : vector<16x8x27xf32>
    %78 = math.exp %77 : vector<16x8x27xf32>
    %cst_23 = arith.constant 1.000000e+00 : f32
    %79 = vector.broadcast %cst_23 : f32 to vector<16x8x27xf32>
    %80 = arith.subf %78, %79 : vector<16x8x27xf32>
    %81 = arith.select %75, %73, %80 : vector<16x8x27xi1>, vector<16x8x27xf32>
    %82 = vector.shape_cast %81 : vector<16x8x27xf32> to vector<8x2x8x27xf32>
    %83 = vector.extract_strided_slice %82 {offsets = [0, 0, 0, 0], sizes = [8, 1, 8, 27], strides = [1, 1, 1, 1]} : vector<8x2x8x27xf32> to vector<8x1x8x27xf32>
    %84 = vector.shape_cast %83 : vector<8x1x8x27xf32> to vector<8x8x27xf32>
    %85 = vector.extract_strided_slice %82 {offsets = [0, 1, 0, 0], sizes = [8, 1, 8, 27], strides = [1, 1, 1, 1]} : vector<8x2x8x27xf32> to vector<8x1x8x27xf32>
    %86 = vector.shape_cast %85 : vector<8x1x8x27xf32> to vector<8x8x27xf32>
    %87 = arith.maximumf %84, %86 : vector<8x8x27xf32>
    %88 = vector.shape_cast %87 : vector<8x8x27xf32> to vector<64x27xf32>
    %c0_24 = arith.constant 0 : index
    %c0_25 = arith.constant 0 : index
    %89 = vector.load %arg5[%c0_24, %c0_25] : memref<27x512xbf16, #tpu.memory_space<vmem>>, vector<27x512xbf16>
    %90 = arith.truncf %88 : vector<64x27xf32> to vector<64x27xbf16>
    %cst_26 = arith.constant dense<0.000000e+00> : vector<64x512xf32>
    %91 = tpu.matmul %90, %89, %cst_26 {dimension_numbers = #tpu.dot_dimension_numbers<[1], [0], [0], [1], [0, 0, 1, 1], [], []>} : vector<64x27xbf16>, vector<27x512xbf16>, vector<64x512xf32> -> vector<64x512xf32>
    %c0_27 = arith.constant 0 : index
    %c0_28 = arith.constant 0 : index
    %92 = vector.load %arg7[%c0_27, %c0_28] : memref<1x512xf32, #tpu.memory_space<vmem>>, vector<1x512xf32>
    %93 = vector.broadcast %92 : vector<1x512xf32> to vector<64x512xf32>
    %94 = arith.addf %91, %93 : vector<64x512xf32>
    %cst_29 = arith.constant 0.000000e+00 : f32
    %95 = vector.broadcast %cst_29 : f32 to vector<8x128xf32>
    %cst_30 = arith.constant 0.000000e+00 : f32
    %96 = vector.broadcast %cst_30 : f32 to vector<8x128xf32>
    %97 = vector.extract_strided_slice %94 {offsets = [0, 0], sizes = [8, 512], strides = [1, 1]} : vector<64x512xf32> to vector<8x512xf32>
    %c0_31 = arith.constant 0 : index
    %c0_32 = arith.constant 0 : index
    %98 = vector.load %arg6[%c0_31, %c0_32] : memref<128x512xbf16, #tpu.memory_space<vmem>>, vector<128x512xbf16>
    %99 = arith.truncf %95 : vector<8x128xf32> to vector<8x128xbf16>
    %cst_33 = arith.constant dense<0.000000e+00> : vector<8x512xf32>
    %100 = tpu.matmul %99, %98, %cst_33 {dimension_numbers = #tpu.dot_dimension_numbers<[1], [0], [0], [1], [0, 0, 1, 1], [], []>} : vector<8x128xbf16>, vector<128x512xbf16>, vector<8x512xf32> -> vector<8x512xf32>
    %101 = arith.addf %97, %100 : vector<8x512xf32>
    %102 = vector.extract_strided_slice %101 {offsets = [0, 0], sizes = [8, 128], strides = [1, 1]} : vector<8x512xf32> to vector<8x128xf32>
    %cst_34 = arith.constant 5.000000e-01 : f32
    %103 = vector.broadcast %cst_34 : f32 to vector<8x128xf32>
    %104 = arith.mulf %103, %102 : vector<8x128xf32>
    %105 = math.tanh %104 : vector<8x128xf32>
    %cst_35 = arith.constant 5.000000e-01 : f32
    %106 = vector.broadcast %cst_35 : f32 to vector<8x128xf32>
    %107 = arith.mulf %106, %105 : vector<8x128xf32>
    %cst_36 = arith.constant 5.000000e-01 : f32
    %108 = vector.broadcast %cst_36 : f32 to vector<8x128xf32>
    %109 = arith.addf %107, %108 : vector<8x128xf32>
    %110 = vector.extract_strided_slice %101 {offsets = [0, 128], sizes = [8, 128], strides = [1, 1]} : vector<8x512xf32> to vector<8x128xf32>
    %cst_37 = arith.constant 5.000000e-01 : f32
    %111 = vector.broadcast %cst_37 : f32 to vector<8x128xf32>
    %112 = arith.mulf %111, %110 : vector<8x128xf32>
    %113 = math.tanh %112 : vector<8x128xf32>
    %cst_38 = arith.constant 5.000000e-01 : f32
    %114 = vector.broadcast %cst_38 : f32 to vector<8x128xf32>
    %115 = arith.mulf %114, %113 : vector<8x128xf32>
    %cst_39 = arith.constant 5.000000e-01 : f32
    %116 = vector.broadcast %cst_39 : f32 to vector<8x128xf32>
    %117 = arith.addf %115, %116 : vector<8x128xf32>
    %118 = vector.extract_strided_slice %101 {offsets = [0, 256], sizes = [8, 128], strides = [1, 1]} : vector<8x512xf32> to vector<8x128xf32>
    %119 = math.tanh %118 : vector<8x128xf32>
    %120 = vector.extract_strided_slice %101 {offsets = [0, 384], sizes = [8, 128], strides = [1, 1]} : vector<8x512xf32> to vector<8x128xf32>
    %cst_40 = arith.constant 5.000000e-01 : f32
    %121 = vector.broadcast %cst_40 : f32 to vector<8x128xf32>
    %122 = arith.mulf %121, %120 : vector<8x128xf32>
    %123 = math.tanh %122 : vector<8x128xf32>
    %cst_41 = arith.constant 5.000000e-01 : f32
    %124 = vector.broadcast %cst_41 : f32 to vector<8x128xf32>
    %125 = arith.mulf %124, %123 : vector<8x128xf32>
    %cst_42 = arith.constant 5.000000e-01 : f32
    %126 = vector.broadcast %cst_42 : f32 to vector<8x128xf32>
    %127 = arith.addf %125, %126 : vector<8x128xf32>
    %128 = arith.mulf %117, %96 : vector<8x128xf32>
    %129 = arith.mulf %109, %119 : vector<8x128xf32>
    %130 = arith.addf %128, %129 : vector<8x128xf32>
    %131 = math.tanh %130 : vector<8x128xf32>
    %132 = arith.mulf %127, %131 : vector<8x128xf32>
    %133 = vector.extract_strided_slice %94 {offsets = [8, 0], sizes = [8, 512], strides = [1, 1]} : vector<64x512xf32> to vector<8x512xf32>
    %c0_43 = arith.constant 0 : index
    %c0_44 = arith.constant 0 : index
    %134 = vector.load %arg6[%c0_43, %c0_44] : memref<128x512xbf16, #tpu.memory_space<vmem>>, vector<128x512xbf16>
    %135 = arith.truncf %132 : vector<8x128xf32> to vector<8x128xbf16>
    %cst_45 = arith.constant dense<0.000000e+00> : vector<8x512xf32>
    %136 = tpu.matmul %135, %134, %cst_45 {dimension_numbers = #tpu.dot_dimension_numbers<[1], [0], [0], [1], [0, 0, 1, 1], [], []>} : vector<8x128xbf16>, vector<128x512xbf16>, vector<8x512xf32> -> vector<8x512xf32>
    %137 = arith.addf %133, %136 : vector<8x512xf32>
    %138 = vector.extract_strided_slice %137 {offsets = [0, 0], sizes = [8, 128], strides = [1, 1]} : vector<8x512xf32> to vector<8x128xf32>
    %cst_46 = arith.constant 5.000000e-01 : f32
    %139 = vector.broadcast %cst_46 : f32 to vector<8x128xf32>
    %140 = arith.mulf %139, %138 : vector<8x128xf32>
    %141 = math.tanh %140 : vector<8x128xf32>
    %cst_47 = arith.constant 5.000000e-01 : f32
    %142 = vector.broadcast %cst_47 : f32 to vector<8x128xf32>
    %143 = arith.mulf %142, %141 : vector<8x128xf32>
    %cst_48 = arith.constant 5.000000e-01 : f32
    %144 = vector.broadcast %cst_48 : f32 to vector<8x128xf32>
    %145 = arith.addf %143, %144 : vector<8x128xf32>
    %146 = vector.extract_strided_slice %137 {offsets = [0, 128], sizes = [8, 128], strides = [1, 1]} : vector<8x512xf32> to vector<8x128xf32>
    %cst_49 = arith.constant 5.000000e-01 : f32
    %147 = vector.broadcast %cst_49 : f32 to vector<8x128xf32>
    %148 = arith.mulf %147, %146 : vector<8x128xf32>
    %149 = math.tanh %148 : vector<8x128xf32>
    %cst_50 = arith.constant 5.000000e-01 : f32
    %150 = vector.broadcast %cst_50 : f32 to vector<8x128xf32>
    %151 = arith.mulf %150, %149 : vector<8x128xf32>
    %cst_51 = arith.constant 5.000000e-01 : f32
    %152 = vector.broadcast %cst_51 : f32 to vector<8x128xf32>
    %153 = arith.addf %151, %152 : vector<8x128xf32>
    %154 = vector.extract_strided_slice %137 {offsets = [0, 256], sizes = [8, 128], strides = [1, 1]} : vector<8x512xf32> to vector<8x128xf32>
    %155 = math.tanh %154 : vector<8x128xf32>
    %156 = vector.extract_strided_slice %137 {offsets = [0, 384], sizes = [8, 128], strides = [1, 1]} : vector<8x512xf32> to vector<8x128xf32>
    %cst_52 = arith.constant 5.000000e-01 : f32
    %157 = vector.broadcast %cst_52 : f32 to vector<8x128xf32>
    %158 = arith.mulf %157, %156 : vector<8x128xf32>
    %159 = math.tanh %158 : vector<8x128xf32>
    %cst_53 = arith.constant 5.000000e-01 : f32
    %160 = vector.broadcast %cst_53 : f32 to vector<8x128xf32>
    %161 = arith.mulf %160, %159 : vector<8x128xf32>
    %cst_54 = arith.constant 5.000000e-01 : f32
    %162 = vector.broadcast %cst_54 : f32 to vector<8x128xf32>
    %163 = arith.addf %161, %162 : vector<8x128xf32>
    %164 = arith.mulf %153, %130 : vector<8x128xf32>
    %165 = arith.mulf %145, %155 : vector<8x128xf32>
    %166 = arith.addf %164, %165 : vector<8x128xf32>
    %167 = math.tanh %166 : vector<8x128xf32>
    %168 = arith.mulf %163, %167 : vector<8x128xf32>
    %169 = vector.extract_strided_slice %94 {offsets = [16, 0], sizes = [8, 512], strides = [1, 1]} : vector<64x512xf32> to vector<8x512xf32>
    %c0_55 = arith.constant 0 : index
    %c0_56 = arith.constant 0 : index
    %170 = vector.load %arg6[%c0_55, %c0_56] : memref<128x512xbf16, #tpu.memory_space<vmem>>, vector<128x512xbf16>
    %171 = arith.truncf %168 : vector<8x128xf32> to vector<8x128xbf16>
    %cst_57 = arith.constant dense<0.000000e+00> : vector<8x512xf32>
    %172 = tpu.matmul %171, %170, %cst_57 {dimension_numbers = #tpu.dot_dimension_numbers<[1], [0], [0], [1], [0, 0, 1, 1], [], []>} : vector<8x128xbf16>, vector<128x512xbf16>, vector<8x512xf32> -> vector<8x512xf32>
    %173 = arith.addf %169, %172 : vector<8x512xf32>
    %174 = vector.extract_strided_slice %173 {offsets = [0, 0], sizes = [8, 128], strides = [1, 1]} : vector<8x512xf32> to vector<8x128xf32>
    %cst_58 = arith.constant 5.000000e-01 : f32
    %175 = vector.broadcast %cst_58 : f32 to vector<8x128xf32>
    %176 = arith.mulf %175, %174 : vector<8x128xf32>
    %177 = math.tanh %176 : vector<8x128xf32>
    %cst_59 = arith.constant 5.000000e-01 : f32
    %178 = vector.broadcast %cst_59 : f32 to vector<8x128xf32>
    %179 = arith.mulf %178, %177 : vector<8x128xf32>
    %cst_60 = arith.constant 5.000000e-01 : f32
    %180 = vector.broadcast %cst_60 : f32 to vector<8x128xf32>
    %181 = arith.addf %179, %180 : vector<8x128xf32>
    %182 = vector.extract_strided_slice %173 {offsets = [0, 128], sizes = [8, 128], strides = [1, 1]} : vector<8x512xf32> to vector<8x128xf32>
    %cst_61 = arith.constant 5.000000e-01 : f32
    %183 = vector.broadcast %cst_61 : f32 to vector<8x128xf32>
    %184 = arith.mulf %183, %182 : vector<8x128xf32>
    %185 = math.tanh %184 : vector<8x128xf32>
    %cst_62 = arith.constant 5.000000e-01 : f32
    %186 = vector.broadcast %cst_62 : f32 to vector<8x128xf32>
    %187 = arith.mulf %186, %185 : vector<8x128xf32>
    %cst_63 = arith.constant 5.000000e-01 : f32
    %188 = vector.broadcast %cst_63 : f32 to vector<8x128xf32>
    %189 = arith.addf %187, %188 : vector<8x128xf32>
    %190 = vector.extract_strided_slice %173 {offsets = [0, 256], sizes = [8, 128], strides = [1, 1]} : vector<8x512xf32> to vector<8x128xf32>
    %191 = math.tanh %190 : vector<8x128xf32>
    %192 = vector.extract_strided_slice %173 {offsets = [0, 384], sizes = [8, 128], strides = [1, 1]} : vector<8x512xf32> to vector<8x128xf32>
    %cst_64 = arith.constant 5.000000e-01 : f32
    %193 = vector.broadcast %cst_64 : f32 to vector<8x128xf32>
    %194 = arith.mulf %193, %192 : vector<8x128xf32>
    %195 = math.tanh %194 : vector<8x128xf32>
    %cst_65 = arith.constant 5.000000e-01 : f32
    %196 = vector.broadcast %cst_65 : f32 to vector<8x128xf32>
    %197 = arith.mulf %196, %195 : vector<8x128xf32>
    %cst_66 = arith.constant 5.000000e-01 : f32
    %198 = vector.broadcast %cst_66 : f32 to vector<8x128xf32>
    %199 = arith.addf %197, %198 : vector<8x128xf32>
    %200 = arith.mulf %189, %166 : vector<8x128xf32>
    %201 = arith.mulf %181, %191 : vector<8x128xf32>
    %202 = arith.addf %200, %201 : vector<8x128xf32>
    %203 = math.tanh %202 : vector<8x128xf32>
    %204 = arith.mulf %199, %203 : vector<8x128xf32>
    %205 = vector.extract_strided_slice %94 {offsets = [24, 0], sizes = [8, 512], strides = [1, 1]} : vector<64x512xf32> to vector<8x512xf32>
    %c0_67 = arith.constant 0 : index
    %c0_68 = arith.constant 0 : index
    %206 = vector.load %arg6[%c0_67, %c0_68] : memref<128x512xbf16, #tpu.memory_space<vmem>>, vector<128x512xbf16>
    %207 = arith.truncf %204 : vector<8x128xf32> to vector<8x128xbf16>
    %cst_69 = arith.constant dense<0.000000e+00> : vector<8x512xf32>
    %208 = tpu.matmul %207, %206, %cst_69 {dimension_numbers = #tpu.dot_dimension_numbers<[1], [0], [0], [1], [0, 0, 1, 1], [], []>} : vector<8x128xbf16>, vector<128x512xbf16>, vector<8x512xf32> -> vector<8x512xf32>
    %209 = arith.addf %205, %208 : vector<8x512xf32>
    %210 = vector.extract_strided_slice %209 {offsets = [0, 0], sizes = [8, 128], strides = [1, 1]} : vector<8x512xf32> to vector<8x128xf32>
    %cst_70 = arith.constant 5.000000e-01 : f32
    %211 = vector.broadcast %cst_70 : f32 to vector<8x128xf32>
    %212 = arith.mulf %211, %210 : vector<8x128xf32>
    %213 = math.tanh %212 : vector<8x128xf32>
    %cst_71 = arith.constant 5.000000e-01 : f32
    %214 = vector.broadcast %cst_71 : f32 to vector<8x128xf32>
    %215 = arith.mulf %214, %213 : vector<8x128xf32>
    %cst_72 = arith.constant 5.000000e-01 : f32
    %216 = vector.broadcast %cst_72 : f32 to vector<8x128xf32>
    %217 = arith.addf %215, %216 : vector<8x128xf32>
    %218 = vector.extract_strided_slice %209 {offsets = [0, 128], sizes = [8, 128], strides = [1, 1]} : vector<8x512xf32> to vector<8x128xf32>
    %cst_73 = arith.constant 5.000000e-01 : f32
    %219 = vector.broadcast %cst_73 : f32 to vector<8x128xf32>
    %220 = arith.mulf %219, %218 : vector<8x128xf32>
    %221 = math.tanh %220 : vector<8x128xf32>
    %cst_74 = arith.constant 5.000000e-01 : f32
    %222 = vector.broadcast %cst_74 : f32 to vector<8x128xf32>
    %223 = arith.mulf %222, %221 : vector<8x128xf32>
    %cst_75 = arith.constant 5.000000e-01 : f32
    %224 = vector.broadcast %cst_75 : f32 to vector<8x128xf32>
    %225 = arith.addf %223, %224 : vector<8x128xf32>
    %226 = vector.extract_strided_slice %209 {offsets = [0, 256], sizes = [8, 128], strides = [1, 1]} : vector<8x512xf32> to vector<8x128xf32>
    %227 = math.tanh %226 : vector<8x128xf32>
    %228 = vector.extract_strided_slice %209 {offsets = [0, 384], sizes = [8, 128], strides = [1, 1]} : vector<8x512xf32> to vector<8x128xf32>
    %cst_76 = arith.constant 5.000000e-01 : f32
    %229 = vector.broadcast %cst_76 : f32 to vector<8x128xf32>
    %230 = arith.mulf %229, %228 : vector<8x128xf32>
    %231 = math.tanh %230 : vector<8x128xf32>
    %cst_77 = arith.constant 5.000000e-01 : f32
    %232 = vector.broadcast %cst_77 : f32 to vector<8x128xf32>
    %233 = arith.mulf %232, %231 : vector<8x128xf32>
    %cst_78 = arith.constant 5.000000e-01 : f32
    %234 = vector.broadcast %cst_78 : f32 to vector<8x128xf32>
    %235 = arith.addf %233, %234 : vector<8x128xf32>
    %236 = arith.mulf %225, %202 : vector<8x128xf32>
    %237 = arith.mulf %217, %227 : vector<8x128xf32>
    %238 = arith.addf %236, %237 : vector<8x128xf32>
    %239 = math.tanh %238 : vector<8x128xf32>
    %240 = arith.mulf %235, %239 : vector<8x128xf32>
    %241 = vector.extract_strided_slice %94 {offsets = [32, 0], sizes = [8, 512], strides = [1, 1]} : vector<64x512xf32> to vector<8x512xf32>
    %c0_79 = arith.constant 0 : index
    %c0_80 = arith.constant 0 : index
    %242 = vector.load %arg6[%c0_79, %c0_80] : memref<128x512xbf16, #tpu.memory_space<vmem>>, vector<128x512xbf16>
    %243 = arith.truncf %240 : vector<8x128xf32> to vector<8x128xbf16>
    %cst_81 = arith.constant dense<0.000000e+00> : vector<8x512xf32>
    %244 = tpu.matmul %243, %242, %cst_81 {dimension_numbers = #tpu.dot_dimension_numbers<[1], [0], [0], [1], [0, 0, 1, 1], [], []>} : vector<8x128xbf16>, vector<128x512xbf16>, vector<8x512xf32> -> vector<8x512xf32>
    %245 = arith.addf %241, %244 : vector<8x512xf32>
    %246 = vector.extract_strided_slice %245 {offsets = [0, 0], sizes = [8, 128], strides = [1, 1]} : vector<8x512xf32> to vector<8x128xf32>
    %cst_82 = arith.constant 5.000000e-01 : f32
    %247 = vector.broadcast %cst_82 : f32 to vector<8x128xf32>
    %248 = arith.mulf %247, %246 : vector<8x128xf32>
    %249 = math.tanh %248 : vector<8x128xf32>
    %cst_83 = arith.constant 5.000000e-01 : f32
    %250 = vector.broadcast %cst_83 : f32 to vector<8x128xf32>
    %251 = arith.mulf %250, %249 : vector<8x128xf32>
    %cst_84 = arith.constant 5.000000e-01 : f32
    %252 = vector.broadcast %cst_84 : f32 to vector<8x128xf32>
    %253 = arith.addf %251, %252 : vector<8x128xf32>
    %254 = vector.extract_strided_slice %245 {offsets = [0, 128], sizes = [8, 128], strides = [1, 1]} : vector<8x512xf32> to vector<8x128xf32>
    %cst_85 = arith.constant 5.000000e-01 : f32
    %255 = vector.broadcast %cst_85 : f32 to vector<8x128xf32>
    %256 = arith.mulf %255, %254 : vector<8x128xf32>
    %257 = math.tanh %256 : vector<8x128xf32>
    %cst_86 = arith.constant 5.000000e-01 : f32
    %258 = vector.broadcast %cst_86 : f32 to vector<8x128xf32>
    %259 = arith.mulf %258, %257 : vector<8x128xf32>
    %cst_87 = arith.constant 5.000000e-01 : f32
    %260 = vector.broadcast %cst_87 : f32 to vector<8x128xf32>
    %261 = arith.addf %259, %260 : vector<8x128xf32>
    %262 = vector.extract_strided_slice %245 {offsets = [0, 256], sizes = [8, 128], strides = [1, 1]} : vector<8x512xf32> to vector<8x128xf32>
    %263 = math.tanh %262 : vector<8x128xf32>
    %264 = vector.extract_strided_slice %245 {offsets = [0, 384], sizes = [8, 128], strides = [1, 1]} : vector<8x512xf32> to vector<8x128xf32>
    %cst_88 = arith.constant 5.000000e-01 : f32
    %265 = vector.broadcast %cst_88 : f32 to vector<8x128xf32>
    %266 = arith.mulf %265, %264 : vector<8x128xf32>
    %267 = math.tanh %266 : vector<8x128xf32>
    %cst_89 = arith.constant 5.000000e-01 : f32
    %268 = vector.broadcast %cst_89 : f32 to vector<8x128xf32>
    %269 = arith.mulf %268, %267 : vector<8x128xf32>
    %cst_90 = arith.constant 5.000000e-01 : f32
    %270 = vector.broadcast %cst_90 : f32 to vector<8x128xf32>
    %271 = arith.addf %269, %270 : vector<8x128xf32>
    %272 = arith.mulf %261, %238 : vector<8x128xf32>
    %273 = arith.mulf %253, %263 : vector<8x128xf32>
    %274 = arith.addf %272, %273 : vector<8x128xf32>
    %275 = math.tanh %274 : vector<8x128xf32>
    %276 = arith.mulf %271, %275 : vector<8x128xf32>
    %277 = vector.extract_strided_slice %94 {offsets = [40, 0], sizes = [8, 512], strides = [1, 1]} : vector<64x512xf32> to vector<8x512xf32>
    %c0_91 = arith.constant 0 : index
    %c0_92 = arith.constant 0 : index
    %278 = vector.load %arg6[%c0_91, %c0_92] : memref<128x512xbf16, #tpu.memory_space<vmem>>, vector<128x512xbf16>
    %279 = arith.truncf %276 : vector<8x128xf32> to vector<8x128xbf16>
    %cst_93 = arith.constant dense<0.000000e+00> : vector<8x512xf32>
    %280 = tpu.matmul %279, %278, %cst_93 {dimension_numbers = #tpu.dot_dimension_numbers<[1], [0], [0], [1], [0, 0, 1, 1], [], []>} : vector<8x128xbf16>, vector<128x512xbf16>, vector<8x512xf32> -> vector<8x512xf32>
    %281 = arith.addf %277, %280 : vector<8x512xf32>
    %282 = vector.extract_strided_slice %281 {offsets = [0, 0], sizes = [8, 128], strides = [1, 1]} : vector<8x512xf32> to vector<8x128xf32>
    %cst_94 = arith.constant 5.000000e-01 : f32
    %283 = vector.broadcast %cst_94 : f32 to vector<8x128xf32>
    %284 = arith.mulf %283, %282 : vector<8x128xf32>
    %285 = math.tanh %284 : vector<8x128xf32>
    %cst_95 = arith.constant 5.000000e-01 : f32
    %286 = vector.broadcast %cst_95 : f32 to vector<8x128xf32>
    %287 = arith.mulf %286, %285 : vector<8x128xf32>
    %cst_96 = arith.constant 5.000000e-01 : f32
    %288 = vector.broadcast %cst_96 : f32 to vector<8x128xf32>
    %289 = arith.addf %287, %288 : vector<8x128xf32>
    %290 = vector.extract_strided_slice %281 {offsets = [0, 128], sizes = [8, 128], strides = [1, 1]} : vector<8x512xf32> to vector<8x128xf32>
    %cst_97 = arith.constant 5.000000e-01 : f32
    %291 = vector.broadcast %cst_97 : f32 to vector<8x128xf32>
    %292 = arith.mulf %291, %290 : vector<8x128xf32>
    %293 = math.tanh %292 : vector<8x128xf32>
    %cst_98 = arith.constant 5.000000e-01 : f32
    %294 = vector.broadcast %cst_98 : f32 to vector<8x128xf32>
    %295 = arith.mulf %294, %293 : vector<8x128xf32>
    %cst_99 = arith.constant 5.000000e-01 : f32
    %296 = vector.broadcast %cst_99 : f32 to vector<8x128xf32>
    %297 = arith.addf %295, %296 : vector<8x128xf32>
    %298 = vector.extract_strided_slice %281 {offsets = [0, 256], sizes = [8, 128], strides = [1, 1]} : vector<8x512xf32> to vector<8x128xf32>
    %299 = math.tanh %298 : vector<8x128xf32>
    %300 = vector.extract_strided_slice %281 {offsets = [0, 384], sizes = [8, 128], strides = [1, 1]} : vector<8x512xf32> to vector<8x128xf32>
    %cst_100 = arith.constant 5.000000e-01 : f32
    %301 = vector.broadcast %cst_100 : f32 to vector<8x128xf32>
    %302 = arith.mulf %301, %300 : vector<8x128xf32>
    %303 = math.tanh %302 : vector<8x128xf32>
    %cst_101 = arith.constant 5.000000e-01 : f32
    %304 = vector.broadcast %cst_101 : f32 to vector<8x128xf32>
    %305 = arith.mulf %304, %303 : vector<8x128xf32>
    %cst_102 = arith.constant 5.000000e-01 : f32
    %306 = vector.broadcast %cst_102 : f32 to vector<8x128xf32>
    %307 = arith.addf %305, %306 : vector<8x128xf32>
    %308 = arith.mulf %297, %274 : vector<8x128xf32>
    %309 = arith.mulf %289, %299 : vector<8x128xf32>
    %310 = arith.addf %308, %309 : vector<8x128xf32>
    %311 = math.tanh %310 : vector<8x128xf32>
    %312 = arith.mulf %307, %311 : vector<8x128xf32>
    %313 = vector.extract_strided_slice %94 {offsets = [48, 0], sizes = [8, 512], strides = [1, 1]} : vector<64x512xf32> to vector<8x512xf32>
    %c0_103 = arith.constant 0 : index
    %c0_104 = arith.constant 0 : index
    %314 = vector.load %arg6[%c0_103, %c0_104] : memref<128x512xbf16, #tpu.memory_space<vmem>>, vector<128x512xbf16>
    %315 = arith.truncf %312 : vector<8x128xf32> to vector<8x128xbf16>
    %cst_105 = arith.constant dense<0.000000e+00> : vector<8x512xf32>
    %316 = tpu.matmul %315, %314, %cst_105 {dimension_numbers = #tpu.dot_dimension_numbers<[1], [0], [0], [1], [0, 0, 1, 1], [], []>} : vector<8x128xbf16>, vector<128x512xbf16>, vector<8x512xf32> -> vector<8x512xf32>
    %317 = arith.addf %313, %316 : vector<8x512xf32>
    %318 = vector.extract_strided_slice %317 {offsets = [0, 0], sizes = [8, 128], strides = [1, 1]} : vector<8x512xf32> to vector<8x128xf32>
    %cst_106 = arith.constant 5.000000e-01 : f32
    %319 = vector.broadcast %cst_106 : f32 to vector<8x128xf32>
    %320 = arith.mulf %319, %318 : vector<8x128xf32>
    %321 = math.tanh %320 : vector<8x128xf32>
    %cst_107 = arith.constant 5.000000e-01 : f32
    %322 = vector.broadcast %cst_107 : f32 to vector<8x128xf32>
    %323 = arith.mulf %322, %321 : vector<8x128xf32>
    %cst_108 = arith.constant 5.000000e-01 : f32
    %324 = vector.broadcast %cst_108 : f32 to vector<8x128xf32>
    %325 = arith.addf %323, %324 : vector<8x128xf32>
    %326 = vector.extract_strided_slice %317 {offsets = [0, 128], sizes = [8, 128], strides = [1, 1]} : vector<8x512xf32> to vector<8x128xf32>
    %cst_109 = arith.constant 5.000000e-01 : f32
    %327 = vector.broadcast %cst_109 : f32 to vector<8x128xf32>
    %328 = arith.mulf %327, %326 : vector<8x128xf32>
    %329 = math.tanh %328 : vector<8x128xf32>
    %cst_110 = arith.constant 5.000000e-01 : f32
    %330 = vector.broadcast %cst_110 : f32 to vector<8x128xf32>
    %331 = arith.mulf %330, %329 : vector<8x128xf32>
    %cst_111 = arith.constant 5.000000e-01 : f32
    %332 = vector.broadcast %cst_111 : f32 to vector<8x128xf32>
    %333 = arith.addf %331, %332 : vector<8x128xf32>
    %334 = vector.extract_strided_slice %317 {offsets = [0, 256], sizes = [8, 128], strides = [1, 1]} : vector<8x512xf32> to vector<8x128xf32>
    %335 = math.tanh %334 : vector<8x128xf32>
    %336 = vector.extract_strided_slice %317 {offsets = [0, 384], sizes = [8, 128], strides = [1, 1]} : vector<8x512xf32> to vector<8x128xf32>
    %cst_112 = arith.constant 5.000000e-01 : f32
    %337 = vector.broadcast %cst_112 : f32 to vector<8x128xf32>
    %338 = arith.mulf %337, %336 : vector<8x128xf32>
    %339 = math.tanh %338 : vector<8x128xf32>
    %cst_113 = arith.constant 5.000000e-01 : f32
    %340 = vector.broadcast %cst_113 : f32 to vector<8x128xf32>
    %341 = arith.mulf %340, %339 : vector<8x128xf32>
    %cst_114 = arith.constant 5.000000e-01 : f32
    %342 = vector.broadcast %cst_114 : f32 to vector<8x128xf32>
    %343 = arith.addf %341, %342 : vector<8x128xf32>
    %344 = arith.mulf %333, %310 : vector<8x128xf32>
    %345 = arith.mulf %325, %335 : vector<8x128xf32>
    %346 = arith.addf %344, %345 : vector<8x128xf32>
    %347 = math.tanh %346 : vector<8x128xf32>
    %348 = arith.mulf %343, %347 : vector<8x128xf32>
    %349 = vector.extract_strided_slice %94 {offsets = [56, 0], sizes = [8, 512], strides = [1, 1]} : vector<64x512xf32> to vector<8x512xf32>
    %c0_115 = arith.constant 0 : index
    %c0_116 = arith.constant 0 : index
    %350 = vector.load %arg6[%c0_115, %c0_116] : memref<128x512xbf16, #tpu.memory_space<vmem>>, vector<128x512xbf16>
    %351 = arith.truncf %348 : vector<8x128xf32> to vector<8x128xbf16>
    %cst_117 = arith.constant dense<0.000000e+00> : vector<8x512xf32>
    %352 = tpu.matmul %351, %350, %cst_117 {dimension_numbers = #tpu.dot_dimension_numbers<[1], [0], [0], [1], [0, 0, 1, 1], [], []>} : vector<8x128xbf16>, vector<128x512xbf16>, vector<8x512xf32> -> vector<8x512xf32>
    %353 = arith.addf %349, %352 : vector<8x512xf32>
    %354 = vector.extract_strided_slice %353 {offsets = [0, 0], sizes = [8, 128], strides = [1, 1]} : vector<8x512xf32> to vector<8x128xf32>
    %cst_118 = arith.constant 5.000000e-01 : f32
    %355 = vector.broadcast %cst_118 : f32 to vector<8x128xf32>
    %356 = arith.mulf %355, %354 : vector<8x128xf32>
    %357 = math.tanh %356 : vector<8x128xf32>
    %cst_119 = arith.constant 5.000000e-01 : f32
    %358 = vector.broadcast %cst_119 : f32 to vector<8x128xf32>
    %359 = arith.mulf %358, %357 : vector<8x128xf32>
    %cst_120 = arith.constant 5.000000e-01 : f32
    %360 = vector.broadcast %cst_120 : f32 to vector<8x128xf32>
    %361 = arith.addf %359, %360 : vector<8x128xf32>
    %362 = vector.extract_strided_slice %353 {offsets = [0, 128], sizes = [8, 128], strides = [1, 1]} : vector<8x512xf32> to vector<8x128xf32>
    %cst_121 = arith.constant 5.000000e-01 : f32
    %363 = vector.broadcast %cst_121 : f32 to vector<8x128xf32>
    %364 = arith.mulf %363, %362 : vector<8x128xf32>
    %365 = math.tanh %364 : vector<8x128xf32>
    %cst_122 = arith.constant 5.000000e-01 : f32
    %366 = vector.broadcast %cst_122 : f32 to vector<8x128xf32>
    %367 = arith.mulf %366, %365 : vector<8x128xf32>
    %cst_123 = arith.constant 5.000000e-01 : f32
    %368 = vector.broadcast %cst_123 : f32 to vector<8x128xf32>
    %369 = arith.addf %367, %368 : vector<8x128xf32>
    %370 = vector.extract_strided_slice %353 {offsets = [0, 256], sizes = [8, 128], strides = [1, 1]} : vector<8x512xf32> to vector<8x128xf32>
    %371 = math.tanh %370 : vector<8x128xf32>
    %372 = vector.extract_strided_slice %353 {offsets = [0, 384], sizes = [8, 128], strides = [1, 1]} : vector<8x512xf32> to vector<8x128xf32>
    %cst_124 = arith.constant 5.000000e-01 : f32
    %373 = vector.broadcast %cst_124 : f32 to vector<8x128xf32>
    %374 = arith.mulf %373, %372 : vector<8x128xf32>
    %375 = math.tanh %374 : vector<8x128xf32>
    %cst_125 = arith.constant 5.000000e-01 : f32
    %376 = vector.broadcast %cst_125 : f32 to vector<8x128xf32>
    %377 = arith.mulf %376, %375 : vector<8x128xf32>
    %cst_126 = arith.constant 5.000000e-01 : f32
    %378 = vector.broadcast %cst_126 : f32 to vector<8x128xf32>
    %379 = arith.addf %377, %378 : vector<8x128xf32>
    %380 = arith.mulf %369, %346 : vector<8x128xf32>
    %381 = arith.mulf %361, %371 : vector<8x128xf32>
    %382 = arith.addf %380, %381 : vector<8x128xf32>
    %383 = math.tanh %382 : vector<8x128xf32>
    %384 = arith.mulf %379, %383 : vector<8x128xf32>
    %c0_i32_127 = arith.constant 0 : i32
    %385 = tpu.memref_slice %arg18[%c0_i32_127] : memref<4x!tpu.dma_semaphore, #tpu.memory_space<semaphore_mem>> -> memref<1x!tpu.dma_semaphore, #tpu.memory_space<semaphore_mem>>
    %386 = tpu.memref_squeeze %385 : memref<1x!tpu.dma_semaphore, #tpu.memory_space<semaphore_mem>> -> memref<!tpu.dma_semaphore, #tpu.memory_space<semaphore_mem>>
    tpu.wait_dma2 semaphore(%386 : memref<!tpu.dma_semaphore, #tpu.memory_space<semaphore_mem>>) src(%arg8 : memref<128x1024xbf16, #tpu.memory_space<any>>) dst(%arg15 : memref<128x1024xbf16, #tpu.memory_space<vmem>>)
    %c0_128 = arith.constant 0 : index
    %c0_129 = arith.constant 0 : index
    %387 = vector.load %arg15[%c0_128, %c0_129] : memref<128x1024xbf16, #tpu.memory_space<vmem>>, vector<128x1024xbf16>
    %388 = arith.truncf %384 : vector<8x128xf32> to vector<8x128xbf16>
    %cst_130 = arith.constant dense<0.000000e+00> : vector<8x1024xf32>
    %389 = tpu.matmul %388, %387, %cst_130 {dimension_numbers = #tpu.dot_dimension_numbers<[1], [0], [0], [1], [0, 0, 1, 1], [], []>} : vector<8x128xbf16>, vector<128x1024xbf16>, vector<8x1024xf32> -> vector<8x1024xf32>
    %c0_131 = arith.constant 0 : index
    %c0_132 = arith.constant 0 : index
    %390 = vector.load %arg9[%c0_131, %c0_132] : memref<1x1024xf32, #tpu.memory_space<vmem>>, vector<1x1024xf32>
    %391 = vector.broadcast %390 : vector<1x1024xf32> to vector<8x1024xf32>
    %392 = arith.addf %389, %391 : vector<8x1024xf32>
    %c1_i32_133 = arith.constant 1 : i32
    %c0_i32_134 = arith.constant 0 : i32
    %c0_i32_135 = arith.constant 0 : i32
    %393 = tpu.memref_slice %arg10[%c0_i32_134, %c0_i32_135] : memref<1024x1024xbf16, #tpu.memory_space<any>> -> memref<512x1024xbf16, #tpu.memory_space<any>>
    %c0_i32_136 = arith.constant 0 : i32
    %c0_i32_137 = arith.constant 0 : i32
    %394 = tpu.memref_slice %arg16[%c0_i32_136, %c0_i32_137] : memref<1024x1024xbf16, #tpu.memory_space<vmem>> -> memref<512x1024xbf16, #tpu.memory_space<vmem>>
    %395 = tpu.memref_slice %arg18[%c1_i32_133] : memref<4x!tpu.dma_semaphore, #tpu.memory_space<semaphore_mem>> -> memref<1x!tpu.dma_semaphore, #tpu.memory_space<semaphore_mem>>
    %396 = tpu.memref_squeeze %395 : memref<1x!tpu.dma_semaphore, #tpu.memory_space<semaphore_mem>> -> memref<!tpu.dma_semaphore, #tpu.memory_space<semaphore_mem>>
    tpu.wait_dma2 semaphore(%396 : memref<!tpu.dma_semaphore, #tpu.memory_space<semaphore_mem>>) src(%393 : memref<512x1024xbf16, #tpu.memory_space<any>>) dst(%394 : memref<512x1024xbf16, #tpu.memory_space<vmem>>)
    %397 = vector.extract_strided_slice %392 {offsets = [0, 0], sizes = [8, 512], strides = [1, 1]} : vector<8x1024xf32> to vector<8x512xf32>
    %c0_138 = arith.constant 0 : index
    %c0_139 = arith.constant 0 : index
    %398 = vector.load %arg16[%c0_138, %c0_139] : memref<1024x1024xbf16, #tpu.memory_space<vmem>>, vector<512x1024xbf16>
    %399 = arith.truncf %397 : vector<8x512xf32> to vector<8x512xbf16>
    %cst_140 = arith.constant dense<0.000000e+00> : vector<8x1024xf32>
    %400 = tpu.matmul %399, %398, %cst_140 {dimension_numbers = #tpu.dot_dimension_numbers<[1], [0], [0], [1], [0, 0, 1, 1], [], []>} : vector<8x512xbf16>, vector<512x1024xbf16>, vector<8x1024xf32> -> vector<8x1024xf32>
    %c0_141 = arith.constant 0 : index
    %c0_142 = arith.constant 0 : index
    %401 = vector.load %arg11[%c0_141, %c0_142] : memref<1x1024xf32, #tpu.memory_space<vmem>>, vector<1x1024xf32>
    %402 = vector.broadcast %401 : vector<1x1024xf32> to vector<8x1024xf32>
    %403 = arith.addf %400, %402 : vector<8x1024xf32>
    %c2_i32_143 = arith.constant 2 : i32
    %c512_i32_144 = arith.constant 512 : i32
    %c0_i32_145 = arith.constant 0 : i32
    %404 = tpu.memref_slice %arg10[%c512_i32_144, %c0_i32_145] : memref<1024x1024xbf16, #tpu.memory_space<any>> -> memref<512x1024xbf16, #tpu.memory_space<any>>
    %c512_i32_146 = arith.constant 512 : i32
    %c0_i32_147 = arith.constant 0 : i32
    %405 = tpu.memref_slice %arg16[%c512_i32_146, %c0_i32_147] : memref<1024x1024xbf16, #tpu.memory_space<vmem>> -> memref<512x1024xbf16, #tpu.memory_space<vmem>>
    %406 = tpu.memref_slice %arg18[%c2_i32_143] : memref<4x!tpu.dma_semaphore, #tpu.memory_space<semaphore_mem>> -> memref<1x!tpu.dma_semaphore, #tpu.memory_space<semaphore_mem>>
    %407 = tpu.memref_squeeze %406 : memref<1x!tpu.dma_semaphore, #tpu.memory_space<semaphore_mem>> -> memref<!tpu.dma_semaphore, #tpu.memory_space<semaphore_mem>>
    tpu.wait_dma2 semaphore(%407 : memref<!tpu.dma_semaphore, #tpu.memory_space<semaphore_mem>>) src(%404 : memref<512x1024xbf16, #tpu.memory_space<any>>) dst(%405 : memref<512x1024xbf16, #tpu.memory_space<vmem>>)
    %408 = vector.extract_strided_slice %392 {offsets = [0, 512], sizes = [8, 512], strides = [1, 1]} : vector<8x1024xf32> to vector<8x512xf32>
    %c512 = arith.constant 512 : index
    %c0_148 = arith.constant 0 : index
    %409 = vector.load %arg16[%c512, %c0_148] : memref<1024x1024xbf16, #tpu.memory_space<vmem>>, vector<512x1024xbf16>
    %410 = arith.truncf %408 : vector<8x512xf32> to vector<8x512xbf16>
    %cst_149 = arith.constant dense<0.000000e+00> : vector<8x1024xf32>
    %411 = tpu.matmul %410, %409, %cst_149 {dimension_numbers = #tpu.dot_dimension_numbers<[1], [0], [0], [1], [0, 0, 1, 1], [], []>} : vector<8x512xbf16>, vector<512x1024xbf16>, vector<8x1024xf32> -> vector<8x1024xf32>
    %412 = arith.addf %403, %411 : vector<8x1024xf32>
    %c3_i32_150 = arith.constant 3 : i32
    %413 = tpu.memref_slice %arg18[%c3_i32_150] : memref<4x!tpu.dma_semaphore, #tpu.memory_space<semaphore_mem>> -> memref<1x!tpu.dma_semaphore, #tpu.memory_space<semaphore_mem>>
    %414 = tpu.memref_squeeze %413 : memref<1x!tpu.dma_semaphore, #tpu.memory_space<semaphore_mem>> -> memref<!tpu.dma_semaphore, #tpu.memory_space<semaphore_mem>>
    tpu.wait_dma2 semaphore(%414 : memref<!tpu.dma_semaphore, #tpu.memory_space<semaphore_mem>>) src(%arg12 : memref<1024x128xbf16, #tpu.memory_space<any>>) dst(%arg17 : memref<1024x128xbf16, #tpu.memory_space<vmem>>)
    %c0_151 = arith.constant 0 : index
    %c0_152 = arith.constant 0 : index
    %415 = vector.load %arg17[%c0_151, %c0_152] : memref<1024x128xbf16, #tpu.memory_space<vmem>>, vector<1024x128xbf16>
    %416 = arith.truncf %412 : vector<8x1024xf32> to vector<8x1024xbf16>
    %cst_153 = arith.constant dense<0.000000e+00> : vector<8x128xf32>
    %417 = tpu.matmul %416, %415, %cst_153 {dimension_numbers = #tpu.dot_dimension_numbers<[1], [0], [0], [1], [0, 0, 1, 1], [], []>} : vector<8x1024xbf16>, vector<1024x128xbf16>, vector<8x128xf32> -> vector<8x128xf32>
    %c0_154 = arith.constant 0 : index
    %c0_155 = arith.constant 0 : index
    %418 = vector.load %arg13[%c0_154, %c0_155] : memref<1x128xf32, #tpu.memory_space<vmem>>, vector<1x128xf32>
    %419 = vector.broadcast %418 : vector<1x128xf32> to vector<8x128xf32>
    %420 = arith.addf %417, %419 : vector<8x128xf32>
    %c0_156 = arith.constant 0 : index
    %c0_157 = arith.constant 0 : index
    %421 = vector.load %arg14[%c0_156, %c0_157] : memref<8x128xf32, #tpu.memory_space<vmem>>, vector<8x128xf32>
    tpu.vector_store %arg14[%c0_156, %c0_157], %420 {strides = array<i32>} : memref<8x128xf32, #tpu.memory_space<vmem>>, vector<8x128xf32>,
    return
  }
}

</mosaic_0001>

<llo_original>
// kernel: worker_act_net_forward.1
$region0: #{worker_act_net_forward.1}
  #allocation0 [shape = 'u32[]', space=smem, size = 0x4, offset = 0x4, fixed_abs, tag = 'smem constant byte address 0x4 - core index']
  #allocation1 [shape = 'u32[72,128]{1,0:T(1,128)}', space=vmem, size = 0x9000, scoped, tag = 'internal scratch']
  #allocation2 [shape = 'bf16[128,1024]{1,0:T(8,128)(2,1)}', space=vmem, size = 0x40000, scoped, tag = 'scratch operand']
  #allocation3 [shape = 'bf16[1024,1024]{1,0:T(8,128)(2,1)}', space=vmem, size = 0x200000, scoped, tag = 'scratch operand']
  #allocation4 [shape = 'bf16[1024,128]{1,0:T(8,128)(2,1)}', space=vmem, size = 0x40000, scoped, tag = 'scratch operand']
  #allocation5 [shape = 's32[4]{0}', space=sflag, size = 0x10, scoped, tag = 'scratch operand']
  #allocation6 [shape = 's32[]', space=sflag, size = 0x4, offset = 0, fixed_abs, tag = 'sflag constant byte address 0x0 - dummy sync flag']
  #allocation7 [shape = 's32[]', space=sflag, size = 0x4, offset = 0, fixed_abs, tag = 'sflag constant byte address 0x0 - dummy sync flag']
  #allocation8 [shape = 's32[]', space=sflag, size = 0x4, offset = 0, fixed_abs, tag = 'sflag constant byte address 0x0 - dummy sync flag']
  #allocation9 [shape = 's32[]', space=sflag, size = 0x4, offset = 0, fixed_abs, tag = 'sflag constant byte address 0x0 - dummy sync flag']
  %s0 = inlined_call_operand.vmem [shape: f32[20,8,27], index: 0, kind: input, shape index: {}]
  %s1 = inlined_call_operand.vmem [shape: f32[5,27], index: 1, kind: input, shape index: {}]
  %s2 = inlined_call_operand.vmem [shape: f32[1,27], index: 2, kind: input, shape index: {}]
  %s3 = inlined_call_operand.vmem [shape: f32[1,27], index: 3, kind: input, shape index: {}]
  %s4 = inlined_call_operand.vmem [shape: f32[1,27], index: 4, kind: input, shape index: {}]
  %s5 = inlined_call_operand.vmem [shape: bf16[27,512], index: 5, kind: input, shape index: {}]
  %s6 = inlined_call_operand.vmem [shape: bf16[128,512], index: 6, kind: input, shape index: {}]
  %s7 = inlined_call_operand.vmem [shape: f32[1,512], index: 7, kind: input, shape index: {}]
  %s8 = inlined_call_operand.vmem [shape: bf16[128,1024], index: 8, kind: input, shape index: {}]
  %s9 = inlined_call_operand.vmem [shape: f32[1,1024], index: 9, kind: input, shape index: {}]
  %s10 = inlined_call_operand.vmem [shape: bf16[1024,1024], index: 10, kind: input, shape index: {}]
  %s11 = inlined_call_operand.vmem [shape: f32[1,1024], index: 11, kind: input, shape index: {}]
  %s12 = inlined_call_operand.vmem [shape: bf16[1024,128], index: 12, kind: input, shape index: {}]
  %s13 = inlined_call_operand.vmem [shape: f32[1,128], index: 13, kind: input, shape index: {}]
  %s14 = inlined_call_operand.vmem [shape: f32[8,128], index: 14, kind: output, shape index: {}]
  %s15 = sld [smem:[#allocation0]]
  $region130: #{worker_act_net_forward.1} parent=0
    _
  %s17 = ssub.s32 1, %s15
  %s18 = scalar_select 0, %s17, %s15
  // Predicated region
  $region2: #{worker_act_net_forward.1} parent=0 // pred_check
    _
  $region3: #{worker_act_net_forward.1} parent=0 // pred_check_branch
    %20 = sbr.rel (0) target = $region5
  $region4: #{worker_act_net_forward.1} parent=0 // pred_region
    _
  $region5: #{worker_act_net_forward.1} parent=0 // pred_fallthru
    _
  // Predicated region
  $region6: #{worker_act_net_forward.1} parent=0 // pred_check
    _
  $region7: #{worker_act_net_forward.1} parent=0 // pred_check_branch
    %22 = sbr.rel (0) target = $region9
  $region8: #{worker_act_net_forward.1} parent=0 // pred_region
    _
  $region9: #{worker_act_net_forward.1} parent=0 // pred_fallthru
    _
  // Predicated region
  $region10: #{worker_act_net_forward.1} parent=0 // pred_check
    _
  $region11: #{worker_act_net_forward.1} parent=0 // pred_check_branch
    %24 = sbr.rel (0) target = $region13
  $region12: #{worker_act_net_forward.1} parent=0 // pred_region
    _
  $region13: #{worker_act_net_forward.1} parent=0 // pred_fallthru
    _
  // Predicated region
  $region14: #{worker_act_net_forward.1} parent=0 // pred_check
    _
  $region15: #{worker_act_net_forward.1} parent=0 // pred_check_branch
    %26 = sbr.rel (0) target = $region17
  $region16: #{worker_act_net_forward.1} parent=0 // pred_region
    _
  $region17: #{worker_act_net_forward.1} parent=0 // pred_fallthru
    _
  // Predicated region
  $region18: #{worker_act_net_forward.1} parent=0 // pred_check
    _
  $region19: #{worker_act_net_forward.1} parent=0 // pred_check_branch
    %28 = sbr.rel (0) target = $region21
  $region20: #{worker_act_net_forward.1} parent=0 // pred_region
    _
  $region21: #{worker_act_net_forward.1} parent=0 // pred_fallthru
    _
  // Predicated region
  $region22: #{worker_act_net_forward.1} parent=0 // pred_check
    _
  $region23: #{worker_act_net_forward.1} parent=0 // pred_check_branch
    %30 = sbr.rel (0) target = $region25
  $region24: #{worker_act_net_forward.1} parent=0 // pred_region
    _
  $region25: #{worker_act_net_forward.1} parent=0 // pred_fallthru
    _
  // Predicated region
  $region26: #{worker_act_net_forward.1} parent=0 // pred_check
    _
  $region27: #{worker_act_net_forward.1} parent=0 // pred_check_branch
    %32 = sbr.rel (0) target = $region29
  $region28: #{worker_act_net_forward.1} parent=0 // pred_region
    _
  $region29: #{worker_act_net_forward.1} parent=0 // pred_fallthru
    _
  // Predicated region
  $region30: #{worker_act_net_forward.1} parent=0 // pred_check
    _
  $region31: #{worker_act_net_forward.1} parent=0 // pred_check_branch
    %34 = sbr.rel (0) target = $region33
  $region32: #{worker_act_net_forward.1} parent=0 // pred_region
    _
  $region33: #{worker_act_net_forward.1} parent=0 // pred_fallthru
    _
  // Predicated region
  $region34: #{worker_act_net_forward.1} parent=0 // pred_check
    _
  $region35: #{worker_act_net_forward.1} parent=0 // pred_check_branch
    %36 = sbr.rel (0) target = $region37
  $region36: #{worker_act_net_forward.1} parent=0 // pred_region
    _
  $region37: #{worker_act_net_forward.1} parent=0 // pred_fallthru
    _
  // Predicated region
  $region38: #{worker_act_net_forward.1} parent=0 // pred_check
    _
  $region39: #{worker_act_net_forward.1} parent=0 // pred_check_branch
    %38 = sbr.rel (0) target = $region41
  $region40: #{worker_act_net_forward.1} parent=0 // pred_region
    _
  $region41: #{worker_act_net_forward.1} parent=0 // pred_fallthru
    _
  // Predicated region
  $region42: #{worker_act_net_forward.1} parent=0 // pred_check
    _
  $region43: #{worker_act_net_forward.1} parent=0 // pred_check_branch
    %40 = sbr.rel (0) target = $region45
  $region44: #{worker_act_net_forward.1} parent=0 // pred_region
    _
  $region45: #{worker_act_net_forward.1} parent=0 // pred_fallthru
    _
  // Predicated region
  $region46: #{worker_act_net_forward.1} parent=0 // pred_check
    _
  $region47: #{worker_act_net_forward.1} parent=0 // pred_check_branch
    %43 = sbr.rel (0) target = $region49
  $region48: #{worker_act_net_forward.1} parent=0 // pred_region
    loop: start=0, step=1, limit=1
    $region50: #{worker_act_net_forward.1} parent=48 // loop_pre_header
      _
    $region51: #{worker_act_net_forward.1} parent=48 // loop_header
      %s45 = sphi 0, %s49
      %p46 = scmp.ge.s32.totalorder %s45, 1
      %s50 = sphi %s8, %s8
      %s51 = sphi [#allocation2], [#allocation2]
    $region52: #{worker_act_net_forward.1} parent=48 // loop_header_branch
      %48 = sbr.rel (%p46) target = $region56
    $region53: #{worker_act_net_forward.1} parent=48 // loop_body
      %v52 = vld [vmem:[%s50] sm:$0xff]
      %53 = vst [vmem:[%s51] sm:$0xff] %v52
      %v54 = vld [vmem:[%s50 + $0x8] sm:$0xff]
      %55 = vst [vmem:[%s51 + $0x8] sm:$0xff] %v54
      %v56 = vld [vmem:[%s50 + $0x10] sm:$0xff]
      %57 = vst [vmem:[%s51 + $0x10] sm:$0xff] %v56
      %v58 = vld [vmem:[%s50 + $0x18] sm:$0xff]
      %59 = vst [vmem:[%s51 + $0x18] sm:$0xff] %v58
      %v60 = vld [vmem:[%s50 + $0x20] sm:$0xff]
      %61 = vst [vmem:[%s51 + $0x20] sm:$0xff] %v60
      %v62 = vld [vmem:[%s50 + $0x28] sm:$0xff]
      %63 = vst [vmem:[%s51 + $0x28] sm:$0xff] %v62
      %v64 = vld [vmem:[%s50 + $0x30] sm:$0xff]
      %65 = vst [vmem:[%s51 + $0x30] sm:$0xff] %v64
      %v66 = vld [vmem:[%s50 + $0x38] sm:$0xff]
      %67 = vst [vmem:[%s51 + $0x38] sm:$0xff] %v66
      %v68 = vld [vmem:[%s50 + $0x40] sm:$0xff]
      %69 = vst [vmem:[%s51 + $0x40] sm:$0xff] %v68
      %v70 = vld [vmem:[%s50 + $0x48] sm:$0xff]
      %71 = vst [vmem:[%s51 + $0x48] sm:$0xff] %v70
      %v72 = vld [vmem:[%s50 + $0x50] sm:$0xff]
      %73 = vst [vmem:[%s51 + $0x50] sm:$0xff] %v72
      %v74 = vld [vmem:[%s50 + $0x58] sm:$0xff]
      %75 = vst [vmem:[%s51 + $0x58] sm:$0xff] %v74
      %v76 = vld [vmem:[%s50 + $0x60] sm:$0xff]
      %77 = vst [vmem:[%s51 + $0x60] sm:$0xff] %v76
      %v78 = vld [vmem:[%s50 + $0x68] sm:$0xff]
      %79 = vst [vmem:[%s51 + $0x68] sm:$0xff] %v78
      %v80 = vld [vmem:[%s50 + $0x70] sm:$0xff]
      %81 = vst [vmem:[%s51 + $0x70] sm:$0xff] %v80
      %v82 = vld [vmem:[%s50 + $0x78] sm:$0xff]
      %83 = vst [vmem:[%s51 + $0x78] sm:$0xff] %v82
      %v84 = vld [vmem:[%s50 + $0x80] sm:$0xff]
      %85 = vst [vmem:[%s51 + $0x80] sm:$0xff] %v84
      %v86 = vld [vmem:[%s50 + $0x88] sm:$0xff]
      %87 = vst [vmem:[%s51 + $0x88] sm:$0xff] %v86
      %v88 = vld [vmem:[%s50 + $0x90] sm:$0xff]
      %89 = vst [vmem:[%s51 + $0x90] sm:$0xff] %v88
      %v90 = vld [vmem:[%s50 + $0x98] sm:$0xff]
      %91 = vst [vmem:[%s51 + $0x98] sm:$0xff] %v90
      %v92 = vld [vmem:[%s50 + $0xa0] sm:$0xff]
      %93 = vst [vmem:[%s51 + $0xa0] sm:$0xff] %v92
      %v94 = vld [vmem:[%s50 + $0xa8] sm:$0xff]
      %95 = vst [vmem:[%s51 + $0xa8] sm:$0xff] %v94
      %v96 = vld [vmem:[%s50 + $0xb0] sm:$0xff]
      %97 = vst [vmem:[%s51 + $0xb0] sm:$0xff] %v96
      %v98 = vld [vmem:[%s50 + $0xb8] sm:$0xff]
      %99 = vst [vmem:[%s51 + $0xb8] sm:$0xff] %v98
      %v100 = vld [vmem:[%s50 + $0xc0] sm:$0xff]
      %101 = vst [vmem:[%s51 + $0xc0] sm:$0xff] %v100
      %v102 = vld [vmem:[%s50 + $0xc8] sm:$0xff]
      %103 = vst [vmem:[%s51 + $0xc8] sm:$0xff] %v102
      %v104 = vld [vmem:[%s50 + $0xd0] sm:$0xff]
      %105 = vst [vmem:[%s51 + $0xd0] sm:$0xff] %v104
      %v106 = vld [vmem:[%s50 + $0xd8] sm:$0xff]
      %107 = vst [vmem:[%s51 + $0xd8] sm:$0xff] %v106
      %v108 = vld [vmem:[%s50 + $0xe0] sm:$0xff]
      %109 = vst [vmem:[%s51 + $0xe0] sm:$0xff] %v108
      %v110 = vld [vmem:[%s50 + $0xe8] sm:$0xff]
      %111 = vst [vmem:[%s51 + $0xe8] sm:$0xff] %v110
      %v112 = vld [vmem:[%s50 + $0xf0] sm:$0xff]
      %113 = vst [vmem:[%s51 + $0xf0] sm:$0xff] %v112
      %v114 = vld [vmem:[%s50 + $0xf8] sm:$0xff]
      %115 = vst [vmem:[%s51 + $0xf8] sm:$0xff] %v114
      %v116 = vld [vmem:[%s50 + $0x100] sm:$0xff]
      %117 = vst [vmem:[%s51 + $0x100] sm:$0xff] %v116
      %v118 = vld [vmem:[%s50 + $0x108] sm:$0xff]
      %119 = vst [vmem:[%s51 + $0x108] sm:$0xff] %v118
      %v120 = vld [vmem:[%s50 + $0x110] sm:$0xff]
      %121 = vst [vmem:[%s51 + $0x110] sm:$0xff] %v120
      %v122 = vld [vmem:[%s50 + $0x118] sm:$0xff]
      %123 = vst [vmem:[%s51 + $0x118] sm:$0xff] %v122
      %v124 = vld [vmem:[%s50 + $0x120] sm:$0xff]
      %125 = vst [vmem:[%s51 + $0x120] sm:$0xff] %v124
      %v126 = vld [vmem:[%s50 + $0x128] sm:$0xff]
      %127 = vst [vmem:[%s51 + $0x128] sm:$0xff] %v126
      %v128 = vld [vmem:[%s50 + $0x130] sm:$0xff]
      %129 = vst [vmem:[%s51 + $0x130] sm:$0xff] %v128
      %v130 = vld [vmem:[%s50 + $0x138] sm:$0xff]
      %131 = vst [vmem:[%s51 + $0x138] sm:$0xff] %v130
      %v132 = vld [vmem:[%s50 + $0x140] sm:$0xff]
      %133 = vst [vmem:[%s51 + $0x140] sm:$0xff] %v132
      %v134 = vld [vmem:[%s50 + $0x148] sm:$0xff]
      %135 = vst [vmem:[%s51 + $0x148] sm:$0xff] %v134
      %v136 = vld [vmem:[%s50 + $0x150] sm:$0xff]
      %137 = vst [vmem:[%s51 + $0x150] sm:$0xff] %v136
      %v138 = vld [vmem:[%s50 + $0x158] sm:$0xff]
      %139 = vst [vmem:[%s51 + $0x158] sm:$0xff] %v138
      %v140 = vld [vmem:[%s50 + $0x160] sm:$0xff]
      %141 = vst [vmem:[%s51 + $0x160] sm:$0xff] %v140
      %v142 = vld [vmem:[%s50 + $0x168] sm:$0xff]
      %143 = vst [vmem:[%s51 + $0x168] sm:$0xff] %v142
      %v144 = vld [vmem:[%s50 + $0x170] sm:$0xff]
      %145 = vst [vmem:[%s51 + $0x170] sm:$0xff] %v144
      %v146 = vld [vmem:[%s50 + $0x178] sm:$0xff]
      %147 = vst [vmem:[%s51 + $0x178] sm:$0xff] %v146
      %v148 = vld [vmem:[%s50 + $0x180] sm:$0xff]
      %149 = vst [vmem:[%s51 + $0x180] sm:$0xff] %v148
      %v150 = vld [vmem:[%s50 + $0x188] sm:$0xff]
      %151 = vst [vmem:[%s51 + $0x188] sm:$0xff] %v150
      %v152 = vld [vmem:[%s50 + $0x190] sm:$0xff]
      %153 = vst [vmem:[%s51 + $0x190] sm:$0xff] %v152
      %v154 = vld [vmem:[%s50 + $0x198] sm:$0xff]
      %155 = vst [vmem:[%s51 + $0x198] sm:$0xff] %v154
      %v156 = vld [vmem:[%s50 + $0x1a0] sm:$0xff]
      %157 = vst [vmem:[%s51 + $0x1a0] sm:$0xff] %v156
      %v158 = vld [vmem:[%s50 + $0x1a8] sm:$0xff]
      %159 = vst [vmem:[%s51 + $0x1a8] sm:$0xff] %v158
      %v160 = vld [vmem:[%s50 + $0x1b0] sm:$0xff]
      %161 = vst [vmem:[%s51 + $0x1b0] sm:$0xff] %v160
      %v162 = vld [vmem:[%s50 + $0x1b8] sm:$0xff]
      %163 = vst [vmem:[%s51 + $0x1b8] sm:$0xff] %v162
      %v164 = vld [vmem:[%s50 + $0x1c0] sm:$0xff]
      %165 = vst [vmem:[%s51 + $0x1c0] sm:$0xff] %v164
      %v166 = vld [vmem:[%s50 + $0x1c8] sm:$0xff]
      %167 = vst [vmem:[%s51 + $0x1c8] sm:$0xff] %v166
      %v168 = vld [vmem:[%s50 + $0x1d0] sm:$0xff]
      %169 = vst [vmem:[%s51 + $0x1d0] sm:$0xff] %v168
      %v170 = vld [vmem:[%s50 + $0x1d8] sm:$0xff]
      %171 = vst [vmem:[%s51 + $0x1d8] sm:$0xff] %v170
      %v172 = vld [vmem:[%s50 + $0x1e0] sm:$0xff]
      %173 = vst [vmem:[%s51 + $0x1e0] sm:$0xff] %v172
      %v174 = vld [vmem:[%s50 + $0x1e8] sm:$0xff]
      %175 = vst [vmem:[%s51 + $0x1e8] sm:$0xff] %v174
      %v176 = vld [vmem:[%s50 + $0x1f0] sm:$0xff]
      %177 = vst [vmem:[%s51 + $0x1f0] sm:$0xff] %v176
      %v178 = vld [vmem:[%s50 + $0x1f8] sm:$0xff]
      %179 = vst [vmem:[%s51 + $0x1f8] sm:$0xff] %v178
    $region54: #{worker_act_net_forward.1} parent=48 // loop_footer
      %s49 = sadd.s32 1, %s45
    $region55: #{worker_act_net_forward.1} parent=48 // loop_footer_branch
      %44 = sbr.rel target = $region51
    $region56: #{worker_act_net_forward.1} parent=48 // loop_exit
      _
  $region49: #{worker_act_net_forward.1} parent=0 // pred_fallthru
    _
  // Predicated region
  $region57: #{worker_act_net_forward.1} parent=0 // pred_check
    _
  $region58: #{worker_act_net_forward.1} parent=0 // pred_check_branch
    %181 = sbr.rel target = $region60
  $region59: #{worker_act_net_forward.1} parent=0 // pred_region
    _
  $region60: #{worker_act_net_forward.1} parent=0 // pred_fallthru
    _
  // Predicated region
  $region61: #{worker_act_net_forward.1} parent=0 // pred_check
    _
  $region62: #{worker_act_net_forward.1} parent=0 // pred_check_branch
    %184 = sbr.rel (0) target = $region64
  $region63: #{worker_act_net_forward.1} parent=0 // pred_region
    %185 = vsyncadd [#allocation5], 8192
  $region64: #{worker_act_net_forward.1} parent=0 // pred_fallthru
    _
  %s186 = scalar_lea.sflag [#allocation5], 1
  // Predicated region
  $region65: #{worker_act_net_forward.1} parent=0 // pred_check
    _
  $region66: #{worker_act_net_forward.1} parent=0 // pred_check_branch
    %188 = sbr.rel (0) target = $region68
  $region67: #{worker_act_net_forward.1} parent=0 // pred_region
    loop: start=0, step=1, limit=1
    $region69: #{worker_act_net_forward.1} parent=67 // loop_pre_header
      _
    $region70: #{worker_act_net_forward.1} parent=67 // loop_header
      %s190 = sphi 0, %s194
      %p191 = scmp.ge.s32.totalorder %s190, 1
      %s195 = sphi %s10, %s10
      %s196 = sphi [#allocation3], [#allocation3]
    $region71: #{worker_act_net_forward.1} parent=67 // loop_header_branch
      %193 = sbr.rel (%p191) target = $region75
    $region72: #{worker_act_net_forward.1} parent=67 // loop_body
      %v197 = vld [vmem:[%s195] sm:$0xff]
      %198 = vst [vmem:[%s196] sm:$0xff] %v197
      %v199 = vld [vmem:[%s195 + $0x8] sm:$0xff]
      %200 = vst [vmem:[%s196 + $0x8] sm:$0xff] %v199
      %v201 = vld [vmem:[%s195 + $0x10] sm:$0xff]
      %202 = vst [vmem:[%s196 + $0x10] sm:$0xff] %v201
      %v203 = vld [vmem:[%s195 + $0x18] sm:$0xff]
      %204 = vst [vmem:[%s196 + $0x18] sm:$0xff] %v203
      %v205 = vld [vmem:[%s195 + $0x20] sm:$0xff]
      %206 = vst [vmem:[%s196 + $0x20] sm:$0xff] %v205
      %v207 = vld [vmem:[%s195 + $0x28] sm:$0xff]
      %208 = vst [vmem:[%s196 + $0x28] sm:$0xff] %v207
      %v209 = vld [vmem:[%s195 + $0x30] sm:$0xff]
      %210 = vst [vmem:[%s196 + $0x30] sm:$0xff] %v209
      %v211 = vld [vmem:[%s195 + $0x38] sm:$0xff]
      %212 = vst [vmem:[%s196 + $0x38] sm:$0xff] %v211
      %v213 = vld [vmem:[%s195 + $0x40] sm:$0xff]
      %214 = vst [vmem:[%s196 + $0x40] sm:$0xff] %v213
      %v215 = vld [vmem:[%s195 + $0x48] sm:$0xff]
      %216 = vst [vmem:[%s196 + $0x48] sm:$0xff] %v215
      %v217 = vld [vmem:[%s195 + $0x50] sm:$0xff]
      %218 = vst [vmem:[%s196 + $0x50] sm:$0xff] %v217
      %v219 = vld [vmem:[%s195 + $0x58] sm:$0xff]
      %220 = vst [vmem:[%s196 + $0x58] sm:$0xff] %v219
      %v221 = vld [vmem:[%s195 + $0x60] sm:$0xff]
      %222 = vst [vmem:[%s196 + $0x60] sm:$0xff] %v221
      %v223 = vld [vmem:[%s195 + $0x68] sm:$0xff]
      %224 = vst [vmem:[%s196 + $0x68] sm:$0xff] %v223
      %v225 = vld [vmem:[%s195 + $0x70] sm:$0xff]
      %226 = vst [vmem:[%s196 + $0x70] sm:$0xff] %v225
      %v227 = vld [vmem:[%s195 + $0x78] sm:$0xff]
      %228 = vst [vmem:[%s196 + $0x78] sm:$0xff] %v227
      %v229 = vld [vmem:[%s195 + $0x80] sm:$0xff]
      %230 = vst [vmem:[%s196 + $0x80] sm:$0xff] %v229
      %v231 = vld [vmem:[%s195 + $0x88] sm:$0xff]
      %232 = vst [vmem:[%s196 + $0x88] sm:$0xff] %v231
      %v233 = vld [vmem:[%s195 + $0x90] sm:$0xff]
      %234 = vst [vmem:[%s196 + $0x90] sm:$0xff] %v233
      %v235 = vld [vmem:[%s195 + $0x98] sm:$0xff]
      %236 = vst [vmem:[%s196 + $0x98] sm:$0xff] %v235
      %v237 = vld [vmem:[%s195 + $0xa0] sm:$0xff]
      %238 = vst [vmem:[%s196 + $0xa0] sm:$0xff] %v237
      %v239 = vld [vmem:[%s195 + $0xa8] sm:$0xff]
      %240 = vst [vmem:[%s196 + $0xa8] sm:$0xff] %v239
      %v241 = vld [vmem:[%s195 + $0xb0] sm:$0xff]
      %242 = vst [vmem:[%s196 + $0xb0] sm:$0xff] %v241
      %v243 = vld [vmem:[%s195 + $0xb8] sm:$0xff]
      %244 = vst [vmem:[%s196 + $0xb8] sm:$0xff] %v243
      %v245 = vld [vmem:[%s195 + $0xc0] sm:$0xff]
      %246 = vst [vmem:[%s196 + $0xc0] sm:$0xff] %v245
      %v247 = vld [vmem:[%s195 + $0xc8] sm:$0xff]
      %248 = vst [vmem:[%s196 + $0xc8] sm:$0xff] %v247
      %v249 = vld [vmem:[%s195 + $0xd0] sm:$0xff]
      %250 = vst [vmem:[%s196 + $0xd0] sm:$0xff] %v249
      %v251 = vld [vmem:[%s195 + $0xd8] sm:$0xff]
      %252 = vst [vmem:[%s196 + $0xd8] sm:$0xff] %v251
      %v253 = vld [vmem:[%s195 + $0xe0] sm:$0xff]
      %254 = vst [vmem:[%s196 + $0xe0] sm:$0xff] %v253
      %v255 = vld [vmem:[%s195 + $0xe8] sm:$0xff]
      %256 = vst [vmem:[%s196 + $0xe8] sm:$0xff] %v255
      %v257 = vld [vmem:[%s195 + $0xf0] sm:$0xff]
      %258 = vst [vmem:[%s196 + $0xf0] sm:$0xff] %v257
      %v259 = vld [vmem:[%s195 + $0xf8] sm:$0xff]
      %260 = vst [vmem:[%s196 + $0xf8] sm:$0xff] %v259
      %v261 = vld [vmem:[%s195 + $0x100] sm:$0xff]
      %262 = vst [vmem:[%s196 + $0x100] sm:$0xff] %v261
      %v263 = vld [vmem:[%s195 + $0x108] sm:$0xff]
      %264 = vst [vmem:[%s196 + $0x108] sm:$0xff] %v263
      %v265 = vld [vmem:[%s195 + $0x110] sm:$0xff]
      %266 = vst [vmem:[%s196 + $0x110] sm:$0xff] %v265
      %v267 = vld [vmem:[%s195 + $0x118] sm:$0xff]
      %268 = vst [vmem:[%s196 + $0x118] sm:$0xff] %v267
      %v269 = vld [vmem:[%s195 + $0x120] sm:$0xff]
      %270 = vst [vmem:[%s196 + $0x120] sm:$0xff] %v269
      %v271 = vld [vmem:[%s195 + $0x128] sm:$0xff]
      %272 = vst [vmem:[%s196 + $0x128] sm:$0xff] %v271
      %v273 = vld [vmem:[%s195 + $0x130] sm:$0xff]
      %274 = vst [vmem:[%s196 + $0x130] sm:$0xff] %v273
      %v275 = vld [vmem:[%s195 + $0x138] sm:$0xff]
      %276 = vst [vmem:[%s196 + $0x138] sm:$0xff] %v275
      %v277 = vld [vmem:[%s195 + $0x140] sm:$0xff]
      %278 = vst [vmem:[%s196 + $0x140] sm:$0xff] %v277
      %v279 = vld [vmem:[%s195 + $0x148] sm:$0xff]
      %280 = vst [vmem:[%s196 + $0x148] sm:$0xff] %v279
      %v281 = vld [vmem:[%s195 + $0x150] sm:$0xff]
      %282 = vst [vmem:[%s196 + $0x150] sm:$0xff] %v281
      %v283 = vld [vmem:[%s195 + $0x158] sm:$0xff]
      %284 = vst [vmem:[%s196 + $0x158] sm:$0xff] %v283
      %v285 = vld [vmem:[%s195 + $0x160] sm:$0xff]
      %286 = vst [vmem:[%s196 + $0x160] sm:$0xff] %v285
      %v287 = vld [vmem:[%s195 + $0x168] sm:$0xff]
      %288 = vst [vmem:[%s196 + $0x168] sm:$0xff] %v287
      %v289 = vld [vmem:[%s195 + $0x170] sm:$0xff]
      %290 = vst [vmem:[%s196 + $0x170] sm:$0xff] %v289
      %v291 = vld [vmem:[%s195 + $0x178] sm:$0xff]
      %292 = vst [vmem:[%s196 + $0x178] sm:$0xff] %v291
      %v293 = vld [vmem:[%s195 + $0x180] sm:$0xff]
      %294 = vst [vmem:[%s196 + $0x180] sm:$0xff] %v293
      %v295 = vld [vmem:[%s195 + $0x188] sm:$0xff]
      %296 = vst [vmem:[%s196 + $0x188] sm:$0xff] %v295
      %v297 = vld [vmem:[%s195 + $0x190] sm:$0xff]
      %298 = vst [vmem:[%s196 + $0x190] sm:$0xff] %v297
      %v299 = vld [vmem:[%s195 + $0x198] sm:$0xff]
      %300 = vst [vmem:[%s196 + $0x198] sm:$0xff] %v299
      %v301 = vld [vmem:[%s195 + $0x1a0] sm:$0xff]
      %302 = vst [vmem:[%s196 + $0x1a0] sm:$0xff] %v301
      %v303 = vld [vmem:[%s195 + $0x1a8] sm:$0xff]
      %304 = vst [vmem:[%s196 + $0x1a8] sm:$0xff] %v303
      %v305 = vld [vmem:[%s195 + $0x1b0] sm:$0xff]
      %306 = vst [vmem:[%s196 + $0x1b0] sm:$0xff] %v305
      %v307 = vld [vmem:[%s195 + $0x1b8] sm:$0xff]
      %308 = vst [vmem:[%s196 + $0x1b8] sm:$0xff] %v307
      %v309 = vld [vmem:[%s195 + $0x1c0] sm:$0xff]
      %310 = vst [vmem:[%s196 + $0x1c0] sm:$0xff] %v309
      %v311 = vld [vmem:[%s195 + $0x1c8] sm:$0xff]
      %312 = vst [vmem:[%s196 + $0x1c8] sm:$0xff] %v311
      %v313 = vld [vmem:[%s195 + $0x1d0] sm:$0xff]
      %314 = vst [vmem:[%s196 + $0x1d0] sm:$0xff] %v313
      %v315 = vld [vmem:[%s195 + $0x1d8] sm:$0xff]
      %316 = vst [vmem:[%s196 + $0x1d8] sm:$0xff] %v315
      %v317 = vld [vmem:[%s195 + $0x1e0] sm:$0xff]
      %318 = vst [vmem:[%s196 + $0x1e0] sm:$0xff] %v317
      %v319 = vld [vmem:[%s195 + $0x1e8] sm:$0xff]
      %320 = vst [vmem:[%s196 + $0x1e8] sm:$0xff] %v319
      %v321 = vld [vmem:[%s195 + $0x1f0] sm:$0xff]
      %322 = vst [vmem:[%s196 + $0x1f0] sm:$0xff] %v321
      %v323 = vld [vmem:[%s195 + $0x1f8] sm:$0xff]
      %324 = vst [vmem:[%s196 + $0x1f8] sm:$0xff] %v323
      %v325 = vld [vmem:[%s195 + $0x200] sm:$0xff]
      %326 = vst [vmem:[%s196 + $0x200] sm:$0xff] %v325
      %v327 = vld [vmem:[%s195 + $0x208] sm:$0xff]
      %328 = vst [vmem:[%s196 + $0x208] sm:$0xff] %v327
      %v329 = vld [vmem:[%s195 + $0x210] sm:$0xff]
      %330 = vst [vmem:[%s196 + $0x210] sm:$0xff] %v329
      %v331 = vld [vmem:[%s195 + $0x218] sm:$0xff]
      %332 = vst [vmem:[%s196 + $0x218] sm:$0xff] %v331
      %v333 = vld [vmem:[%s195 + $0x220] sm:$0xff]
      %334 = vst [vmem:[%s196 + $0x220] sm:$0xff] %v333
      %v335 = vld [vmem:[%s195 + $0x228] sm:$0xff]
      %336 = vst [vmem:[%s196 + $0x228] sm:$0xff] %v335
      %v337 = vld [vmem:[%s195 + $0x230] sm:$0xff]
      %338 = vst [vmem:[%s196 + $0x230] sm:$0xff] %v337
      %v339 = vld [vmem:[%s195 + $0x238] sm:$0xff]
      %340 = vst [vmem:[%s196 + $0x238] sm:$0xff] %v339
      %v341 = vld [vmem:[%s195 + $0x240] sm:$0xff]
      %342 = vst [vmem:[%s196 + $0x240] sm:$0xff] %v341
      %v343 = vld [vmem:[%s195 + $0x248] sm:$0xff]
      %344 = vst [vmem:[%s196 + $0x248] sm:$0xff] %v343
      %v345 = vld [vmem:[%s195 + $0x250] sm:$0xff]
      %346 = vst [vmem:[%s196 + $0x250] sm:$0xff] %v345
      %v347 = vld [vmem:[%s195 + $0x258] sm:$0xff]
      %348 = vst [vmem:[%s196 + $0x258] sm:$0xff] %v347
      %v349 = vld [vmem:[%s195 + $0x260] sm:$0xff]
      %350 = vst [vmem:[%s196 + $0x260] sm:$0xff] %v349
      %v351 = vld [vmem:[%s195 + $0x268] sm:$0xff]
      %352 = vst [vmem:[%s196 + $0x268] sm:$0xff] %v351
      %v353 = vld [vmem:[%s195 + $0x270] sm:$0xff]
      %354 = vst [vmem:[%s196 + $0x270] sm:$0xff] %v353
      %v355 = vld [vmem:[%s195 + $0x278] sm:$0xff]
      %356 = vst [vmem:[%s196 + $0x278] sm:$0xff] %v355
      %v357 = vld [vmem:[%s195 + $0x280] sm:$0xff]
      %358 = vst [vmem:[%s196 + $0x280] sm:$0xff] %v357
      %v359 = vld [vmem:[%s195 + $0x288] sm:$0xff]
      %360 = vst [vmem:[%s196 + $0x288] sm:$0xff] %v359
      %v361 = vld [vmem:[%s195 + $0x290] sm:$0xff]
      %362 = vst [vmem:[%s196 + $0x290] sm:$0xff] %v361
      %v363 = vld [vmem:[%s195 + $0x298] sm:$0xff]
      %364 = vst [vmem:[%s196 + $0x298] sm:$0xff] %v363
      %v365 = vld [vmem:[%s195 + $0x2a0] sm:$0xff]
      %366 = vst [vmem:[%s196 + $0x2a0] sm:$0xff] %v365
      %v367 = vld [vmem:[%s195 + $0x2a8] sm:$0xff]
      %368 = vst [vmem:[%s196 + $0x2a8] sm:$0xff] %v367
      %v369 = vld [vmem:[%s195 + $0x2b0] sm:$0xff]
      %370 = vst [vmem:[%s196 + $0x2b0] sm:$0xff] %v369
      %v371 = vld [vmem:[%s195 + $0x2b8] sm:$0xff]
      %372 = vst [vmem:[%s196 + $0x2b8] sm:$0xff] %v371
      %v373 = vld [vmem:[%s195 + $0x2c0] sm:$0xff]
      %374 = vst [vmem:[%s196 + $0x2c0] sm:$0xff] %v373
      %v375 = vld [vmem:[%s195 + $0x2c8] sm:$0xff]
      %376 = vst [vmem:[%s196 + $0x2c8] sm:$0xff] %v375
      %v377 = vld [vmem:[%s195 + $0x2d0] sm:$0xff]
      %378 = vst [vmem:[%s196 + $0x2d0] sm:$0xff] %v377
      %v379 = vld [vmem:[%s195 + $0x2d8] sm:$0xff]
      %380 = vst [vmem:[%s196 + $0x2d8] sm:$0xff] %v379
      %v381 = vld [vmem:[%s195 + $0x2e0] sm:$0xff]
      %382 = vst [vmem:[%s196 + $0x2e0] sm:$0xff] %v381
      %v383 = vld [vmem:[%s195 + $0x2e8] sm:$0xff]
      %384 = vst [vmem:[%s196 + $0x2e8] sm:$0xff] %v383
      %v385 = vld [vmem:[%s195 + $0x2f0] sm:$0xff]
      %386 = vst [vmem:[%s196 + $0x2f0] sm:$0xff] %v385
      %v387 = vld [vmem:[%s195 + $0x2f8] sm:$0xff]
      %388 = vst [vmem:[%s196 + $0x2f8] sm:$0xff] %v387
      %v389 = vld [vmem:[%s195 + $0x300] sm:$0xff]
      %390 = vst [vmem:[%s196 + $0x300] sm:$0xff] %v389
      %v391 = vld [vmem:[%s195 + $0x308] sm:$0xff]
      %392 = vst [vmem:[%s196 + $0x308] sm:$0xff] %v391
      %v393 = vld [vmem:[%s195 + $0x310] sm:$0xff]
      %394 = vst [vmem:[%s196 + $0x310] sm:$0xff] %v393
      %v395 = vld [vmem:[%s195 + $0x318] sm:$0xff]
      %396 = vst [vmem:[%s196 + $0x318] sm:$0xff] %v395
      %v397 = vld [vmem:[%s195 + $0x320] sm:$0xff]
      %398 = vst [vmem:[%s196 + $0x320] sm:$0xff] %v397
      %v399 = vld [vmem:[%s195 + $0x328] sm:$0xff]
      %400 = vst [vmem:[%s196 + $0x328] sm:$0xff] %v399
      %v401 = vld [vmem:[%s195 + $0x330] sm:$0xff]
      %402 = vst [vmem:[%s196 + $0x330] sm:$0xff] %v401
      %v403 = vld [vmem:[%s195 + $0x338] sm:$0xff]
      %404 = vst [vmem:[%s196 + $0x338] sm:$0xff] %v403
      %v405 = vld [vmem:[%s195 + $0x340] sm:$0xff]
      %406 = vst [vmem:[%s196 + $0x340] sm:$0xff] %v405
      %v407 = vld [vmem:[%s195 + $0x348] sm:$0xff]
      %408 = vst [vmem:[%s196 + $0x348] sm:$0xff] %v407
      %v409 = vld [vmem:[%s195 + $0x350] sm:$0xff]
      %410 = vst [vmem:[%s196 + $0x350] sm:$0xff] %v409
      %v411 = vld [vmem:[%s195 + $0x358] sm:$0xff]
      %412 = vst [vmem:[%s196 + $0x358] sm:$0xff] %v411
      %v413 = vld [vmem:[%s195 + $0x360] sm:$0xff]
      %414 = vst [vmem:[%s196 + $0x360] sm:$0xff] %v413
      %v415 = vld [vmem:[%s195 + $0x368] sm:$0xff]
      %416 = vst [vmem:[%s196 + $0x368] sm:$0xff] %v415
      %v417 = vld [vmem:[%s195 + $0x370] sm:$0xff]
      %418 = vst [vmem:[%s196 + $0x370] sm:$0xff] %v417
      %v419 = vld [vmem:[%s195 + $0x378] sm:$0xff]
      %420 = vst [vmem:[%s196 + $0x378] sm:$0xff] %v419
      %v421 = vld [vmem:[%s195 + $0x380] sm:$0xff]
      %422 = vst [vmem:[%s196 + $0x380] sm:$0xff] %v421
      %v423 = vld [vmem:[%s195 + $0x388] sm:$0xff]
      %424 = vst [vmem:[%s196 + $0x388] sm:$0xff] %v423
      %v425 = vld [vmem:[%s195 + $0x390] sm:$0xff]
      %426 = vst [vmem:[%s196 + $0x390] sm:$0xff] %v425
      %v427 = vld [vmem:[%s195 + $0x398] sm:$0xff]
      %428 = vst [vmem:[%s196 + $0x398] sm:$0xff] %v427
      %v429 = vld [vmem:[%s195 + $0x3a0] sm:$0xff]
      %430 = vst [vmem:[%s196 + $0x3a0] sm:$0xff] %v429
      %v431 = vld [vmem:[%s195 + $0x3a8] sm:$0xff]
      %432 = vst [vmem:[%s196 + $0x3a8] sm:$0xff] %v431
      %v433 = vld [vmem:[%s195 + $0x3b0] sm:$0xff]
      %434 = vst [vmem:[%s196 + $0x3b0] sm:$0xff] %v433
      %v435 = vld [vmem:[%s195 + $0x3b8] sm:$0xff]
      %436 = vst [vmem:[%s196 + $0x3b8] sm:$0xff] %v435
      %v437 = vld [vmem:[%s195 + $0x3c0] sm:$0xff]
      %438 = vst [vmem:[%s196 + $0x3c0] sm:$0xff] %v437
      %v439 = vld [vmem:[%s195 + $0x3c8] sm:$0xff]
      %440 = vst [vmem:[%s196 + $0x3c8] sm:$0xff] %v439
      %v441 = vld [vmem:[%s195 + $0x3d0] sm:$0xff]
      %442 = vst [vmem:[%s196 + $0x3d0] sm:$0xff] %v441
      %v443 = vld [vmem:[%s195 + $0x3d8] sm:$0xff]
      %444 = vst [vmem:[%s196 + $0x3d8] sm:$0xff] %v443
      %v445 = vld [vmem:[%s195 + $0x3e0] sm:$0xff]
      %446 = vst [vmem:[%s196 + $0x3e0] sm:$0xff] %v445
      %v447 = vld [vmem:[%s195 + $0x3e8] sm:$0xff]
      %448 = vst [vmem:[%s196 + $0x3e8] sm:$0xff] %v447
      %v449 = vld [vmem:[%s195 + $0x3f0] sm:$0xff]
      %450 = vst [vmem:[%s196 + $0x3f0] sm:$0xff] %v449
      %v451 = vld [vmem:[%s195 + $0x3f8] sm:$0xff]
      %452 = vst [vmem:[%s196 + $0x3f8] sm:$0xff] %v451
      %v453 = vld [vmem:[%s195 + $0x400] sm:$0xff]
      %454 = vst [vmem:[%s196 + $0x400] sm:$0xff] %v453
      %v455 = vld [vmem:[%s195 + $0x408] sm:$0xff]
      %456 = vst [vmem:[%s196 + $0x408] sm:$0xff] %v455
      %v457 = vld [vmem:[%s195 + $0x410] sm:$0xff]
      %458 = vst [vmem:[%s196 + $0x410] sm:$0xff] %v457
      %v459 = vld [vmem:[%s195 + $0x418] sm:$0xff]
      %460 = vst [vmem:[%s196 + $0x418] sm:$0xff] %v459
      %v461 = vld [vmem:[%s195 + $0x420] sm:$0xff]
      %462 = vst [vmem:[%s196 + $0x420] sm:$0xff] %v461
      %v463 = vld [vmem:[%s195 + $0x428] sm:$0xff]
      %464 = vst [vmem:[%s196 + $0x428] sm:$0xff] %v463
      %v465 = vld [vmem:[%s195 + $0x430] sm:$0xff]
      %466 = vst [vmem:[%s196 + $0x430] sm:$0xff] %v465
      %v467 = vld [vmem:[%s195 + $0x438] sm:$0xff]
      %468 = vst [vmem:[%s196 + $0x438] sm:$0xff] %v467
      %v469 = vld [vmem:[%s195 + $0x440] sm:$0xff]
      %470 = vst [vmem:[%s196 + $0x440] sm:$0xff] %v469
      %v471 = vld [vmem:[%s195 + $0x448] sm:$0xff]
      %472 = vst [vmem:[%s196 + $0x448] sm:$0xff] %v471
      %v473 = vld [vmem:[%s195 + $0x450] sm:$0xff]
      %474 = vst [vmem:[%s196 + $0x450] sm:$0xff] %v473
      %v475 = vld [vmem:[%s195 + $0x458] sm:$0xff]
      %476 = vst [vmem:[%s196 + $0x458] sm:$0xff] %v475
      %v477 = vld [vmem:[%s195 + $0x460] sm:$0xff]
      %478 = vst [vmem:[%s196 + $0x460] sm:$0xff] %v477
      %v479 = vld [vmem:[%s195 + $0x468] sm:$0xff]
      %480 = vst [vmem:[%s196 + $0x468] sm:$0xff] %v479
      %v481 = vld [vmem:[%s195 + $0x470] sm:$0xff]
      %482 = vst [vmem:[%s196 + $0x470] sm:$0xff] %v481
      %v483 = vld [vmem:[%s195 + $0x478] sm:$0xff]
      %484 = vst [vmem:[%s196 + $0x478] sm:$0xff] %v483
      %v485 = vld [vmem:[%s195 + $0x480] sm:$0xff]
      %486 = vst [vmem:[%s196 + $0x480] sm:$0xff] %v485
      %v487 = vld [vmem:[%s195 + $0x488] sm:$0xff]
      %488 = vst [vmem:[%s196 + $0x488] sm:$0xff] %v487
      %v489 = vld [vmem:[%s195 + $0x490] sm:$0xff]
      %490 = vst [vmem:[%s196 + $0x490] sm:$0xff] %v489
      %v491 = vld [vmem:[%s195 + $0x498] sm:$0xff]
      %492 = vst [vmem:[%s196 + $0x498] sm:$0xff] %v491
      %v493 = vld [vmem:[%s195 + $0x4a0] sm:$0xff]
      %494 = vst [vmem:[%s196 + $0x4a0] sm:$0xff] %v493
      %v495 = vld [vmem:[%s195 + $0x4a8] sm:$0xff]
      %496 = vst [vmem:[%s196 + $0x4a8] sm:$0xff] %v495
      %v497 = vld [vmem:[%s195 + $0x4b0] sm:$0xff]
      %498 = vst [vmem:[%s196 + $0x4b0] sm:$0xff] %v497
      %v499 = vld [vmem:[%s195 + $0x4b8] sm:$0xff]
      %500 = vst [vmem:[%s196 + $0x4b8] sm:$0xff] %v499
      %v501 = vld [vmem:[%s195 + $0x4c0] sm:$0xff]
      %502 = vst [vmem:[%s196 + $0x4c0] sm:$0xff] %v501
      %v503 = vld [vmem:[%s195 + $0x4c8] sm:$0xff]
      %504 = vst [vmem:[%s196 + $0x4c8] sm:$0xff] %v503
      %v505 = vld [vmem:[%s195 + $0x4d0] sm:$0xff]
      %506 = vst [vmem:[%s196 + $0x4d0] sm:$0xff] %v505
      %v507 = vld [vmem:[%s195 + $0x4d8] sm:$0xff]
      %508 = vst [vmem:[%s196 + $0x4d8] sm:$0xff] %v507
      %v509 = vld [vmem:[%s195 + $0x4e0] sm:$0xff]
      %510 = vst [vmem:[%s196 + $0x4e0] sm:$0xff] %v509
      %v511 = vld [vmem:[%s195 + $0x4e8] sm:$0xff]
      %512 = vst [vmem:[%s196 + $0x4e8] sm:$0xff] %v511
      %v513 = vld [vmem:[%s195 + $0x4f0] sm:$0xff]
      %514 = vst [vmem:[%s196 + $0x4f0] sm:$0xff] %v513
      %v515 = vld [vmem:[%s195 + $0x4f8] sm:$0xff]
      %516 = vst [vmem:[%s196 + $0x4f8] sm:$0xff] %v515
      %v517 = vld [vmem:[%s195 + $0x500] sm:$0xff]
      %518 = vst [vmem:[%s196 + $0x500] sm:$0xff] %v517
      %v519 = vld [vmem:[%s195 + $0x508] sm:$0xff]
      %520 = vst [vmem:[%s196 + $0x508] sm:$0xff] %v519
      %v521 = vld [vmem:[%s195 + $0x510] sm:$0xff]
      %522 = vst [vmem:[%s196 + $0x510] sm:$0xff] %v521
      %v523 = vld [vmem:[%s195 + $0x518] sm:$0xff]
      %524 = vst [vmem:[%s196 + $0x518] sm:$0xff] %v523
      %v525 = vld [vmem:[%s195 + $0x520] sm:$0xff]
      %526 = vst [vmem:[%s196 + $0x520] sm:$0xff] %v525
      %v527 = vld [vmem:[%s195 + $0x528] sm:$0xff]
      %528 = vst [vmem:[%s196 + $0x528] sm:$0xff] %v527
      %v529 = vld [vmem:[%s195 + $0x530] sm:$0xff]
      %530 = vst [vmem:[%s196 + $0x530] sm:$0xff] %v529
      %v531 = vld [vmem:[%s195 + $0x538] sm:$0xff]
      %532 = vst [vmem:[%s196 + $0x538] sm:$0xff] %v531
      %v533 = vld [vmem:[%s195 + $0x540] sm:$0xff]
      %534 = vst [vmem:[%s196 + $0x540] sm:$0xff] %v533
      %v535 = vld [vmem:[%s195 + $0x548] sm:$0xff]
      %536 = vst [vmem:[%s196 + $0x548] sm:$0xff] %v535
      %v537 = vld [vmem:[%s195 + $0x550] sm:$0xff]
      %538 = vst [vmem:[%s196 + $0x550] sm:$0xff] %v537
      %v539 = vld [vmem:[%s195 + $0x558] sm:$0xff]
      %540 = vst [vmem:[%s196 + $0x558] sm:$0xff] %v539
      %v541 = vld [vmem:[%s195 + $0x560] sm:$0xff]
      %542 = vst [vmem:[%s196 + $0x560] sm:$0xff] %v541
      %v543 = vld [vmem:[%s195 + $0x568] sm:$0xff]
      %544 = vst [vmem:[%s196 + $0x568] sm:$0xff] %v543
      %v545 = vld [vmem:[%s195 + $0x570] sm:$0xff]
      %546 = vst [vmem:[%s196 + $0x570] sm:$0xff] %v545
      %v547 = vld [vmem:[%s195 + $0x578] sm:$0xff]
      %548 = vst [vmem:[%s196 + $0x578] sm:$0xff] %v547
      %v549 = vld [vmem:[%s195 + $0x580] sm:$0xff]
      %550 = vst [vmem:[%s196 + $0x580] sm:$0xff] %v549
      %v551 = vld [vmem:[%s195 + $0x588] sm:$0xff]
      %552 = vst [vmem:[%s196 + $0x588] sm:$0xff] %v551
      %v553 = vld [vmem:[%s195 + $0x590] sm:$0xff]
      %554 = vst [vmem:[%s196 + $0x590] sm:$0xff] %v553
      %v555 = vld [vmem:[%s195 + $0x598] sm:$0xff]
      %556 = vst [vmem:[%s196 + $0x598] sm:$0xff] %v555
      %v557 = vld [vmem:[%s195 + $0x5a0] sm:$0xff]
      %558 = vst [vmem:[%s196 + $0x5a0] sm:$0xff] %v557
      %v559 = vld [vmem:[%s195 + $0x5a8] sm:$0xff]
      %560 = vst [vmem:[%s196 + $0x5a8] sm:$0xff] %v559
      %v561 = vld [vmem:[%s195 + $0x5b0] sm:$0xff]
      %562 = vst [vmem:[%s196 + $0x5b0] sm:$0xff] %v561
      %v563 = vld [vmem:[%s195 + $0x5b8] sm:$0xff]
      %564 = vst [vmem:[%s196 + $0x5b8] sm:$0xff] %v563
      %v565 = vld [vmem:[%s195 + $0x5c0] sm:$0xff]
      %566 = vst [vmem:[%s196 + $0x5c0] sm:$0xff] %v565
      %v567 = vld [vmem:[%s195 + $0x5c8] sm:$0xff]
      %568 = vst [vmem:[%s196 + $0x5c8] sm:$0xff] %v567
      %v569 = vld [vmem:[%s195 + $0x5d0] sm:$0xff]
      %570 = vst [vmem:[%s196 + $0x5d0] sm:$0xff] %v569
      %v571 = vld [vmem:[%s195 + $0x5d8] sm:$0xff]
      %572 = vst [vmem:[%s196 + $0x5d8] sm:$0xff] %v571
      %v573 = vld [vmem:[%s195 + $0x5e0] sm:$0xff]
      %574 = vst [vmem:[%s196 + $0x5e0] sm:$0xff] %v573
      %v575 = vld [vmem:[%s195 + $0x5e8] sm:$0xff]
      %576 = vst [vmem:[%s196 + $0x5e8] sm:$0xff] %v575
      %v577 = vld [vmem:[%s195 + $0x5f0] sm:$0xff]
      %578 = vst [vmem:[%s196 + $0x5f0] sm:$0xff] %v577
      %v579 = vld [vmem:[%s195 + $0x5f8] sm:$0xff]
      %580 = vst [vmem:[%s196 + $0x5f8] sm:$0xff] %v579
      %v581 = vld [vmem:[%s195 + $0x600] sm:$0xff]
      %582 = vst [vmem:[%s196 + $0x600] sm:$0xff] %v581
      %v583 = vld [vmem:[%s195 + $0x608] sm:$0xff]
      %584 = vst [vmem:[%s196 + $0x608] sm:$0xff] %v583
      %v585 = vld [vmem:[%s195 + $0x610] sm:$0xff]
      %586 = vst [vmem:[%s196 + $0x610] sm:$0xff] %v585
      %v587 = vld [vmem:[%s195 + $0x618] sm:$0xff]
      %588 = vst [vmem:[%s196 + $0x618] sm:$0xff] %v587
      %v589 = vld [vmem:[%s195 + $0x620] sm:$0xff]
      %590 = vst [vmem:[%s196 + $0x620] sm:$0xff] %v589
      %v591 = vld [vmem:[%s195 + $0x628] sm:$0xff]
      %592 = vst [vmem:[%s196 + $0x628] sm:$0xff] %v591
      %v593 = vld [vmem:[%s195 + $0x630] sm:$0xff]
      %594 = vst [vmem:[%s196 + $0x630] sm:$0xff] %v593
      %v595 = vld [vmem:[%s195 + $0x638] sm:$0xff]
      %596 = vst [vmem:[%s196 + $0x638] sm:$0xff] %v595
      %v597 = vld [vmem:[%s195 + $0x640] sm:$0xff]
      %598 = vst [vmem:[%s196 + $0x640] sm:$0xff] %v597
      %v599 = vld [vmem:[%s195 + $0x648] sm:$0xff]
      %600 = vst [vmem:[%s196 + $0x648] sm:$0xff] %v599
      %v601 = vld [vmem:[%s195 + $0x650] sm:$0xff]
      %602 = vst [vmem:[%s196 + $0x650] sm:$0xff] %v601
      %v603 = vld [vmem:[%s195 + $0x658] sm:$0xff]
      %604 = vst [vmem:[%s196 + $0x658] sm:$0xff] %v603
      %v605 = vld [vmem:[%s195 + $0x660] sm:$0xff]
      %606 = vst [vmem:[%s196 + $0x660] sm:$0xff] %v605
      %v607 = vld [vmem:[%s195 + $0x668] sm:$0xff]
      %608 = vst [vmem:[%s196 + $0x668] sm:$0xff] %v607
      %v609 = vld [vmem:[%s195 + $0x670] sm:$0xff]
      %610 = vst [vmem:[%s196 + $0x670] sm:$0xff] %v609
      %v611 = vld [vmem:[%s195 + $0x678] sm:$0xff]
      %612 = vst [vmem:[%s196 + $0x678] sm:$0xff] %v611
      %v613 = vld [vmem:[%s195 + $0x680] sm:$0xff]
      %614 = vst [vmem:[%s196 + $0x680] sm:$0xff] %v613
      %v615 = vld [vmem:[%s195 + $0x688] sm:$0xff]
      %616 = vst [vmem:[%s196 + $0x688] sm:$0xff] %v615
      %v617 = vld [vmem:[%s195 + $0x690] sm:$0xff]
      %618 = vst [vmem:[%s196 + $0x690] sm:$0xff] %v617
      %v619 = vld [vmem:[%s195 + $0x698] sm:$0xff]
      %620 = vst [vmem:[%s196 + $0x698] sm:$0xff] %v619
      %v621 = vld [vmem:[%s195 + $0x6a0] sm:$0xff]
      %622 = vst [vmem:[%s196 + $0x6a0] sm:$0xff] %v621
      %v623 = vld [vmem:[%s195 + $0x6a8] sm:$0xff]
      %624 = vst [vmem:[%s196 + $0x6a8] sm:$0xff] %v623
      %v625 = vld [vmem:[%s195 + $0x6b0] sm:$0xff]
      %626 = vst [vmem:[%s196 + $0x6b0] sm:$0xff] %v625
      %v627 = vld [vmem:[%s195 + $0x6b8] sm:$0xff]
      %628 = vst [vmem:[%s196 + $0x6b8] sm:$0xff] %v627
      %v629 = vld [vmem:[%s195 + $0x6c0] sm:$0xff]
      %630 = vst [vmem:[%s196 + $0x6c0] sm:$0xff] %v629
      %v631 = vld [vmem:[%s195 + $0x6c8] sm:$0xff]
      %632 = vst [vmem:[%s196 + $0x6c8] sm:$0xff] %v631
      %v633 = vld [vmem:[%s195 + $0x6d0] sm:$0xff]
      %634 = vst [vmem:[%s196 + $0x6d0] sm:$0xff] %v633
      %v635 = vld [vmem:[%s195 + $0x6d8] sm:$0xff]
      %636 = vst [vmem:[%s196 + $0x6d8] sm:$0xff] %v635
      %v637 = vld [vmem:[%s195 + $0x6e0] sm:$0xff]
      %638 = vst [vmem:[%s196 + $0x6e0] sm:$0xff] %v637
      %v639 = vld [vmem:[%s195 + $0x6e8] sm:$0xff]
      %640 = vst [vmem:[%s196 + $0x6e8] sm:$0xff] %v639
      %v641 = vld [vmem:[%s195 + $0x6f0] sm:$0xff]
      %642 = vst [vmem:[%s196 + $0x6f0] sm:$0xff] %v641
      %v643 = vld [vmem:[%s195 + $0x6f8] sm:$0xff]
      %644 = vst [vmem:[%s196 + $0x6f8] sm:$0xff] %v643
      %v645 = vld [vmem:[%s195 + $0x700] sm:$0xff]
      %646 = vst [vmem:[%s196 + $0x700] sm:$0xff] %v645
      %v647 = vld [vmem:[%s195 + $0x708] sm:$0xff]
      %648 = vst [vmem:[%s196 + $0x708] sm:$0xff] %v647
      %v649 = vld [vmem:[%s195 + $0x710] sm:$0xff]
      %650 = vst [vmem:[%s196 + $0x710] sm:$0xff] %v649
      %v651 = vld [vmem:[%s195 + $0x718] sm:$0xff]
      %652 = vst [vmem:[%s196 + $0x718] sm:$0xff] %v651
      %v653 = vld [vmem:[%s195 + $0x720] sm:$0xff]
      %654 = vst [vmem:[%s196 + $0x720] sm:$0xff] %v653
      %v655 = vld [vmem:[%s195 + $0x728] sm:$0xff]
      %656 = vst [vmem:[%s196 + $0x728] sm:$0xff] %v655
      %v657 = vld [vmem:[%s195 + $0x730] sm:$0xff]
      %658 = vst [vmem:[%s196 + $0x730] sm:$0xff] %v657
      %v659 = vld [vmem:[%s195 + $0x738] sm:$0xff]
      %660 = vst [vmem:[%s196 + $0x738] sm:$0xff] %v659
      %v661 = vld [vmem:[%s195 + $0x740] sm:$0xff]
      %662 = vst [vmem:[%s196 + $0x740] sm:$0xff] %v661
      %v663 = vld [vmem:[%s195 + $0x748] sm:$0xff]
      %664 = vst [vmem:[%s196 + $0x748] sm:$0xff] %v663
      %v665 = vld [vmem:[%s195 + $0x750] sm:$0xff]
      %666 = vst [vmem:[%s196 + $0x750] sm:$0xff] %v665
      %v667 = vld [vmem:[%s195 + $0x758] sm:$0xff]
      %668 = vst [vmem:[%s196 + $0x758] sm:$0xff] %v667
      %v669 = vld [vmem:[%s195 + $0x760] sm:$0xff]
      %670 = vst [vmem:[%s196 + $0x760] sm:$0xff] %v669
      %v671 = vld [vmem:[%s195 + $0x768] sm:$0xff]
      %672 = vst [vmem:[%s196 + $0x768] sm:$0xff] %v671
      %v673 = vld [vmem:[%s195 + $0x770] sm:$0xff]
      %674 = vst [vmem:[%s196 + $0x770] sm:$0xff] %v673
      %v675 = vld [vmem:[%s195 + $0x778] sm:$0xff]
      %676 = vst [vmem:[%s196 + $0x778] sm:$0xff] %v675
      %v677 = vld [vmem:[%s195 + $0x780] sm:$0xff]
      %678 = vst [vmem:[%s196 + $0x780] sm:$0xff] %v677
      %v679 = vld [vmem:[%s195 + $0x788] sm:$0xff]
      %680 = vst [vmem:[%s196 + $0x788] sm:$0xff] %v679
      %v681 = vld [vmem:[%s195 + $0x790] sm:$0xff]
      %682 = vst [vmem:[%s196 + $0x790] sm:$0xff] %v681
      %v683 = vld [vmem:[%s195 + $0x798] sm:$0xff]
      %684 = vst [vmem:[%s196 + $0x798] sm:$0xff] %v683
      %v685 = vld [vmem:[%s195 + $0x7a0] sm:$0xff]
      %686 = vst [vmem:[%s196 + $0x7a0] sm:$0xff] %v685
      %v687 = vld [vmem:[%s195 + $0x7a8] sm:$0xff]
      %688 = vst [vmem:[%s196 + $0x7a8] sm:$0xff] %v687
      %v689 = vld [vmem:[%s195 + $0x7b0] sm:$0xff]
      %690 = vst [vmem:[%s196 + $0x7b0] sm:$0xff] %v689
      %v691 = vld [vmem:[%s195 + $0x7b8] sm:$0xff]
      %692 = vst [vmem:[%s196 + $0x7b8] sm:$0xff] %v691
      %v693 = vld [vmem:[%s195 + $0x7c0] sm:$0xff]
      %694 = vst [vmem:[%s196 + $0x7c0] sm:$0xff] %v693
      %v695 = vld [vmem:[%s195 + $0x7c8] sm:$0xff]
      %696 = vst [vmem:[%s196 + $0x7c8] sm:$0xff] %v695
      %v697 = vld [vmem:[%s195 + $0x7d0] sm:$0xff]
      %698 = vst [vmem:[%s196 + $0x7d0] sm:$0xff] %v697
      %v699 = vld [vmem:[%s195 + $0x7d8] sm:$0xff]
      %700 = vst [vmem:[%s196 + $0x7d8] sm:$0xff] %v699
      %v701 = vld [vmem:[%s195 + $0x7e0] sm:$0xff]
      %702 = vst [vmem:[%s196 + $0x7e0] sm:$0xff] %v701
      %v703 = vld [vmem:[%s195 + $0x7e8] sm:$0xff]
      %704 = vst [vmem:[%s196 + $0x7e8] sm:$0xff] %v703
      %v705 = vld [vmem:[%s195 + $0x7f0] sm:$0xff]
      %706 = vst [vmem:[%s196 + $0x7f0] sm:$0xff] %v705
      %v707 = vld [vmem:[%s195 + $0x7f8] sm:$0xff]
      %708 = vst [vmem:[%s196 + $0x7f8] sm:$0xff] %v707
    $region73: #{worker_act_net_forward.1} parent=67 // loop_footer
      %s194 = sadd.s32 1, %s190
    $region74: #{worker_act_net_forward.1} parent=67 // loop_footer_branch
      %189 = sbr.rel target = $region70
    $region75: #{worker_act_net_forward.1} parent=67 // loop_exit
      _
  $region68: #{worker_act_net_forward.1} parent=0 // pred_fallthru
    _
  // Predicated region
  $region76: #{worker_act_net_forward.1} parent=0 // pred_check
    _
  $region77: #{worker_act_net_forward.1} parent=0 // pred_check_branch
    %710 = sbr.rel target = $region79
  $region78: #{worker_act_net_forward.1} parent=0 // pred_region
    _
  $region79: #{worker_act_net_forward.1} parent=0 // pred_fallthru
    _
  // Predicated region
  $region80: #{worker_act_net_forward.1} parent=0 // pred_check
    _
  $region81: #{worker_act_net_forward.1} parent=0 // pred_check_branch
    %713 = sbr.rel (0) target = $region83
  $region82: #{worker_act_net_forward.1} parent=0 // pred_region
    %714 = vsyncadd %s186, 32768
  $region83: #{worker_act_net_forward.1} parent=0 // pred_fallthru
    _
  %s715 = scalar_lea.vmem %s10, 2048
  %s716 = scalar_lea.vmem [#allocation3], 2048
  %s717 = scalar_lea.sflag [#allocation5], 2
  // Predicated region
  $region84: #{worker_act_net_forward.1} parent=0 // pred_check
    _
  $region85: #{worker_act_net_forward.1} parent=0 // pred_check_branch
    %719 = sbr.rel (0) target = $region87
  $region86: #{worker_act_net_forward.1} parent=0 // pred_region
    loop: start=0, step=1, limit=1
    $region88: #{worker_act_net_forward.1} parent=86 // loop_pre_header
      _
    $region89: #{worker_act_net_forward.1} parent=86 // loop_header
      %s721 = sphi 0, %s725
      %p722 = scmp.ge.s32.totalorder %s721, 1
      %s726 = sphi %s715, %s715
      %s727 = sphi %s716, %s716
    $region90: #{worker_act_net_forward.1} parent=86 // loop_header_branch
      %724 = sbr.rel (%p722) target = $region94
    $region91: #{worker_act_net_forward.1} parent=86 // loop_body
      %v728 = vld [vmem:[%s726] sm:$0xff]
      %729 = vst [vmem:[%s727] sm:$0xff] %v728
      %v730 = vld [vmem:[%s726 + $0x8] sm:$0xff]
      %731 = vst [vmem:[%s727 + $0x8] sm:$0xff] %v730
      %v732 = vld [vmem:[%s726 + $0x10] sm:$0xff]
      %733 = vst [vmem:[%s727 + $0x10] sm:$0xff] %v732
      %v734 = vld [vmem:[%s726 + $0x18] sm:$0xff]
      %735 = vst [vmem:[%s727 + $0x18] sm:$0xff] %v734
      %v736 = vld [vmem:[%s726 + $0x20] sm:$0xff]
      %737 = vst [vmem:[%s727 + $0x20] sm:$0xff] %v736
      %v738 = vld [vmem:[%s726 + $0x28] sm:$0xff]
      %739 = vst [vmem:[%s727 + $0x28] sm:$0xff] %v738
      %v740 = vld [vmem:[%s726 + $0x30] sm:$0xff]
      %741 = vst [vmem:[%s727 + $0x30] sm:$0xff] %v740
      %v742 = vld [vmem:[%s726 + $0x38] sm:$0xff]
      %743 = vst [vmem:[%s727 + $0x38] sm:$0xff] %v742
      %v744 = vld [vmem:[%s726 + $0x40] sm:$0xff]
      %745 = vst [vmem:[%s727 + $0x40] sm:$0xff] %v744
      %v746 = vld [vmem:[%s726 + $0x48] sm:$0xff]
      %747 = vst [vmem:[%s727 + $0x48] sm:$0xff] %v746
      %v748 = vld [vmem:[%s726 + $0x50] sm:$0xff]
      %749 = vst [vmem:[%s727 + $0x50] sm:$0xff] %v748
      %v750 = vld [vmem:[%s726 + $0x58] sm:$0xff]
      %751 = vst [vmem:[%s727 + $0x58] sm:$0xff] %v750
      %v752 = vld [vmem:[%s726 + $0x60] sm:$0xff]
      %753 = vst [vmem:[%s727 + $0x60] sm:$0xff] %v752
      %v754 = vld [vmem:[%s726 + $0x68] sm:$0xff]
      %755 = vst [vmem:[%s727 + $0x68] sm:$0xff] %v754
      %v756 = vld [vmem:[%s726 + $0x70] sm:$0xff]
      %757 = vst [vmem:[%s727 + $0x70] sm:$0xff] %v756
      %v758 = vld [vmem:[%s726 + $0x78] sm:$0xff]
      %759 = vst [vmem:[%s727 + $0x78] sm:$0xff] %v758
      %v760 = vld [vmem:[%s726 + $0x80] sm:$0xff]
      %761 = vst [vmem:[%s727 + $0x80] sm:$0xff] %v760
      %v762 = vld [vmem:[%s726 + $0x88] sm:$0xff]
      %763 = vst [vmem:[%s727 + $0x88] sm:$0xff] %v762
      %v764 = vld [vmem:[%s726 + $0x90] sm:$0xff]
      %765 = vst [vmem:[%s727 + $0x90] sm:$0xff] %v764
      %v766 = vld [vmem:[%s726 + $0x98] sm:$0xff]
      %767 = vst [vmem:[%s727 + $0x98] sm:$0xff] %v766
      %v768 = vld [vmem:[%s726 + $0xa0] sm:$0xff]
      %769 = vst [vmem:[%s727 + $0xa0] sm:$0xff] %v768
      %v770 = vld [vmem:[%s726 + $0xa8] sm:$0xff]
      %771 = vst [vmem:[%s727 + $0xa8] sm:$0xff] %v770
      %v772 = vld [vmem:[%s726 + $0xb0] sm:$0xff]
      %773 = vst [vmem:[%s727 + $0xb0] sm:$0xff] %v772
      %v774 = vld [vmem:[%s726 + $0xb8] sm:$0xff]
      %775 = vst [vmem:[%s727 + $0xb8] sm:$0xff] %v774
      %v776 = vld [vmem:[%s726 + $0xc0] sm:$0xff]
      %777 = vst [vmem:[%s727 + $0xc0] sm:$0xff] %v776
      %v778 = vld [vmem:[%s726 + $0xc8] sm:$0xff]
      %779 = vst [vmem:[%s727 + $0xc8] sm:$0xff] %v778
      %v780 = vld [vmem:[%s726 + $0xd0] sm:$0xff]
      %781 = vst [vmem:[%s727 + $0xd0] sm:$0xff] %v780
      %v782 = vld [vmem:[%s726 + $0xd8] sm:$0xff]
      %783 = vst [vmem:[%s727 + $0xd8] sm:$0xff] %v782
      %v784 = vld [vmem:[%s726 + $0xe0] sm:$0xff]
      %785 = vst [vmem:[%s727 + $0xe0] sm:$0xff] %v784
      %v786 = vld [vmem:[%s726 + $0xe8] sm:$0xff]
      %787 = vst [vmem:[%s727 + $0xe8] sm:$0xff] %v786
      %v788 = vld [vmem:[%s726 + $0xf0] sm:$0xff]
      %789 = vst [vmem:[%s727 + $0xf0] sm:$0xff] %v788
      %v790 = vld [vmem:[%s726 + $0xf8] sm:$0xff]
      %791 = vst [vmem:[%s727 + $0xf8] sm:$0xff] %v790
      %v792 = vld [vmem:[%s726 + $0x100] sm:$0xff]
      %793 = vst [vmem:[%s727 + $0x100] sm:$0xff] %v792
      %v794 = vld [vmem:[%s726 + $0x108] sm:$0xff]
      %795 = vst [vmem:[%s727 + $0x108] sm:$0xff] %v794
      %v796 = vld [vmem:[%s726 + $0x110] sm:$0xff]
      %797 = vst [vmem:[%s727 + $0x110] sm:$0xff] %v796
      %v798 = vld [vmem:[%s726 + $0x118] sm:$0xff]
      %799 = vst [vmem:[%s727 + $0x118] sm:$0xff] %v798
      %v800 = vld [vmem:[%s726 + $0x120] sm:$0xff]
      %801 = vst [vmem:[%s727 + $0x120] sm:$0xff] %v800
      %v802 = vld [vmem:[%s726 + $0x128] sm:$0xff]
      %803 = vst [vmem:[%s727 + $0x128] sm:$0xff] %v802
      %v804 = vld [vmem:[%s726 + $0x130] sm:$0xff]
      %805 = vst [vmem:[%s727 + $0x130] sm:$0xff] %v804
      %v806 = vld [vmem:[%s726 + $0x138] sm:$0xff]
      %807 = vst [vmem:[%s727 + $0x138] sm:$0xff] %v806
      %v808 = vld [vmem:[%s726 + $0x140] sm:$0xff]
      %809 = vst [vmem:[%s727 + $0x140] sm:$0xff] %v808
      %v810 = vld [vmem:[%s726 + $0x148] sm:$0xff]
      %811 = vst [vmem:[%s727 + $0x148] sm:$0xff] %v810
      %v812 = vld [vmem:[%s726 + $0x150] sm:$0xff]
      %813 = vst [vmem:[%s727 + $0x150] sm:$0xff] %v812
      %v814 = vld [vmem:[%s726 + $0x158] sm:$0xff]
      %815 = vst [vmem:[%s727 + $0x158] sm:$0xff] %v814
      %v816 = vld [vmem:[%s726 + $0x160] sm:$0xff]
      %817 = vst [vmem:[%s727 + $0x160] sm:$0xff] %v816
      %v818 = vld [vmem:[%s726 + $0x168] sm:$0xff]
      %819 = vst [vmem:[%s727 + $0x168] sm:$0xff] %v818
      %v820 = vld [vmem:[%s726 + $0x170] sm:$0xff]
      %821 = vst [vmem:[%s727 + $0x170] sm:$0xff] %v820
      %v822 = vld [vmem:[%s726 + $0x178] sm:$0xff]
      %823 = vst [vmem:[%s727 + $0x178] sm:$0xff] %v822
      %v824 = vld [vmem:[%s726 + $0x180] sm:$0xff]
      %825 = vst [vmem:[%s727 + $0x180] sm:$0xff] %v824
      %v826 = vld [vmem:[%s726 + $0x188] sm:$0xff]
      %827 = vst [vmem:[%s727 + $0x188] sm:$0xff] %v826
      %v828 = vld [vmem:[%s726 + $0x190] sm:$0xff]
      %829 = vst [vmem:[%s727 + $0x190] sm:$0xff] %v828
      %v830 = vld [vmem:[%s726 + $0x198] sm:$0xff]
      %831 = vst [vmem:[%s727 + $0x198] sm:$0xff] %v830
      %v832 = vld [vmem:[%s726 + $0x1a0] sm:$0xff]
      %833 = vst [vmem:[%s727 + $0x1a0] sm:$0xff] %v832
      %v834 = vld [vmem:[%s726 + $0x1a8] sm:$0xff]
      %835 = vst [vmem:[%s727 + $0x1a8] sm:$0xff] %v834
      %v836 = vld [vmem:[%s726 + $0x1b0] sm:$0xff]
      %837 = vst [vmem:[%s727 + $0x1b0] sm:$0xff] %v836
      %v838 = vld [vmem:[%s726 + $0x1b8] sm:$0xff]
      %839 = vst [vmem:[%s727 + $0x1b8] sm:$0xff] %v838
      %v840 = vld [vmem:[%s726 + $0x1c0] sm:$0xff]
      %841 = vst [vmem:[%s727 + $0x1c0] sm:$0xff] %v840
      %v842 = vld [vmem:[%s726 + $0x1c8] sm:$0xff]
      %843 = vst [vmem:[%s727 + $0x1c8] sm:$0xff] %v842
      %v844 = vld [vmem:[%s726 + $0x1d0] sm:$0xff]
      %845 = vst [vmem:[%s727 + $0x1d0] sm:$0xff] %v844
      %v846 = vld [vmem:[%s726 + $0x1d8] sm:$0xff]
      %847 = vst [vmem:[%s727 + $0x1d8] sm:$0xff] %v846
      %v848 = vld [vmem:[%s726 + $0x1e0] sm:$0xff]
      %849 = vst [vmem:[%s727 + $0x1e0] sm:$0xff] %v848
      %v850 = vld [vmem:[%s726 + $0x1e8] sm:$0xff]
      %851 = vst [vmem:[%s727 + $0x1e8] sm:$0xff] %v850
      %v852 = vld [vmem:[%s726 + $0x1f0] sm:$0xff]
      %853 = vst [vmem:[%s727 + $0x1f0] sm:$0xff] %v852
      %v854 = vld [vmem:[%s726 + $0x1f8] sm:$0xff]
      %855 = vst [vmem:[%s727 + $0x1f8] sm:$0xff] %v854
      %v856 = vld [vmem:[%s726 + $0x200] sm:$0xff]
      %857 = vst [vmem:[%s727 + $0x200] sm:$0xff] %v856
      %v858 = vld [vmem:[%s726 + $0x208] sm:$0xff]
      %859 = vst [vmem:[%s727 + $0x208] sm:$0xff] %v858
      %v860 = vld [vmem:[%s726 + $0x210] sm:$0xff]
      %861 = vst [vmem:[%s727 + $0x210] sm:$0xff] %v860
      %v862 = vld [vmem:[%s726 + $0x218] sm:$0xff]
      %863 = vst [vmem:[%s727 + $0x218] sm:$0xff] %v862
      %v864 = vld [vmem:[%s726 + $0x220] sm:$0xff]
      %865 = vst [vmem:[%s727 + $0x220] sm:$0xff] %v864
      %v866 = vld [vmem:[%s726 + $0x228] sm:$0xff]
      %867 = vst [vmem:[%s727 + $0x228] sm:$0xff] %v866
      %v868 = vld [vmem:[%s726 + $0x230] sm:$0xff]
      %869 = vst [vmem:[%s727 + $0x230] sm:$0xff] %v868
      %v870 = vld [vmem:[%s726 + $0x238] sm:$0xff]
      %871 = vst [vmem:[%s727 + $0x238] sm:$0xff] %v870
      %v872 = vld [vmem:[%s726 + $0x240] sm:$0xff]
      %873 = vst [vmem:[%s727 + $0x240] sm:$0xff] %v872
      %v874 = vld [vmem:[%s726 + $0x248] sm:$0xff]
      %875 = vst [vmem:[%s727 + $0x248] sm:$0xff] %v874
      %v876 = vld [vmem:[%s726 + $0x250] sm:$0xff]
      %877 = vst [vmem:[%s727 + $0x250] sm:$0xff] %v876
      %v878 = vld [vmem:[%s726 + $0x258] sm:$0xff]
      %879 = vst [vmem:[%s727 + $0x258] sm:$0xff] %v878
      %v880 = vld [vmem:[%s726 + $0x260] sm:$0xff]
      %881 = vst [vmem:[%s727 + $0x260] sm:$0xff] %v880
      %v882 = vld [vmem:[%s726 + $0x268] sm:$0xff]
      %883 = vst [vmem:[%s727 + $0x268] sm:$0xff] %v882
      %v884 = vld [vmem:[%s726 + $0x270] sm:$0xff]
      %885 = vst [vmem:[%s727 + $0x270] sm:$0xff] %v884
      %v886 = vld [vmem:[%s726 + $0x278] sm:$0xff]
      %887 = vst [vmem:[%s727 + $0x278] sm:$0xff] %v886
      %v888 = vld [vmem:[%s726 + $0x280] sm:$0xff]
      %889 = vst [vmem:[%s727 + $0x280] sm:$0xff] %v888
      %v890 = vld [vmem:[%s726 + $0x288] sm:$0xff]
      %891 = vst [vmem:[%s727 + $0x288] sm:$0xff] %v890
      %v892 = vld [vmem:[%s726 + $0x290] sm:$0xff]
      %893 = vst [vmem:[%s727 + $0x290] sm:$0xff] %v892
      %v894 = vld [vmem:[%s726 + $0x298] sm:$0xff]
      %895 = vst [vmem:[%s727 + $0x298] sm:$0xff] %v894
      %v896 = vld [vmem:[%s726 + $0x2a0] sm:$0xff]
      %897 = vst [vmem:[%s727 + $0x2a0] sm:$0xff] %v896
      %v898 = vld [vmem:[%s726 + $0x2a8] sm:$0xff]
      %899 = vst [vmem:[%s727 + $0x2a8] sm:$0xff] %v898
      %v900 = vld [vmem:[%s726 + $0x2b0] sm:$0xff]
      %901 = vst [vmem:[%s727 + $0x2b0] sm:$0xff] %v900
      %v902 = vld [vmem:[%s726 + $0x2b8] sm:$0xff]
      %903 = vst [vmem:[%s727 + $0x2b8] sm:$0xff] %v902
      %v904 = vld [vmem:[%s726 + $0x2c0] sm:$0xff]
      %905 = vst [vmem:[%s727 + $0x2c0] sm:$0xff] %v904
      %v906 = vld [vmem:[%s726 + $0x2c8] sm:$0xff]
      %907 = vst [vmem:[%s727 + $0x2c8] sm:$0xff] %v906
      %v908 = vld [vmem:[%s726 + $0x2d0] sm:$0xff]
      %909 = vst [vmem:[%s727 + $0x2d0] sm:$0xff] %v908
      %v910 = vld [vmem:[%s726 + $0x2d8] sm:$0xff]
      %911 = vst [vmem:[%s727 + $0x2d8] sm:$0xff] %v910
      %v912 = vld [vmem:[%s726 + $0x2e0] sm:$0xff]
      %913 = vst [vmem:[%s727 + $0x2e0] sm:$0xff] %v912
      %v914 = vld [vmem:[%s726 + $0x2e8] sm:$0xff]
      %915 = vst [vmem:[%s727 + $0x2e8] sm:$0xff] %v914
      %v916 = vld [vmem:[%s726 + $0x2f0] sm:$0xff]
      %917 = vst [vmem:[%s727 + $0x2f0] sm:$0xff] %v916
      %v918 = vld [vmem:[%s726 + $0x2f8] sm:$0xff]
      %919 = vst [vmem:[%s727 + $0x2f8] sm:$0xff] %v918
      %v920 = vld [vmem:[%s726 + $0x300] sm:$0xff]
      %921 = vst [vmem:[%s727 + $0x300] sm:$0xff] %v920
      %v922 = vld [vmem:[%s726 + $0x308] sm:$0xff]
      %923 = vst [vmem:[%s727 + $0x308] sm:$0xff] %v922
      %v924 = vld [vmem:[%s726 + $0x310] sm:$0xff]
      %925 = vst [vmem:[%s727 + $0x310] sm:$0xff] %v924
      %v926 = vld [vmem:[%s726 + $0x318] sm:$0xff]
      %927 = vst [vmem:[%s727 + $0x318] sm:$0xff] %v926
      %v928 = vld [vmem:[%s726 + $0x320] sm:$0xff]
      %929 = vst [vmem:[%s727 + $0x320] sm:$0xff] %v928
      %v930 = vld [vmem:[%s726 + $0x328] sm:$0xff]
      %931 = vst [vmem:[%s727 + $0x328] sm:$0xff] %v930
      %v932 = vld [vmem:[%s726 + $0x330] sm:$0xff]
      %933 = vst [vmem:[%s727 + $0x330] sm:$0xff] %v932
      %v934 = vld [vmem:[%s726 + $0x338] sm:$0xff]
      %935 = vst [vmem:[%s727 + $0x338] sm:$0xff] %v934
      %v936 = vld [vmem:[%s726 + $0x340] sm:$0xff]
      %937 = vst [vmem:[%s727 + $0x340] sm:$0xff] %v936
      %v938 = vld [vmem:[%s726 + $0x348] sm:$0xff]
      %939 = vst [vmem:[%s727 + $0x348] sm:$0xff] %v938
      %v940 = vld [vmem:[%s726 + $0x350] sm:$0xff]
      %941 = vst [vmem:[%s727 + $0x350] sm:$0xff] %v940
      %v942 = vld [vmem:[%s726 + $0x358] sm:$0xff]
      %943 = vst [vmem:[%s727 + $0x358] sm:$0xff] %v942
      %v944 = vld [vmem:[%s726 + $0x360] sm:$0xff]
      %945 = vst [vmem:[%s727 + $0x360] sm:$0xff] %v944
      %v946 = vld [vmem:[%s726 + $0x368] sm:$0xff]
      %947 = vst [vmem:[%s727 + $0x368] sm:$0xff] %v946
      %v948 = vld [vmem:[%s726 + $0x370] sm:$0xff]
      %949 = vst [vmem:[%s727 + $0x370] sm:$0xff] %v948
      %v950 = vld [vmem:[%s726 + $0x378] sm:$0xff]
      %951 = vst [vmem:[%s727 + $0x378] sm:$0xff] %v950
      %v952 = vld [vmem:[%s726 + $0x380] sm:$0xff]
      %953 = vst [vmem:[%s727 + $0x380] sm:$0xff] %v952
      %v954 = vld [vmem:[%s726 + $0x388] sm:$0xff]
      %955 = vst [vmem:[%s727 + $0x388] sm:$0xff] %v954
      %v956 = vld [vmem:[%s726 + $0x390] sm:$0xff]
      %957 = vst [vmem:[%s727 + $0x390] sm:$0xff] %v956
      %v958 = vld [vmem:[%s726 + $0x398] sm:$0xff]
      %959 = vst [vmem:[%s727 + $0x398] sm:$0xff] %v958
      %v960 = vld [vmem:[%s726 + $0x3a0] sm:$0xff]
      %961 = vst [vmem:[%s727 + $0x3a0] sm:$0xff] %v960
      %v962 = vld [vmem:[%s726 + $0x3a8] sm:$0xff]
      %963 = vst [vmem:[%s727 + $0x3a8] sm:$0xff] %v962
      %v964 = vld [vmem:[%s726 + $0x3b0] sm:$0xff]
      %965 = vst [vmem:[%s727 + $0x3b0] sm:$0xff] %v964
      %v966 = vld [vmem:[%s726 + $0x3b8] sm:$0xff]
      %967 = vst [vmem:[%s727 + $0x3b8] sm:$0xff] %v966
      %v968 = vld [vmem:[%s726 + $0x3c0] sm:$0xff]
      %969 = vst [vmem:[%s727 + $0x3c0] sm:$0xff] %v968
      %v970 = vld [vmem:[%s726 + $0x3c8] sm:$0xff]
      %971 = vst [vmem:[%s727 + $0x3c8] sm:$0xff] %v970
      %v972 = vld [vmem:[%s726 + $0x3d0] sm:$0xff]
      %973 = vst [vmem:[%s727 + $0x3d0] sm:$0xff] %v972
      %v974 = vld [vmem:[%s726 + $0x3d8] sm:$0xff]
      %975 = vst [vmem:[%s727 + $0x3d8] sm:$0xff] %v974
      %v976 = vld [vmem:[%s726 + $0x3e0] sm:$0xff]
      %977 = vst [vmem:[%s727 + $0x3e0] sm:$0xff] %v976
      %v978 = vld [vmem:[%s726 + $0x3e8] sm:$0xff]
      %979 = vst [vmem:[%s727 + $0x3e8] sm:$0xff] %v978
      %v980 = vld [vmem:[%s726 + $0x3f0] sm:$0xff]
      %981 = vst [vmem:[%s727 + $0x3f0] sm:$0xff] %v980
      %v982 = vld [vmem:[%s726 + $0x3f8] sm:$0xff]
      %983 = vst [vmem:[%s727 + $0x3f8] sm:$0xff] %v982
      %v984 = vld [vmem:[%s726 + $0x400] sm:$0xff]
      %985 = vst [vmem:[%s727 + $0x400] sm:$0xff] %v984
      %v986 = vld [vmem:[%s726 + $0x408] sm:$0xff]
      %987 = vst [vmem:[%s727 + $0x408] sm:$0xff] %v986
      %v988 = vld [vmem:[%s726 + $0x410] sm:$0xff]
      %989 = vst [vmem:[%s727 + $0x410] sm:$0xff] %v988
      %v990 = vld [vmem:[%s726 + $0x418] sm:$0xff]
      %991 = vst [vmem:[%s727 + $0x418] sm:$0xff] %v990
      %v992 = vld [vmem:[%s726 + $0x420] sm:$0xff]
      %993 = vst [vmem:[%s727 + $0x420] sm:$0xff] %v992
      %v994 = vld [vmem:[%s726 + $0x428] sm:$0xff]
      %995 = vst [vmem:[%s727 + $0x428] sm:$0xff] %v994
      %v996 = vld [vmem:[%s726 + $0x430] sm:$0xff]
      %997 = vst [vmem:[%s727 + $0x430] sm:$0xff] %v996
      %v998 = vld [vmem:[%s726 + $0x438] sm:$0xff]
      %999 = vst [vmem:[%s727 + $0x438] sm:$0xff] %v998
      %v1000 = vld [vmem:[%s726 + $0x440] sm:$0xff]
      %1001 = vst [vmem:[%s727 + $0x440] sm:$0xff] %v1000
      %v1002 = vld [vmem:[%s726 + $0x448] sm:$0xff]
      %1003 = vst [vmem:[%s727 + $0x448] sm:$0xff] %v1002
      %v1004 = vld [vmem:[%s726 + $0x450] sm:$0xff]
      %1005 = vst [vmem:[%s727 + $0x450] sm:$0xff] %v1004
      %v1006 = vld [vmem:[%s726 + $0x458] sm:$0xff]
      %1007 = vst [vmem:[%s727 + $0x458] sm:$0xff] %v1006
      %v1008 = vld [vmem:[%s726 + $0x460] sm:$0xff]
      %1009 = vst [vmem:[%s727 + $0x460] sm:$0xff] %v1008
      %v1010 = vld [vmem:[%s726 + $0x468] sm:$0xff]
      %1011 = vst [vmem:[%s727 + $0x468] sm:$0xff] %v1010
      %v1012 = vld [vmem:[%s726 + $0x470] sm:$0xff]
      %1013 = vst [vmem:[%s727 + $0x470] sm:$0xff] %v1012
      %v1014 = vld [vmem:[%s726 + $0x478] sm:$0xff]
      %1015 = vst [vmem:[%s727 + $0x478] sm:$0xff] %v1014
      %v1016 = vld [vmem:[%s726 + $0x480] sm:$0xff]
      %1017 = vst [vmem:[%s727 + $0x480] sm:$0xff] %v1016
      %v1018 = vld [vmem:[%s726 + $0x488] sm:$0xff]
      %1019 = vst [vmem:[%s727 + $0x488] sm:$0xff] %v1018
      %v1020 = vld [vmem:[%s726 + $0x490] sm:$0xff]
      %1021 = vst [vmem:[%s727 + $0x490] sm:$0xff] %v1020
      %v1022 = vld [vmem:[%s726 + $0x498] sm:$0xff]
      %1023 = vst [vmem:[%s727 + $0x498] sm:$0xff] %v1022
      %v1024 = vld [vmem:[%s726 + $0x4a0] sm:$0xff]
      %1025 = vst [vmem:[%s727 + $0x4a0] sm:$0xff] %v1024
      %v1026 = vld [vmem:[%s726 + $0x4a8] sm:$0xff]
      %1027 = vst [vmem:[%s727 + $0x4a8] sm:$0xff] %v1026
      %v1028 = vld [vmem:[%s726 + $0x4b0] sm:$0xff]
      %1029 = vst [vmem:[%s727 + $0x4b0] sm:$0xff] %v1028
      %v1030 = vld [vmem:[%s726 + $0x4b8] sm:$0xff]
      %1031 = vst [vmem:[%s727 + $0x4b8] sm:$0xff] %v1030
      %v1032 = vld [vmem:[%s726 + $0x4c0] sm:$0xff]
      %1033 = vst [vmem:[%s727 + $0x4c0] sm:$0xff] %v1032
      %v1034 = vld [vmem:[%s726 + $0x4c8] sm:$0xff]
      %1035 = vst [vmem:[%s727 + $0x4c8] sm:$0xff] %v1034
      %v1036 = vld [vmem:[%s726 + $0x4d0] sm:$0xff]
      %1037 = vst [vmem:[%s727 + $0x4d0] sm:$0xff] %v1036
      %v1038 = vld [vmem:[%s726 + $0x4d8] sm:$0xff]
      %1039 = vst [vmem:[%s727 + $0x4d8] sm:$0xff] %v1038
      %v1040 = vld [vmem:[%s726 + $0x4e0] sm:$0xff]
      %1041 = vst [vmem:[%s727 + $0x4e0] sm:$0xff] %v1040
      %v1042 = vld [vmem:[%s726 + $0x4e8] sm:$0xff]
      %1043 = vst [vmem:[%s727 + $0x4e8] sm:$0xff] %v1042
      %v1044 = vld [vmem:[%s726 + $0x4f0] sm:$0xff]
      %1045 = vst [vmem:[%s727 + $0x4f0] sm:$0xff] %v1044
      %v1046 = vld [vmem:[%s726 + $0x4f8] sm:$0xff]
      %1047 = vst [vmem:[%s727 + $0x4f8] sm:$0xff] %v1046
      %v1048 = vld [vmem:[%s726 + $0x500] sm:$0xff]
      %1049 = vst [vmem:[%s727 + $0x500] sm:$0xff] %v1048
      %v1050 = vld [vmem:[%s726 + $0x508] sm:$0xff]
      %1051 = vst [vmem:[%s727 + $0x508] sm:$0xff] %v1050
      %v1052 = vld [vmem:[%s726 + $0x510] sm:$0xff]
      %1053 = vst [vmem:[%s727 + $0x510] sm:$0xff] %v1052
      %v1054 = vld [vmem:[%s726 + $0x518] sm:$0xff]
      %1055 = vst [vmem:[%s727 + $0x518] sm:$0xff] %v1054
      %v1056 = vld [vmem:[%s726 + $0x520] sm:$0xff]
      %1057 = vst [vmem:[%s727 + $0x520] sm:$0xff] %v1056
      %v1058 = vld [vmem:[%s726 + $0x528] sm:$0xff]
      %1059 = vst [vmem:[%s727 + $0x528] sm:$0xff] %v1058
      %v1060 = vld [vmem:[%s726 + $0x530] sm:$0xff]
      %1061 = vst [vmem:[%s727 + $0x530] sm:$0xff] %v1060
      %v1062 = vld [vmem:[%s726 + $0x538] sm:$0xff]
      %1063 = vst [vmem:[%s727 + $0x538] sm:$0xff] %v1062
      %v1064 = vld [vmem:[%s726 + $0x540] sm:$0xff]
      %1065 = vst [vmem:[%s727 + $0x540] sm:$0xff] %v1064
      %v1066 = vld [vmem:[%s726 + $0x548] sm:$0xff]
      %1067 = vst [vmem:[%s727 + $0x548] sm:$0xff] %v1066
      %v1068 = vld [vmem:[%s726 + $0x550] sm:$0xff]
      %1069 = vst [vmem:[%s727 + $0x550] sm:$0xff] %v1068
      %v1070 = vld [vmem:[%s726 + $0x558] sm:$0xff]
      %1071 = vst [vmem:[%s727 + $0x558] sm:$0xff] %v1070
      %v1072 = vld [vmem:[%s726 + $0x560] sm:$0xff]
      %1073 = vst [vmem:[%s727 + $0x560] sm:$0xff] %v1072
      %v1074 = vld [vmem:[%s726 + $0x568] sm:$0xff]
      %1075 = vst [vmem:[%s727 + $0x568] sm:$0xff] %v1074
      %v1076 = vld [vmem:[%s726 + $0x570] sm:$0xff]
      %1077 = vst [vmem:[%s727 + $0x570] sm:$0xff] %v1076
      %v1078 = vld [vmem:[%s726 + $0x578] sm:$0xff]
      %1079 = vst [vmem:[%s727 + $0x578] sm:$0xff] %v1078
      %v1080 = vld [vmem:[%s726 + $0x580] sm:$0xff]
      %1081 = vst [vmem:[%s727 + $0x580] sm:$0xff] %v1080
      %v1082 = vld [vmem:[%s726 + $0x588] sm:$0xff]
      %1083 = vst [vmem:[%s727 + $0x588] sm:$0xff] %v1082
      %v1084 = vld [vmem:[%s726 + $0x590] sm:$0xff]
      %1085 = vst [vmem:[%s727 + $0x590] sm:$0xff] %v1084
      %v1086 = vld [vmem:[%s726 + $0x598] sm:$0xff]
      %1087 = vst [vmem:[%s727 + $0x598] sm:$0xff] %v1086
      %v1088 = vld [vmem:[%s726 + $0x5a0] sm:$0xff]
      %1089 = vst [vmem:[%s727 + $0x5a0] sm:$0xff] %v1088
      %v1090 = vld [vmem:[%s726 + $0x5a8] sm:$0xff]
      %1091 = vst [vmem:[%s727 + $0x5a8] sm:$0xff] %v1090
      %v1092 = vld [vmem:[%s726 + $0x5b0] sm:$0xff]
      %1093 = vst [vmem:[%s727 + $0x5b0] sm:$0xff] %v1092
      %v1094 = vld [vmem:[%s726 + $0x5b8] sm:$0xff]
      %1095 = vst [vmem:[%s727 + $0x5b8] sm:$0xff] %v1094
      %v1096 = vld [vmem:[%s726 + $0x5c0] sm:$0xff]
      %1097 = vst [vmem:[%s727 + $0x5c0] sm:$0xff] %v1096
      %v1098 = vld [vmem:[%s726 + $0x5c8] sm:$0xff]
      %1099 = vst [vmem:[%s727 + $0x5c8] sm:$0xff] %v1098
      %v1100 = vld [vmem:[%s726 + $0x5d0] sm:$0xff]
      %1101 = vst [vmem:[%s727 + $0x5d0] sm:$0xff] %v1100
      %v1102 = vld [vmem:[%s726 + $0x5d8] sm:$0xff]
      %1103 = vst [vmem:[%s727 + $0x5d8] sm:$0xff] %v1102
      %v1104 = vld [vmem:[%s726 + $0x5e0] sm:$0xff]
      %1105 = vst [vmem:[%s727 + $0x5e0] sm:$0xff] %v1104
      %v1106 = vld [vmem:[%s726 + $0x5e8] sm:$0xff]
      %1107 = vst [vmem:[%s727 + $0x5e8] sm:$0xff] %v1106
      %v1108 = vld [vmem:[%s726 + $0x5f0] sm:$0xff]
      %1109 = vst [vmem:[%s727 + $0x5f0] sm:$0xff] %v1108
      %v1110 = vld [vmem:[%s726 + $0x5f8] sm:$0xff]
      %1111 = vst [vmem:[%s727 + $0x5f8] sm:$0xff] %v1110
      %v1112 = vld [vmem:[%s726 + $0x600] sm:$0xff]
      %1113 = vst [vmem:[%s727 + $0x600] sm:$0xff] %v1112
      %v1114 = vld [vmem:[%s726 + $0x608] sm:$0xff]
      %1115 = vst [vmem:[%s727 + $0x608] sm:$0xff] %v1114
      %v1116 = vld [vmem:[%s726 + $0x610] sm:$0xff]
      %1117 = vst [vmem:[%s727 + $0x610] sm:$0xff] %v1116
      %v1118 = vld [vmem:[%s726 + $0x618] sm:$0xff]
      %1119 = vst [vmem:[%s727 + $0x618] sm:$0xff] %v1118
      %v1120 = vld [vmem:[%s726 + $0x620] sm:$0xff]
      %1121 = vst [vmem:[%s727 + $0x620] sm:$0xff] %v1120
      %v1122 = vld [vmem:[%s726 + $0x628] sm:$0xff]
      %1123 = vst [vmem:[%s727 + $0x628] sm:$0xff] %v1122
      %v1124 = vld [vmem:[%s726 + $0x630] sm:$0xff]
      %1125 = vst [vmem:[%s727 + $0x630] sm:$0xff] %v1124
      %v1126 = vld [vmem:[%s726 + $0x638] sm:$0xff]
      %1127 = vst [vmem:[%s727 + $0x638] sm:$0xff] %v1126
      %v1128 = vld [vmem:[%s726 + $0x640] sm:$0xff]
      %1129 = vst [vmem:[%s727 + $0x640] sm:$0xff] %v1128
      %v1130 = vld [vmem:[%s726 + $0x648] sm:$0xff]
      %1131 = vst [vmem:[%s727 + $0x648] sm:$0xff] %v1130
      %v1132 = vld [vmem:[%s726 + $0x650] sm:$0xff]
      %1133 = vst [vmem:[%s727 + $0x650] sm:$0xff] %v1132
      %v1134 = vld [vmem:[%s726 + $0x658] sm:$0xff]
      %1135 = vst [vmem:[%s727 + $0x658] sm:$0xff] %v1134
      %v1136 = vld [vmem:[%s726 + $0x660] sm:$0xff]
      %1137 = vst [vmem:[%s727 + $0x660] sm:$0xff] %v1136
      %v1138 = vld [vmem:[%s726 + $0x668] sm:$0xff]
      %1139 = vst [vmem:[%s727 + $0x668] sm:$0xff] %v1138
      %v1140 = vld [vmem:[%s726 + $0x670] sm:$0xff]
      %1141 = vst [vmem:[%s727 + $0x670] sm:$0xff] %v1140
      %v1142 = vld [vmem:[%s726 + $0x678] sm:$0xff]
      %1143 = vst [vmem:[%s727 + $0x678] sm:$0xff] %v1142
      %v1144 = vld [vmem:[%s726 + $0x680] sm:$0xff]
      %1145 = vst [vmem:[%s727 + $0x680] sm:$0xff] %v1144
      %v1146 = vld [vmem:[%s726 + $0x688] sm:$0xff]
      %1147 = vst [vmem:[%s727 + $0x688] sm:$0xff] %v1146
      %v1148 = vld [vmem:[%s726 + $0x690] sm:$0xff]
      %1149 = vst [vmem:[%s727 + $0x690] sm:$0xff] %v1148
      %v1150 = vld [vmem:[%s726 + $0x698] sm:$0xff]
      %1151 = vst [vmem:[%s727 + $0x698] sm:$0xff] %v1150
      %v1152 = vld [vmem:[%s726 + $0x6a0] sm:$0xff]
      %1153 = vst [vmem:[%s727 + $0x6a0] sm:$0xff] %v1152
      %v1154 = vld [vmem:[%s726 + $0x6a8] sm:$0xff]
      %1155 = vst [vmem:[%s727 + $0x6a8] sm:$0xff] %v1154
      %v1156 = vld [vmem:[%s726 + $0x6b0] sm:$0xff]
      %1157 = vst [vmem:[%s727 + $0x6b0] sm:$0xff] %v1156
      %v1158 = vld [vmem:[%s726 + $0x6b8] sm:$0xff]
      %1159 = vst [vmem:[%s727 + $0x6b8] sm:$0xff] %v1158
      %v1160 = vld [vmem:[%s726 + $0x6c0] sm:$0xff]
      %1161 = vst [vmem:[%s727 + $0x6c0] sm:$0xff] %v1160
      %v1162 = vld [vmem:[%s726 + $0x6c8] sm:$0xff]
      %1163 = vst [vmem:[%s727 + $0x6c8] sm:$0xff] %v1162
      %v1164 = vld [vmem:[%s726 + $0x6d0] sm:$0xff]
      %1165 = vst [vmem:[%s727 + $0x6d0] sm:$0xff] %v1164
      %v1166 = vld [vmem:[%s726 + $0x6d8] sm:$0xff]
      %1167 = vst [vmem:[%s727 + $0x6d8] sm:$0xff] %v1166
      %v1168 = vld [vmem:[%s726 + $0x6e0] sm:$0xff]
      %1169 = vst [vmem:[%s727 + $0x6e0] sm:$0xff] %v1168
      %v1170 = vld [vmem:[%s726 + $0x6e8] sm:$0xff]
      %1171 = vst [vmem:[%s727 + $0x6e8] sm:$0xff] %v1170
      %v1172 = vld [vmem:[%s726 + $0x6f0] sm:$0xff]
      %1173 = vst [vmem:[%s727 + $0x6f0] sm:$0xff] %v1172
      %v1174 = vld [vmem:[%s726 + $0x6f8] sm:$0xff]
      %1175 = vst [vmem:[%s727 + $0x6f8] sm:$0xff] %v1174
      %v1176 = vld [vmem:[%s726 + $0x700] sm:$0xff]
      %1177 = vst [vmem:[%s727 + $0x700] sm:$0xff] %v1176
      %v1178 = vld [vmem:[%s726 + $0x708] sm:$0xff]
      %1179 = vst [vmem:[%s727 + $0x708] sm:$0xff] %v1178
      %v1180 = vld [vmem:[%s726 + $0x710] sm:$0xff]
      %1181 = vst [vmem:[%s727 + $0x710] sm:$0xff] %v1180
      %v1182 = vld [vmem:[%s726 + $0x718] sm:$0xff]
      %1183 = vst [vmem:[%s727 + $0x718] sm:$0xff] %v1182
      %v1184 = vld [vmem:[%s726 + $0x720] sm:$0xff]
      %1185 = vst [vmem:[%s727 + $0x720] sm:$0xff] %v1184
      %v1186 = vld [vmem:[%s726 + $0x728] sm:$0xff]
      %1187 = vst [vmem:[%s727 + $0x728] sm:$0xff] %v1186
      %v1188 = vld [vmem:[%s726 + $0x730] sm:$0xff]
      %1189 = vst [vmem:[%s727 + $0x730] sm:$0xff] %v1188
      %v1190 = vld [vmem:[%s726 + $0x738] sm:$0xff]
      %1191 = vst [vmem:[%s727 + $0x738] sm:$0xff] %v1190
      %v1192 = vld [vmem:[%s726 + $0x740] sm:$0xff]
      %1193 = vst [vmem:[%s727 + $0x740] sm:$0xff] %v1192
      %v1194 = vld [vmem:[%s726 + $0x748] sm:$0xff]
      %1195 = vst [vmem:[%s727 + $0x748] sm:$0xff] %v1194
      %v1196 = vld [vmem:[%s726 + $0x750] sm:$0xff]
      %1197 = vst [vmem:[%s727 + $0x750] sm:$0xff] %v1196
      %v1198 = vld [vmem:[%s726 + $0x758] sm:$0xff]
      %1199 = vst [vmem:[%s727 + $0x758] sm:$0xff] %v1198
      %v1200 = vld [vmem:[%s726 + $0x760] sm:$0xff]
      %1201 = vst [vmem:[%s727 + $0x760] sm:$0xff] %v1200
      %v1202 = vld [vmem:[%s726 + $0x768] sm:$0xff]
      %1203 = vst [vmem:[%s727 + $0x768] sm:$0xff] %v1202
      %v1204 = vld [vmem:[%s726 + $0x770] sm:$0xff]
      %1205 = vst [vmem:[%s727 + $0x770] sm:$0xff] %v1204
      %v1206 = vld [vmem:[%s726 + $0x778] sm:$0xff]
      %1207 = vst [vmem:[%s727 + $0x778] sm:$0xff] %v1206
      %v1208 = vld [vmem:[%s726 + $0x780] sm:$0xff]
      %1209 = vst [vmem:[%s727 + $0x780] sm:$0xff] %v1208
      %v1210 = vld [vmem:[%s726 + $0x788] sm:$0xff]
      %1211 = vst [vmem:[%s727 + $0x788] sm:$0xff] %v1210
      %v1212 = vld [vmem:[%s726 + $0x790] sm:$0xff]
      %1213 = vst [vmem:[%s727 + $0x790] sm:$0xff] %v1212
      %v1214 = vld [vmem:[%s726 + $0x798] sm:$0xff]
      %1215 = vst [vmem:[%s727 + $0x798] sm:$0xff] %v1214
      %v1216 = vld [vmem:[%s726 + $0x7a0] sm:$0xff]
      %1217 = vst [vmem:[%s727 + $0x7a0] sm:$0xff] %v1216
      %v1218 = vld [vmem:[%s726 + $0x7a8] sm:$0xff]
      %1219 = vst [vmem:[%s727 + $0x7a8] sm:$0xff] %v1218
      %v1220 = vld [vmem:[%s726 + $0x7b0] sm:$0xff]
      %1221 = vst [vmem:[%s727 + $0x7b0] sm:$0xff] %v1220
      %v1222 = vld [vmem:[%s726 + $0x7b8] sm:$0xff]
      %1223 = vst [vmem:[%s727 + $0x7b8] sm:$0xff] %v1222
      %v1224 = vld [vmem:[%s726 + $0x7c0] sm:$0xff]
      %1225 = vst [vmem:[%s727 + $0x7c0] sm:$0xff] %v1224
      %v1226 = vld [vmem:[%s726 + $0x7c8] sm:$0xff]
      %1227 = vst [vmem:[%s727 + $0x7c8] sm:$0xff] %v1226
      %v1228 = vld [vmem:[%s726 + $0x7d0] sm:$0xff]
      %1229 = vst [vmem:[%s727 + $0x7d0] sm:$0xff] %v1228
      %v1230 = vld [vmem:[%s726 + $0x7d8] sm:$0xff]
      %1231 = vst [vmem:[%s727 + $0x7d8] sm:$0xff] %v1230
      %v1232 = vld [vmem:[%s726 + $0x7e0] sm:$0xff]
      %1233 = vst [vmem:[%s727 + $0x7e0] sm:$0xff] %v1232
      %v1234 = vld [vmem:[%s726 + $0x7e8] sm:$0xff]
      %1235 = vst [vmem:[%s727 + $0x7e8] sm:$0xff] %v1234
      %v1236 = vld [vmem:[%s726 + $0x7f0] sm:$0xff]
      %1237 = vst [vmem:[%s727 + $0x7f0] sm:$0xff] %v1236
      %v1238 = vld [vmem:[%s726 + $0x7f8] sm:$0xff]
      %1239 = vst [vmem:[%s727 + $0x7f8] sm:$0xff] %v1238
    $region92: #{worker_act_net_forward.1} parent=86 // loop_footer
      %s725 = sadd.s32 1, %s721
    $region93: #{worker_act_net_forward.1} parent=86 // loop_footer_branch
      %720 = sbr.rel target = $region89
    $region94: #{worker_act_net_forward.1} parent=86 // loop_exit
      _
  $region87: #{worker_act_net_forward.1} parent=0 // pred_fallthru
    _
  // Predicated region
  $region95: #{worker_act_net_forward.1} parent=0 // pred_check
    _
  $region96: #{worker_act_net_forward.1} parent=0 // pred_check_branch
    %1241 = sbr.rel target = $region98
  $region97: #{worker_act_net_forward.1} parent=0 // pred_region
    _
  $region98: #{worker_act_net_forward.1} parent=0 // pred_fallthru
    _
  // Predicated region
  $region99: #{worker_act_net_forward.1} parent=0 // pred_check
    _
  $region100: #{worker_act_net_forward.1} parent=0 // pred_check_branch
    %1244 = sbr.rel (0) target = $region102
  $region101: #{worker_act_net_forward.1} parent=0 // pred_region
    %1245 = vsyncadd %s717, 32768
  $region102: #{worker_act_net_forward.1} parent=0 // pred_fallthru
    _
  %s1246 = scalar_lea.sflag [#allocation5], 3
  // Predicated region
  $region103: #{worker_act_net_forward.1} parent=0 // pred_check
    _
  $region104: #{worker_act_net_forward.1} parent=0 // pred_check_branch
    %1248 = sbr.rel (0) target = $region106
  $region105: #{worker_act_net_forward.1} parent=0 // pred_region
    loop: start=0, step=1, limit=1
    $region107: #{worker_act_net_forward.1} parent=105 // loop_pre_header
      _
    $region108: #{worker_act_net_forward.1} parent=105 // loop_header
      %s1250 = sphi 0, %s1254
      %p1251 = scmp.ge.s32.totalorder %s1250, 1
      %s1255 = sphi %s12, %s12
      %s1256 = sphi [#allocation4], [#allocation4]
    $region109: #{worker_act_net_forward.1} parent=105 // loop_header_branch
      %1253 = sbr.rel (%p1251) target = $region113
    $region110: #{worker_act_net_forward.1} parent=105 // loop_body
      %v1257 = vld [vmem:[%s1255] sm:$0xff]
      %1258 = vst [vmem:[%s1256] sm:$0xff] %v1257
      %v1259 = vld [vmem:[%s1255 + $0x8] sm:$0xff]
      %1260 = vst [vmem:[%s1256 + $0x8] sm:$0xff] %v1259
      %v1261 = vld [vmem:[%s1255 + $0x10] sm:$0xff]
      %1262 = vst [vmem:[%s1256 + $0x10] sm:$0xff] %v1261
      %v1263 = vld [vmem:[%s1255 + $0x18] sm:$0xff]
      %1264 = vst [vmem:[%s1256 + $0x18] sm:$0xff] %v1263
      %v1265 = vld [vmem:[%s1255 + $0x20] sm:$0xff]
      %1266 = vst [vmem:[%s1256 + $0x20] sm:$0xff] %v1265
      %v1267 = vld [vmem:[%s1255 + $0x28] sm:$0xff]
      %1268 = vst [vmem:[%s1256 + $0x28] sm:$0xff] %v1267
      %v1269 = vld [vmem:[%s1255 + $0x30] sm:$0xff]
      %1270 = vst [vmem:[%s1256 + $0x30] sm:$0xff] %v1269
      %v1271 = vld [vmem:[%s1255 + $0x38] sm:$0xff]
      %1272 = vst [vmem:[%s1256 + $0x38] sm:$0xff] %v1271
      %v1273 = vld [vmem:[%s1255 + $0x40] sm:$0xff]
      %1274 = vst [vmem:[%s1256 + $0x40] sm:$0xff] %v1273
      %v1275 = vld [vmem:[%s1255 + $0x48] sm:$0xff]
      %1276 = vst [vmem:[%s1256 + $0x48] sm:$0xff] %v1275
      %v1277 = vld [vmem:[%s1255 + $0x50] sm:$0xff]
      %1278 = vst [vmem:[%s1256 + $0x50] sm:$0xff] %v1277
      %v1279 = vld [vmem:[%s1255 + $0x58] sm:$0xff]
      %1280 = vst [vmem:[%s1256 + $0x58] sm:$0xff] %v1279
      %v1281 = vld [vmem:[%s1255 + $0x60] sm:$0xff]
      %1282 = vst [vmem:[%s1256 + $0x60] sm:$0xff] %v1281
      %v1283 = vld [vmem:[%s1255 + $0x68] sm:$0xff]
      %1284 = vst [vmem:[%s1256 + $0x68] sm:$0xff] %v1283
      %v1285 = vld [vmem:[%s1255 + $0x70] sm:$0xff]
      %1286 = vst [vmem:[%s1256 + $0x70] sm:$0xff] %v1285
      %v1287 = vld [vmem:[%s1255 + $0x78] sm:$0xff]
      %1288 = vst [vmem:[%s1256 + $0x78] sm:$0xff] %v1287
      %v1289 = vld [vmem:[%s1255 + $0x80] sm:$0xff]
      %1290 = vst [vmem:[%s1256 + $0x80] sm:$0xff] %v1289
      %v1291 = vld [vmem:[%s1255 + $0x88] sm:$0xff]
      %1292 = vst [vmem:[%s1256 + $0x88] sm:$0xff] %v1291
      %v1293 = vld [vmem:[%s1255 + $0x90] sm:$0xff]
      %1294 = vst [vmem:[%s1256 + $0x90] sm:$0xff] %v1293
      %v1295 = vld [vmem:[%s1255 + $0x98] sm:$0xff]
      %1296 = vst [vmem:[%s1256 + $0x98] sm:$0xff] %v1295
      %v1297 = vld [vmem:[%s1255 + $0xa0] sm:$0xff]
      %1298 = vst [vmem:[%s1256 + $0xa0] sm:$0xff] %v1297
      %v1299 = vld [vmem:[%s1255 + $0xa8] sm:$0xff]
      %1300 = vst [vmem:[%s1256 + $0xa8] sm:$0xff] %v1299
      %v1301 = vld [vmem:[%s1255 + $0xb0] sm:$0xff]
      %1302 = vst [vmem:[%s1256 + $0xb0] sm:$0xff] %v1301
      %v1303 = vld [vmem:[%s1255 + $0xb8] sm:$0xff]
      %1304 = vst [vmem:[%s1256 + $0xb8] sm:$0xff] %v1303
      %v1305 = vld [vmem:[%s1255 + $0xc0] sm:$0xff]
      %1306 = vst [vmem:[%s1256 + $0xc0] sm:$0xff] %v1305
      %v1307 = vld [vmem:[%s1255 + $0xc8] sm:$0xff]
      %1308 = vst [vmem:[%s1256 + $0xc8] sm:$0xff] %v1307
      %v1309 = vld [vmem:[%s1255 + $0xd0] sm:$0xff]
      %1310 = vst [vmem:[%s1256 + $0xd0] sm:$0xff] %v1309
      %v1311 = vld [vmem:[%s1255 + $0xd8] sm:$0xff]
      %1312 = vst [vmem:[%s1256 + $0xd8] sm:$0xff] %v1311
      %v1313 = vld [vmem:[%s1255 + $0xe0] sm:$0xff]
      %1314 = vst [vmem:[%s1256 + $0xe0] sm:$0xff] %v1313
      %v1315 = vld [vmem:[%s1255 + $0xe8] sm:$0xff]
      %1316 = vst [vmem:[%s1256 + $0xe8] sm:$0xff] %v1315
      %v1317 = vld [vmem:[%s1255 + $0xf0] sm:$0xff]
      %1318 = vst [vmem:[%s1256 + $0xf0] sm:$0xff] %v1317
      %v1319 = vld [vmem:[%s1255 + $0xf8] sm:$0xff]
      %1320 = vst [vmem:[%s1256 + $0xf8] sm:$0xff] %v1319
      %v1321 = vld [vmem:[%s1255 + $0x100] sm:$0xff]
      %1322 = vst [vmem:[%s1256 + $0x100] sm:$0xff] %v1321
      %v1323 = vld [vmem:[%s1255 + $0x108] sm:$0xff]
      %1324 = vst [vmem:[%s1256 + $0x108] sm:$0xff] %v1323
      %v1325 = vld [vmem:[%s1255 + $0x110] sm:$0xff]
      %1326 = vst [vmem:[%s1256 + $0x110] sm:$0xff] %v1325
      %v1327 = vld [vmem:[%s1255 + $0x118] sm:$0xff]
      %1328 = vst [vmem:[%s1256 + $0x118] sm:$0xff] %v1327
      %v1329 = vld [vmem:[%s1255 + $0x120] sm:$0xff]
      %1330 = vst [vmem:[%s1256 + $0x120] sm:$0xff] %v1329
      %v1331 = vld [vmem:[%s1255 + $0x128] sm:$0xff]
      %1332 = vst [vmem:[%s1256 + $0x128] sm:$0xff] %v1331
      %v1333 = vld [vmem:[%s1255 + $0x130] sm:$0xff]
      %1334 = vst [vmem:[%s1256 + $0x130] sm:$0xff] %v1333
      %v1335 = vld [vmem:[%s1255 + $0x138] sm:$0xff]
      %1336 = vst [vmem:[%s1256 + $0x138] sm:$0xff] %v1335
      %v1337 = vld [vmem:[%s1255 + $0x140] sm:$0xff]
      %1338 = vst [vmem:[%s1256 + $0x140] sm:$0xff] %v1337
      %v1339 = vld [vmem:[%s1255 + $0x148] sm:$0xff]
      %1340 = vst [vmem:[%s1256 + $0x148] sm:$0xff] %v1339
      %v1341 = vld [vmem:[%s1255 + $0x150] sm:$0xff]
      %1342 = vst [vmem:[%s1256 + $0x150] sm:$0xff] %v1341
      %v1343 = vld [vmem:[%s1255 + $0x158] sm:$0xff]
      %1344 = vst [vmem:[%s1256 + $0x158] sm:$0xff] %v1343
      %v1345 = vld [vmem:[%s1255 + $0x160] sm:$0xff]
      %1346 = vst [vmem:[%s1256 + $0x160] sm:$0xff] %v1345
      %v1347 = vld [vmem:[%s1255 + $0x168] sm:$0xff]
      %1348 = vst [vmem:[%s1256 + $0x168] sm:$0xff] %v1347
      %v1349 = vld [vmem:[%s1255 + $0x170] sm:$0xff]
      %1350 = vst [vmem:[%s1256 + $0x170] sm:$0xff] %v1349
      %v1351 = vld [vmem:[%s1255 + $0x178] sm:$0xff]
      %1352 = vst [vmem:[%s1256 + $0x178] sm:$0xff] %v1351
      %v1353 = vld [vmem:[%s1255 + $0x180] sm:$0xff]
      %1354 = vst [vmem:[%s1256 + $0x180] sm:$0xff] %v1353
      %v1355 = vld [vmem:[%s1255 + $0x188] sm:$0xff]
      %1356 = vst [vmem:[%s1256 + $0x188] sm:$0xff] %v1355
      %v1357 = vld [vmem:[%s1255 + $0x190] sm:$0xff]
      %1358 = vst [vmem:[%s1256 + $0x190] sm:$0xff] %v1357
      %v1359 = vld [vmem:[%s1255 + $0x198] sm:$0xff]
      %1360 = vst [vmem:[%s1256 + $0x198] sm:$0xff] %v1359
      %v1361 = vld [vmem:[%s1255 + $0x1a0] sm:$0xff]
      %1362 = vst [vmem:[%s1256 + $0x1a0] sm:$0xff] %v1361
      %v1363 = vld [vmem:[%s1255 + $0x1a8] sm:$0xff]
      %1364 = vst [vmem:[%s1256 + $0x1a8] sm:$0xff] %v1363
      %v1365 = vld [vmem:[%s1255 + $0x1b0] sm:$0xff]
      %1366 = vst [vmem:[%s1256 + $0x1b0] sm:$0xff] %v1365
      %v1367 = vld [vmem:[%s1255 + $0x1b8] sm:$0xff]
      %1368 = vst [vmem:[%s1256 + $0x1b8] sm:$0xff] %v1367
      %v1369 = vld [vmem:[%s1255 + $0x1c0] sm:$0xff]
      %1370 = vst [vmem:[%s1256 + $0x1c0] sm:$0xff] %v1369
      %v1371 = vld [vmem:[%s1255 + $0x1c8] sm:$0xff]
      %1372 = vst [vmem:[%s1256 + $0x1c8] sm:$0xff] %v1371
      %v1373 = vld [vmem:[%s1255 + $0x1d0] sm:$0xff]
      %1374 = vst [vmem:[%s1256 + $0x1d0] sm:$0xff] %v1373
      %v1375 = vld [vmem:[%s1255 + $0x1d8] sm:$0xff]
      %1376 = vst [vmem:[%s1256 + $0x1d8] sm:$0xff] %v1375
      %v1377 = vld [vmem:[%s1255 + $0x1e0] sm:$0xff]
      %1378 = vst [vmem:[%s1256 + $0x1e0] sm:$0xff] %v1377
      %v1379 = vld [vmem:[%s1255 + $0x1e8] sm:$0xff]
      %1380 = vst [vmem:[%s1256 + $0x1e8] sm:$0xff] %v1379
      %v1381 = vld [vmem:[%s1255 + $0x1f0] sm:$0xff]
      %1382 = vst [vmem:[%s1256 + $0x1f0] sm:$0xff] %v1381
      %v1383 = vld [vmem:[%s1255 + $0x1f8] sm:$0xff]
      %1384 = vst [vmem:[%s1256 + $0x1f8] sm:$0xff] %v1383
    $region111: #{worker_act_net_forward.1} parent=105 // loop_footer
      %s1254 = sadd.s32 1, %s1250
    $region112: #{worker_act_net_forward.1} parent=105 // loop_footer_branch
      %1249 = sbr.rel target = $region108
    $region113: #{worker_act_net_forward.1} parent=105 // loop_exit
      _
  $region106: #{worker_act_net_forward.1} parent=0 // pred_fallthru
    _
  // Predicated region
  $region114: #{worker_act_net_forward.1} parent=0 // pred_check
    _
  $region115: #{worker_act_net_forward.1} parent=0 // pred_check_branch
    %1386 = sbr.rel target = $region117
  $region116: #{worker_act_net_forward.1} parent=0 // pred_region
    _
  $region117: #{worker_act_net_forward.1} parent=0 // pred_fallthru
    _
  // Predicated region
  $region118: #{worker_act_net_forward.1} parent=0 // pred_check
    _
  $region119: #{worker_act_net_forward.1} parent=0 // pred_check_branch
    %1389 = sbr.rel (0) target = $region121
  $region120: #{worker_act_net_forward.1} parent=0 // pred_region
    %1390 = vsyncadd %s1246, 8192
  $region121: #{worker_act_net_forward.1} parent=0 // pred_fallthru
    _
  %v1391 = vld [vmem:[%s0] sm:$0xff]
  %v1392 = vld [vmem:[%s0 + $0x8] sm:$0xff]
  %v1393 = vld [vmem:[%s0 + $0x10] sm:$0xff]
  %v1394 = vld [vmem:[%s0 + $0x18] sm:$0xff]
  %v1395 = vld [vmem:[%s0 + $0x20] sm:$0xff]
  %v1396 = vld [vmem:[%s0 + $0x28] sm:$0xff]
  %v1397 = vld [vmem:[%s0 + $0x30] sm:$0xff]
  %v1398 = vld [vmem:[%s0 + $0x38] sm:$0xff]
  %v1399 = vld [vmem:[%s0 + $0x40] sm:$0xff]
  %v1400 = vld [vmem:[%s0 + $0x48] sm:$0xff]
  %v1401 = vld [vmem:[%s0 + $0x50] sm:$0xff]
  %v1402 = vld [vmem:[%s0 + $0x58] sm:$0xff]
  %v1403 = vld [vmem:[%s0 + $0x60] sm:$0xff]
  %v1404 = vld [vmem:[%s0 + $0x68] sm:$0xff]
  %v1405 = vld [vmem:[%s0 + $0x70] sm:$0xff]
  %v1406 = vld [vmem:[%s0 + $0x78] sm:$0xff]
  %v1407 = vld [vmem:[%s0 + $0x80] sm:$0xff]
  %v1408 = vld [vmem:[%s0 + $0x88] sm:$0xff]
  %v1409 = vld [vmem:[%s0 + $0x90] sm:$0xff]
  %v1410 = vld [vmem:[%s0 + $0x98] sm:$0xff]
  %v1411 = vld [vmem:[%s1] sm:$0x1f]
  %v1412 = vperm.slane %v1411, 0
  %v1413 = vmul.f32 %v1391, %v1412
  %v1414 = vmul.f32 %v1392, %v1412
  %v1415 = vmul.f32 %v1393, %v1412
  %v1416 = vmul.f32 %v1394, %v1412
  %v1417 = vmul.f32 %v1395, %v1412
  %v1418 = vmul.f32 %v1396, %v1412
  %v1419 = vmul.f32 %v1397, %v1412
  %v1420 = vmul.f32 %v1398, %v1412
  %v1421 = vmul.f32 %v1399, %v1412
  %v1422 = vmul.f32 %v1400, %v1412
  %v1423 = vmul.f32 %v1401, %v1412
  %v1424 = vmul.f32 %v1402, %v1412
  %v1425 = vmul.f32 %v1403, %v1412
  %v1426 = vmul.f32 %v1404, %v1412
  %v1427 = vmul.f32 %v1405, %v1412
  %v1428 = vmul.f32 %v1406, %v1412
  %v1429 = vperm.slane %v1411, 1
  %v1430 = vmul.f32 %v1392, %v1429
  %v1431 = vmul.f32 %v1393, %v1429
  %v1432 = vmul.f32 %v1394, %v1429
  %v1433 = vmul.f32 %v1395, %v1429
  %v1434 = vmul.f32 %v1396, %v1429
  %v1435 = vmul.f32 %v1397, %v1429
  %v1436 = vmul.f32 %v1398, %v1429
  %v1437 = vmul.f32 %v1399, %v1429
  %v1438 = vmul.f32 %v1400, %v1429
  %v1439 = vmul.f32 %v1401, %v1429
  %v1440 = vmul.f32 %v1402, %v1429
  %v1441 = vmul.f32 %v1403, %v1429
  %v1442 = vmul.f32 %v1404, %v1429
  %v1443 = vmul.f32 %v1405, %v1429
  %v1444 = vmul.f32 %v1406, %v1429
  %v1445 = vmul.f32 %v1407, %v1429
  %v1446 = vadd.f32 %v1413, %v1430
  %v1447 = vadd.f32 %v1414, %v1431
  %v1448 = vadd.f32 %v1415, %v1432
  %v1449 = vadd.f32 %v1416, %v1433
  %v1450 = vadd.f32 %v1417, %v1434
  %v1451 = vadd.f32 %v1418, %v1435
  %v1452 = vadd.f32 %v1419, %v1436
  %v1453 = vadd.f32 %v1420, %v1437
  %v1454 = vadd.f32 %v1421, %v1438
  %v1455 = vadd.f32 %v1422, %v1439
  %v1456 = vadd.f32 %v1423, %v1440
  %v1457 = vadd.f32 %v1424, %v1441
  %v1458 = vadd.f32 %v1425, %v1442
  %v1459 = vadd.f32 %v1426, %v1443
  %v1460 = vadd.f32 %v1427, %v1444
  %v1461 = vadd.f32 %v1428, %v1445
  %v1462 = vperm.slane %v1411, 2
  %v1463 = vmul.f32 %v1393, %v1462
  %v1464 = vmul.f32 %v1394, %v1462
  %v1465 = vmul.f32 %v1395, %v1462
  %v1466 = vmul.f32 %v1396, %v1462
  %v1467 = vmul.f32 %v1397, %v1462
  %v1468 = vmul.f32 %v1398, %v1462
  %v1469 = vmul.f32 %v1399, %v1462
  %v1470 = vmul.f32 %v1400, %v1462
  %v1471 = vmul.f32 %v1401, %v1462
  %v1472 = vmul.f32 %v1402, %v1462
  %v1473 = vmul.f32 %v1403, %v1462
  %v1474 = vmul.f32 %v1404, %v1462
  %v1475 = vmul.f32 %v1405, %v1462
  %v1476 = vmul.f32 %v1406, %v1462
  %v1477 = vmul.f32 %v1407, %v1462
  %v1478 = vmul.f32 %v1408, %v1462
  %v1479 = vadd.f32 %v1446, %v1463
  %v1480 = vadd.f32 %v1447, %v1464
  %v1481 = vadd.f32 %v1448, %v1465
  %v1482 = vadd.f32 %v1449, %v1466
  %v1483 = vadd.f32 %v1450, %v1467
  %v1484 = vadd.f32 %v1451, %v1468
  %v1485 = vadd.f32 %v1452, %v1469
  %v1486 = vadd.f32 %v1453, %v1470
  %v1487 = vadd.f32 %v1454, %v1471
  %v1488 = vadd.f32 %v1455, %v1472
  %v1489 = vadd.f32 %v1456, %v1473
  %v1490 = vadd.f32 %v1457, %v1474
  %v1491 = vadd.f32 %v1458, %v1475
  %v1492 = vadd.f32 %v1459, %v1476
  %v1493 = vadd.f32 %v1460, %v1477
  %v1494 = vadd.f32 %v1461, %v1478
  %v1495 = vperm.slane %v1411, 3
  %v1496 = vmul.f32 %v1394, %v1495
  %v1497 = vmul.f32 %v1395, %v1495
  %v1498 = vmul.f32 %v1396, %v1495
  %v1499 = vmul.f32 %v1397, %v1495
  %v1500 = vmul.f32 %v1398, %v1495
  %v1501 = vmul.f32 %v1399, %v1495
  %v1502 = vmul.f32 %v1400, %v1495
  %v1503 = vmul.f32 %v1401, %v1495
  %v1504 = vmul.f32 %v1402, %v1495
  %v1505 = vmul.f32 %v1403, %v1495
  %v1506 = vmul.f32 %v1404, %v1495
  %v1507 = vmul.f32 %v1405, %v1495
  %v1508 = vmul.f32 %v1406, %v1495
  %v1509 = vmul.f32 %v1407, %v1495
  %v1510 = vmul.f32 %v1408, %v1495
  %v1511 = vmul.f32 %v1409, %v1495
  %v1512 = vadd.f32 %v1479, %v1496
  %v1513 = vadd.f32 %v1480, %v1497
  %v1514 = vadd.f32 %v1481, %v1498
  %v1515 = vadd.f32 %v1482, %v1499
  %v1516 = vadd.f32 %v1483, %v1500
  %v1517 = vadd.f32 %v1484, %v1501
  %v1518 = vadd.f32 %v1485, %v1502
  %v1519 = vadd.f32 %v1486, %v1503
  %v1520 = vadd.f32 %v1487, %v1504
  %v1521 = vadd.f32 %v1488, %v1505
  %v1522 = vadd.f32 %v1489, %v1506
  %v1523 = vadd.f32 %v1490, %v1507
  %v1524 = vadd.f32 %v1491, %v1508
  %v1525 = vadd.f32 %v1492, %v1509
  %v1526 = vadd.f32 %v1493, %v1510
  %v1527 = vadd.f32 %v1494, %v1511
  %v1528 = vperm.slane %v1411, 4
  %v1529 = vmul.f32 %v1395, %v1528
  %v1530 = vmul.f32 %v1396, %v1528
  %v1531 = vmul.f32 %v1397, %v1528
  %v1532 = vmul.f32 %v1398, %v1528
  %v1533 = vmul.f32 %v1399, %v1528
  %v1534 = vmul.f32 %v1400, %v1528
  %v1535 = vmul.f32 %v1401, %v1528
  %v1536 = vmul.f32 %v1402, %v1528
  %v1537 = vmul.f32 %v1403, %v1528
  %v1538 = vmul.f32 %v1404, %v1528
  %v1539 = vmul.f32 %v1405, %v1528
  %v1540 = vmul.f32 %v1406, %v1528
  %v1541 = vmul.f32 %v1407, %v1528
  %v1542 = vmul.f32 %v1408, %v1528
  %v1543 = vmul.f32 %v1409, %v1528
  %v1544 = vmul.f32 %v1410, %v1528
  %v1545 = vadd.f32 %v1512, %v1529
  %v1546 = vadd.f32 %v1513, %v1530
  %v1547 = vadd.f32 %v1514, %v1531
  %v1548 = vadd.f32 %v1515, %v1532
  %v1549 = vadd.f32 %v1516, %v1533
  %v1550 = vadd.f32 %v1517, %v1534
  %v1551 = vadd.f32 %v1518, %v1535
  %v1552 = vadd.f32 %v1519, %v1536
  %v1553 = vadd.f32 %v1520, %v1537
  %v1554 = vadd.f32 %v1521, %v1538
  %v1555 = vadd.f32 %v1522, %v1539
  %v1556 = vadd.f32 %v1523, %v1540
  %v1557 = vadd.f32 %v1524, %v1541
  %v1558 = vadd.f32 %v1525, %v1542
  %v1559 = vadd.f32 %v1526, %v1543
  %v1560 = vadd.f32 %v1527, %v1544
  %v1561 = vld [vmem:[%s2] sm:$0x1]
  %v1563 = vperm.slane %v1561, 0
  %v1565 = vadd.f32 %v1545, %v1563
  %v1566 = vadd.f32 %v1546, %v1563
  %v1567 = vadd.f32 %v1547, %v1563
  %v1568 = vadd.f32 %v1548, %v1563
  %v1569 = vadd.f32 %v1549, %v1563
  %v1570 = vadd.f32 %v1550, %v1563
  %v1571 = vadd.f32 %v1551, %v1563
  %v1572 = vadd.f32 %v1552, %v1563
  %v1573 = vadd.f32 %v1553, %v1563
  %v1574 = vadd.f32 %v1554, %v1563
  %v1575 = vadd.f32 %v1555, %v1563
  %v1576 = vadd.f32 %v1556, %v1563
  %v1577 = vadd.f32 %v1557, %v1563
  %v1578 = vadd.f32 %v1558, %v1563
  %v1579 = vadd.f32 %v1559, %v1563
  %v1580 = vadd.f32 %v1560, %v1563
  %vm1581 = vcmask 214016
  %v1582 = vsel %vm1581, %v1565, 0.0
  %v1583 = vsel %vm1581, %v1566, 0.0
  %v1584 = vadd.f32 %v1582, %v1583
  %v1585 = vsel %vm1581, %v1567, 0.0
  %v1586 = vadd.f32 %v1584, %v1585
  %v1587 = vsel %vm1581, %v1568, 0.0
  %v1588 = vadd.f32 %v1586, %v1587
  %v1589 = vsel %vm1581, %v1569, 0.0
  %v1590 = vadd.f32 %v1588, %v1589
  %v1591 = vsel %vm1581, %v1570, 0.0
  %v1592 = vadd.f32 %v1590, %v1591
  %v1593 = vsel %vm1581, %v1571, 0.0
  %v1594 = vadd.f32 %v1592, %v1593
  %v1595 = vsel %vm1581, %v1572, 0.0
  %v1596 = vadd.f32 %v1594, %v1595
  %v1597 = vsel %vm1581, %v1573, 0.0
  %v1598 = vadd.f32 %v1596, %v1597
  %v1599 = vsel %vm1581, %v1574, 0.0
  %v1600 = vadd.f32 %v1598, %v1599
  %v1601 = vsel %vm1581, %v1575, 0.0
  %v1602 = vadd.f32 %v1600, %v1601
  %v1603 = vsel %vm1581, %v1576, 0.0
  %v1604 = vadd.f32 %v1602, %v1603
  %v1605 = vsel %vm1581, %v1577, 0.0
  %v1606 = vadd.f32 %v1604, %v1605
  %v1607 = vsel %vm1581, %v1578, 0.0
  %v1608 = vadd.f32 %v1606, %v1607
  %v1609 = vsel %vm1581, %v1579, 0.0
  %v1610 = vadd.f32 %v1608, %v1609
  %v1611 = vsel %vm1581, %v1580, 0.0
  %v1612 = vadd.f32 %v1610, %v1611
  %v1613 = vrot.slane %v1612, 4
  %v1614 = vadd.f32 %v1612, %v1613
  %v1615 = vrot.slane %v1614, 2
  %v1616 = vadd.f32 %v1614, %v1615
  %v1617 = vrot.slane %v1616, 1
  %v1618 = vadd.f32 %v1616, %v1617
  %v1619 = vrcp.pop 32.0
  %v1620 = vmul.f32 32.0, %v1619
  %v1621 = vsub.f32 1.0, %v1620
  %v1622 = vmul.f32 %v1619, %v1621
  %v1623 = vadd.f32 %v1619, %v1622
  %vm1624 = vweird.f32 %v1619
  %v1625 = vsel %vm1624, %v1619, %v1623
  %v1626 = vmul.f32 %v1618, %v1625
  %v1627 = vsub.f32 %v1565, %v1626
  %v1628 = vsub.f32 %v1566, %v1626
  %v1629 = vsub.f32 %v1567, %v1626
  %v1630 = vsub.f32 %v1568, %v1626
  %v1631 = vsub.f32 %v1569, %v1626
  %v1632 = vsub.f32 %v1570, %v1626
  %v1633 = vsub.f32 %v1571, %v1626
  %v1634 = vsub.f32 %v1572, %v1626
  %v1635 = vsub.f32 %v1573, %v1626
  %v1636 = vsub.f32 %v1574, %v1626
  %v1637 = vsub.f32 %v1575, %v1626
  %v1638 = vsub.f32 %v1576, %v1626
  %v1639 = vsub.f32 %v1577, %v1626
  %v1640 = vsub.f32 %v1578, %v1626
  %v1641 = vsub.f32 %v1579, %v1626
  %v1642 = vsub.f32 %v1580, %v1626
  %v1643 = vmul.f32 %v1627, %v1627
  %v1644 = vmul.f32 %v1628, %v1628
  %v1645 = vmul.f32 %v1629, %v1629
  %v1646 = vmul.f32 %v1630, %v1630
  %v1647 = vmul.f32 %v1631, %v1631
  %v1648 = vmul.f32 %v1632, %v1632
  %v1649 = vmul.f32 %v1633, %v1633
  %v1650 = vmul.f32 %v1634, %v1634
  %v1651 = vmul.f32 %v1635, %v1635
  %v1652 = vmul.f32 %v1636, %v1636
  %v1653 = vmul.f32 %v1637, %v1637
  %v1654 = vmul.f32 %v1638, %v1638
  %v1655 = vmul.f32 %v1639, %v1639
  %v1656 = vmul.f32 %v1640, %v1640
  %v1657 = vmul.f32 %v1641, %v1641
  %v1658 = vmul.f32 %v1642, %v1642
  %v1659 = vsel %vm1581, %v1643, 0.0
  %v1660 = vsel %vm1581, %v1644, 0.0
  %v1661 = vadd.f32 %v1659, %v1660
  %v1662 = vsel %vm1581, %v1645, 0.0
  %v1663 = vadd.f32 %v1661, %v1662
  %v1664 = vsel %vm1581, %v1646, 0.0
  %v1665 = vadd.f32 %v1663, %v1664
  %v1666 = vsel %vm1581, %v1647, 0.0
  %v1667 = vadd.f32 %v1665, %v1666
  %v1668 = vsel %vm1581, %v1648, 0.0
  %v1669 = vadd.f32 %v1667, %v1668
  %v1670 = vsel %vm1581, %v1649, 0.0
  %v1671 = vadd.f32 %v1669, %v1670
  %v1672 = vsel %vm1581, %v1650, 0.0
  %v1673 = vadd.f32 %v1671, %v1672
  %v1674 = vsel %vm1581, %v1651, 0.0
  %v1675 = vadd.f32 %v1673, %v1674
  %v1676 = vsel %vm1581, %v1652, 0.0
  %v1677 = vadd.f32 %v1675, %v1676
  %v1678 = vsel %vm1581, %v1653, 0.0
  %v1679 = vadd.f32 %v1677, %v1678
  %v1680 = vsel %vm1581, %v1654, 0.0
  %v1681 = vadd.f32 %v1679, %v1680
  %v1682 = vsel %vm1581, %v1655, 0.0
  %v1683 = vadd.f32 %v1681, %v1682
  %v1684 = vsel %vm1581, %v1656, 0.0
  %v1685 = vadd.f32 %v1683, %v1684
  %v1686 = vsel %vm1581, %v1657, 0.0
  %v1687 = vadd.f32 %v1685, %v1686
  %v1688 = vsel %vm1581, %v1658, 0.0
  %v1689 = vadd.f32 %v1687, %v1688
  %v1690 = vrot.slane %v1689, 4
  %v1691 = vadd.f32 %v1689, %v1690
  %v1692 = vrot.slane %v1691, 2
  %v1693 = vadd.f32 %v1691, %v1692
  %v1694 = vrot.slane %v1693, 1
  %v1695 = vadd.f32 %v1693, %v1694
  %v1696 = vmul.f32 %v1695, %v1625
  %v1697 = vadd.f32 %v1696, 1e-05
  %v1698 = vrsqrt.pop %v1697
  %v1699 = vmul.f32 %v1698, %v1697
  %v1700 = vmul.f32 %v1699, %v1698
  %v1701 = vmul.f32 0.5, %v1700
  %v1702 = vsub.f32 1.5, %v1701
  %v1703 = vmul.f32 %v1698, %v1702
  %vm1704 = vweird.f32 %v1697
  %vm1705 = vweird.f32 %v1698
  %vm1706 = vmor %vm1704, %vm1705
  %v1707 = vsel %vm1706, %v1698, %v1703
  %v1708 = vmul.f32 %v1627, %v1707
  %v1709 = vmul.f32 %v1628, %v1707
  %v1710 = vmul.f32 %v1629, %v1707
  %v1711 = vmul.f32 %v1630, %v1707
  %v1712 = vmul.f32 %v1631, %v1707
  %v1713 = vmul.f32 %v1632, %v1707
  %v1714 = vmul.f32 %v1633, %v1707
  %v1715 = vmul.f32 %v1634, %v1707
  %v1716 = vmul.f32 %v1635, %v1707
  %v1717 = vmul.f32 %v1636, %v1707
  %v1718 = vmul.f32 %v1637, %v1707
  %v1719 = vmul.f32 %v1638, %v1707
  %v1720 = vmul.f32 %v1639, %v1707
  %v1721 = vmul.f32 %v1640, %v1707
  %v1722 = vmul.f32 %v1641, %v1707
  %v1723 = vmul.f32 %v1642, %v1707
  %v1724 = vld [vmem:[%s3] sm:$0x1]
  %v1726 = vperm.slane %v1724, 0
  %v1728 = vmul.f32 %v1708, %v1726
  %v1729 = vmul.f32 %v1709, %v1726
  %v1730 = vmul.f32 %v1710, %v1726
  %v1731 = vmul.f32 %v1711, %v1726
  %v1732 = vmul.f32 %v1712, %v1726
  %v1733 = vmul.f32 %v1713, %v1726
  %v1734 = vmul.f32 %v1714, %v1726
  %v1735 = vmul.f32 %v1715, %v1726
  %v1736 = vmul.f32 %v1716, %v1726
  %v1737 = vmul.f32 %v1717, %v1726
  %v1738 = vmul.f32 %v1718, %v1726
  %v1739 = vmul.f32 %v1719, %v1726
  %v1740 = vmul.f32 %v1720, %v1726
  %v1741 = vmul.f32 %v1721, %v1726
  %v1742 = vmul.f32 %v1722, %v1726
  %v1743 = vmul.f32 %v1723, %v1726
  %v1744 = vld [vmem:[%s4] sm:$0x1]
  %v1746 = vperm.slane %v1744, 0
  %v1748 = vadd.f32 %v1728, %v1746
  %v1749 = vadd.f32 %v1729, %v1746
  %v1750 = vadd.f32 %v1730, %v1746
  %v1751 = vadd.f32 %v1731, %v1746
  %v1752 = vadd.f32 %v1732, %v1746
  %v1753 = vadd.f32 %v1733, %v1746
  %v1754 = vadd.f32 %v1734, %v1746
  %v1755 = vadd.f32 %v1735, %v1746
  %v1756 = vadd.f32 %v1736, %v1746
  %v1757 = vadd.f32 %v1737, %v1746
  %v1758 = vadd.f32 %v1738, %v1746
  %v1759 = vadd.f32 %v1739, %v1746
  %v1760 = vadd.f32 %v1740, %v1746
  %v1761 = vadd.f32 %v1741, %v1746
  %v1762 = vadd.f32 %v1742, %v1746
  %v1763 = vadd.f32 %v1743, %v1746
  %vm1764 = vcmp.gt.f32.partialorder %v1748, 0.0
  %vm1765 = vcmp.gt.f32.partialorder %v1749, 0.0
  %vm1766 = vcmp.gt.f32.partialorder %v1750, 0.0
  %vm1767 = vcmp.gt.f32.partialorder %v1751, 0.0
  %vm1768 = vcmp.gt.f32.partialorder %v1752, 0.0
  %vm1769 = vcmp.gt.f32.partialorder %v1753, 0.0
  %vm1770 = vcmp.gt.f32.partialorder %v1754, 0.0
  %vm1771 = vcmp.gt.f32.partialorder %v1755, 0.0
  %vm1772 = vcmp.gt.f32.partialorder %v1756, 0.0
  %vm1773 = vcmp.gt.f32.partialorder %v1757, 0.0
  %vm1774 = vcmp.gt.f32.partialorder %v1758, 0.0
  %vm1775 = vcmp.gt.f32.partialorder %v1759, 0.0
  %vm1776 = vcmp.gt.f32.partialorder %v1760, 0.0
  %vm1777 = vcmp.gt.f32.partialorder %v1761, 0.0
  %vm1778 = vcmp.gt.f32.partialorder %v1762, 0.0
  %vm1779 = vcmp.gt.f32.partialorder %v1763, 0.0
  %v1780 = vmin.f32 %v1748, 0.0
  %v1781 = vmin.f32 %v1749, 0.0
  %v1782 = vmin.f32 %v1750, 0.0
  %v1783 = vmin.f32 %v1751, 0.0
  %v1784 = vmin.f32 %v1752, 0.0
  %v1785 = vmin.f32 %v1753, 0.0
  %v1786 = vmin.f32 %v1754, 0.0
  %v1787 = vmin.f32 %v1755, 0.0
  %v1788 = vmin.f32 %v1756, 0.0
  %v1789 = vmin.f32 %v1757, 0.0
  %v1790 = vmin.f32 %v1758, 0.0
  %v1791 = vmin.f32 %v1759, 0.0
  %v1792 = vmin.f32 %v1760, 0.0
  %v1793 = vmin.f32 %v1761, 0.0
  %v1794 = vmin.f32 %v1762, 0.0
  %v1795 = vmin.f32 %v1763, 0.0
  %v1796 = vmul.f32 %v1780, 1.442695
  %v1797 = vpow.pop %v1796
  %v1798 = vmul.f32 %v1781, 1.442695
  %v1799 = vpow.pop %v1798
  %v1800 = vmul.f32 %v1782, 1.442695
  %v1801 = vpow.pop %v1800
  %v1802 = vmul.f32 %v1783, 1.442695
  %v1803 = vpow.pop %v1802
  %v1804 = vmul.f32 %v1784, 1.442695
  %v1805 = vpow.pop %v1804
  %v1806 = vmul.f32 %v1785, 1.442695
  %v1807 = vpow.pop %v1806
  %v1808 = vmul.f32 %v1786, 1.442695
  %v1809 = vpow.pop %v1808
  %v1810 = vmul.f32 %v1787, 1.442695
  %v1811 = vpow.pop %v1810
  %v1812 = vmul.f32 %v1788, 1.442695
  %v1813 = vpow.pop %v1812
  %v1814 = vmul.f32 %v1789, 1.442695
  %v1815 = vpow.pop %v1814
  %v1816 = vmul.f32 %v1790, 1.442695
  %v1817 = vpow.pop %v1816
  %v1818 = vmul.f32 %v1791, 1.442695
  %v1819 = vpow.pop %v1818
  %v1820 = vmul.f32 %v1792, 1.442695
  %v1821 = vpow.pop %v1820
  %v1822 = vmul.f32 %v1793, 1.442695
  %v1823 = vpow.pop %v1822
  %v1824 = vmul.f32 %v1794, 1.442695
  %v1825 = vpow.pop %v1824
  %v1826 = vmul.f32 %v1795, 1.442695
  %v1827 = vpow.pop %v1826
  %v1828 = vsub.f32 %v1797, 1.0
  %v1829 = vsub.f32 %v1799, 1.0
  %v1830 = vsub.f32 %v1801, 1.0
  %v1831 = vsub.f32 %v1803, 1.0
  %v1832 = vsub.f32 %v1805, 1.0
  %v1833 = vsub.f32 %v1807, 1.0
  %v1834 = vsub.f32 %v1809, 1.0
  %v1835 = vsub.f32 %v1811, 1.0
  %v1836 = vsub.f32 %v1813, 1.0
  %v1837 = vsub.f32 %v1815, 1.0
  %v1838 = vsub.f32 %v1817, 1.0
  %v1839 = vsub.f32 %v1819, 1.0
  %v1840 = vsub.f32 %v1821, 1.0
  %v1841 = vsub.f32 %v1823, 1.0
  %v1842 = vsub.f32 %v1825, 1.0
  %v1843 = vsub.f32 %v1827, 1.0
  %v1844 = vsel %vm1764, %v1748, %v1828
  %v1845 = vsel %vm1765, %v1749, %v1829
  %v1846 = vsel %vm1766, %v1750, %v1830
  %v1847 = vsel %vm1767, %v1751, %v1831
  %v1848 = vsel %vm1768, %v1752, %v1832
  %v1849 = vsel %vm1769, %v1753, %v1833
  %v1850 = vsel %vm1770, %v1754, %v1834
  %v1851 = vsel %vm1771, %v1755, %v1835
  %v1852 = vsel %vm1772, %v1756, %v1836
  %v1853 = vsel %vm1773, %v1757, %v1837
  %v1854 = vsel %vm1774, %v1758, %v1838
  %v1855 = vsel %vm1775, %v1759, %v1839
  %v1856 = vsel %vm1776, %v1760, %v1840
  %v1857 = vsel %vm1777, %v1761, %v1841
  %v1858 = vsel %vm1778, %v1762, %v1842
  %v1859 = vsel %vm1779, %v1763, %v1843
  %v1860 = vmax.f32 %v1844, %v1845
  %v1861 = vmax.f32 %v1846, %v1847
  %v1862 = vmax.f32 %v1848, %v1849
  %v1863 = vmax.f32 %v1850, %v1851
  %v1864 = vmax.f32 %v1852, %v1853
  %v1865 = vmax.f32 %v1854, %v1855
  %v1866 = vmax.f32 %v1856, %v1857
  %v1867 = vmax.f32 %v1858, %v1859
  %v1868 = vld [vmem:[%s5] sm:$0xff]
  %v1869 = vld [vmem:[%s5 + $0x8] sm:$0xff]
  %v1870 = vld [vmem:[%s5 + $0x10] sm:$0xff]
  %v1871 = vld [vmem:[%s5 + $0x18] sm:$0xff]
  %v1872 = vld [vmem:[%s5 + $0x20] sm:$0xff]
  %v1873 = vld [vmem:[%s5 + $0x28] sm:$0xff]
  %v1874 = vld [vmem:[%s5 + $0x30] sm:$0x33]
  %v1875 = vld [vmem:[%s5 + $0x38] sm:$0x33]
  %v1876 = vpack.c.bf16 %v1861, %v1860
  %v1877 = vpack.c.bf16 %v1863, %v1862
  %v1878 = vpack.c.bf16 %v1865, %v1864
  %v1879 = vpack.c.bf16 %v1867, %v1866
  %v1880 = vld [vmem:[%s7] sm:$0xf]
  %v1882 = vperm.slane %v1880, 0
  %v1883 = vperm.slane %v1880, 1
  %v1884 = vperm.slane %v1880, 2
  %v1885 = vperm.slane %v1880, 3
  %v1898 = vunpack.c.l.b16 %v1868
  %v1899 = vunpack.c.h.b16 %v1868
  %v1900 = vunpack.c.l.b16 %v1869
  %v1901 = vunpack.c.h.b16 %v1869
  %v1902 = vunpack.c.l.b16 %v1870
  %v1903 = vunpack.c.h.b16 %v1870
  %v1904 = vunpack.c.l.b16 %v1871
  %v1905 = vunpack.c.h.b16 %v1871
  %v1906 = vunpack.c.l.b16 %v1872
  %v1907 = vunpack.c.h.b16 %v1872
  %v1908 = vunpack.c.l.b16 %v1873
  %v1909 = vunpack.c.h.b16 %v1873
  %v1910 = vunpack.c.l.b16 %v1874
  %v1911 = vunpack.c.h.b16 %v1874
  %v1912 = vunpack.c.l.b16 %v1875
  %v1913 = vunpack.c.h.b16 %v1875
  %v1914 = vpack.c.b16 %v1902, %v1898
  %v1915 = vpack.c.b16 %v1903, %v1899
  %v1916 = vpack.c.b16 %v1904, %v1900
  %v1917 = vpack.c.b16 %v1905, %v1901
  %v1918 = vpack.c.b16 %v1910, %v1906
  %v1919 = vpack.c.b16 %v1911, %v1907
  %v1920 = vpack.c.b16 %v1912, %v1908
  %v1921 = vpack.c.b16 %v1913, %v1909
  %vm1926 = vcmask 220160
  %v1928 = vsel %vm1926, %v1876, 0
  %v1931 = vsel %vm1926, %v1877, 0
  %v1934 = vsel %vm1926, %v1878, 0
  %v1937 = vsel %vm1926, %v1879, 0
  %vm1939 = vcmask 1044480
  %vm1940 = vcmask 1045504
  %v1941 = vsel %vm1939, 4294967295, 65535
  %v1942 = vsel %vm1940, %v1941, 0
  %v1944 = vand.u32 %v1918, %v1942
  %v1947 = vand.u32 %v1919, %v1942
  %v1950 = vand.u32 %v1920, %v1942
  %v1953 = vand.u32 %v1921, %v1942
  %1955 = vmatpush.bf16.msra.mxu0 0
  %1956 = vmatpush.bf16.msra.mxu0 0
  %1957 = vmatpush.bf16.msra.mxu0 0
  %1958 = vmatpush.bf16.msra.mxu0 0
  %1959 = vmatpush.bf16.msra.mxu0 0
  %1960 = vmatpush.bf16.msra.mxu0 0
  %1961 = vmatpush.bf16.msra.mxu0 %v1944
  %1962 = vmatpush.bf16.msra.mxu0 %v1914
  %1963 = vmatmul.bf16.gmra.mxu0 %v1928
  %v1964 = vpop.f32.mrf.mxu0
  %v1965 = vadd.f32 %v1882, %v1964
  %v1966 = vpop.f32.mrf.mxu0
  %v1967 = vadd.f32 %v1882, %v1966
  %1968 = vmatmul.bf16.gmra.mxu0 %v1931
  %v1969 = vpop.f32.mrf.mxu0
  %v1970 = vadd.f32 %v1882, %v1969
  %v1971 = vpop.f32.mrf.mxu0
  %v1972 = vadd.f32 %v1882, %v1971
  %1973 = vmatmul.bf16.gmra.mxu0 %v1934
  %v1974 = vpop.f32.mrf.mxu0
  %v1975 = vadd.f32 %v1882, %v1974
  %v1976 = vpop.f32.mrf.mxu0
  %v1977 = vadd.f32 %v1882, %v1976
  %1978 = vmatmul.bf16.gmra.mxu0 %v1937
  %v1979 = vpop.f32.mrf.mxu0
  %v1980 = vadd.f32 %v1882, %v1979
  %v1981 = vpop.f32.mrf.mxu0
  %v1982 = vadd.f32 %v1882, %v1981
  %1983 = vdwg.mxu0
  %1984 = vmatpush.bf16.msra.mxu0 0
  %1985 = vmatpush.bf16.msra.mxu0 0
  %1986 = vmatpush.bf16.msra.mxu0 0
  %1987 = vmatpush.bf16.msra.mxu0 0
  %1988 = vmatpush.bf16.msra.mxu0 0
  %1989 = vmatpush.bf16.msra.mxu0 0
  %1990 = vmatpush.bf16.msra.mxu0 %v1947
  %1991 = vmatpush.bf16.msra.mxu0 %v1915
  %1992 = vmatmul.bf16.gmra.mxu0 %v1928
  %v1993 = vpop.f32.mrf.mxu0
  %v1994 = vadd.f32 %v1883, %v1993
  %v1995 = vpop.f32.mrf.mxu0
  %v1996 = vadd.f32 %v1883, %v1995
  %1997 = vmatmul.bf16.gmra.mxu0 %v1931
  %v1998 = vpop.f32.mrf.mxu0
  %v1999 = vadd.f32 %v1883, %v1998
  %v2000 = vpop.f32.mrf.mxu0
  %v2001 = vadd.f32 %v1883, %v2000
  %2002 = vmatmul.bf16.gmra.mxu0 %v1934
  %v2003 = vpop.f32.mrf.mxu0
  %v2004 = vadd.f32 %v1883, %v2003
  %v2005 = vpop.f32.mrf.mxu0
  %v2006 = vadd.f32 %v1883, %v2005
  %2007 = vmatmul.bf16.gmra.mxu0 %v1937
  %v2008 = vpop.f32.mrf.mxu0
  %v2009 = vadd.f32 %v1883, %v2008
  %v2010 = vpop.f32.mrf.mxu0
  %v2011 = vadd.f32 %v1883, %v2010
  %2012 = vdwg.mxu0
  %2013 = vmatpush.bf16.msra.mxu0 0
  %2014 = vmatpush.bf16.msra.mxu0 0
  %2015 = vmatpush.bf16.msra.mxu0 0
  %2016 = vmatpush.bf16.msra.mxu0 0
  %2017 = vmatpush.bf16.msra.mxu0 0
  %2018 = vmatpush.bf16.msra.mxu0 0
  %2019 = vmatpush.bf16.msra.mxu0 %v1950
  %2020 = vmatpush.bf16.msra.mxu0 %v1916
  %2021 = vmatmul.bf16.gmra.mxu0 %v1928
  %v2022 = vpop.f32.mrf.mxu0
  %v2023 = vadd.f32 %v1884, %v2022
  %v2024 = vpop.f32.mrf.mxu0
  %v2025 = vadd.f32 %v1884, %v2024
  %2026 = vmatmul.bf16.gmra.mxu0 %v1931
  %v2027 = vpop.f32.mrf.mxu0
  %v2028 = vadd.f32 %v1884, %v2027
  %v2029 = vpop.f32.mrf.mxu0
  %v2030 = vadd.f32 %v1884, %v2029
  %2031 = vmatmul.bf16.gmra.mxu0 %v1934
  %v2032 = vpop.f32.mrf.mxu0
  %v2033 = vadd.f32 %v1884, %v2032
  %v2034 = vpop.f32.mrf.mxu0
  %v2035 = vadd.f32 %v1884, %v2034
  %2036 = vmatmul.bf16.gmra.mxu0 %v1937
  %v2037 = vpop.f32.mrf.mxu0
  %v2038 = vadd.f32 %v1884, %v2037
  %v2039 = vpop.f32.mrf.mxu0
  %v2040 = vadd.f32 %v1884, %v2039
  %2041 = vdwg.mxu0
  %2042 = vmatpush.bf16.msra.mxu0 0
  %2043 = vmatpush.bf16.msra.mxu0 0
  %2044 = vmatpush.bf16.msra.mxu0 0
  %2045 = vmatpush.bf16.msra.mxu0 0
  %2046 = vmatpush.bf16.msra.mxu0 0
  %2047 = vmatpush.bf16.msra.mxu0 0
  %2048 = vmatpush.bf16.msra.mxu0 %v1953
  %2049 = vmatpush.bf16.msra.mxu0 %v1917
  %2050 = vmatmul.bf16.gmra.mxu0 %v1928
  %v2051 = vpop.f32.mrf.mxu0
  %v2052 = vadd.f32 %v1885, %v2051
  %v2053 = vpop.f32.mrf.mxu0
  %v2054 = vadd.f32 %v1885, %v2053
  %2055 = vmatmul.bf16.gmra.mxu0 %v1931
  %v2056 = vpop.f32.mrf.mxu0
  %v2057 = vadd.f32 %v1885, %v2056
  %v2058 = vpop.f32.mrf.mxu0
  %v2059 = vadd.f32 %v1885, %v2058
  %2060 = vmatmul.bf16.gmra.mxu0 %v1934
  %v2061 = vpop.f32.mrf.mxu0
  %v2062 = vadd.f32 %v1885, %v2061
  %v2063 = vpop.f32.mrf.mxu0
  %v2064 = vadd.f32 %v1885, %v2063
  %2065 = vmatmul.bf16.gmra.mxu0 %v1937
  %v2066 = vpop.f32.mrf.mxu0
  %v2067 = vadd.f32 %v1885, %v2066
  %v2068 = vpop.f32.mrf.mxu0
  %v2069 = vadd.f32 %v1885, %v2068
  %2070 = vdwg.mxu0
  %v2071 = vld [vmem:[%s6] sm:$0xff]
  %v2072 = vld [vmem:[%s6 + $0x8] sm:$0xff]
  %v2073 = vld [vmem:[%s6 + $0x10] sm:$0xff]
  %v2074 = vld [vmem:[%s6 + $0x18] sm:$0xff]
  %v2075 = vld [vmem:[%s6 + $0x20] sm:$0xff]
  %v2076 = vld [vmem:[%s6 + $0x28] sm:$0xff]
  %v2077 = vld [vmem:[%s6 + $0x30] sm:$0xff]
  %v2078 = vld [vmem:[%s6 + $0x38] sm:$0xff]
  %v2079 = vld [vmem:[%s6 + $0x40] sm:$0xff]
  %v2080 = vld [vmem:[%s6 + $0x48] sm:$0xff]
  %v2081 = vld [vmem:[%s6 + $0x50] sm:$0xff]
  %v2082 = vld [vmem:[%s6 + $0x58] sm:$0xff]
  %v2083 = vld [vmem:[%s6 + $0x60] sm:$0xff]
  %v2084 = vld [vmem:[%s6 + $0x68] sm:$0xff]
  %v2085 = vld [vmem:[%s6 + $0x70] sm:$0xff]
  %v2086 = vld [vmem:[%s6 + $0x78] sm:$0xff]
  %v2087 = vld [vmem:[%s6 + $0x80] sm:$0xff]
  %v2088 = vld [vmem:[%s6 + $0x88] sm:$0xff]
  %v2089 = vld [vmem:[%s6 + $0x90] sm:$0xff]
  %v2090 = vld [vmem:[%s6 + $0x98] sm:$0xff]
  %v2091 = vld [vmem:[%s6 + $0xa0] sm:$0xff]
  %v2092 = vld [vmem:[%s6 + $0xa8] sm:$0xff]
  %v2093 = vld [vmem:[%s6 + $0xb0] sm:$0xff]
  %v2094 = vld [vmem:[%s6 + $0xb8] sm:$0xff]
  %v2095 = vld [vmem:[%s6 + $0xc0] sm:$0xff]
  %v2096 = vld [vmem:[%s6 + $0xc8] sm:$0xff]
  %v2097 = vld [vmem:[%s6 + $0xd0] sm:$0xff]
  %v2098 = vld [vmem:[%s6 + $0xd8] sm:$0xff]
  %v2099 = vld [vmem:[%s6 + $0xe0] sm:$0xff]
  %v2100 = vld [vmem:[%s6 + $0xe8] sm:$0xff]
  %v2101 = vld [vmem:[%s6 + $0xf0] sm:$0xff]
  %v2102 = vld [vmem:[%s6 + $0xf8] sm:$0xff]
  %v2135 = vunpack.c.l.b16 %v2071
  %v2136 = vunpack.c.h.b16 %v2071
  %v2137 = vunpack.c.l.b16 %v2072
  %v2138 = vunpack.c.h.b16 %v2072
  %v2139 = vunpack.c.l.b16 %v2073
  %v2140 = vunpack.c.h.b16 %v2073
  %v2141 = vunpack.c.l.b16 %v2074
  %v2142 = vunpack.c.h.b16 %v2074
  %v2143 = vunpack.c.l.b16 %v2075
  %v2144 = vunpack.c.h.b16 %v2075
  %v2145 = vunpack.c.l.b16 %v2076
  %v2146 = vunpack.c.h.b16 %v2076
  %v2147 = vunpack.c.l.b16 %v2077
  %v2148 = vunpack.c.h.b16 %v2077
  %v2149 = vunpack.c.l.b16 %v2078
  %v2150 = vunpack.c.h.b16 %v2078
  %v2151 = vunpack.c.l.b16 %v2079
  %v2152 = vunpack.c.h.b16 %v2079
  %v2153 = vunpack.c.l.b16 %v2080
  %v2154 = vunpack.c.h.b16 %v2080
  %v2155 = vunpack.c.l.b16 %v2081
  %v2156 = vunpack.c.h.b16 %v2081
  %v2157 = vunpack.c.l.b16 %v2082
  %v2158 = vunpack.c.h.b16 %v2082
  %v2159 = vunpack.c.l.b16 %v2083
  %v2160 = vunpack.c.h.b16 %v2083
  %v2161 = vunpack.c.l.b16 %v2084
  %v2162 = vunpack.c.h.b16 %v2084
  %v2163 = vunpack.c.l.b16 %v2085
  %v2164 = vunpack.c.h.b16 %v2085
  %v2165 = vunpack.c.l.b16 %v2086
  %v2166 = vunpack.c.h.b16 %v2086
  %v2167 = vunpack.c.l.b16 %v2087
  %v2168 = vunpack.c.h.b16 %v2087
  %v2169 = vunpack.c.l.b16 %v2088
  %v2170 = vunpack.c.h.b16 %v2088
  %v2171 = vunpack.c.l.b16 %v2089
  %v2172 = vunpack.c.h.b16 %v2089
  %v2173 = vunpack.c.l.b16 %v2090
  %v2174 = vunpack.c.h.b16 %v2090
  %v2175 = vunpack.c.l.b16 %v2091
  %v2176 = vunpack.c.h.b16 %v2091
  %v2177 = vunpack.c.l.b16 %v2092
  %v2178 = vunpack.c.h.b16 %v2092
  %v2179 = vunpack.c.l.b16 %v2093
  %v2180 = vunpack.c.h.b16 %v2093
  %v2181 = vunpack.c.l.b16 %v2094
  %v2182 = vunpack.c.h.b16 %v2094
  %v2183 = vunpack.c.l.b16 %v2095
  %v2184 = vunpack.c.h.b16 %v2095
  %v2185 = vunpack.c.l.b16 %v2096
  %v2186 = vunpack.c.h.b16 %v2096
  %v2187 = vunpack.c.l.b16 %v2097
  %v2188 = vunpack.c.h.b16 %v2097
  %v2189 = vunpack.c.l.b16 %v2098
  %v2190 = vunpack.c.h.b16 %v2098
  %v2191 = vunpack.c.l.b16 %v2099
  %v2192 = vunpack.c.h.b16 %v2099
  %v2193 = vunpack.c.l.b16 %v2100
  %v2194 = vunpack.c.h.b16 %v2100
  %v2195 = vunpack.c.l.b16 %v2101
  %v2196 = vunpack.c.h.b16 %v2101
  %v2197 = vunpack.c.l.b16 %v2102
  %v2198 = vunpack.c.h.b16 %v2102
  %v2199 = vpack.c.b16 %v2139, %v2135
  %v2200 = vpack.c.b16 %v2140, %v2136
  %v2201 = vpack.c.b16 %v2141, %v2137
  %v2202 = vpack.c.b16 %v2142, %v2138
  %v2203 = vpack.c.b16 %v2147, %v2143
  %v2204 = vpack.c.b16 %v2148, %v2144
  %v2205 = vpack.c.b16 %v2149, %v2145
  %v2206 = vpack.c.b16 %v2150, %v2146
  %v2207 = vpack.c.b16 %v2155, %v2151
  %v2208 = vpack.c.b16 %v2156, %v2152
  %v2209 = vpack.c.b16 %v2157, %v2153
  %v2210 = vpack.c.b16 %v2158, %v2154
  %v2211 = vpack.c.b16 %v2163, %v2159
  %v2212 = vpack.c.b16 %v2164, %v2160
  %v2213 = vpack.c.b16 %v2165, %v2161
  %v2214 = vpack.c.b16 %v2166, %v2162
  %v2215 = vpack.c.b16 %v2171, %v2167
  %v2216 = vpack.c.b16 %v2172, %v2168
  %v2217 = vpack.c.b16 %v2173, %v2169
  %v2218 = vpack.c.b16 %v2174, %v2170
  %v2219 = vpack.c.b16 %v2179, %v2175
  %v2220 = vpack.c.b16 %v2180, %v2176
  %v2221 = vpack.c.b16 %v2181, %v2177
  %v2222 = vpack.c.b16 %v2182, %v2178
  %v2223 = vpack.c.b16 %v2187, %v2183
  %v2224 = vpack.c.b16 %v2188, %v2184
  %v2225 = vpack.c.b16 %v2189, %v2185
  %v2226 = vpack.c.b16 %v2190, %v2186
  %v2227 = vpack.c.b16 %v2195, %v2191
  %v2228 = vpack.c.b16 %v2196, %v2192
  %v2229 = vpack.c.b16 %v2197, %v2193
  %v2230 = vpack.c.b16 %v2198, %v2194
  %2263 = vmatpush.bf16.msra.mxu0 %v2227
  %2264 = vmatpush.bf16.msra.mxu0 %v2223
  %2265 = vmatpush.bf16.msra.mxu0 %v2219
  %2266 = vmatpush.bf16.msra.mxu0 %v2215
  %2267 = vmatpush.bf16.msra.mxu0 %v2211
  %2268 = vmatpush.bf16.msra.mxu0 %v2207
  %2269 = vmatpush.bf16.msra.mxu0 %v2203
  %2270 = vmatpush.bf16.msra.mxu0 %v2199
  %2271 = vmatmul.bf16.gmra.mxu0 0
  %v2272 = vpop.f32.mrf.mxu0
  %v2273 = vadd.f32 0.0, %v2272
  %v2274 = vpop.f32.mrf.mxu0
  %2275 = vdwg.mxu0
  %2276 = vmatpush.bf16.msra.mxu0 %v2228
  %2277 = vmatpush.bf16.msra.mxu0 %v2224
  %2278 = vmatpush.bf16.msra.mxu0 %v2220
  %2279 = vmatpush.bf16.msra.mxu0 %v2216
  %2280 = vmatpush.bf16.msra.mxu0 %v2212
  %2281 = vmatpush.bf16.msra.mxu0 %v2208
  %2282 = vmatpush.bf16.msra.mxu0 %v2204
  %2283 = vmatpush.bf16.msra.mxu0 %v2200
  %2284 = vmatmul.bf16.gmra.mxu0 0
  %v2285 = vpop.f32.mrf.mxu0
  %v2286 = vadd.f32 0.0, %v2285
  %v2287 = vpop.f32.mrf.mxu0
  %2288 = vdwg.mxu0
  %2289 = vmatpush.bf16.msra.mxu0 %v2229
  %2290 = vmatpush.bf16.msra.mxu0 %v2225
  %2291 = vmatpush.bf16.msra.mxu0 %v2221
  %2292 = vmatpush.bf16.msra.mxu0 %v2217
  %2293 = vmatpush.bf16.msra.mxu0 %v2213
  %2294 = vmatpush.bf16.msra.mxu0 %v2209
  %2295 = vmatpush.bf16.msra.mxu0 %v2205
  %2296 = vmatpush.bf16.msra.mxu0 %v2201
  %2297 = vmatmul.bf16.gmra.mxu0 0
  %v2298 = vpop.f32.mrf.mxu0
  %v2299 = vadd.f32 0.0, %v2298
  %v2300 = vpop.f32.mrf.mxu0
  %2301 = vdwg.mxu0
  %2302 = vmatpush.bf16.msra.mxu0 %v2230
  %2303 = vmatpush.bf16.msra.mxu0 %v2226
  %2304 = vmatpush.bf16.msra.mxu0 %v2222
  %2305 = vmatpush.bf16.msra.mxu0 %v2218
  %2306 = vmatpush.bf16.msra.mxu0 %v2214
  %2307 = vmatpush.bf16.msra.mxu0 %v2210
  %2308 = vmatpush.bf16.msra.mxu0 %v2206
  %2309 = vmatpush.bf16.msra.mxu0 %v2202
  %2310 = vmatmul.bf16.gmra.mxu0 0
  %v2311 = vpop.f32.mrf.mxu0
  %v2312 = vadd.f32 0.0, %v2311
  %v2313 = vpop.f32.mrf.mxu0
  %2314 = vdwg.mxu0
  %v2315 = vadd.f32 %v1965, %v2273
  %v2316 = vadd.f32 %v1994, %v2286
  %v2317 = vadd.f32 %v2023, %v2299
  %v2318 = vadd.f32 %v2052, %v2312
  %v2319 = vmul.f32 %v2315, 0.5
  %v2320 = vtanh.pop %v2319
  %v2321 = vmul.f32 %v2320, 0.5
  %v2322 = vadd.f32 %v2321, 0.5
  %v2323 = vmul.f32 %v2316, 0.5
  %v2324 = vtanh.pop %v2323
  %v2325 = vmul.f32 %v2324, 0.5
  %v2326 = vadd.f32 %v2325, 0.5
  %v2327 = vtanh.pop %v2317
  %v2328 = vmul.f32 %v2318, 0.5
  %v2329 = vtanh.pop %v2328
  %v2330 = vmul.f32 %v2329, 0.5
  %v2331 = vadd.f32 %v2330, 0.5
  %v2332 = vmul.f32 %v2326, 0.0
  %v2333 = vmul.f32 %v2322, %v2327
  %v2334 = vadd.f32 %v2332, %v2333
  %v2335 = vtanh.pop %v2334
  %v2336 = vmul.f32 %v2331, %v2335
  %v2337 = vpack.c.bf16 %v2336, %v2336
  %2338 = vmatpush.bf16.msra.mxu0 %v2227
  %2339 = vmatpush.bf16.msra.mxu0 %v2223
  %2340 = vmatpush.bf16.msra.mxu0 %v2219
  %2341 = vmatpush.bf16.msra.mxu0 %v2215
  %2342 = vmatpush.bf16.msra.mxu0 %v2211
  %2343 = vmatpush.bf16.msra.mxu0 %v2207
  %2344 = vmatpush.bf16.msra.mxu0 %v2203
  %2345 = vmatpush.bf16.msra.mxu0 %v2199
  %2346 = vmatmul.bf16.gmra.mxu0 %v2337
  %v2347 = vpop.f32.mrf.mxu0
  %v2348 = vadd.f32 0.0, %v2347
  %v2349 = vpop.f32.mrf.mxu0
  %2350 = vdwg.mxu0
  %2351 = vmatpush.bf16.msra.mxu0 %v2228
  %2352 = vmatpush.bf16.msra.mxu0 %v2224
  %2353 = vmatpush.bf16.msra.mxu0 %v2220
  %2354 = vmatpush.bf16.msra.mxu0 %v2216
  %2355 = vmatpush.bf16.msra.mxu0 %v2212
  %2356 = vmatpush.bf16.msra.mxu0 %v2208
  %2357 = vmatpush.bf16.msra.mxu0 %v2204
  %2358 = vmatpush.bf16.msra.mxu0 %v2200
  %2359 = vmatmul.bf16.gmra.mxu0 %v2337
  %v2360 = vpop.f32.mrf.mxu0
  %v2361 = vadd.f32 0.0, %v2360
  %v2362 = vpop.f32.mrf.mxu0
  %2363 = vdwg.mxu0
  %2364 = vmatpush.bf16.msra.mxu0 %v2229
  %2365 = vmatpush.bf16.msra.mxu0 %v2225
  %2366 = vmatpush.bf16.msra.mxu0 %v2221
  %2367 = vmatpush.bf16.msra.mxu0 %v2217
  %2368 = vmatpush.bf16.msra.mxu0 %v2213
  %2369 = vmatpush.bf16.msra.mxu0 %v2209
  %2370 = vmatpush.bf16.msra.mxu0 %v2205
  %2371 = vmatpush.bf16.msra.mxu0 %v2201
  %2372 = vmatmul.bf16.gmra.mxu0 %v2337
  %v2373 = vpop.f32.mrf.mxu0
  %v2374 = vadd.f32 0.0, %v2373
  %v2375 = vpop.f32.mrf.mxu0
  %2376 = vdwg.mxu0
  %2377 = vmatpush.bf16.msra.mxu0 %v2230
  %2378 = vmatpush.bf16.msra.mxu0 %v2226
  %2379 = vmatpush.bf16.msra.mxu0 %v2222
  %2380 = vmatpush.bf16.msra.mxu0 %v2218
  %2381 = vmatpush.bf16.msra.mxu0 %v2214
  %2382 = vmatpush.bf16.msra.mxu0 %v2210
  %2383 = vmatpush.bf16.msra.mxu0 %v2206
  %2384 = vmatpush.bf16.msra.mxu0 %v2202
  %2385 = vmatmul.bf16.gmra.mxu0 %v2337
  %v2386 = vpop.f32.mrf.mxu0
  %v2387 = vadd.f32 0.0, %v2386
  %v2388 = vpop.f32.mrf.mxu0
  %2389 = vdwg.mxu0
  %v2390 = vadd.f32 %v1967, %v2348
  %v2391 = vadd.f32 %v1996, %v2361
  %v2392 = vadd.f32 %v2025, %v2374
  %v2393 = vadd.f32 %v2054, %v2387
  %v2394 = vmul.f32 %v2390, 0.5
  %v2395 = vtanh.pop %v2394
  %v2396 = vmul.f32 %v2395, 0.5
  %v2397 = vadd.f32 %v2396, 0.5
  %v2398 = vmul.f32 %v2391, 0.5
  %v2399 = vtanh.pop %v2398
  %v2400 = vmul.f32 %v2399, 0.5
  %v2401 = vadd.f32 %v2400, 0.5
  %v2402 = vtanh.pop %v2392
  %v2403 = vmul.f32 %v2393, 0.5
  %v2404 = vtanh.pop %v2403
  %v2405 = vmul.f32 %v2404, 0.5
  %v2406 = vadd.f32 %v2405, 0.5
  %v2407 = vmul.f32 %v2401, %v2334
  %v2408 = vmul.f32 %v2397, %v2402
  %v2409 = vadd.f32 %v2407, %v2408
  %v2410 = vtanh.pop %v2409
  %v2411 = vmul.f32 %v2406, %v2410
  %v2412 = vpack.c.bf16 %v2411, %v2411
  %2413 = vmatpush.bf16.msra.mxu0 %v2227
  %2414 = vmatpush.bf16.msra.mxu0 %v2223
  %2415 = vmatpush.bf16.msra.mxu0 %v2219
  %2416 = vmatpush.bf16.msra.mxu0 %v2215
  %2417 = vmatpush.bf16.msra.mxu0 %v2211
  %2418 = vmatpush.bf16.msra.mxu0 %v2207
  %2419 = vmatpush.bf16.msra.mxu0 %v2203
  %2420 = vmatpush.bf16.msra.mxu0 %v2199
  %2421 = vmatmul.bf16.gmra.mxu0 %v2412
  %v2422 = vpop.f32.mrf.mxu0
  %v2423 = vadd.f32 0.0, %v2422
  %v2424 = vpop.f32.mrf.mxu0
  %2425 = vdwg.mxu0
  %2426 = vmatpush.bf16.msra.mxu0 %v2228
  %2427 = vmatpush.bf16.msra.mxu0 %v2224
  %2428 = vmatpush.bf16.msra.mxu0 %v2220
  %2429 = vmatpush.bf16.msra.mxu0 %v2216
  %2430 = vmatpush.bf16.msra.mxu0 %v2212
  %2431 = vmatpush.bf16.msra.mxu0 %v2208
  %2432 = vmatpush.bf16.msra.mxu0 %v2204
  %2433 = vmatpush.bf16.msra.mxu0 %v2200
  %2434 = vmatmul.bf16.gmra.mxu0 %v2412
  %v2435 = vpop.f32.mrf.mxu0
  %v2436 = vadd.f32 0.0, %v2435
  %v2437 = vpop.f32.mrf.mxu0
  %2438 = vdwg.mxu0
  %2439 = vmatpush.bf16.msra.mxu0 %v2229
  %2440 = vmatpush.bf16.msra.mxu0 %v2225
  %2441 = vmatpush.bf16.msra.mxu0 %v2221
  %2442 = vmatpush.bf16.msra.mxu0 %v2217
  %2443 = vmatpush.bf16.msra.mxu0 %v2213
  %2444 = vmatpush.bf16.msra.mxu0 %v2209
  %2445 = vmatpush.bf16.msra.mxu0 %v2205
  %2446 = vmatpush.bf16.msra.mxu0 %v2201
  %2447 = vmatmul.bf16.gmra.mxu0 %v2412
  %v2448 = vpop.f32.mrf.mxu0
  %v2449 = vadd.f32 0.0, %v2448
  %v2450 = vpop.f32.mrf.mxu0
  %2451 = vdwg.mxu0
  %2452 = vmatpush.bf16.msra.mxu0 %v2230
  %2453 = vmatpush.bf16.msra.mxu0 %v2226
  %2454 = vmatpush.bf16.msra.mxu0 %v2222
  %2455 = vmatpush.bf16.msra.mxu0 %v2218
  %2456 = vmatpush.bf16.msra.mxu0 %v2214
  %2457 = vmatpush.bf16.msra.mxu0 %v2210
  %2458 = vmatpush.bf16.msra.mxu0 %v2206
  %2459 = vmatpush.bf16.msra.mxu0 %v2202
  %2460 = vmatmul.bf16.gmra.mxu0 %v2412
  %v2461 = vpop.f32.mrf.mxu0
  %v2462 = vadd.f32 0.0, %v2461
  %v2463 = vpop.f32.mrf.mxu0
  %2464 = vdwg.mxu0
  %v2465 = vadd.f32 %v1970, %v2423
  %v2466 = vadd.f32 %v1999, %v2436
  %v2467 = vadd.f32 %v2028, %v2449
  %v2468 = vadd.f32 %v2057, %v2462
  %v2469 = vmul.f32 %v2465, 0.5
  %v2470 = vtanh.pop %v2469
  %v2471 = vmul.f32 %v2470, 0.5
  %v2472 = vadd.f32 %v2471, 0.5
  %v2473 = vmul.f32 %v2466, 0.5
  %v2474 = vtanh.pop %v2473
  %v2475 = vmul.f32 %v2474, 0.5
  %v2476 = vadd.f32 %v2475, 0.5
  %v2477 = vtanh.pop %v2467
  %v2478 = vmul.f32 %v2468, 0.5
  %v2479 = vtanh.pop %v2478
  %v2480 = vmul.f32 %v2479, 0.5
  %v2481 = vadd.f32 %v2480, 0.5
  %v2482 = vmul.f32 %v2476, %v2409
  %v2483 = vmul.f32 %v2472, %v2477
  %v2484 = vadd.f32 %v2482, %v2483
  %v2485 = vtanh.pop %v2484
  %v2486 = vmul.f32 %v2481, %v2485
  %v2487 = vpack.c.bf16 %v2486, %v2486
  %2488 = vmatpush.bf16.msra.mxu0 %v2227
  %2489 = vmatpush.bf16.msra.mxu0 %v2223
  %2490 = vmatpush.bf16.msra.mxu0 %v2219
  %2491 = vmatpush.bf16.msra.mxu0 %v2215
  %2492 = vmatpush.bf16.msra.mxu0 %v2211
  %2493 = vmatpush.bf16.msra.mxu0 %v2207
  %2494 = vmatpush.bf16.msra.mxu0 %v2203
  %2495 = vmatpush.bf16.msra.mxu0 %v2199
  %2496 = vmatmul.bf16.gmra.mxu0 %v2487
  %v2497 = vpop.f32.mrf.mxu0
  %v2498 = vadd.f32 0.0, %v2497
  %v2499 = vpop.f32.mrf.mxu0
  %2500 = vdwg.mxu0
  %2501 = vmatpush.bf16.msra.mxu0 %v2228
  %2502 = vmatpush.bf16.msra.mxu0 %v2224
  %2503 = vmatpush.bf16.msra.mxu0 %v2220
  %2504 = vmatpush.bf16.msra.mxu0 %v2216
  %2505 = vmatpush.bf16.msra.mxu0 %v2212
  %2506 = vmatpush.bf16.msra.mxu0 %v2208
  %2507 = vmatpush.bf16.msra.mxu0 %v2204
  %2508 = vmatpush.bf16.msra.mxu0 %v2200
  %2509 = vmatmul.bf16.gmra.mxu0 %v2487
  %v2510 = vpop.f32.mrf.mxu0
  %v2511 = vadd.f32 0.0, %v2510
  %v2512 = vpop.f32.mrf.mxu0
  %2513 = vdwg.mxu0
  %2514 = vmatpush.bf16.msra.mxu0 %v2229
  %2515 = vmatpush.bf16.msra.mxu0 %v2225
  %2516 = vmatpush.bf16.msra.mxu0 %v2221
  %2517 = vmatpush.bf16.msra.mxu0 %v2217
  %2518 = vmatpush.bf16.msra.mxu0 %v2213
  %2519 = vmatpush.bf16.msra.mxu0 %v2209
  %2520 = vmatpush.bf16.msra.mxu0 %v2205
  %2521 = vmatpush.bf16.msra.mxu0 %v2201
  %2522 = vmatmul.bf16.gmra.mxu0 %v2487
  %v2523 = vpop.f32.mrf.mxu0
  %v2524 = vadd.f32 0.0, %v2523
  %v2525 = vpop.f32.mrf.mxu0
  %2526 = vdwg.mxu0
  %2527 = vmatpush.bf16.msra.mxu0 %v2230
  %2528 = vmatpush.bf16.msra.mxu0 %v2226
  %2529 = vmatpush.bf16.msra.mxu0 %v2222
  %2530 = vmatpush.bf16.msra.mxu0 %v2218
  %2531 = vmatpush.bf16.msra.mxu0 %v2214
  %2532 = vmatpush.bf16.msra.mxu0 %v2210
  %2533 = vmatpush.bf16.msra.mxu0 %v2206
  %2534 = vmatpush.bf16.msra.mxu0 %v2202
  %2535 = vmatmul.bf16.gmra.mxu0 %v2487
  %v2536 = vpop.f32.mrf.mxu0
  %v2537 = vadd.f32 0.0, %v2536
  %v2538 = vpop.f32.mrf.mxu0
  %2539 = vdwg.mxu0
  %v2540 = vadd.f32 %v1972, %v2498
  %v2541 = vadd.f32 %v2001, %v2511
  %v2542 = vadd.f32 %v2030, %v2524
  %v2543 = vadd.f32 %v2059, %v2537
  %v2544 = vmul.f32 %v2540, 0.5
  %v2545 = vtanh.pop %v2544
  %v2546 = vmul.f32 %v2545, 0.5
  %v2547 = vadd.f32 %v2546, 0.5
  %v2548 = vmul.f32 %v2541, 0.5
  %v2549 = vtanh.pop %v2548
  %v2550 = vmul.f32 %v2549, 0.5
  %v2551 = vadd.f32 %v2550, 0.5
  %v2552 = vtanh.pop %v2542
  %v2553 = vmul.f32 %v2543, 0.5
  %v2554 = vtanh.pop %v2553
  %v2555 = vmul.f32 %v2554, 0.5
  %v2556 = vadd.f32 %v2555, 0.5
  %v2557 = vmul.f32 %v2551, %v2484
  %v2558 = vmul.f32 %v2547, %v2552
  %v2559 = vadd.f32 %v2557, %v2558
  %v2560 = vtanh.pop %v2559
  %v2561 = vmul.f32 %v2556, %v2560
  %v2562 = vpack.c.bf16 %v2561, %v2561
  %2563 = vmatpush.bf16.msra.mxu0 %v2227
  %2564 = vmatpush.bf16.msra.mxu0 %v2223
  %2565 = vmatpush.bf16.msra.mxu0 %v2219
  %2566 = vmatpush.bf16.msra.mxu0 %v2215
  %2567 = vmatpush.bf16.msra.mxu0 %v2211
  %2568 = vmatpush.bf16.msra.mxu0 %v2207
  %2569 = vmatpush.bf16.msra.mxu0 %v2203
  %2570 = vmatpush.bf16.msra.mxu0 %v2199
  %2571 = vmatmul.bf16.gmra.mxu0 %v2562
  %v2572 = vpop.f32.mrf.mxu0
  %v2573 = vadd.f32 0.0, %v2572
  %v2574 = vpop.f32.mrf.mxu0
  %2575 = vdwg.mxu0
  %2576 = vmatpush.bf16.msra.mxu0 %v2228
  %2577 = vmatpush.bf16.msra.mxu0 %v2224
  %2578 = vmatpush.bf16.msra.mxu0 %v2220
  %2579 = vmatpush.bf16.msra.mxu0 %v2216
  %2580 = vmatpush.bf16.msra.mxu0 %v2212
  %2581 = vmatpush.bf16.msra.mxu0 %v2208
  %2582 = vmatpush.bf16.msra.mxu0 %v2204
  %2583 = vmatpush.bf16.msra.mxu0 %v2200
  %2584 = vmatmul.bf16.gmra.mxu0 %v2562
  %v2585 = vpop.f32.mrf.mxu0
  %v2586 = vadd.f32 0.0, %v2585
  %v2587 = vpop.f32.mrf.mxu0
  %2588 = vdwg.mxu0
  %2589 = vmatpush.bf16.msra.mxu0 %v2229
  %2590 = vmatpush.bf16.msra.mxu0 %v2225
  %2591 = vmatpush.bf16.msra.mxu0 %v2221
  %2592 = vmatpush.bf16.msra.mxu0 %v2217
  %2593 = vmatpush.bf16.msra.mxu0 %v2213
  %2594 = vmatpush.bf16.msra.mxu0 %v2209
  %2595 = vmatpush.bf16.msra.mxu0 %v2205
  %2596 = vmatpush.bf16.msra.mxu0 %v2201
  %2597 = vmatmul.bf16.gmra.mxu0 %v2562
  %v2598 = vpop.f32.mrf.mxu0
  %v2599 = vadd.f32 0.0, %v2598
  %v2600 = vpop.f32.mrf.mxu0
  %2601 = vdwg.mxu0
  %2602 = vmatpush.bf16.msra.mxu0 %v2230
  %2603 = vmatpush.bf16.msra.mxu0 %v2226
  %2604 = vmatpush.bf16.msra.mxu0 %v2222
  %2605 = vmatpush.bf16.msra.mxu0 %v2218
  %2606 = vmatpush.bf16.msra.mxu0 %v2214
  %2607 = vmatpush.bf16.msra.mxu0 %v2210
  %2608 = vmatpush.bf16.msra.mxu0 %v2206
  %2609 = vmatpush.bf16.msra.mxu0 %v2202
  %2610 = vmatmul.bf16.gmra.mxu0 %v2562
  %v2611 = vpop.f32.mrf.mxu0
  %v2612 = vadd.f32 0.0, %v2611
  %v2613 = vpop.f32.mrf.mxu0
  %2614 = vdwg.mxu0
  %v2615 = vadd.f32 %v1975, %v2573
  %v2616 = vadd.f32 %v2004, %v2586
  %v2617 = vadd.f32 %v2033, %v2599
  %v2618 = vadd.f32 %v2062, %v2612
  %v2619 = vmul.f32 %v2615, 0.5
  %v2620 = vtanh.pop %v2619
  %v2621 = vmul.f32 %v2620, 0.5
  %v2622 = vadd.f32 %v2621, 0.5
  %v2623 = vmul.f32 %v2616, 0.5
  %v2624 = vtanh.pop %v2623
  %v2625 = vmul.f32 %v2624, 0.5
  %v2626 = vadd.f32 %v2625, 0.5
  %v2627 = vtanh.pop %v2617
  %v2628 = vmul.f32 %v2618, 0.5
  %v2629 = vtanh.pop %v2628
  %v2630 = vmul.f32 %v2629, 0.5
  %v2631 = vadd.f32 %v2630, 0.5
  %v2632 = vmul.f32 %v2626, %v2559
  %v2633 = vmul.f32 %v2622, %v2627
  %v2634 = vadd.f32 %v2632, %v2633
  %v2635 = vtanh.pop %v2634
  %v2636 = vmul.f32 %v2631, %v2635
  %v2637 = vpack.c.bf16 %v2636, %v2636
  %2638 = vmatpush.bf16.msra.mxu0 %v2227
  %2639 = vmatpush.bf16.msra.mxu0 %v2223
  %2640 = vmatpush.bf16.msra.mxu0 %v2219
  %2641 = vmatpush.bf16.msra.mxu0 %v2215
  %2642 = vmatpush.bf16.msra.mxu0 %v2211
  %2643 = vmatpush.bf16.msra.mxu0 %v2207
  %2644 = vmatpush.bf16.msra.mxu0 %v2203
  %2645 = vmatpush.bf16.msra.mxu0 %v2199
  %2646 = vmatmul.bf16.gmra.mxu0 %v2637
  %v2647 = vpop.f32.mrf.mxu0
  %v2648 = vadd.f32 0.0, %v2647
  %v2649 = vpop.f32.mrf.mxu0
  %2650 = vdwg.mxu0
  %2651 = vmatpush.bf16.msra.mxu0 %v2228
  %2652 = vmatpush.bf16.msra.mxu0 %v2224
  %2653 = vmatpush.bf16.msra.mxu0 %v2220
  %2654 = vmatpush.bf16.msra.mxu0 %v2216
  %2655 = vmatpush.bf16.msra.mxu0 %v2212
  %2656 = vmatpush.bf16.msra.mxu0 %v2208
  %2657 = vmatpush.bf16.msra.mxu0 %v2204
  %2658 = vmatpush.bf16.msra.mxu0 %v2200
  %2659 = vmatmul.bf16.gmra.mxu0 %v2637
  %v2660 = vpop.f32.mrf.mxu0
  %v2661 = vadd.f32 0.0, %v2660
  %v2662 = vpop.f32.mrf.mxu0
  %2663 = vdwg.mxu0
  %2664 = vmatpush.bf16.msra.mxu0 %v2229
  %2665 = vmatpush.bf16.msra.mxu0 %v2225
  %2666 = vmatpush.bf16.msra.mxu0 %v2221
  %2667 = vmatpush.bf16.msra.mxu0 %v2217
  %2668 = vmatpush.bf16.msra.mxu0 %v2213
  %2669 = vmatpush.bf16.msra.mxu0 %v2209
  %2670 = vmatpush.bf16.msra.mxu0 %v2205
  %2671 = vmatpush.bf16.msra.mxu0 %v2201
  %2672 = vmatmul.bf16.gmra.mxu0 %v2637
  %v2673 = vpop.f32.mrf.mxu0
  %v2674 = vadd.f32 0.0, %v2673
  %v2675 = vpop.f32.mrf.mxu0
  %2676 = vdwg.mxu0
  %2677 = vmatpush.bf16.msra.mxu0 %v2230
  %2678 = vmatpush.bf16.msra.mxu0 %v2226
  %2679 = vmatpush.bf16.msra.mxu0 %v2222
  %2680 = vmatpush.bf16.msra.mxu0 %v2218
  %2681 = vmatpush.bf16.msra.mxu0 %v2214
  %2682 = vmatpush.bf16.msra.mxu0 %v2210
  %2683 = vmatpush.bf16.msra.mxu0 %v2206
  %2684 = vmatpush.bf16.msra.mxu0 %v2202
  %2685 = vmatmul.bf16.gmra.mxu0 %v2637
  %v2686 = vpop.f32.mrf.mxu0
  %v2687 = vadd.f32 0.0, %v2686
  %v2688 = vpop.f32.mrf.mxu0
  %2689 = vdwg.mxu0
  %v2690 = vadd.f32 %v1977, %v2648
  %v2691 = vadd.f32 %v2006, %v2661
  %v2692 = vadd.f32 %v2035, %v2674
  %v2693 = vadd.f32 %v2064, %v2687
  %v2694 = vmul.f32 %v2690, 0.5
  %v2695 = vtanh.pop %v2694
  %v2696 = vmul.f32 %v2695, 0.5
  %v2697 = vadd.f32 %v2696, 0.5
  %v2698 = vmul.f32 %v2691, 0.5
  %v2699 = vtanh.pop %v2698
  %v2700 = vmul.f32 %v2699, 0.5
  %v2701 = vadd.f32 %v2700, 0.5
  %v2702 = vtanh.pop %v2692
  %v2703 = vmul.f32 %v2693, 0.5
  %v2704 = vtanh.pop %v2703
  %v2705 = vmul.f32 %v2704, 0.5
  %v2706 = vadd.f32 %v2705, 0.5
  %v2707 = vmul.f32 %v2701, %v2634
  %v2708 = vmul.f32 %v2697, %v2702
  %v2709 = vadd.f32 %v2707, %v2708
  %v2710 = vtanh.pop %v2709
  %v2711 = vmul.f32 %v2706, %v2710
  %v2712 = vpack.c.bf16 %v2711, %v2711
  %2713 = vmatpush.bf16.msra.mxu0 %v2227
  %2714 = vmatpush.bf16.msra.mxu0 %v2223
  %2715 = vmatpush.bf16.msra.mxu0 %v2219
  %2716 = vmatpush.bf16.msra.mxu0 %v2215
  %2717 = vmatpush.bf16.msra.mxu0 %v2211
  %2718 = vmatpush.bf16.msra.mxu0 %v2207
  %2719 = vmatpush.bf16.msra.mxu0 %v2203
  %2720 = vmatpush.bf16.msra.mxu0 %v2199
  %2721 = vmatmul.bf16.gmra.mxu0 %v2712
  %v2722 = vpop.f32.mrf.mxu0
  %v2723 = vadd.f32 0.0, %v2722
  %v2724 = vpop.f32.mrf.mxu0
  %2725 = vdwg.mxu0
  %2726 = vmatpush.bf16.msra.mxu0 %v2228
  %2727 = vmatpush.bf16.msra.mxu0 %v2224
  %2728 = vmatpush.bf16.msra.mxu0 %v2220
  %2729 = vmatpush.bf16.msra.mxu0 %v2216
  %2730 = vmatpush.bf16.msra.mxu0 %v2212
  %2731 = vmatpush.bf16.msra.mxu0 %v2208
  %2732 = vmatpush.bf16.msra.mxu0 %v2204
  %2733 = vmatpush.bf16.msra.mxu0 %v2200
  %2734 = vmatmul.bf16.gmra.mxu0 %v2712
  %v2735 = vpop.f32.mrf.mxu0
  %v2736 = vadd.f32 0.0, %v2735
  %v2737 = vpop.f32.mrf.mxu0
  %2738 = vdwg.mxu0
  %2739 = vmatpush.bf16.msra.mxu0 %v2229
  %2740 = vmatpush.bf16.msra.mxu0 %v2225
  %2741 = vmatpush.bf16.msra.mxu0 %v2221
  %2742 = vmatpush.bf16.msra.mxu0 %v2217
  %2743 = vmatpush.bf16.msra.mxu0 %v2213
  %2744 = vmatpush.bf16.msra.mxu0 %v2209
  %2745 = vmatpush.bf16.msra.mxu0 %v2205
  %2746 = vmatpush.bf16.msra.mxu0 %v2201
  %2747 = vmatmul.bf16.gmra.mxu0 %v2712
  %v2748 = vpop.f32.mrf.mxu0
  %v2749 = vadd.f32 0.0, %v2748
  %v2750 = vpop.f32.mrf.mxu0
  %2751 = vdwg.mxu0
  %2752 = vmatpush.bf16.msra.mxu0 %v2230
  %2753 = vmatpush.bf16.msra.mxu0 %v2226
  %2754 = vmatpush.bf16.msra.mxu0 %v2222
  %2755 = vmatpush.bf16.msra.mxu0 %v2218
  %2756 = vmatpush.bf16.msra.mxu0 %v2214
  %2757 = vmatpush.bf16.msra.mxu0 %v2210
  %2758 = vmatpush.bf16.msra.mxu0 %v2206
  %2759 = vmatpush.bf16.msra.mxu0 %v2202
  %2760 = vmatmul.bf16.gmra.mxu0 %v2712
  %v2761 = vpop.f32.mrf.mxu0
  %v2762 = vadd.f32 0.0, %v2761
  %v2763 = vpop.f32.mrf.mxu0
  %2764 = vdwg.mxu0
  %v2765 = vadd.f32 %v1980, %v2723
  %v2766 = vadd.f32 %v2009, %v2736
  %v2767 = vadd.f32 %v2038, %v2749
  %v2768 = vadd.f32 %v2067, %v2762
  %v2769 = vmul.f32 %v2765, 0.5
  %v2770 = vtanh.pop %v2769
  %v2771 = vmul.f32 %v2770, 0.5
  %v2772 = vadd.f32 %v2771, 0.5
  %v2773 = vmul.f32 %v2766, 0.5
  %v2774 = vtanh.pop %v2773
  %v2775 = vmul.f32 %v2774, 0.5
  %v2776 = vadd.f32 %v2775, 0.5
  %v2777 = vtanh.pop %v2767
  %v2778 = vmul.f32 %v2768, 0.5
  %v2779 = vtanh.pop %v2778
  %v2780 = vmul.f32 %v2779, 0.5
  %v2781 = vadd.f32 %v2780, 0.5
  %v2782 = vmul.f32 %v2776, %v2709
  %v2783 = vmul.f32 %v2772, %v2777
  %v2784 = vadd.f32 %v2782, %v2783
  %v2785 = vtanh.pop %v2784
  %v2786 = vmul.f32 %v2781, %v2785
  %v2787 = vpack.c.bf16 %v2786, %v2786
  %2788 = vmatpush.bf16.msra.mxu0 %v2227
  %2789 = vmatpush.bf16.msra.mxu0 %v2223
  %2790 = vmatpush.bf16.msra.mxu0 %v2219
  %2791 = vmatpush.bf16.msra.mxu0 %v2215
  %2792 = vmatpush.bf16.msra.mxu0 %v2211
  %2793 = vmatpush.bf16.msra.mxu0 %v2207
  %2794 = vmatpush.bf16.msra.mxu0 %v2203
  %2795 = vmatpush.bf16.msra.mxu0 %v2199
  %2796 = vmatmul.bf16.gmra.mxu0 %v2787
  %v2797 = vpop.f32.mrf.mxu0
  %v2798 = vadd.f32 0.0, %v2797
  %v2799 = vpop.f32.mrf.mxu0
  %2800 = vdwg.mxu0
  %2801 = vmatpush.bf16.msra.mxu0 %v2228
  %2802 = vmatpush.bf16.msra.mxu0 %v2224
  %2803 = vmatpush.bf16.msra.mxu0 %v2220
  %2804 = vmatpush.bf16.msra.mxu0 %v2216
  %2805 = vmatpush.bf16.msra.mxu0 %v2212
  %2806 = vmatpush.bf16.msra.mxu0 %v2208
  %2807 = vmatpush.bf16.msra.mxu0 %v2204
  %2808 = vmatpush.bf16.msra.mxu0 %v2200
  %2809 = vmatmul.bf16.gmra.mxu0 %v2787
  %v2810 = vpop.f32.mrf.mxu0
  %v2811 = vadd.f32 0.0, %v2810
  %v2812 = vpop.f32.mrf.mxu0
  %2813 = vdwg.mxu0
  %2814 = vmatpush.bf16.msra.mxu0 %v2229
  %2815 = vmatpush.bf16.msra.mxu0 %v2225
  %2816 = vmatpush.bf16.msra.mxu0 %v2221
  %2817 = vmatpush.bf16.msra.mxu0 %v2217
  %2818 = vmatpush.bf16.msra.mxu0 %v2213
  %2819 = vmatpush.bf16.msra.mxu0 %v2209
  %2820 = vmatpush.bf16.msra.mxu0 %v2205
  %2821 = vmatpush.bf16.msra.mxu0 %v2201
  %2822 = vmatmul.bf16.gmra.mxu0 %v2787
  %v2823 = vpop.f32.mrf.mxu0
  %v2824 = vadd.f32 0.0, %v2823
  %v2825 = vpop.f32.mrf.mxu0
  %2826 = vdwg.mxu0
  %2827 = vmatpush.bf16.msra.mxu0 %v2230
  %2828 = vmatpush.bf16.msra.mxu0 %v2226
  %2829 = vmatpush.bf16.msra.mxu0 %v2222
  %2830 = vmatpush.bf16.msra.mxu0 %v2218
  %2831 = vmatpush.bf16.msra.mxu0 %v2214
  %2832 = vmatpush.bf16.msra.mxu0 %v2210
  %2833 = vmatpush.bf16.msra.mxu0 %v2206
  %2834 = vmatpush.bf16.msra.mxu0 %v2202
  %2835 = vmatmul.bf16.gmra.mxu0 %v2787
  %v2836 = vpop.f32.mrf.mxu0
  %v2837 = vadd.f32 0.0, %v2836
  %v2838 = vpop.f32.mrf.mxu0
  %2839 = vdwg.mxu0
  %v2840 = vadd.f32 %v1982, %v2798
  %v2841 = vadd.f32 %v2011, %v2811
  %v2842 = vadd.f32 %v2040, %v2824
  %v2843 = vadd.f32 %v2069, %v2837
  %v2844 = vmul.f32 %v2840, 0.5
  %v2845 = vtanh.pop %v2844
  %v2846 = vmul.f32 %v2845, 0.5
  %v2847 = vadd.f32 %v2846, 0.5
  %v2848 = vmul.f32 %v2841, 0.5
  %v2849 = vtanh.pop %v2848
  %v2850 = vmul.f32 %v2849, 0.5
  %v2851 = vadd.f32 %v2850, 0.5
  %v2852 = vtanh.pop %v2842
  %v2853 = vmul.f32 %v2843, 0.5
  %v2854 = vtanh.pop %v2853
  %v2855 = vmul.f32 %v2854, 0.5
  %v2856 = vadd.f32 %v2855, 0.5
  %v2857 = vmul.f32 %v2851, %v2784
  %v2858 = vmul.f32 %v2847, %v2852
  %v2859 = vadd.f32 %v2857, %v2858
  %v2860 = vtanh.pop %v2859
  %v2861 = vmul.f32 %v2856, %v2860
  %s2862 = smul.u32 4, 16
  %s2863 = smul.u32 %s2862, 8
  %s2864 = sshll.u32 %s2863, 4
  %2865 = dma.done [#allocation5], %s2864
  %v2866 = vld [vmem:[#allocation2] sm:$0xff]
  %v2867 = vld [vmem:[#allocation2 + $0x8] sm:$0xff]
  %v2868 = vld [vmem:[#allocation2 + $0x10] sm:$0xff]
  %v2869 = vld [vmem:[#allocation2 + $0x18] sm:$0xff]
  %v2870 = vld [vmem:[#allocation2 + $0x20] sm:$0xff]
  %v2871 = vld [vmem:[#allocation2 + $0x28] sm:$0xff]
  %v2872 = vld [vmem:[#allocation2 + $0x30] sm:$0xff]
  %v2873 = vld [vmem:[#allocation2 + $0x38] sm:$0xff]
  %v2874 = vld [vmem:[#allocation2 + $0x40] sm:$0xff]
  %v2875 = vld [vmem:[#allocation2 + $0x48] sm:$0xff]
  %v2876 = vld [vmem:[#allocation2 + $0x50] sm:$0xff]
  %v2877 = vld [vmem:[#allocation2 + $0x58] sm:$0xff]
  %v2878 = vld [vmem:[#allocation2 + $0x60] sm:$0xff]
  %v2879 = vld [vmem:[#allocation2 + $0x68] sm:$0xff]
  %v2880 = vld [vmem:[#allocation2 + $0x70] sm:$0xff]
  %v2881 = vld [vmem:[#allocation2 + $0x78] sm:$0xff]
  %v2882 = vld [vmem:[#allocation2 + $0x80] sm:$0xff]
  %v2883 = vld [vmem:[#allocation2 + $0x88] sm:$0xff]
  %v2884 = vld [vmem:[#allocation2 + $0x90] sm:$0xff]
  %v2885 = vld [vmem:[#allocation2 + $0x98] sm:$0xff]
  %v2886 = vld [vmem:[#allocation2 + $0xa0] sm:$0xff]
  %v2887 = vld [vmem:[#allocation2 + $0xa8] sm:$0xff]
  %v2888 = vld [vmem:[#allocation2 + $0xb0] sm:$0xff]
  %v2889 = vld [vmem:[#allocation2 + $0xb8] sm:$0xff]
  %v2890 = vld [vmem:[#allocation2 + $0xc0] sm:$0xff]
  %v2891 = vld [vmem:[#allocation2 + $0xc8] sm:$0xff]
  %v2892 = vld [vmem:[#allocation2 + $0xd0] sm:$0xff]
  %v2893 = vld [vmem:[#allocation2 + $0xd8] sm:$0xff]
  %v2894 = vld [vmem:[#allocation2 + $0xe0] sm:$0xff]
  %v2895 = vld [vmem:[#allocation2 + $0xe8] sm:$0xff]
  %v2896 = vld [vmem:[#allocation2 + $0xf0] sm:$0xff]
  %v2897 = vld [vmem:[#allocation2 + $0xf8] sm:$0xff]
  %v2898 = vld [vmem:[#allocation2 + $0x100] sm:$0xff]
  %v2899 = vld [vmem:[#allocation2 + $0x108] sm:$0xff]
  %v2900 = vld [vmem:[#allocation2 + $0x110] sm:$0xff]
  %v2901 = vld [vmem:[#allocation2 + $0x118] sm:$0xff]
  %v2902 = vld [vmem:[#allocation2 + $0x120] sm:$0xff]
  %v2903 = vld [vmem:[#allocation2 + $0x128] sm:$0xff]
  %v2904 = vld [vmem:[#allocation2 + $0x130] sm:$0xff]
  %v2905 = vld [vmem:[#allocation2 + $0x138] sm:$0xff]
  %v2906 = vld [vmem:[#allocation2 + $0x140] sm:$0xff]
  %v2907 = vld [vmem:[#allocation2 + $0x148] sm:$0xff]
  %v2908 = vld [vmem:[#allocation2 + $0x150] sm:$0xff]
  %v2909 = vld [vmem:[#allocation2 + $0x158] sm:$0xff]
  %v2910 = vld [vmem:[#allocation2 + $0x160] sm:$0xff]
  %v2911 = vld [vmem:[#allocation2 + $0x168] sm:$0xff]
  %v2912 = vld [vmem:[#allocation2 + $0x170] sm:$0xff]
  %v2913 = vld [vmem:[#allocation2 + $0x178] sm:$0xff]
  %v2914 = vld [vmem:[#allocation2 + $0x180] sm:$0xff]
  %v2915 = vld [vmem:[#allocation2 + $0x188] sm:$0xff]
  %v2916 = vld [vmem:[#allocation2 + $0x190] sm:$0xff]
  %v2917 = vld [vmem:[#allocation2 + $0x198] sm:$0xff]
  %v2918 = vld [vmem:[#allocation2 + $0x1a0] sm:$0xff]
  %v2919 = vld [vmem:[#allocation2 + $0x1a8] sm:$0xff]
  %v2920 = vld [vmem:[#allocation2 + $0x1b0] sm:$0xff]
  %v2921 = vld [vmem:[#allocation2 + $0x1b8] sm:$0xff]
  %v2922 = vld [vmem:[#allocation2 + $0x1c0] sm:$0xff]
  %v2923 = vld [vmem:[#allocation2 + $0x1c8] sm:$0xff]
  %v2924 = vld [vmem:[#allocation2 + $0x1d0] sm:$0xff]
  %v2925 = vld [vmem:[#allocation2 + $0x1d8] sm:$0xff]
  %v2926 = vld [vmem:[#allocation2 + $0x1e0] sm:$0xff]
  %v2927 = vld [vmem:[#allocation2 + $0x1e8] sm:$0xff]
  %v2928 = vld [vmem:[#allocation2 + $0x1f0] sm:$0xff]
  %v2929 = vld [vmem:[#allocation2 + $0x1f8] sm:$0xff]
  %v2930 = vpack.c.bf16 %v2861, %v2861
  %v2931 = vld [vmem:[%s9] sm:$0xff]
  %v2933 = vperm.slane %v2931, 0
  %v2934 = vperm.slane %v2931, 1
  %v2935 = vperm.slane %v2931, 2
  %v2936 = vperm.slane %v2931, 3
  %v2937 = vperm.slane %v2931, 4
  %v2938 = vperm.slane %v2931, 5
  %v2939 = vperm.slane %v2931, 6
  %v2940 = vperm.slane %v2931, 7
  %v3013 = vunpack.c.l.b16 %v2866
  %v3014 = vunpack.c.h.b16 %v2866
  %v3015 = vunpack.c.l.b16 %v2867
  %v3016 = vunpack.c.h.b16 %v2867
  %v3017 = vunpack.c.l.b16 %v2868
  %v3018 = vunpack.c.h.b16 %v2868
  %v3019 = vunpack.c.l.b16 %v2869
  %v3020 = vunpack.c.h.b16 %v2869
  %v3021 = vunpack.c.l.b16 %v2870
  %v3022 = vunpack.c.h.b16 %v2870
  %v3023 = vunpack.c.l.b16 %v2871
  %v3024 = vunpack.c.h.b16 %v2871
  %v3025 = vunpack.c.l.b16 %v2872
  %v3026 = vunpack.c.h.b16 %v2872
  %v3027 = vunpack.c.l.b16 %v2873
  %v3028 = vunpack.c.h.b16 %v2873
  %v3029 = vunpack.c.l.b16 %v2874
  %v3030 = vunpack.c.h.b16 %v2874
  %v3031 = vunpack.c.l.b16 %v2875
  %v3032 = vunpack.c.h.b16 %v2875
  %v3033 = vunpack.c.l.b16 %v2876
  %v3034 = vunpack.c.h.b16 %v2876
  %v3035 = vunpack.c.l.b16 %v2877
  %v3036 = vunpack.c.h.b16 %v2877
  %v3037 = vunpack.c.l.b16 %v2878
  %v3038 = vunpack.c.h.b16 %v2878
  %v3039 = vunpack.c.l.b16 %v2879
  %v3040 = vunpack.c.h.b16 %v2879
  %v3041 = vunpack.c.l.b16 %v2880
  %v3042 = vunpack.c.h.b16 %v2880
  %v3043 = vunpack.c.l.b16 %v2881
  %v3044 = vunpack.c.h.b16 %v2881
  %v3045 = vunpack.c.l.b16 %v2882
  %v3046 = vunpack.c.h.b16 %v2882
  %v3047 = vunpack.c.l.b16 %v2883
  %v3048 = vunpack.c.h.b16 %v2883
  %v3049 = vunpack.c.l.b16 %v2884
  %v3050 = vunpack.c.h.b16 %v2884
  %v3051 = vunpack.c.l.b16 %v2885
  %v3052 = vunpack.c.h.b16 %v2885
  %v3053 = vunpack.c.l.b16 %v2886
  %v3054 = vunpack.c.h.b16 %v2886
  %v3055 = vunpack.c.l.b16 %v2887
  %v3056 = vunpack.c.h.b16 %v2887
  %v3057 = vunpack.c.l.b16 %v2888
  %v3058 = vunpack.c.h.b16 %v2888
  %v3059 = vunpack.c.l.b16 %v2889
  %v3060 = vunpack.c.h.b16 %v2889
  %v3061 = vunpack.c.l.b16 %v2890
  %v3062 = vunpack.c.h.b16 %v2890
  %v3063 = vunpack.c.l.b16 %v2891
  %v3064 = vunpack.c.h.b16 %v2891
  %v3065 = vunpack.c.l.b16 %v2892
  %v3066 = vunpack.c.h.b16 %v2892
  %v3067 = vunpack.c.l.b16 %v2893
  %v3068 = vunpack.c.h.b16 %v2893
  %v3069 = vunpack.c.l.b16 %v2894
  %v3070 = vunpack.c.h.b16 %v2894
  %v3071 = vunpack.c.l.b16 %v2895
  %v3072 = vunpack.c.h.b16 %v2895
  %v3073 = vunpack.c.l.b16 %v2896
  %v3074 = vunpack.c.h.b16 %v2896
  %v3075 = vunpack.c.l.b16 %v2897
  %v3076 = vunpack.c.h.b16 %v2897
  %v3077 = vunpack.c.l.b16 %v2898
  %v3078 = vunpack.c.h.b16 %v2898
  %v3079 = vunpack.c.l.b16 %v2899
  %v3080 = vunpack.c.h.b16 %v2899
  %v3081 = vunpack.c.l.b16 %v2900
  %v3082 = vunpack.c.h.b16 %v2900
  %v3083 = vunpack.c.l.b16 %v2901
  %v3084 = vunpack.c.h.b16 %v2901
  %v3085 = vunpack.c.l.b16 %v2902
  %v3086 = vunpack.c.h.b16 %v2902
  %v3087 = vunpack.c.l.b16 %v2903
  %v3088 = vunpack.c.h.b16 %v2903
  %v3089 = vunpack.c.l.b16 %v2904
  %v3090 = vunpack.c.h.b16 %v2904
  %v3091 = vunpack.c.l.b16 %v2905
  %v3092 = vunpack.c.h.b16 %v2905
  %v3093 = vunpack.c.l.b16 %v2906
  %v3094 = vunpack.c.h.b16 %v2906
  %v3095 = vunpack.c.l.b16 %v2907
  %v3096 = vunpack.c.h.b16 %v2907
  %v3097 = vunpack.c.l.b16 %v2908
  %v3098 = vunpack.c.h.b16 %v2908
  %v3099 = vunpack.c.l.b16 %v2909
  %v3100 = vunpack.c.h.b16 %v2909
  %v3101 = vunpack.c.l.b16 %v2910
  %v3102 = vunpack.c.h.b16 %v2910
  %v3103 = vunpack.c.l.b16 %v2911
  %v3104 = vunpack.c.h.b16 %v2911
  %v3105 = vunpack.c.l.b16 %v2912
  %v3106 = vunpack.c.h.b16 %v2912
  %v3107 = vunpack.c.l.b16 %v2913
  %v3108 = vunpack.c.h.b16 %v2913
  %v3109 = vunpack.c.l.b16 %v2914
  %v3110 = vunpack.c.h.b16 %v2914
  %v3111 = vunpack.c.l.b16 %v2915
  %v3112 = vunpack.c.h.b16 %v2915
  %v3113 = vunpack.c.l.b16 %v2916
  %v3114 = vunpack.c.h.b16 %v2916
  %v3115 = vunpack.c.l.b16 %v2917
  %v3116 = vunpack.c.h.b16 %v2917
  %v3117 = vunpack.c.l.b16 %v2918
  %v3118 = vunpack.c.h.b16 %v2918
  %v3119 = vunpack.c.l.b16 %v2919
  %v3120 = vunpack.c.h.b16 %v2919
  %v3121 = vunpack.c.l.b16 %v2920
  %v3122 = vunpack.c.h.b16 %v2920
  %v3123 = vunpack.c.l.b16 %v2921
  %v3124 = vunpack.c.h.b16 %v2921
  %v3125 = vunpack.c.l.b16 %v2922
  %v3126 = vunpack.c.h.b16 %v2922
  %v3127 = vunpack.c.l.b16 %v2923
  %v3128 = vunpack.c.h.b16 %v2923
  %v3129 = vunpack.c.l.b16 %v2924
  %v3130 = vunpack.c.h.b16 %v2924
  %v3131 = vunpack.c.l.b16 %v2925
  %v3132 = vunpack.c.h.b16 %v2925
  %v3133 = vunpack.c.l.b16 %v2926
  %v3134 = vunpack.c.h.b16 %v2926
  %v3135 = vunpack.c.l.b16 %v2927
  %v3136 = vunpack.c.h.b16 %v2927
  %v3137 = vunpack.c.l.b16 %v2928
  %v3138 = vunpack.c.h.b16 %v2928
  %v3139 = vunpack.c.l.b16 %v2929
  %v3140 = vunpack.c.h.b16 %v2929
  %v3141 = vpack.c.b16 %v3021, %v3013
  %v3142 = vpack.c.b16 %v3022, %v3014
  %v3143 = vpack.c.b16 %v3023, %v3015
  %v3144 = vpack.c.b16 %v3024, %v3016
  %v3145 = vpack.c.b16 %v3025, %v3017
  %v3146 = vpack.c.b16 %v3026, %v3018
  %v3147 = vpack.c.b16 %v3027, %v3019
  %v3148 = vpack.c.b16 %v3028, %v3020
  %v3149 = vpack.c.b16 %v3037, %v3029
  %v3150 = vpack.c.b16 %v3038, %v3030
  %v3151 = vpack.c.b16 %v3039, %v3031
  %v3152 = vpack.c.b16 %v3040, %v3032
  %v3153 = vpack.c.b16 %v3041, %v3033
  %v3154 = vpack.c.b16 %v3042, %v3034
  %v3155 = vpack.c.b16 %v3043, %v3035
  %v3156 = vpack.c.b16 %v3044, %v3036
  %v3157 = vpack.c.b16 %v3053, %v3045
  %v3158 = vpack.c.b16 %v3054, %v3046
  %v3159 = vpack.c.b16 %v3055, %v3047
  %v3160 = vpack.c.b16 %v3056, %v3048
  %v3161 = vpack.c.b16 %v3057, %v3049
  %v3162 = vpack.c.b16 %v3058, %v3050
  %v3163 = vpack.c.b16 %v3059, %v3051
  %v3164 = vpack.c.b16 %v3060, %v3052
  %v3165 = vpack.c.b16 %v3069, %v3061
  %v3166 = vpack.c.b16 %v3070, %v3062
  %v3167 = vpack.c.b16 %v3071, %v3063
  %v3168 = vpack.c.b16 %v3072, %v3064
  %v3169 = vpack.c.b16 %v3073, %v3065
  %v3170 = vpack.c.b16 %v3074, %v3066
  %v3171 = vpack.c.b16 %v3075, %v3067
  %v3172 = vpack.c.b16 %v3076, %v3068
  %v3173 = vpack.c.b16 %v3085, %v3077
  %v3174 = vpack.c.b16 %v3086, %v3078
  %v3175 = vpack.c.b16 %v3087, %v3079
  %v3176 = vpack.c.b16 %v3088, %v3080
  %v3177 = vpack.c.b16 %v3089, %v3081
  %v3178 = vpack.c.b16 %v3090, %v3082
  %v3179 = vpack.c.b16 %v3091, %v3083
  %v3180 = vpack.c.b16 %v3092, %v3084
  %v3181 = vpack.c.b16 %v3101, %v3093
  %v3182 = vpack.c.b16 %v3102, %v3094
  %v3183 = vpack.c.b16 %v3103, %v3095
  %v3184 = vpack.c.b16 %v3104, %v3096
  %v3185 = vpack.c.b16 %v3105, %v3097
  %v3186 = vpack.c.b16 %v3106, %v3098
  %v3187 = vpack.c.b16 %v3107, %v3099
  %v3188 = vpack.c.b16 %v3108, %v3100
  %v3189 = vpack.c.b16 %v3117, %v3109
  %v3190 = vpack.c.b16 %v3118, %v3110
  %v3191 = vpack.c.b16 %v3119, %v3111
  %v3192 = vpack.c.b16 %v3120, %v3112
  %v3193 = vpack.c.b16 %v3121, %v3113
  %v3194 = vpack.c.b16 %v3122, %v3114
  %v3195 = vpack.c.b16 %v3123, %v3115
  %v3196 = vpack.c.b16 %v3124, %v3116
  %v3197 = vpack.c.b16 %v3133, %v3125
  %v3198 = vpack.c.b16 %v3134, %v3126
  %v3199 = vpack.c.b16 %v3135, %v3127
  %v3200 = vpack.c.b16 %v3136, %v3128
  %v3201 = vpack.c.b16 %v3137, %v3129
  %v3202 = vpack.c.b16 %v3138, %v3130
  %v3203 = vpack.c.b16 %v3139, %v3131
  %v3204 = vpack.c.b16 %v3140, %v3132
  %3269 = vmatpush.bf16.msra.mxu0 %v3197
  %3270 = vmatpush.bf16.msra.mxu0 %v3189
  %3271 = vmatpush.bf16.msra.mxu0 %v3181
  %3272 = vmatpush.bf16.msra.mxu0 %v3173
  %3273 = vmatpush.bf16.msra.mxu0 %v3165
  %3274 = vmatpush.bf16.msra.mxu0 %v3157
  %3275 = vmatpush.bf16.msra.mxu0 %v3149
  %3276 = vmatpush.bf16.msra.mxu0 %v3141
  %3277 = vmatmul.bf16.gmra.mxu0 %v2930
  %v3278 = vpop.f32.mrf.mxu0
  %v3279 = vadd.f32 %v2933, %v3278
  %v3280 = vpop.f32.mrf.mxu0
  %3281 = vdwg.mxu0
  %3282 = vmatpush.bf16.msra.mxu0 %v3198
  %3283 = vmatpush.bf16.msra.mxu0 %v3190
  %3284 = vmatpush.bf16.msra.mxu0 %v3182
  %3285 = vmatpush.bf16.msra.mxu0 %v3174
  %3286 = vmatpush.bf16.msra.mxu0 %v3166
  %3287 = vmatpush.bf16.msra.mxu0 %v3158
  %3288 = vmatpush.bf16.msra.mxu0 %v3150
  %3289 = vmatpush.bf16.msra.mxu0 %v3142
  %3290 = vmatmul.bf16.gmra.mxu0 %v2930
  %v3291 = vpop.f32.mrf.mxu0
  %v3292 = vadd.f32 %v2934, %v3291
  %v3293 = vpop.f32.mrf.mxu0
  %3294 = vdwg.mxu0
  %3295 = vmatpush.bf16.msra.mxu0 %v3199
  %3296 = vmatpush.bf16.msra.mxu0 %v3191
  %3297 = vmatpush.bf16.msra.mxu0 %v3183
  %3298 = vmatpush.bf16.msra.mxu0 %v3175
  %3299 = vmatpush.bf16.msra.mxu0 %v3167
  %3300 = vmatpush.bf16.msra.mxu0 %v3159
  %3301 = vmatpush.bf16.msra.mxu0 %v3151
  %3302 = vmatpush.bf16.msra.mxu0 %v3143
  %3303 = vmatmul.bf16.gmra.mxu0 %v2930
  %v3304 = vpop.f32.mrf.mxu0
  %v3305 = vadd.f32 %v2935, %v3304
  %v3306 = vpop.f32.mrf.mxu0
  %3307 = vdwg.mxu0
  %3308 = vmatpush.bf16.msra.mxu0 %v3200
  %3309 = vmatpush.bf16.msra.mxu0 %v3192
  %3310 = vmatpush.bf16.msra.mxu0 %v3184
  %3311 = vmatpush.bf16.msra.mxu0 %v3176
  %3312 = vmatpush.bf16.msra.mxu0 %v3168
  %3313 = vmatpush.bf16.msra.mxu0 %v3160
  %3314 = vmatpush.bf16.msra.mxu0 %v3152
  %3315 = vmatpush.bf16.msra.mxu0 %v3144
  %3316 = vmatmul.bf16.gmra.mxu0 %v2930
  %v3317 = vpop.f32.mrf.mxu0
  %v3318 = vadd.f32 %v2936, %v3317
  %v3319 = vpop.f32.mrf.mxu0
  %3320 = vdwg.mxu0
  %3321 = vmatpush.bf16.msra.mxu0 %v3201
  %3322 = vmatpush.bf16.msra.mxu0 %v3193
  %3323 = vmatpush.bf16.msra.mxu0 %v3185
  %3324 = vmatpush.bf16.msra.mxu0 %v3177
  %3325 = vmatpush.bf16.msra.mxu0 %v3169
  %3326 = vmatpush.bf16.msra.mxu0 %v3161
  %3327 = vmatpush.bf16.msra.mxu0 %v3153
  %3328 = vmatpush.bf16.msra.mxu0 %v3145
  %3329 = vmatmul.bf16.gmra.mxu0 %v2930
  %v3330 = vpop.f32.mrf.mxu0
  %v3331 = vadd.f32 %v2937, %v3330
  %v3332 = vpop.f32.mrf.mxu0
  %3333 = vdwg.mxu0
  %3334 = vmatpush.bf16.msra.mxu0 %v3202
  %3335 = vmatpush.bf16.msra.mxu0 %v3194
  %3336 = vmatpush.bf16.msra.mxu0 %v3186
  %3337 = vmatpush.bf16.msra.mxu0 %v3178
  %3338 = vmatpush.bf16.msra.mxu0 %v3170
  %3339 = vmatpush.bf16.msra.mxu0 %v3162
  %3340 = vmatpush.bf16.msra.mxu0 %v3154
  %3341 = vmatpush.bf16.msra.mxu0 %v3146
  %3342 = vmatmul.bf16.gmra.mxu0 %v2930
  %v3343 = vpop.f32.mrf.mxu0
  %v3344 = vadd.f32 %v2938, %v3343
  %v3345 = vpop.f32.mrf.mxu0
  %3346 = vdwg.mxu0
  %3347 = vmatpush.bf16.msra.mxu0 %v3203
  %3348 = vmatpush.bf16.msra.mxu0 %v3195
  %3349 = vmatpush.bf16.msra.mxu0 %v3187
  %3350 = vmatpush.bf16.msra.mxu0 %v3179
  %3351 = vmatpush.bf16.msra.mxu0 %v3171
  %3352 = vmatpush.bf16.msra.mxu0 %v3163
  %3353 = vmatpush.bf16.msra.mxu0 %v3155
  %3354 = vmatpush.bf16.msra.mxu0 %v3147
  %3355 = vmatmul.bf16.gmra.mxu0 %v2930
  %v3356 = vpop.f32.mrf.mxu0
  %v3357 = vadd.f32 %v2939, %v3356
  %v3358 = vpop.f32.mrf.mxu0
  %3359 = vdwg.mxu0
  %3360 = vmatpush.bf16.msra.mxu0 %v3204
  %3361 = vmatpush.bf16.msra.mxu0 %v3196
  %3362 = vmatpush.bf16.msra.mxu0 %v3188
  %3363 = vmatpush.bf16.msra.mxu0 %v3180
  %3364 = vmatpush.bf16.msra.mxu0 %v3172
  %3365 = vmatpush.bf16.msra.mxu0 %v3164
  %3366 = vmatpush.bf16.msra.mxu0 %v3156
  %3367 = vmatpush.bf16.msra.mxu0 %v3148
  %3368 = vmatmul.bf16.gmra.mxu0 %v2930
  %v3369 = vpop.f32.mrf.mxu0
  %v3370 = vadd.f32 %v2940, %v3369
  %v3371 = vpop.f32.mrf.mxu0
  %3372 = vdwg.mxu0
  %s3373 = smul.u32 4, 64
  %s3374 = smul.u32 %s3373, 8
  %s3375 = sshll.u32 %s3374, 4
  %3376 = dma.done %s186, %s3375
  %v3377 = vld [vmem:[#allocation3] sm:$0xff]
  %v3378 = vld [vmem:[#allocation3 + $0x8] sm:$0xff]
  %v3379 = vld [vmem:[#allocation3 + $0x10] sm:$0xff]
  %v3380 = vld [vmem:[#allocation3 + $0x18] sm:$0xff]
  %v3381 = vld [vmem:[#allocation3 + $0x20] sm:$0xff]
  %v3382 = vld [vmem:[#allocation3 + $0x28] sm:$0xff]
  %v3383 = vld [vmem:[#allocation3 + $0x30] sm:$0xff]
  %v3384 = vld [vmem:[#allocation3 + $0x38] sm:$0xff]
  %v3385 = vld [vmem:[#allocation3 + $0x40] sm:$0xff]
  %v3386 = vld [vmem:[#allocation3 + $0x48] sm:$0xff]
  %v3387 = vld [vmem:[#allocation3 + $0x50] sm:$0xff]
  %v3388 = vld [vmem:[#allocation3 + $0x58] sm:$0xff]
  %v3389 = vld [vmem:[#allocation3 + $0x60] sm:$0xff]
  %v3390 = vld [vmem:[#allocation3 + $0x68] sm:$0xff]
  %v3391 = vld [vmem:[#allocation3 + $0x70] sm:$0xff]
  %v3392 = vld [vmem:[#allocation3 + $0x78] sm:$0xff]
  %v3393 = vld [vmem:[#allocation3 + $0x80] sm:$0xff]
  %v3394 = vld [vmem:[#allocation3 + $0x88] sm:$0xff]
  %v3395 = vld [vmem:[#allocation3 + $0x90] sm:$0xff]
  %v3396 = vld [vmem:[#allocation3 + $0x98] sm:$0xff]
  %v3397 = vld [vmem:[#allocation3 + $0xa0] sm:$0xff]
  %v3398 = vld [vmem:[#allocation3 + $0xa8] sm:$0xff]
  %v3399 = vld [vmem:[#allocation3 + $0xb0] sm:$0xff]
  %v3400 = vld [vmem:[#allocation3 + $0xb8] sm:$0xff]
  %v3401 = vld [vmem:[#allocation3 + $0xc0] sm:$0xff]
  %v3402 = vld [vmem:[#allocation3 + $0xc8] sm:$0xff]
  %v3403 = vld [vmem:[#allocation3 + $0xd0] sm:$0xff]
  %v3404 = vld [vmem:[#allocation3 + $0xd8] sm:$0xff]
  %v3405 = vld [vmem:[#allocation3 + $0xe0] sm:$0xff]
  %v3406 = vld [vmem:[#allocation3 + $0xe8] sm:$0xff]
  %v3407 = vld [vmem:[#allocation3 + $0xf0] sm:$0xff]
  %v3408 = vld [vmem:[#allocation3 + $0xf8] sm:$0xff]
  %v3409 = vld [vmem:[#allocation3 + $0x100] sm:$0xff]
  %v3410 = vld [vmem:[#allocation3 + $0x108] sm:$0xff]
  %v3411 = vld [vmem:[#allocation3 + $0x110] sm:$0xff]
  %v3412 = vld [vmem:[#allocation3 + $0x118] sm:$0xff]
  %v3413 = vld [vmem:[#allocation3 + $0x120] sm:$0xff]
  %v3414 = vld [vmem:[#allocation3 + $0x128] sm:$0xff]
  %v3415 = vld [vmem:[#allocation3 + $0x130] sm:$0xff]
  %v3416 = vld [vmem:[#allocation3 + $0x138] sm:$0xff]
  %v3417 = vld [vmem:[#allocation3 + $0x140] sm:$0xff]
  %v3418 = vld [vmem:[#allocation3 + $0x148] sm:$0xff]
  %v3419 = vld [vmem:[#allocation3 + $0x150] sm:$0xff]
  %v3420 = vld [vmem:[#allocation3 + $0x158] sm:$0xff]
  %v3421 = vld [vmem:[#allocation3 + $0x160] sm:$0xff]
  %v3422 = vld [vmem:[#allocation3 + $0x168] sm:$0xff]
  %v3423 = vld [vmem:[#allocation3 + $0x170] sm:$0xff]
  %v3424 = vld [vmem:[#allocation3 + $0x178] sm:$0xff]
  %v3425 = vld [vmem:[#allocation3 + $0x180] sm:$0xff]
  %v3426 = vld [vmem:[#allocation3 + $0x188] sm:$0xff]
  %v3427 = vld [vmem:[#allocation3 + $0x190] sm:$0xff]
  %v3428 = vld [vmem:[#allocation3 + $0x198] sm:$0xff]
  %v3429 = vld [vmem:[#allocation3 + $0x1a0] sm:$0xff]
  %v3430 = vld [vmem:[#allocation3 + $0x1a8] sm:$0xff]
  %v3431 = vld [vmem:[#allocation3 + $0x1b0] sm:$0xff]
  %v3432 = vld [vmem:[#allocation3 + $0x1b8] sm:$0xff]
  %v3433 = vld [vmem:[#allocation3 + $0x1c0] sm:$0xff]
  %v3434 = vld [vmem:[#allocation3 + $0x1c8] sm:$0xff]
  %v3435 = vld [vmem:[#allocation3 + $0x1d0] sm:$0xff]
  %v3436 = vld [vmem:[#allocation3 + $0x1d8] sm:$0xff]
  %v3437 = vld [vmem:[#allocation3 + $0x1e0] sm:$0xff]
  %v3438 = vld [vmem:[#allocation3 + $0x1e8] sm:$0xff]
  %v3439 = vld [vmem:[#allocation3 + $0x1f0] sm:$0xff]
  %v3440 = vld [vmem:[#allocation3 + $0x1f8] sm:$0xff]
  %v3441 = vld [vmem:[#allocation3 + $0x200] sm:$0xff]
  %v3442 = vld [vmem:[#allocation3 + $0x208] sm:$0xff]
  %v3443 = vld [vmem:[#allocation3 + $0x210] sm:$0xff]
  %v3444 = vld [vmem:[#allocation3 + $0x218] sm:$0xff]
  %v3445 = vld [vmem:[#allocation3 + $0x220] sm:$0xff]
  %v3446 = vld [vmem:[#allocation3 + $0x228] sm:$0xff]
  %v3447 = vld [vmem:[#allocation3 + $0x230] sm:$0xff]
  %v3448 = vld [vmem:[#allocation3 + $0x238] sm:$0xff]
  %v3449 = vld [vmem:[#allocation3 + $0x240] sm:$0xff]
  %v3450 = vld [vmem:[#allocation3 + $0x248] sm:$0xff]
  %v3451 = vld [vmem:[#allocation3 + $0x250] sm:$0xff]
  %v3452 = vld [vmem:[#allocation3 + $0x258] sm:$0xff]
  %v3453 = vld [vmem:[#allocation3 + $0x260] sm:$0xff]
  %v3454 = vld [vmem:[#allocation3 + $0x268] sm:$0xff]
  %v3455 = vld [vmem:[#allocation3 + $0x270] sm:$0xff]
  %v3456 = vld [vmem:[#allocation3 + $0x278] sm:$0xff]
  %v3457 = vld [vmem:[#allocation3 + $0x280] sm:$0xff]
  %v3458 = vld [vmem:[#allocation3 + $0x288] sm:$0xff]
  %v3459 = vld [vmem:[#allocation3 + $0x290] sm:$0xff]
  %v3460 = vld [vmem:[#allocation3 + $0x298] sm:$0xff]
  %v3461 = vld [vmem:[#allocation3 + $0x2a0] sm:$0xff]
  %v3462 = vld [vmem:[#allocation3 + $0x2a8] sm:$0xff]
  %v3463 = vld [vmem:[#allocation3 + $0x2b0] sm:$0xff]
  %v3464 = vld [vmem:[#allocation3 + $0x2b8] sm:$0xff]
  %v3465 = vld [vmem:[#allocation3 + $0x2c0] sm:$0xff]
  %v3466 = vld [vmem:[#allocation3 + $0x2c8] sm:$0xff]
  %v3467 = vld [vmem:[#allocation3 + $0x2d0] sm:$0xff]
  %v3468 = vld [vmem:[#allocation3 + $0x2d8] sm:$0xff]
  %v3469 = vld [vmem:[#allocation3 + $0x2e0] sm:$0xff]
  %v3470 = vld [vmem:[#allocation3 + $0x2e8] sm:$0xff]
  %v3471 = vld [vmem:[#allocation3 + $0x2f0] sm:$0xff]
  %v3472 = vld [vmem:[#allocation3 + $0x2f8] sm:$0xff]
  %v3473 = vld [vmem:[#allocation3 + $0x300] sm:$0xff]
  %v3474 = vld [vmem:[#allocation3 + $0x308] sm:$0xff]
  %v3475 = vld [vmem:[#allocation3 + $0x310] sm:$0xff]
  %v3476 = vld [vmem:[#allocation3 + $0x318] sm:$0xff]
  %v3477 = vld [vmem:[#allocation3 + $0x320] sm:$0xff]
  %v3478 = vld [vmem:[#allocation3 + $0x328] sm:$0xff]
  %v3479 = vld [vmem:[#allocation3 + $0x330] sm:$0xff]
  %v3480 = vld [vmem:[#allocation3 + $0x338] sm:$0xff]
  %v3481 = vld [vmem:[#allocation3 + $0x340] sm:$0xff]
  %v3482 = vld [vmem:[#allocation3 + $0x348] sm:$0xff]
  %v3483 = vld [vmem:[#allocation3 + $0x350] sm:$0xff]
  %v3484 = vld [vmem:[#allocation3 + $0x358] sm:$0xff]
  %v3485 = vld [vmem:[#allocation3 + $0x360] sm:$0xff]
  %v3486 = vld [vmem:[#allocation3 + $0x368] sm:$0xff]
  %v3487 = vld [vmem:[#allocation3 + $0x370] sm:$0xff]
  %v3488 = vld [vmem:[#allocation3 + $0x378] sm:$0xff]
  %v3489 = vld [vmem:[#allocation3 + $0x380] sm:$0xff]
  %v3490 = vld [vmem:[#allocation3 + $0x388] sm:$0xff]
  %v3491 = vld [vmem:[#allocation3 + $0x390] sm:$0xff]
  %v3492 = vld [vmem:[#allocation3 + $0x398] sm:$0xff]
  %v3493 = vld [vmem:[#allocation3 + $0x3a0] sm:$0xff]
  %v3494 = vld [vmem:[#allocation3 + $0x3a8] sm:$0xff]
  %v3495 = vld [vmem:[#allocation3 + $0x3b0] sm:$0xff]
  %v3496 = vld [vmem:[#allocation3 + $0x3b8] sm:$0xff]
  %v3497 = vld [vmem:[#allocation3 + $0x3c0] sm:$0xff]
  %v3498 = vld [vmem:[#allocation3 + $0x3c8] sm:$0xff]
  %v3499 = vld [vmem:[#allocation3 + $0x3d0] sm:$0xff]
  %v3500 = vld [vmem:[#allocation3 + $0x3d8] sm:$0xff]
  %v3501 = vld [vmem:[#allocation3 + $0x3e0] sm:$0xff]
  %v3502 = vld [vmem:[#allocation3 + $0x3e8] sm:$0xff]
  %v3503 = vld [vmem:[#allocation3 + $0x3f0] sm:$0xff]
  %v3504 = vld [vmem:[#allocation3 + $0x3f8] sm:$0xff]
  %v3505 = vld [vmem:[#allocation3 + $0x400] sm:$0xff]
  %v3506 = vld [vmem:[#allocation3 + $0x408] sm:$0xff]
  %v3507 = vld [vmem:[#allocation3 + $0x410] sm:$0xff]
  %v3508 = vld [vmem:[#allocation3 + $0x418] sm:$0xff]
  %v3509 = vld [vmem:[#allocation3 + $0x420] sm:$0xff]
  %v3510 = vld [vmem:[#allocation3 + $0x428] sm:$0xff]
  %v3511 = vld [vmem:[#allocation3 + $0x430] sm:$0xff]
  %v3512 = vld [vmem:[#allocation3 + $0x438] sm:$0xff]
  %v3513 = vld [vmem:[#allocation3 + $0x440] sm:$0xff]
  %v3514 = vld [vmem:[#allocation3 + $0x448] sm:$0xff]
  %v3515 = vld [vmem:[#allocation3 + $0x450] sm:$0xff]
  %v3516 = vld [vmem:[#allocation3 + $0x458] sm:$0xff]
  %v3517 = vld [vmem:[#allocation3 + $0x460] sm:$0xff]
  %v3518 = vld [vmem:[#allocation3 + $0x468] sm:$0xff]
  %v3519 = vld [vmem:[#allocation3 + $0x470] sm:$0xff]
  %v3520 = vld [vmem:[#allocation3 + $0x478] sm:$0xff]
  %v3521 = vld [vmem:[#allocation3 + $0x480] sm:$0xff]
  %v3522 = vld [vmem:[#allocation3 + $0x488] sm:$0xff]
  %v3523 = vld [vmem:[#allocation3 + $0x490] sm:$0xff]
  %v3524 = vld [vmem:[#allocation3 + $0x498] sm:$0xff]
  %v3525 = vld [vmem:[#allocation3 + $0x4a0] sm:$0xff]
  %v3526 = vld [vmem:[#allocation3 + $0x4a8] sm:$0xff]
  %v3527 = vld [vmem:[#allocation3 + $0x4b0] sm:$0xff]
  %v3528 = vld [vmem:[#allocation3 + $0x4b8] sm:$0xff]
  %v3529 = vld [vmem:[#allocation3 + $0x4c0] sm:$0xff]
  %v3530 = vld [vmem:[#allocation3 + $0x4c8] sm:$0xff]
  %v3531 = vld [vmem:[#allocation3 + $0x4d0] sm:$0xff]
  %v3532 = vld [vmem:[#allocation3 + $0x4d8] sm:$0xff]
  %v3533 = vld [vmem:[#allocation3 + $0x4e0] sm:$0xff]
  %v3534 = vld [vmem:[#allocation3 + $0x4e8] sm:$0xff]
  %v3535 = vld [vmem:[#allocation3 + $0x4f0] sm:$0xff]
  %v3536 = vld [vmem:[#allocation3 + $0x4f8] sm:$0xff]
  %v3537 = vld [vmem:[#allocation3 + $0x500] sm:$0xff]
  %v3538 = vld [vmem:[#allocation3 + $0x508] sm:$0xff]
  %v3539 = vld [vmem:[#allocation3 + $0x510] sm:$0xff]
  %v3540 = vld [vmem:[#allocation3 + $0x518] sm:$0xff]
  %v3541 = vld [vmem:[#allocation3 + $0x520] sm:$0xff]
  %v3542 = vld [vmem:[#allocation3 + $0x528] sm:$0xff]
  %v3543 = vld [vmem:[#allocation3 + $0x530] sm:$0xff]
  %v3544 = vld [vmem:[#allocation3 + $0x538] sm:$0xff]
  %v3545 = vld [vmem:[#allocation3 + $0x540] sm:$0xff]
  %v3546 = vld [vmem:[#allocation3 + $0x548] sm:$0xff]
  %v3547 = vld [vmem:[#allocation3 + $0x550] sm:$0xff]
  %v3548 = vld [vmem:[#allocation3 + $0x558] sm:$0xff]
  %v3549 = vld [vmem:[#allocation3 + $0x560] sm:$0xff]
  %v3550 = vld [vmem:[#allocation3 + $0x568] sm:$0xff]
  %v3551 = vld [vmem:[#allocation3 + $0x570] sm:$0xff]
  %v3552 = vld [vmem:[#allocation3 + $0x578] sm:$0xff]
  %v3553 = vld [vmem:[#allocation3 + $0x580] sm:$0xff]
  %v3554 = vld [vmem:[#allocation3 + $0x588] sm:$0xff]
  %v3555 = vld [vmem:[#allocation3 + $0x590] sm:$0xff]
  %v3556 = vld [vmem:[#allocation3 + $0x598] sm:$0xff]
  %v3557 = vld [vmem:[#allocation3 + $0x5a0] sm:$0xff]
  %v3558 = vld [vmem:[#allocation3 + $0x5a8] sm:$0xff]
  %v3559 = vld [vmem:[#allocation3 + $0x5b0] sm:$0xff]
  %v3560 = vld [vmem:[#allocation3 + $0x5b8] sm:$0xff]
  %v3561 = vld [vmem:[#allocation3 + $0x5c0] sm:$0xff]
  %v3562 = vld [vmem:[#allocation3 + $0x5c8] sm:$0xff]
  %v3563 = vld [vmem:[#allocation3 + $0x5d0] sm:$0xff]
  %v3564 = vld [vmem:[#allocation3 + $0x5d8] sm:$0xff]
  %v3565 = vld [vmem:[#allocation3 + $0x5e0] sm:$0xff]
  %v3566 = vld [vmem:[#allocation3 + $0x5e8] sm:$0xff]
  %v3567 = vld [vmem:[#allocation3 + $0x5f0] sm:$0xff]
  %v3568 = vld [vmem:[#allocation3 + $0x5f8] sm:$0xff]
  %v3569 = vld [vmem:[#allocation3 + $0x600] sm:$0xff]
  %v3570 = vld [vmem:[#allocation3 + $0x608] sm:$0xff]
  %v3571 = vld [vmem:[#allocation3 + $0x610] sm:$0xff]
  %v3572 = vld [vmem:[#allocation3 + $0x618] sm:$0xff]
  %v3573 = vld [vmem:[#allocation3 + $0x620] sm:$0xff]
  %v3574 = vld [vmem:[#allocation3 + $0x628] sm:$0xff]
  %v3575 = vld [vmem:[#allocation3 + $0x630] sm:$0xff]
  %v3576 = vld [vmem:[#allocation3 + $0x638] sm:$0xff]
  %v3577 = vld [vmem:[#allocation3 + $0x640] sm:$0xff]
  %v3578 = vld [vmem:[#allocation3 + $0x648] sm:$0xff]
  %v3579 = vld [vmem:[#allocation3 + $0x650] sm:$0xff]
  %v3580 = vld [vmem:[#allocation3 + $0x658] sm:$0xff]
  %v3581 = vld [vmem:[#allocation3 + $0x660] sm:$0xff]
  %v3582 = vld [vmem:[#allocation3 + $0x668] sm:$0xff]
  %v3583 = vld [vmem:[#allocation3 + $0x670] sm:$0xff]
  %v3584 = vld [vmem:[#allocation3 + $0x678] sm:$0xff]
  %v3585 = vld [vmem:[#allocation3 + $0x680] sm:$0xff]
  %v3586 = vld [vmem:[#allocation3 + $0x688] sm:$0xff]
  %v3587 = vld [vmem:[#allocation3 + $0x690] sm:$0xff]
  %v3588 = vld [vmem:[#allocation3 + $0x698] sm:$0xff]
  %v3589 = vld [vmem:[#allocation3 + $0x6a0] sm:$0xff]
  %v3590 = vld [vmem:[#allocation3 + $0x6a8] sm:$0xff]
  %v3591 = vld [vmem:[#allocation3 + $0x6b0] sm:$0xff]
  %v3592 = vld [vmem:[#allocation3 + $0x6b8] sm:$0xff]
  %v3593 = vld [vmem:[#allocation3 + $0x6c0] sm:$0xff]
  %v3594 = vld [vmem:[#allocation3 + $0x6c8] sm:$0xff]
  %v3595 = vld [vmem:[#allocation3 + $0x6d0] sm:$0xff]
  %v3596 = vld [vmem:[#allocation3 + $0x6d8] sm:$0xff]
  %v3597 = vld [vmem:[#allocation3 + $0x6e0] sm:$0xff]
  %v3598 = vld [vmem:[#allocation3 + $0x6e8] sm:$0xff]
  %v3599 = vld [vmem:[#allocation3 + $0x6f0] sm:$0xff]
  %v3600 = vld [vmem:[#allocation3 + $0x6f8] sm:$0xff]
  %v3601 = vld [vmem:[#allocation3 + $0x700] sm:$0xff]
  %v3602 = vld [vmem:[#allocation3 + $0x708] sm:$0xff]
  %v3603 = vld [vmem:[#allocation3 + $0x710] sm:$0xff]
  %v3604 = vld [vmem:[#allocation3 + $0x718] sm:$0xff]
  %v3605 = vld [vmem:[#allocation3 + $0x720] sm:$0xff]
  %v3606 = vld [vmem:[#allocation3 + $0x728] sm:$0xff]
  %v3607 = vld [vmem:[#allocation3 + $0x730] sm:$0xff]
  %v3608 = vld [vmem:[#allocation3 + $0x738] sm:$0xff]
  %v3609 = vld [vmem:[#allocation3 + $0x740] sm:$0xff]
  %v3610 = vld [vmem:[#allocation3 + $0x748] sm:$0xff]
  %v3611 = vld [vmem:[#allocation3 + $0x750] sm:$0xff]
  %v3612 = vld [vmem:[#allocation3 + $0x758] sm:$0xff]
  %v3613 = vld [vmem:[#allocation3 + $0x760] sm:$0xff]
  %v3614 = vld [vmem:[#allocation3 + $0x768] sm:$0xff]
  %v3615 = vld [vmem:[#allocation3 + $0x770] sm:$0xff]
  %v3616 = vld [vmem:[#allocation3 + $0x778] sm:$0xff]
  %v3617 = vld [vmem:[#allocation3 + $0x780] sm:$0xff]
  %v3618 = vld [vmem:[#allocation3 + $0x788] sm:$0xff]
  %v3619 = vld [vmem:[#allocation3 + $0x790] sm:$0xff]
  %v3620 = vld [vmem:[#allocation3 + $0x798] sm:$0xff]
  %v3621 = vld [vmem:[#allocation3 + $0x7a0] sm:$0xff]
  %v3622 = vld [vmem:[#allocation3 + $0x7a8] sm:$0xff]
  %v3623 = vld [vmem:[#allocation3 + $0x7b0] sm:$0xff]
  %v3624 = vld [vmem:[#allocation3 + $0x7b8] sm:$0xff]
  %v3625 = vld [vmem:[#allocation3 + $0x7c0] sm:$0xff]
  %v3626 = vld [vmem:[#allocation3 + $0x7c8] sm:$0xff]
  %v3627 = vld [vmem:[#allocation3 + $0x7d0] sm:$0xff]
  %v3628 = vld [vmem:[#allocation3 + $0x7d8] sm:$0xff]
  %v3629 = vld [vmem:[#allocation3 + $0x7e0] sm:$0xff]
  %v3630 = vld [vmem:[#allocation3 + $0x7e8] sm:$0xff]
  %v3631 = vld [vmem:[#allocation3 + $0x7f0] sm:$0xff]
  %v3632 = vld [vmem:[#allocation3 + $0x7f8] sm:$0xff]
  %v3633 = vpack.c.bf16 %v3279, %v3279
  %v3634 = vpack.c.bf16 %v3292, %v3292
  %v3635 = vpack.c.bf16 %v3305, %v3305
  %v3636 = vpack.c.bf16 %v3318, %v3318
  %v3637 = vld [vmem:[%s11] sm:$0xff]
  %v3639 = vperm.slane %v3637, 0
  %v3640 = vperm.slane %v3637, 1
  %v3641 = vperm.slane %v3637, 2
  %v3642 = vperm.slane %v3637, 3
  %v3643 = vperm.slane %v3637, 4
  %v3644 = vperm.slane %v3637, 5
  %v3645 = vperm.slane %v3637, 6
  %v3646 = vperm.slane %v3637, 7
  %v3911 = vunpack.c.l.b16 %v3377
  %v3912 = vunpack.c.h.b16 %v3377
  %v3913 = vunpack.c.l.b16 %v3378
  %v3914 = vunpack.c.h.b16 %v3378
  %v3915 = vunpack.c.l.b16 %v3379
  %v3916 = vunpack.c.h.b16 %v3379
  %v3917 = vunpack.c.l.b16 %v3380
  %v3918 = vunpack.c.h.b16 %v3380
  %v3919 = vunpack.c.l.b16 %v3381
  %v3920 = vunpack.c.h.b16 %v3381
  %v3921 = vunpack.c.l.b16 %v3382
  %v3922 = vunpack.c.h.b16 %v3382
  %v3923 = vunpack.c.l.b16 %v3383
  %v3924 = vunpack.c.h.b16 %v3383
  %v3925 = vunpack.c.l.b16 %v3384
  %v3926 = vunpack.c.h.b16 %v3384
  %v3927 = vunpack.c.l.b16 %v3385
  %v3928 = vunpack.c.h.b16 %v3385
  %v3929 = vunpack.c.l.b16 %v3386
  %v3930 = vunpack.c.h.b16 %v3386
  %v3931 = vunpack.c.l.b16 %v3387
  %v3932 = vunpack.c.h.b16 %v3387
  %v3933 = vunpack.c.l.b16 %v3388
  %v3934 = vunpack.c.h.b16 %v3388
  %v3935 = vunpack.c.l.b16 %v3389
  %v3936 = vunpack.c.h.b16 %v3389
  %v3937 = vunpack.c.l.b16 %v3390
  %v3938 = vunpack.c.h.b16 %v3390
  %v3939 = vunpack.c.l.b16 %v3391
  %v3940 = vunpack.c.h.b16 %v3391
  %v3941 = vunpack.c.l.b16 %v3392
  %v3942 = vunpack.c.h.b16 %v3392
  %v3943 = vunpack.c.l.b16 %v3393
  %v3944 = vunpack.c.h.b16 %v3393
  %v3945 = vunpack.c.l.b16 %v3394
  %v3946 = vunpack.c.h.b16 %v3394
  %v3947 = vunpack.c.l.b16 %v3395
  %v3948 = vunpack.c.h.b16 %v3395
  %v3949 = vunpack.c.l.b16 %v3396
  %v3950 = vunpack.c.h.b16 %v3396
  %v3951 = vunpack.c.l.b16 %v3397
  %v3952 = vunpack.c.h.b16 %v3397
  %v3953 = vunpack.c.l.b16 %v3398
  %v3954 = vunpack.c.h.b16 %v3398
  %v3955 = vunpack.c.l.b16 %v3399
  %v3956 = vunpack.c.h.b16 %v3399
  %v3957 = vunpack.c.l.b16 %v3400
  %v3958 = vunpack.c.h.b16 %v3400
  %v3959 = vunpack.c.l.b16 %v3401
  %v3960 = vunpack.c.h.b16 %v3401
  %v3961 = vunpack.c.l.b16 %v3402
  %v3962 = vunpack.c.h.b16 %v3402
  %v3963 = vunpack.c.l.b16 %v3403
  %v3964 = vunpack.c.h.b16 %v3403
  %v3965 = vunpack.c.l.b16 %v3404
  %v3966 = vunpack.c.h.b16 %v3404
  %v3967 = vunpack.c.l.b16 %v3405
  %v3968 = vunpack.c.h.b16 %v3405
  %v3969 = vunpack.c.l.b16 %v3406
  %v3970 = vunpack.c.h.b16 %v3406
  %v3971 = vunpack.c.l.b16 %v3407
  %v3972 = vunpack.c.h.b16 %v3407
  %v3973 = vunpack.c.l.b16 %v3408
  %v3974 = vunpack.c.h.b16 %v3408
  %v3975 = vunpack.c.l.b16 %v3409
  %v3976 = vunpack.c.h.b16 %v3409
  %v3977 = vunpack.c.l.b16 %v3410
  %v3978 = vunpack.c.h.b16 %v3410
  %v3979 = vunpack.c.l.b16 %v3411
  %v3980 = vunpack.c.h.b16 %v3411
  %v3981 = vunpack.c.l.b16 %v3412
  %v3982 = vunpack.c.h.b16 %v3412
  %v3983 = vunpack.c.l.b16 %v3413
  %v3984 = vunpack.c.h.b16 %v3413
  %v3985 = vunpack.c.l.b16 %v3414
  %v3986 = vunpack.c.h.b16 %v3414
  %v3987 = vunpack.c.l.b16 %v3415
  %v3988 = vunpack.c.h.b16 %v3415
  %v3989 = vunpack.c.l.b16 %v3416
  %v3990 = vunpack.c.h.b16 %v3416
  %v3991 = vunpack.c.l.b16 %v3417
  %v3992 = vunpack.c.h.b16 %v3417
  %v3993 = vunpack.c.l.b16 %v3418
  %v3994 = vunpack.c.h.b16 %v3418
  %v3995 = vunpack.c.l.b16 %v3419
  %v3996 = vunpack.c.h.b16 %v3419
  %v3997 = vunpack.c.l.b16 %v3420
  %v3998 = vunpack.c.h.b16 %v3420
  %v3999 = vunpack.c.l.b16 %v3421
  %v4000 = vunpack.c.h.b16 %v3421
  %v4001 = vunpack.c.l.b16 %v3422
  %v4002 = vunpack.c.h.b16 %v3422
  %v4003 = vunpack.c.l.b16 %v3423
  %v4004 = vunpack.c.h.b16 %v3423
  %v4005 = vunpack.c.l.b16 %v3424
  %v4006 = vunpack.c.h.b16 %v3424
  %v4007 = vunpack.c.l.b16 %v3425
  %v4008 = vunpack.c.h.b16 %v3425
  %v4009 = vunpack.c.l.b16 %v3426
  %v4010 = vunpack.c.h.b16 %v3426
  %v4011 = vunpack.c.l.b16 %v3427
  %v4012 = vunpack.c.h.b16 %v3427
  %v4013 = vunpack.c.l.b16 %v3428
  %v4014 = vunpack.c.h.b16 %v3428
  %v4015 = vunpack.c.l.b16 %v3429
  %v4016 = vunpack.c.h.b16 %v3429
  %v4017 = vunpack.c.l.b16 %v3430
  %v4018 = vunpack.c.h.b16 %v3430
  %v4019 = vunpack.c.l.b16 %v3431
  %v4020 = vunpack.c.h.b16 %v3431
  %v4021 = vunpack.c.l.b16 %v3432
  %v4022 = vunpack.c.h.b16 %v3432
  %v4023 = vunpack.c.l.b16 %v3433
  %v4024 = vunpack.c.h.b16 %v3433
  %v4025 = vunpack.c.l.b16 %v3434
  %v4026 = vunpack.c.h.b16 %v3434
  %v4027 = vunpack.c.l.b16 %v3435
  %v4028 = vunpack.c.h.b16 %v3435
  %v4029 = vunpack.c.l.b16 %v3436
  %v4030 = vunpack.c.h.b16 %v3436
  %v4031 = vunpack.c.l.b16 %v3437
  %v4032 = vunpack.c.h.b16 %v3437
  %v4033 = vunpack.c.l.b16 %v3438
  %v4034 = vunpack.c.h.b16 %v3438
  %v4035 = vunpack.c.l.b16 %v3439
  %v4036 = vunpack.c.h.b16 %v3439
  %v4037 = vunpack.c.l.b16 %v3440
  %v4038 = vunpack.c.h.b16 %v3440
  %v4039 = vunpack.c.l.b16 %v3441
  %v4040 = vunpack.c.h.b16 %v3441
  %v4041 = vunpack.c.l.b16 %v3442
  %v4042 = vunpack.c.h.b16 %v3442
  %v4043 = vunpack.c.l.b16 %v3443
  %v4044 = vunpack.c.h.b16 %v3443
  %v4045 = vunpack.c.l.b16 %v3444
  %v4046 = vunpack.c.h.b16 %v3444
  %v4047 = vunpack.c.l.b16 %v3445
  %v4048 = vunpack.c.h.b16 %v3445
  %v4049 = vunpack.c.l.b16 %v3446
  %v4050 = vunpack.c.h.b16 %v3446
  %v4051 = vunpack.c.l.b16 %v3447
  %v4052 = vunpack.c.h.b16 %v3447
  %v4053 = vunpack.c.l.b16 %v3448
  %v4054 = vunpack.c.h.b16 %v3448
  %v4055 = vunpack.c.l.b16 %v3449
  %v4056 = vunpack.c.h.b16 %v3449
  %v4057 = vunpack.c.l.b16 %v3450
  %v4058 = vunpack.c.h.b16 %v3450
  %v4059 = vunpack.c.l.b16 %v3451
  %v4060 = vunpack.c.h.b16 %v3451
  %v4061 = vunpack.c.l.b16 %v3452
  %v4062 = vunpack.c.h.b16 %v3452
  %v4063 = vunpack.c.l.b16 %v3453
  %v4064 = vunpack.c.h.b16 %v3453
  %v4065 = vunpack.c.l.b16 %v3454
  %v4066 = vunpack.c.h.b16 %v3454
  %v4067 = vunpack.c.l.b16 %v3455
  %v4068 = vunpack.c.h.b16 %v3455
  %v4069 = vunpack.c.l.b16 %v3456
  %v4070 = vunpack.c.h.b16 %v3456
  %v4071 = vunpack.c.l.b16 %v3457
  %v4072 = vunpack.c.h.b16 %v3457
  %v4073 = vunpack.c.l.b16 %v3458
  %v4074 = vunpack.c.h.b16 %v3458
  %v4075 = vunpack.c.l.b16 %v3459
  %v4076 = vunpack.c.h.b16 %v3459
  %v4077 = vunpack.c.l.b16 %v3460
  %v4078 = vunpack.c.h.b16 %v3460
  %v4079 = vunpack.c.l.b16 %v3461
  %v4080 = vunpack.c.h.b16 %v3461
  %v4081 = vunpack.c.l.b16 %v3462
  %v4082 = vunpack.c.h.b16 %v3462
  %v4083 = vunpack.c.l.b16 %v3463
  %v4084 = vunpack.c.h.b16 %v3463
  %v4085 = vunpack.c.l.b16 %v3464
  %v4086 = vunpack.c.h.b16 %v3464
  %v4087 = vunpack.c.l.b16 %v3465
  %v4088 = vunpack.c.h.b16 %v3465
  %v4089 = vunpack.c.l.b16 %v3466
  %v4090 = vunpack.c.h.b16 %v3466
  %v4091 = vunpack.c.l.b16 %v3467
  %v4092 = vunpack.c.h.b16 %v3467
  %v4093 = vunpack.c.l.b16 %v3468
  %v4094 = vunpack.c.h.b16 %v3468
  %v4095 = vunpack.c.l.b16 %v3469
  %v4096 = vunpack.c.h.b16 %v3469
  %v4097 = vunpack.c.l.b16 %v3470
  %v4098 = vunpack.c.h.b16 %v3470
  %v4099 = vunpack.c.l.b16 %v3471
  %v4100 = vunpack.c.h.b16 %v3471
  %v4101 = vunpack.c.l.b16 %v3472
  %v4102 = vunpack.c.h.b16 %v3472
  %v4103 = vunpack.c.l.b16 %v3473
  %v4104 = vunpack.c.h.b16 %v3473
  %v4105 = vunpack.c.l.b16 %v3474
  %v4106 = vunpack.c.h.b16 %v3474
  %v4107 = vunpack.c.l.b16 %v3475
  %v4108 = vunpack.c.h.b16 %v3475
  %v4109 = vunpack.c.l.b16 %v3476
  %v4110 = vunpack.c.h.b16 %v3476
  %v4111 = vunpack.c.l.b16 %v3477
  %v4112 = vunpack.c.h.b16 %v3477
  %v4113 = vunpack.c.l.b16 %v3478
  %v4114 = vunpack.c.h.b16 %v3478
  %v4115 = vunpack.c.l.b16 %v3479
  %v4116 = vunpack.c.h.b16 %v3479
  %v4117 = vunpack.c.l.b16 %v3480
  %v4118 = vunpack.c.h.b16 %v3480
  %v4119 = vunpack.c.l.b16 %v3481
  %v4120 = vunpack.c.h.b16 %v3481
  %v4121 = vunpack.c.l.b16 %v3482
  %v4122 = vunpack.c.h.b16 %v3482
  %v4123 = vunpack.c.l.b16 %v3483
  %v4124 = vunpack.c.h.b16 %v3483
  %v4125 = vunpack.c.l.b16 %v3484
  %v4126 = vunpack.c.h.b16 %v3484
  %v4127 = vunpack.c.l.b16 %v3485
  %v4128 = vunpack.c.h.b16 %v3485
  %v4129 = vunpack.c.l.b16 %v3486
  %v4130 = vunpack.c.h.b16 %v3486
  %v4131 = vunpack.c.l.b16 %v3487
  %v4132 = vunpack.c.h.b16 %v3487
  %v4133 = vunpack.c.l.b16 %v3488
  %v4134 = vunpack.c.h.b16 %v3488
  %v4135 = vunpack.c.l.b16 %v3489
  %v4136 = vunpack.c.h.b16 %v3489
  %v4137 = vunpack.c.l.b16 %v3490
  %v4138 = vunpack.c.h.b16 %v3490
  %v4139 = vunpack.c.l.b16 %v3491
  %v4140 = vunpack.c.h.b16 %v3491
  %v4141 = vunpack.c.l.b16 %v3492
  %v4142 = vunpack.c.h.b16 %v3492
  %v4143 = vunpack.c.l.b16 %v3493
  %v4144 = vunpack.c.h.b16 %v3493
  %v4145 = vunpack.c.l.b16 %v3494
  %v4146 = vunpack.c.h.b16 %v3494
  %v4147 = vunpack.c.l.b16 %v3495
  %v4148 = vunpack.c.h.b16 %v3495
  %v4149 = vunpack.c.l.b16 %v3496
  %v4150 = vunpack.c.h.b16 %v3496
  %v4151 = vunpack.c.l.b16 %v3497
  %v4152 = vunpack.c.h.b16 %v3497
  %v4153 = vunpack.c.l.b16 %v3498
  %v4154 = vunpack.c.h.b16 %v3498
  %v4155 = vunpack.c.l.b16 %v3499
  %v4156 = vunpack.c.h.b16 %v3499
  %v4157 = vunpack.c.l.b16 %v3500
  %v4158 = vunpack.c.h.b16 %v3500
  %v4159 = vunpack.c.l.b16 %v3501
  %v4160 = vunpack.c.h.b16 %v3501
  %v4161 = vunpack.c.l.b16 %v3502
  %v4162 = vunpack.c.h.b16 %v3502
  %v4163 = vunpack.c.l.b16 %v3503
  %v4164 = vunpack.c.h.b16 %v3503
  %v4165 = vunpack.c.l.b16 %v3504
  %v4166 = vunpack.c.h.b16 %v3504
  %v4167 = vunpack.c.l.b16 %v3505
  %v4168 = vunpack.c.h.b16 %v3505
  %v4169 = vunpack.c.l.b16 %v3506
  %v4170 = vunpack.c.h.b16 %v3506
  %v4171 = vunpack.c.l.b16 %v3507
  %v4172 = vunpack.c.h.b16 %v3507
  %v4173 = vunpack.c.l.b16 %v3508
  %v4174 = vunpack.c.h.b16 %v3508
  %v4175 = vunpack.c.l.b16 %v3509
  %v4176 = vunpack.c.h.b16 %v3509
  %v4177 = vunpack.c.l.b16 %v3510
  %v4178 = vunpack.c.h.b16 %v3510
  %v4179 = vunpack.c.l.b16 %v3511
  %v4180 = vunpack.c.h.b16 %v3511
  %v4181 = vunpack.c.l.b16 %v3512
  %v4182 = vunpack.c.h.b16 %v3512
  %v4183 = vunpack.c.l.b16 %v3513
  %v4184 = vunpack.c.h.b16 %v3513
  %v4185 = vunpack.c.l.b16 %v3514
  %v4186 = vunpack.c.h.b16 %v3514
  %v4187 = vunpack.c.l.b16 %v3515
  %v4188 = vunpack.c.h.b16 %v3515
  %v4189 = vunpack.c.l.b16 %v3516
  %v4190 = vunpack.c.h.b16 %v3516
  %v4191 = vunpack.c.l.b16 %v3517
  %v4192 = vunpack.c.h.b16 %v3517
  %v4193 = vunpack.c.l.b16 %v3518
  %v4194 = vunpack.c.h.b16 %v3518
  %v4195 = vunpack.c.l.b16 %v3519
  %v4196 = vunpack.c.h.b16 %v3519
  %v4197 = vunpack.c.l.b16 %v3520
  %v4198 = vunpack.c.h.b16 %v3520
  %v4199 = vunpack.c.l.b16 %v3521
  %v4200 = vunpack.c.h.b16 %v3521
  %v4201 = vunpack.c.l.b16 %v3522
  %v4202 = vunpack.c.h.b16 %v3522
  %v4203 = vunpack.c.l.b16 %v3523
  %v4204 = vunpack.c.h.b16 %v3523
  %v4205 = vunpack.c.l.b16 %v3524
  %v4206 = vunpack.c.h.b16 %v3524
  %v4207 = vunpack.c.l.b16 %v3525
  %v4208 = vunpack.c.h.b16 %v3525
  %v4209 = vunpack.c.l.b16 %v3526
  %v4210 = vunpack.c.h.b16 %v3526
  %v4211 = vunpack.c.l.b16 %v3527
  %v4212 = vunpack.c.h.b16 %v3527
  %v4213 = vunpack.c.l.b16 %v3528
  %v4214 = vunpack.c.h.b16 %v3528
  %v4215 = vunpack.c.l.b16 %v3529
  %v4216 = vunpack.c.h.b16 %v3529
  %v4217 = vunpack.c.l.b16 %v3530
  %v4218 = vunpack.c.h.b16 %v3530
  %v4219 = vunpack.c.l.b16 %v3531
  %v4220 = vunpack.c.h.b16 %v3531
  %v4221 = vunpack.c.l.b16 %v3532
  %v4222 = vunpack.c.h.b16 %v3532
  %v4223 = vunpack.c.l.b16 %v3533
  %v4224 = vunpack.c.h.b16 %v3533
  %v4225 = vunpack.c.l.b16 %v3534
  %v4226 = vunpack.c.h.b16 %v3534
  %v4227 = vunpack.c.l.b16 %v3535
  %v4228 = vunpack.c.h.b16 %v3535
  %v4229 = vunpack.c.l.b16 %v3536
  %v4230 = vunpack.c.h.b16 %v3536
  %v4231 = vunpack.c.l.b16 %v3537
  %v4232 = vunpack.c.h.b16 %v3537
  %v4233 = vunpack.c.l.b16 %v3538
  %v4234 = vunpack.c.h.b16 %v3538
  %v4235 = vunpack.c.l.b16 %v3539
  %v4236 = vunpack.c.h.b16 %v3539
  %v4237 = vunpack.c.l.b16 %v3540
  %v4238 = vunpack.c.h.b16 %v3540
  %v4239 = vunpack.c.l.b16 %v3541
  %v4240 = vunpack.c.h.b16 %v3541
  %v4241 = vunpack.c.l.b16 %v3542
  %v4242 = vunpack.c.h.b16 %v3542
  %v4243 = vunpack.c.l.b16 %v3543
  %v4244 = vunpack.c.h.b16 %v3543
  %v4245 = vunpack.c.l.b16 %v3544
  %v4246 = vunpack.c.h.b16 %v3544
  %v4247 = vunpack.c.l.b16 %v3545
  %v4248 = vunpack.c.h.b16 %v3545
  %v4249 = vunpack.c.l.b16 %v3546
  %v4250 = vunpack.c.h.b16 %v3546
  %v4251 = vunpack.c.l.b16 %v3547
  %v4252 = vunpack.c.h.b16 %v3547
  %v4253 = vunpack.c.l.b16 %v3548
  %v4254 = vunpack.c.h.b16 %v3548
  %v4255 = vunpack.c.l.b16 %v3549
  %v4256 = vunpack.c.h.b16 %v3549
  %v4257 = vunpack.c.l.b16 %v3550
  %v4258 = vunpack.c.h.b16 %v3550
  %v4259 = vunpack.c.l.b16 %v3551
  %v4260 = vunpack.c.h.b16 %v3551
  %v4261 = vunpack.c.l.b16 %v3552
  %v4262 = vunpack.c.h.b16 %v3552
  %v4263 = vunpack.c.l.b16 %v3553
  %v4264 = vunpack.c.h.b16 %v3553
  %v4265 = vunpack.c.l.b16 %v3554
  %v4266 = vunpack.c.h.b16 %v3554
  %v4267 = vunpack.c.l.b16 %v3555
  %v4268 = vunpack.c.h.b16 %v3555
  %v4269 = vunpack.c.l.b16 %v3556
  %v4270 = vunpack.c.h.b16 %v3556
  %v4271 = vunpack.c.l.b16 %v3557
  %v4272 = vunpack.c.h.b16 %v3557
  %v4273 = vunpack.c.l.b16 %v3558
  %v4274 = vunpack.c.h.b16 %v3558
  %v4275 = vunpack.c.l.b16 %v3559
  %v4276 = vunpack.c.h.b16 %v3559
  %v4277 = vunpack.c.l.b16 %v3560
  %v4278 = vunpack.c.h.b16 %v3560
  %v4279 = vunpack.c.l.b16 %v3561
  %v4280 = vunpack.c.h.b16 %v3561
  %v4281 = vunpack.c.l.b16 %v3562
  %v4282 = vunpack.c.h.b16 %v3562
  %v4283 = vunpack.c.l.b16 %v3563
  %v4284 = vunpack.c.h.b16 %v3563
  %v4285 = vunpack.c.l.b16 %v3564
  %v4286 = vunpack.c.h.b16 %v3564
  %v4287 = vunpack.c.l.b16 %v3565
  %v4288 = vunpack.c.h.b16 %v3565
  %v4289 = vunpack.c.l.b16 %v3566
  %v4290 = vunpack.c.h.b16 %v3566
  %v4291 = vunpack.c.l.b16 %v3567
  %v4292 = vunpack.c.h.b16 %v3567
  %v4293 = vunpack.c.l.b16 %v3568
  %v4294 = vunpack.c.h.b16 %v3568
  %v4295 = vunpack.c.l.b16 %v3569
  %v4296 = vunpack.c.h.b16 %v3569
  %v4297 = vunpack.c.l.b16 %v3570
  %v4298 = vunpack.c.h.b16 %v3570
  %v4299 = vunpack.c.l.b16 %v3571
  %v4300 = vunpack.c.h.b16 %v3571
  %v4301 = vunpack.c.l.b16 %v3572
  %v4302 = vunpack.c.h.b16 %v3572
  %v4303 = vunpack.c.l.b16 %v3573
  %v4304 = vunpack.c.h.b16 %v3573
  %v4305 = vunpack.c.l.b16 %v3574
  %v4306 = vunpack.c.h.b16 %v3574
  %v4307 = vunpack.c.l.b16 %v3575
  %v4308 = vunpack.c.h.b16 %v3575
  %v4309 = vunpack.c.l.b16 %v3576
  %v4310 = vunpack.c.h.b16 %v3576
  %v4311 = vunpack.c.l.b16 %v3577
  %v4312 = vunpack.c.h.b16 %v3577
  %v4313 = vunpack.c.l.b16 %v3578
  %v4314 = vunpack.c.h.b16 %v3578
  %v4315 = vunpack.c.l.b16 %v3579
  %v4316 = vunpack.c.h.b16 %v3579
  %v4317 = vunpack.c.l.b16 %v3580
  %v4318 = vunpack.c.h.b16 %v3580
  %v4319 = vunpack.c.l.b16 %v3581
  %v4320 = vunpack.c.h.b16 %v3581
  %v4321 = vunpack.c.l.b16 %v3582
  %v4322 = vunpack.c.h.b16 %v3582
  %v4323 = vunpack.c.l.b16 %v3583
  %v4324 = vunpack.c.h.b16 %v3583
  %v4325 = vunpack.c.l.b16 %v3584
  %v4326 = vunpack.c.h.b16 %v3584
  %v4327 = vunpack.c.l.b16 %v3585
  %v4328 = vunpack.c.h.b16 %v3585
  %v4329 = vunpack.c.l.b16 %v3586
  %v4330 = vunpack.c.h.b16 %v3586
  %v4331 = vunpack.c.l.b16 %v3587
  %v4332 = vunpack.c.h.b16 %v3587
  %v4333 = vunpack.c.l.b16 %v3588
  %v4334 = vunpack.c.h.b16 %v3588
  %v4335 = vunpack.c.l.b16 %v3589
  %v4336 = vunpack.c.h.b16 %v3589
  %v4337 = vunpack.c.l.b16 %v3590
  %v4338 = vunpack.c.h.b16 %v3590
  %v4339 = vunpack.c.l.b16 %v3591
  %v4340 = vunpack.c.h.b16 %v3591
  %v4341 = vunpack.c.l.b16 %v3592
  %v4342 = vunpack.c.h.b16 %v3592
  %v4343 = vunpack.c.l.b16 %v3593
  %v4344 = vunpack.c.h.b16 %v3593
  %v4345 = vunpack.c.l.b16 %v3594
  %v4346 = vunpack.c.h.b16 %v3594
  %v4347 = vunpack.c.l.b16 %v3595
  %v4348 = vunpack.c.h.b16 %v3595
  %v4349 = vunpack.c.l.b16 %v3596
  %v4350 = vunpack.c.h.b16 %v3596
  %v4351 = vunpack.c.l.b16 %v3597
  %v4352 = vunpack.c.h.b16 %v3597
  %v4353 = vunpack.c.l.b16 %v3598
  %v4354 = vunpack.c.h.b16 %v3598
  %v4355 = vunpack.c.l.b16 %v3599
  %v4356 = vunpack.c.h.b16 %v3599
  %v4357 = vunpack.c.l.b16 %v3600
  %v4358 = vunpack.c.h.b16 %v3600
  %v4359 = vunpack.c.l.b16 %v3601
  %v4360 = vunpack.c.h.b16 %v3601
  %v4361 = vunpack.c.l.b16 %v3602
  %v4362 = vunpack.c.h.b16 %v3602
  %v4363 = vunpack.c.l.b16 %v3603
  %v4364 = vunpack.c.h.b16 %v3603
  %v4365 = vunpack.c.l.b16 %v3604
  %v4366 = vunpack.c.h.b16 %v3604
  %v4367 = vunpack.c.l.b16 %v3605
  %v4368 = vunpack.c.h.b16 %v3605
  %v4369 = vunpack.c.l.b16 %v3606
  %v4370 = vunpack.c.h.b16 %v3606
  %v4371 = vunpack.c.l.b16 %v3607
  %v4372 = vunpack.c.h.b16 %v3607
  %v4373 = vunpack.c.l.b16 %v3608
  %v4374 = vunpack.c.h.b16 %v3608
  %v4375 = vunpack.c.l.b16 %v3609
  %v4376 = vunpack.c.h.b16 %v3609
  %v4377 = vunpack.c.l.b16 %v3610
  %v4378 = vunpack.c.h.b16 %v3610
  %v4379 = vunpack.c.l.b16 %v3611
  %v4380 = vunpack.c.h.b16 %v3611
  %v4381 = vunpack.c.l.b16 %v3612
  %v4382 = vunpack.c.h.b16 %v3612
  %v4383 = vunpack.c.l.b16 %v3613
  %v4384 = vunpack.c.h.b16 %v3613
  %v4385 = vunpack.c.l.b16 %v3614
  %v4386 = vunpack.c.h.b16 %v3614
  %v4387 = vunpack.c.l.b16 %v3615
  %v4388 = vunpack.c.h.b16 %v3615
  %v4389 = vunpack.c.l.b16 %v3616
  %v4390 = vunpack.c.h.b16 %v3616
  %v4391 = vunpack.c.l.b16 %v3617
  %v4392 = vunpack.c.h.b16 %v3617
  %v4393 = vunpack.c.l.b16 %v3618
  %v4394 = vunpack.c.h.b16 %v3618
  %v4395 = vunpack.c.l.b16 %v3619
  %v4396 = vunpack.c.h.b16 %v3619
  %v4397 = vunpack.c.l.b16 %v3620
  %v4398 = vunpack.c.h.b16 %v3620
  %v4399 = vunpack.c.l.b16 %v3621
  %v4400 = vunpack.c.h.b16 %v3621
  %v4401 = vunpack.c.l.b16 %v3622
  %v4402 = vunpack.c.h.b16 %v3622
  %v4403 = vunpack.c.l.b16 %v3623
  %v4404 = vunpack.c.h.b16 %v3623
  %v4405 = vunpack.c.l.b16 %v3624
  %v4406 = vunpack.c.h.b16 %v3624
  %v4407 = vunpack.c.l.b16 %v3625
  %v4408 = vunpack.c.h.b16 %v3625
  %v4409 = vunpack.c.l.b16 %v3626
  %v4410 = vunpack.c.h.b16 %v3626
  %v4411 = vunpack.c.l.b16 %v3627
  %v4412 = vunpack.c.h.b16 %v3627
  %v4413 = vunpack.c.l.b16 %v3628
  %v4414 = vunpack.c.h.b16 %v3628
  %v4415 = vunpack.c.l.b16 %v3629
  %v4416 = vunpack.c.h.b16 %v3629
  %v4417 = vunpack.c.l.b16 %v3630
  %v4418 = vunpack.c.h.b16 %v3630
  %v4419 = vunpack.c.l.b16 %v3631
  %v4420 = vunpack.c.h.b16 %v3631
  %v4421 = vunpack.c.l.b16 %v3632
  %v4422 = vunpack.c.h.b16 %v3632
  %v4423 = vpack.c.b16 %v3919, %v3911
  %v4424 = vpack.c.b16 %v3920, %v3912
  %v4425 = vpack.c.b16 %v3921, %v3913
  %v4426 = vpack.c.b16 %v3922, %v3914
  %v4427 = vpack.c.b16 %v3923, %v3915
  %v4428 = vpack.c.b16 %v3924, %v3916
  %v4429 = vpack.c.b16 %v3925, %v3917
  %v4430 = vpack.c.b16 %v3926, %v3918
  %v4431 = vpack.c.b16 %v3935, %v3927
  %v4432 = vpack.c.b16 %v3936, %v3928
  %v4433 = vpack.c.b16 %v3937, %v3929
  %v4434 = vpack.c.b16 %v3938, %v3930
  %v4435 = vpack.c.b16 %v3939, %v3931
  %v4436 = vpack.c.b16 %v3940, %v3932
  %v4437 = vpack.c.b16 %v3941, %v3933
  %v4438 = vpack.c.b16 %v3942, %v3934
  %v4439 = vpack.c.b16 %v3951, %v3943
  %v4440 = vpack.c.b16 %v3952, %v3944
  %v4441 = vpack.c.b16 %v3953, %v3945
  %v4442 = vpack.c.b16 %v3954, %v3946
  %v4443 = vpack.c.b16 %v3955, %v3947
  %v4444 = vpack.c.b16 %v3956, %v3948
  %v4445 = vpack.c.b16 %v3957, %v3949
  %v4446 = vpack.c.b16 %v3958, %v3950
  %v4447 = vpack.c.b16 %v3967, %v3959
  %v4448 = vpack.c.b16 %v3968, %v3960
  %v4449 = vpack.c.b16 %v3969, %v3961
  %v4450 = vpack.c.b16 %v3970, %v3962
  %v4451 = vpack.c.b16 %v3971, %v3963
  %v4452 = vpack.c.b16 %v3972, %v3964
  %v4453 = vpack.c.b16 %v3973, %v3965
  %v4454 = vpack.c.b16 %v3974, %v3966
  %v4455 = vpack.c.b16 %v3983, %v3975
  %v4456 = vpack.c.b16 %v3984, %v3976
  %v4457 = vpack.c.b16 %v3985, %v3977
  %v4458 = vpack.c.b16 %v3986, %v3978
  %v4459 = vpack.c.b16 %v3987, %v3979
  %v4460 = vpack.c.b16 %v3988, %v3980
  %v4461 = vpack.c.b16 %v3989, %v3981
  %v4462 = vpack.c.b16 %v3990, %v3982
  %v4463 = vpack.c.b16 %v3999, %v3991
  %v4464 = vpack.c.b16 %v4000, %v3992
  %v4465 = vpack.c.b16 %v4001, %v3993
  %v4466 = vpack.c.b16 %v4002, %v3994
  %v4467 = vpack.c.b16 %v4003, %v3995
  %v4468 = vpack.c.b16 %v4004, %v3996
  %v4469 = vpack.c.b16 %v4005, %v3997
  %v4470 = vpack.c.b16 %v4006, %v3998
  %v4471 = vpack.c.b16 %v4015, %v4007
  %v4472 = vpack.c.b16 %v4016, %v4008
  %v4473 = vpack.c.b16 %v4017, %v4009
  %v4474 = vpack.c.b16 %v4018, %v4010
  %v4475 = vpack.c.b16 %v4019, %v4011
  %v4476 = vpack.c.b16 %v4020, %v4012
  %v4477 = vpack.c.b16 %v4021, %v4013
  %v4478 = vpack.c.b16 %v4022, %v4014
  %v4479 = vpack.c.b16 %v4031, %v4023
  %v4480 = vpack.c.b16 %v4032, %v4024
  %v4481 = vpack.c.b16 %v4033, %v4025
  %v4482 = vpack.c.b16 %v4034, %v4026
  %v4483 = vpack.c.b16 %v4035, %v4027
  %v4484 = vpack.c.b16 %v4036, %v4028
  %v4485 = vpack.c.b16 %v4037, %v4029
  %v4486 = vpack.c.b16 %v4038, %v4030
  %v4487 = vpack.c.b16 %v4047, %v4039
  %v4488 = vpack.c.b16 %v4048, %v4040
  %v4489 = vpack.c.b16 %v4049, %v4041
  %v4490 = vpack.c.b16 %v4050, %v4042
  %v4491 = vpack.c.b16 %v4051, %v4043
  %v4492 = vpack.c.b16 %v4052, %v4044
  %v4493 = vpack.c.b16 %v4053, %v4045
  %v4494 = vpack.c.b16 %v4054, %v4046
  %v4495 = vpack.c.b16 %v4063, %v4055
  %v4496 = vpack.c.b16 %v4064, %v4056
  %v4497 = vpack.c.b16 %v4065, %v4057
  %v4498 = vpack.c.b16 %v4066, %v4058
  %v4499 = vpack.c.b16 %v4067, %v4059
  %v4500 = vpack.c.b16 %v4068, %v4060
  %v4501 = vpack.c.b16 %v4069, %v4061
  %v4502 = vpack.c.b16 %v4070, %v4062
  %v4503 = vpack.c.b16 %v4079, %v4071
  %v4504 = vpack.c.b16 %v4080, %v4072
  %v4505 = vpack.c.b16 %v4081, %v4073
  %v4506 = vpack.c.b16 %v4082, %v4074
  %v4507 = vpack.c.b16 %v4083, %v4075
  %v4508 = vpack.c.b16 %v4084, %v4076
  %v4509 = vpack.c.b16 %v4085, %v4077
  %v4510 = vpack.c.b16 %v4086, %v4078
  %v4511 = vpack.c.b16 %v4095, %v4087
  %v4512 = vpack.c.b16 %v4096, %v4088
  %v4513 = vpack.c.b16 %v4097, %v4089
  %v4514 = vpack.c.b16 %v4098, %v4090
  %v4515 = vpack.c.b16 %v4099, %v4091
  %v4516 = vpack.c.b16 %v4100, %v4092
  %v4517 = vpack.c.b16 %v4101, %v4093
  %v4518 = vpack.c.b16 %v4102, %v4094
  %v4519 = vpack.c.b16 %v4111, %v4103
  %v4520 = vpack.c.b16 %v4112, %v4104
  %v4521 = vpack.c.b16 %v4113, %v4105
  %v4522 = vpack.c.b16 %v4114, %v4106
  %v4523 = vpack.c.b16 %v4115, %v4107
  %v4524 = vpack.c.b16 %v4116, %v4108
  %v4525 = vpack.c.b16 %v4117, %v4109
  %v4526 = vpack.c.b16 %v4118, %v4110
  %v4527 = vpack.c.b16 %v4127, %v4119
  %v4528 = vpack.c.b16 %v4128, %v4120
  %v4529 = vpack.c.b16 %v4129, %v4121
  %v4530 = vpack.c.b16 %v4130, %v4122
  %v4531 = vpack.c.b16 %v4131, %v4123
  %v4532 = vpack.c.b16 %v4132, %v4124
  %v4533 = vpack.c.b16 %v4133, %v4125
  %v4534 = vpack.c.b16 %v4134, %v4126
  %v4535 = vpack.c.b16 %v4143, %v4135
  %v4536 = vpack.c.b16 %v4144, %v4136
  %v4537 = vpack.c.b16 %v4145, %v4137
  %v4538 = vpack.c.b16 %v4146, %v4138
  %v4539 = vpack.c.b16 %v4147, %v4139
  %v4540 = vpack.c.b16 %v4148, %v4140
  %v4541 = vpack.c.b16 %v4149, %v4141
  %v4542 = vpack.c.b16 %v4150, %v4142
  %v4543 = vpack.c.b16 %v4159, %v4151
  %v4544 = vpack.c.b16 %v4160, %v4152
  %v4545 = vpack.c.b16 %v4161, %v4153
  %v4546 = vpack.c.b16 %v4162, %v4154
  %v4547 = vpack.c.b16 %v4163, %v4155
  %v4548 = vpack.c.b16 %v4164, %v4156
  %v4549 = vpack.c.b16 %v4165, %v4157
  %v4550 = vpack.c.b16 %v4166, %v4158
  %v4551 = vpack.c.b16 %v4175, %v4167
  %v4552 = vpack.c.b16 %v4176, %v4168
  %v4553 = vpack.c.b16 %v4177, %v4169
  %v4554 = vpack.c.b16 %v4178, %v4170
  %v4555 = vpack.c.b16 %v4179, %v4171
  %v4556 = vpack.c.b16 %v4180, %v4172
  %v4557 = vpack.c.b16 %v4181, %v4173
  %v4558 = vpack.c.b16 %v4182, %v4174
  %v4559 = vpack.c.b16 %v4191, %v4183
  %v4560 = vpack.c.b16 %v4192, %v4184
  %v4561 = vpack.c.b16 %v4193, %v4185
  %v4562 = vpack.c.b16 %v4194, %v4186
  %v4563 = vpack.c.b16 %v4195, %v4187
  %v4564 = vpack.c.b16 %v4196, %v4188
  %v4565 = vpack.c.b16 %v4197, %v4189
  %v4566 = vpack.c.b16 %v4198, %v4190
  %v4567 = vpack.c.b16 %v4207, %v4199
  %v4568 = vpack.c.b16 %v4208, %v4200
  %v4569 = vpack.c.b16 %v4209, %v4201
  %v4570 = vpack.c.b16 %v4210, %v4202
  %v4571 = vpack.c.b16 %v4211, %v4203
  %v4572 = vpack.c.b16 %v4212, %v4204
  %v4573 = vpack.c.b16 %v4213, %v4205
  %v4574 = vpack.c.b16 %v4214, %v4206
  %v4575 = vpack.c.b16 %v4223, %v4215
  %v4576 = vpack.c.b16 %v4224, %v4216
  %v4577 = vpack.c.b16 %v4225, %v4217
  %v4578 = vpack.c.b16 %v4226, %v4218
  %v4579 = vpack.c.b16 %v4227, %v4219
  %v4580 = vpack.c.b16 %v4228, %v4220
  %v4581 = vpack.c.b16 %v4229, %v4221
  %v4582 = vpack.c.b16 %v4230, %v4222
  %v4583 = vpack.c.b16 %v4239, %v4231
  %v4584 = vpack.c.b16 %v4240, %v4232
  %v4585 = vpack.c.b16 %v4241, %v4233
  %v4586 = vpack.c.b16 %v4242, %v4234
  %v4587 = vpack.c.b16 %v4243, %v4235
  %v4588 = vpack.c.b16 %v4244, %v4236
  %v4589 = vpack.c.b16 %v4245, %v4237
  %v4590 = vpack.c.b16 %v4246, %v4238
  %v4591 = vpack.c.b16 %v4255, %v4247
  %v4592 = vpack.c.b16 %v4256, %v4248
  %v4593 = vpack.c.b16 %v4257, %v4249
  %v4594 = vpack.c.b16 %v4258, %v4250
  %v4595 = vpack.c.b16 %v4259, %v4251
  %v4596 = vpack.c.b16 %v4260, %v4252
  %v4597 = vpack.c.b16 %v4261, %v4253
  %v4598 = vpack.c.b16 %v4262, %v4254
  %v4599 = vpack.c.b16 %v4271, %v4263
  %v4600 = vpack.c.b16 %v4272, %v4264
  %v4601 = vpack.c.b16 %v4273, %v4265
  %v4602 = vpack.c.b16 %v4274, %v4266
  %v4603 = vpack.c.b16 %v4275, %v4267
  %v4604 = vpack.c.b16 %v4276, %v4268
  %v4605 = vpack.c.b16 %v4277, %v4269
  %v4606 = vpack.c.b16 %v4278, %v4270
  %v4607 = vpack.c.b16 %v4287, %v4279
  %v4608 = vpack.c.b16 %v4288, %v4280
  %v4609 = vpack.c.b16 %v4289, %v4281
  %v4610 = vpack.c.b16 %v4290, %v4282
  %v4611 = vpack.c.b16 %v4291, %v4283
  %v4612 = vpack.c.b16 %v4292, %v4284
  %v4613 = vpack.c.b16 %v4293, %v4285
  %v4614 = vpack.c.b16 %v4294, %v4286
  %v4615 = vpack.c.b16 %v4303, %v4295
  %v4616 = vpack.c.b16 %v4304, %v4296
  %v4617 = vpack.c.b16 %v4305, %v4297
  %v4618 = vpack.c.b16 %v4306, %v4298
  %v4619 = vpack.c.b16 %v4307, %v4299
  %v4620 = vpack.c.b16 %v4308, %v4300
  %v4621 = vpack.c.b16 %v4309, %v4301
  %v4622 = vpack.c.b16 %v4310, %v4302
  %v4623 = vpack.c.b16 %v4319, %v4311
  %v4624 = vpack.c.b16 %v4320, %v4312
  %v4625 = vpack.c.b16 %v4321, %v4313
  %v4626 = vpack.c.b16 %v4322, %v4314
  %v4627 = vpack.c.b16 %v4323, %v4315
  %v4628 = vpack.c.b16 %v4324, %v4316
  %v4629 = vpack.c.b16 %v4325, %v4317
  %v4630 = vpack.c.b16 %v4326, %v4318
  %v4631 = vpack.c.b16 %v4335, %v4327
  %v4632 = vpack.c.b16 %v4336, %v4328
  %v4633 = vpack.c.b16 %v4337, %v4329
  %v4634 = vpack.c.b16 %v4338, %v4330
  %v4635 = vpack.c.b16 %v4339, %v4331
  %v4636 = vpack.c.b16 %v4340, %v4332
  %v4637 = vpack.c.b16 %v4341, %v4333
  %v4638 = vpack.c.b16 %v4342, %v4334
  %v4639 = vpack.c.b16 %v4351, %v4343
  %v4640 = vpack.c.b16 %v4352, %v4344
  %v4641 = vpack.c.b16 %v4353, %v4345
  %v4642 = vpack.c.b16 %v4354, %v4346
  %v4643 = vpack.c.b16 %v4355, %v4347
  %v4644 = vpack.c.b16 %v4356, %v4348
  %v4645 = vpack.c.b16 %v4357, %v4349
  %v4646 = vpack.c.b16 %v4358, %v4350
  %v4647 = vpack.c.b16 %v4367, %v4359
  %v4648 = vpack.c.b16 %v4368, %v4360
  %v4649 = vpack.c.b16 %v4369, %v4361
  %v4650 = vpack.c.b16 %v4370, %v4362
  %v4651 = vpack.c.b16 %v4371, %v4363
  %v4652 = vpack.c.b16 %v4372, %v4364
  %v4653 = vpack.c.b16 %v4373, %v4365
  %v4654 = vpack.c.b16 %v4374, %v4366
  %v4655 = vpack.c.b16 %v4383, %v4375
  %v4656 = vpack.c.b16 %v4384, %v4376
  %v4657 = vpack.c.b16 %v4385, %v4377
  %v4658 = vpack.c.b16 %v4386, %v4378
  %v4659 = vpack.c.b16 %v4387, %v4379
  %v4660 = vpack.c.b16 %v4388, %v4380
  %v4661 = vpack.c.b16 %v4389, %v4381
  %v4662 = vpack.c.b16 %v4390, %v4382
  %v4663 = vpack.c.b16 %v4399, %v4391
  %v4664 = vpack.c.b16 %v4400, %v4392
  %v4665 = vpack.c.b16 %v4401, %v4393
  %v4666 = vpack.c.b16 %v4402, %v4394
  %v4667 = vpack.c.b16 %v4403, %v4395
  %v4668 = vpack.c.b16 %v4404, %v4396
  %v4669 = vpack.c.b16 %v4405, %v4397
  %v4670 = vpack.c.b16 %v4406, %v4398
  %v4671 = vpack.c.b16 %v4415, %v4407
  %v4672 = vpack.c.b16 %v4416, %v4408
  %v4673 = vpack.c.b16 %v4417, %v4409
  %v4674 = vpack.c.b16 %v4418, %v4410
  %v4675 = vpack.c.b16 %v4419, %v4411
  %v4676 = vpack.c.b16 %v4420, %v4412
  %v4677 = vpack.c.b16 %v4421, %v4413
  %v4678 = vpack.c.b16 %v4422, %v4414
  %4935 = vmatpush.bf16.msra.mxu0 %v4479
  %4936 = vmatpush.bf16.msra.mxu0 %v4471
  %4937 = vmatpush.bf16.msra.mxu0 %v4463
  %4938 = vmatpush.bf16.msra.mxu0 %v4455
  %4939 = vmatpush.bf16.msra.mxu0 %v4447
  %4940 = vmatpush.bf16.msra.mxu0 %v4439
  %4941 = vmatpush.bf16.msra.mxu0 %v4431
  %4942 = vmatpush.bf16.msra.mxu0 %v4423
  %4943 = vmatmul.bf16.gmra.mxu0 %v3633
  %v4944 = vpop.f32.mrf.mxu0
  %v4945 = vadd.f32 %v3639, %v4944
  %v4946 = vpop.f32.mrf.mxu0
  %4947 = vdwg.mxu0
  %4948 = vmatpush.bf16.msra.mxu0 %v4543
  %4949 = vmatpush.bf16.msra.mxu0 %v4535
  %4950 = vmatpush.bf16.msra.mxu0 %v4527
  %4951 = vmatpush.bf16.msra.mxu0 %v4519
  %4952 = vmatpush.bf16.msra.mxu0 %v4511
  %4953 = vmatpush.bf16.msra.mxu0 %v4503
  %4954 = vmatpush.bf16.msra.mxu0 %v4495
  %4955 = vmatpush.bf16.msra.mxu0 %v4487
  %4956 = vmatmul.bf16.gmra.mxu0 %v3634
  %v4957 = vpop.f32.mrf.mxu0
  %v4958 = vadd.f32 %v4945, %v4957
  %v4959 = vpop.f32.mrf.mxu0
  %4960 = vdwg.mxu0
  %4961 = vmatpush.bf16.msra.mxu0 %v4607
  %4962 = vmatpush.bf16.msra.mxu0 %v4599
  %4963 = vmatpush.bf16.msra.mxu0 %v4591
  %4964 = vmatpush.bf16.msra.mxu0 %v4583
  %4965 = vmatpush.bf16.msra.mxu0 %v4575
  %4966 = vmatpush.bf16.msra.mxu0 %v4567
  %4967 = vmatpush.bf16.msra.mxu0 %v4559
  %4968 = vmatpush.bf16.msra.mxu0 %v4551
  %4969 = vmatmul.bf16.gmra.mxu0 %v3635
  %v4970 = vpop.f32.mrf.mxu0
  %v4971 = vadd.f32 %v4958, %v4970
  %v4972 = vpop.f32.mrf.mxu0
  %4973 = vdwg.mxu0
  %4974 = vmatpush.bf16.msra.mxu0 %v4671
  %4975 = vmatpush.bf16.msra.mxu0 %v4663
  %4976 = vmatpush.bf16.msra.mxu0 %v4655
  %4977 = vmatpush.bf16.msra.mxu0 %v4647
  %4978 = vmatpush.bf16.msra.mxu0 %v4639
  %4979 = vmatpush.bf16.msra.mxu0 %v4631
  %4980 = vmatpush.bf16.msra.mxu0 %v4623
  %4981 = vmatpush.bf16.msra.mxu0 %v4615
  %4982 = vmatmul.bf16.gmra.mxu0 %v3636
  %v4983 = vpop.f32.mrf.mxu0
  %v4984 = vadd.f32 %v4971, %v4983
  %v4985 = vpop.f32.mrf.mxu0
  %4986 = vdwg.mxu0
  %4987 = vmatpush.bf16.msra.mxu0 %v4480
  %4988 = vmatpush.bf16.msra.mxu0 %v4472
  %4989 = vmatpush.bf16.msra.mxu0 %v4464
  %4990 = vmatpush.bf16.msra.mxu0 %v4456
  %4991 = vmatpush.bf16.msra.mxu0 %v4448
  %4992 = vmatpush.bf16.msra.mxu0 %v4440
  %4993 = vmatpush.bf16.msra.mxu0 %v4432
  %4994 = vmatpush.bf16.msra.mxu0 %v4424
  %4995 = vmatmul.bf16.gmra.mxu0 %v3633
  %v4996 = vpop.f32.mrf.mxu0
  %v4997 = vadd.f32 %v3640, %v4996
  %v4998 = vpop.f32.mrf.mxu0
  %4999 = vdwg.mxu0
  %5000 = vmatpush.bf16.msra.mxu0 %v4544
  %5001 = vmatpush.bf16.msra.mxu0 %v4536
  %5002 = vmatpush.bf16.msra.mxu0 %v4528
  %5003 = vmatpush.bf16.msra.mxu0 %v4520
  %5004 = vmatpush.bf16.msra.mxu0 %v4512
  %5005 = vmatpush.bf16.msra.mxu0 %v4504
  %5006 = vmatpush.bf16.msra.mxu0 %v4496
  %5007 = vmatpush.bf16.msra.mxu0 %v4488
  %5008 = vmatmul.bf16.gmra.mxu0 %v3634
  %v5009 = vpop.f32.mrf.mxu0
  %v5010 = vadd.f32 %v4997, %v5009
  %v5011 = vpop.f32.mrf.mxu0
  %5012 = vdwg.mxu0
  %5013 = vmatpush.bf16.msra.mxu0 %v4608
  %5014 = vmatpush.bf16.msra.mxu0 %v4600
  %5015 = vmatpush.bf16.msra.mxu0 %v4592
  %5016 = vmatpush.bf16.msra.mxu0 %v4584
  %5017 = vmatpush.bf16.msra.mxu0 %v4576
  %5018 = vmatpush.bf16.msra.mxu0 %v4568
  %5019 = vmatpush.bf16.msra.mxu0 %v4560
  %5020 = vmatpush.bf16.msra.mxu0 %v4552
  %5021 = vmatmul.bf16.gmra.mxu0 %v3635
  %v5022 = vpop.f32.mrf.mxu0
  %v5023 = vadd.f32 %v5010, %v5022
  %v5024 = vpop.f32.mrf.mxu0
  %5025 = vdwg.mxu0
  %5026 = vmatpush.bf16.msra.mxu0 %v4672
  %5027 = vmatpush.bf16.msra.mxu0 %v4664
  %5028 = vmatpush.bf16.msra.mxu0 %v4656
  %5029 = vmatpush.bf16.msra.mxu0 %v4648
  %5030 = vmatpush.bf16.msra.mxu0 %v4640
  %5031 = vmatpush.bf16.msra.mxu0 %v4632
  %5032 = vmatpush.bf16.msra.mxu0 %v4624
  %5033 = vmatpush.bf16.msra.mxu0 %v4616
  %5034 = vmatmul.bf16.gmra.mxu0 %v3636
  %v5035 = vpop.f32.mrf.mxu0
  %v5036 = vadd.f32 %v5023, %v5035
  %v5037 = vpop.f32.mrf.mxu0
  %5038 = vdwg.mxu0
  %5039 = vmatpush.bf16.msra.mxu0 %v4481
  %5040 = vmatpush.bf16.msra.mxu0 %v4473
  %5041 = vmatpush.bf16.msra.mxu0 %v4465
  %5042 = vmatpush.bf16.msra.mxu0 %v4457
  %5043 = vmatpush.bf16.msra.mxu0 %v4449
  %5044 = vmatpush.bf16.msra.mxu0 %v4441
  %5045 = vmatpush.bf16.msra.mxu0 %v4433
  %5046 = vmatpush.bf16.msra.mxu0 %v4425
  %5047 = vmatmul.bf16.gmra.mxu0 %v3633
  %v5048 = vpop.f32.mrf.mxu0
  %v5049 = vadd.f32 %v3641, %v5048
  %v5050 = vpop.f32.mrf.mxu0
  %5051 = vdwg.mxu0
  %5052 = vmatpush.bf16.msra.mxu0 %v4545
  %5053 = vmatpush.bf16.msra.mxu0 %v4537
  %5054 = vmatpush.bf16.msra.mxu0 %v4529
  %5055 = vmatpush.bf16.msra.mxu0 %v4521
  %5056 = vmatpush.bf16.msra.mxu0 %v4513
  %5057 = vmatpush.bf16.msra.mxu0 %v4505
  %5058 = vmatpush.bf16.msra.mxu0 %v4497
  %5059 = vmatpush.bf16.msra.mxu0 %v4489
  %5060 = vmatmul.bf16.gmra.mxu0 %v3634
  %v5061 = vpop.f32.mrf.mxu0
  %v5062 = vadd.f32 %v5049, %v5061
  %v5063 = vpop.f32.mrf.mxu0
  %5064 = vdwg.mxu0
  %5065 = vmatpush.bf16.msra.mxu0 %v4609
  %5066 = vmatpush.bf16.msra.mxu0 %v4601
  %5067 = vmatpush.bf16.msra.mxu0 %v4593
  %5068 = vmatpush.bf16.msra.mxu0 %v4585
  %5069 = vmatpush.bf16.msra.mxu0 %v4577
  %5070 = vmatpush.bf16.msra.mxu0 %v4569
  %5071 = vmatpush.bf16.msra.mxu0 %v4561
  %5072 = vmatpush.bf16.msra.mxu0 %v4553
  %5073 = vmatmul.bf16.gmra.mxu0 %v3635
  %v5074 = vpop.f32.mrf.mxu0
  %v5075 = vadd.f32 %v5062, %v5074
  %v5076 = vpop.f32.mrf.mxu0
  %5077 = vdwg.mxu0
  %5078 = vmatpush.bf16.msra.mxu0 %v4673
  %5079 = vmatpush.bf16.msra.mxu0 %v4665
  %5080 = vmatpush.bf16.msra.mxu0 %v4657
  %5081 = vmatpush.bf16.msra.mxu0 %v4649
  %5082 = vmatpush.bf16.msra.mxu0 %v4641
  %5083 = vmatpush.bf16.msra.mxu0 %v4633
  %5084 = vmatpush.bf16.msra.mxu0 %v4625
  %5085 = vmatpush.bf16.msra.mxu0 %v4617
  %5086 = vmatmul.bf16.gmra.mxu0 %v3636
  %v5087 = vpop.f32.mrf.mxu0
  %v5088 = vadd.f32 %v5075, %v5087
  %v5089 = vpop.f32.mrf.mxu0
  %5090 = vdwg.mxu0
  %5091 = vmatpush.bf16.msra.mxu0 %v4482
  %5092 = vmatpush.bf16.msra.mxu0 %v4474
  %5093 = vmatpush.bf16.msra.mxu0 %v4466
  %5094 = vmatpush.bf16.msra.mxu0 %v4458
  %5095 = vmatpush.bf16.msra.mxu0 %v4450
  %5096 = vmatpush.bf16.msra.mxu0 %v4442
  %5097 = vmatpush.bf16.msra.mxu0 %v4434
  %5098 = vmatpush.bf16.msra.mxu0 %v4426
  %5099 = vmatmul.bf16.gmra.mxu0 %v3633
  %v5100 = vpop.f32.mrf.mxu0
  %v5101 = vadd.f32 %v3642, %v5100
  %v5102 = vpop.f32.mrf.mxu0
  %5103 = vdwg.mxu0
  %5104 = vmatpush.bf16.msra.mxu0 %v4546
  %5105 = vmatpush.bf16.msra.mxu0 %v4538
  %5106 = vmatpush.bf16.msra.mxu0 %v4530
  %5107 = vmatpush.bf16.msra.mxu0 %v4522
  %5108 = vmatpush.bf16.msra.mxu0 %v4514
  %5109 = vmatpush.bf16.msra.mxu0 %v4506
  %5110 = vmatpush.bf16.msra.mxu0 %v4498
  %5111 = vmatpush.bf16.msra.mxu0 %v4490
  %5112 = vmatmul.bf16.gmra.mxu0 %v3634
  %v5113 = vpop.f32.mrf.mxu0
  %v5114 = vadd.f32 %v5101, %v5113
  %v5115 = vpop.f32.mrf.mxu0
  %5116 = vdwg.mxu0
  %5117 = vmatpush.bf16.msra.mxu0 %v4610
  %5118 = vmatpush.bf16.msra.mxu0 %v4602
  %5119 = vmatpush.bf16.msra.mxu0 %v4594
  %5120 = vmatpush.bf16.msra.mxu0 %v4586
  %5121 = vmatpush.bf16.msra.mxu0 %v4578
  %5122 = vmatpush.bf16.msra.mxu0 %v4570
  %5123 = vmatpush.bf16.msra.mxu0 %v4562
  %5124 = vmatpush.bf16.msra.mxu0 %v4554
  %5125 = vmatmul.bf16.gmra.mxu0 %v3635
  %v5126 = vpop.f32.mrf.mxu0
  %v5127 = vadd.f32 %v5114, %v5126
  %v5128 = vpop.f32.mrf.mxu0
  %5129 = vdwg.mxu0
  %5130 = vmatpush.bf16.msra.mxu0 %v4674
  %5131 = vmatpush.bf16.msra.mxu0 %v4666
  %5132 = vmatpush.bf16.msra.mxu0 %v4658
  %5133 = vmatpush.bf16.msra.mxu0 %v4650
  %5134 = vmatpush.bf16.msra.mxu0 %v4642
  %5135 = vmatpush.bf16.msra.mxu0 %v4634
  %5136 = vmatpush.bf16.msra.mxu0 %v4626
  %5137 = vmatpush.bf16.msra.mxu0 %v4618
  %5138 = vmatmul.bf16.gmra.mxu0 %v3636
  %v5139 = vpop.f32.mrf.mxu0
  %v5140 = vadd.f32 %v5127, %v5139
  %v5141 = vpop.f32.mrf.mxu0
  %5142 = vdwg.mxu0
  %5143 = vmatpush.bf16.msra.mxu0 %v4483
  %5144 = vmatpush.bf16.msra.mxu0 %v4475
  %5145 = vmatpush.bf16.msra.mxu0 %v4467
  %5146 = vmatpush.bf16.msra.mxu0 %v4459
  %5147 = vmatpush.bf16.msra.mxu0 %v4451
  %5148 = vmatpush.bf16.msra.mxu0 %v4443
  %5149 = vmatpush.bf16.msra.mxu0 %v4435
  %5150 = vmatpush.bf16.msra.mxu0 %v4427
  %5151 = vmatmul.bf16.gmra.mxu0 %v3633
  %v5152 = vpop.f32.mrf.mxu0
  %v5153 = vadd.f32 %v3643, %v5152
  %v5154 = vpop.f32.mrf.mxu0
  %5155 = vdwg.mxu0
  %5156 = vmatpush.bf16.msra.mxu0 %v4547
  %5157 = vmatpush.bf16.msra.mxu0 %v4539
  %5158 = vmatpush.bf16.msra.mxu0 %v4531
  %5159 = vmatpush.bf16.msra.mxu0 %v4523
  %5160 = vmatpush.bf16.msra.mxu0 %v4515
  %5161 = vmatpush.bf16.msra.mxu0 %v4507
  %5162 = vmatpush.bf16.msra.mxu0 %v4499
  %5163 = vmatpush.bf16.msra.mxu0 %v4491
  %5164 = vmatmul.bf16.gmra.mxu0 %v3634
  %v5165 = vpop.f32.mrf.mxu0
  %v5166 = vadd.f32 %v5153, %v5165
  %v5167 = vpop.f32.mrf.mxu0
  %5168 = vdwg.mxu0
  %5169 = vmatpush.bf16.msra.mxu0 %v4611
  %5170 = vmatpush.bf16.msra.mxu0 %v4603
  %5171 = vmatpush.bf16.msra.mxu0 %v4595
  %5172 = vmatpush.bf16.msra.mxu0 %v4587
  %5173 = vmatpush.bf16.msra.mxu0 %v4579
  %5174 = vmatpush.bf16.msra.mxu0 %v4571
  %5175 = vmatpush.bf16.msra.mxu0 %v4563
  %5176 = vmatpush.bf16.msra.mxu0 %v4555
  %5177 = vmatmul.bf16.gmra.mxu0 %v3635
  %v5178 = vpop.f32.mrf.mxu0
  %v5179 = vadd.f32 %v5166, %v5178
  %v5180 = vpop.f32.mrf.mxu0
  %5181 = vdwg.mxu0
  %5182 = vmatpush.bf16.msra.mxu0 %v4675
  %5183 = vmatpush.bf16.msra.mxu0 %v4667
  %5184 = vmatpush.bf16.msra.mxu0 %v4659
  %5185 = vmatpush.bf16.msra.mxu0 %v4651
  %5186 = vmatpush.bf16.msra.mxu0 %v4643
  %5187 = vmatpush.bf16.msra.mxu0 %v4635
  %5188 = vmatpush.bf16.msra.mxu0 %v4627
  %5189 = vmatpush.bf16.msra.mxu0 %v4619
  %5190 = vmatmul.bf16.gmra.mxu0 %v3636
  %v5191 = vpop.f32.mrf.mxu0
  %v5192 = vadd.f32 %v5179, %v5191
  %v5193 = vpop.f32.mrf.mxu0
  %5194 = vdwg.mxu0
  %5195 = vmatpush.bf16.msra.mxu0 %v4484
  %5196 = vmatpush.bf16.msra.mxu0 %v4476
  %5197 = vmatpush.bf16.msra.mxu0 %v4468
  %5198 = vmatpush.bf16.msra.mxu0 %v4460
  %5199 = vmatpush.bf16.msra.mxu0 %v4452
  %5200 = vmatpush.bf16.msra.mxu0 %v4444
  %5201 = vmatpush.bf16.msra.mxu0 %v4436
  %5202 = vmatpush.bf16.msra.mxu0 %v4428
  %5203 = vmatmul.bf16.gmra.mxu0 %v3633
  %v5204 = vpop.f32.mrf.mxu0
  %v5205 = vadd.f32 %v3644, %v5204
  %v5206 = vpop.f32.mrf.mxu0
  %5207 = vdwg.mxu0
  %5208 = vmatpush.bf16.msra.mxu0 %v4548
  %5209 = vmatpush.bf16.msra.mxu0 %v4540
  %5210 = vmatpush.bf16.msra.mxu0 %v4532
  %5211 = vmatpush.bf16.msra.mxu0 %v4524
  %5212 = vmatpush.bf16.msra.mxu0 %v4516
  %5213 = vmatpush.bf16.msra.mxu0 %v4508
  %5214 = vmatpush.bf16.msra.mxu0 %v4500
  %5215 = vmatpush.bf16.msra.mxu0 %v4492
  %5216 = vmatmul.bf16.gmra.mxu0 %v3634
  %v5217 = vpop.f32.mrf.mxu0
  %v5218 = vadd.f32 %v5205, %v5217
  %v5219 = vpop.f32.mrf.mxu0
  %5220 = vdwg.mxu0
  %5221 = vmatpush.bf16.msra.mxu0 %v4612
  %5222 = vmatpush.bf16.msra.mxu0 %v4604
  %5223 = vmatpush.bf16.msra.mxu0 %v4596
  %5224 = vmatpush.bf16.msra.mxu0 %v4588
  %5225 = vmatpush.bf16.msra.mxu0 %v4580
  %5226 = vmatpush.bf16.msra.mxu0 %v4572
  %5227 = vmatpush.bf16.msra.mxu0 %v4564
  %5228 = vmatpush.bf16.msra.mxu0 %v4556
  %5229 = vmatmul.bf16.gmra.mxu0 %v3635
  %v5230 = vpop.f32.mrf.mxu0
  %v5231 = vadd.f32 %v5218, %v5230
  %v5232 = vpop.f32.mrf.mxu0
  %5233 = vdwg.mxu0
  %5234 = vmatpush.bf16.msra.mxu0 %v4676
  %5235 = vmatpush.bf16.msra.mxu0 %v4668
  %5236 = vmatpush.bf16.msra.mxu0 %v4660
  %5237 = vmatpush.bf16.msra.mxu0 %v4652
  %5238 = vmatpush.bf16.msra.mxu0 %v4644
  %5239 = vmatpush.bf16.msra.mxu0 %v4636
  %5240 = vmatpush.bf16.msra.mxu0 %v4628
  %5241 = vmatpush.bf16.msra.mxu0 %v4620
  %5242 = vmatmul.bf16.gmra.mxu0 %v3636
  %v5243 = vpop.f32.mrf.mxu0
  %v5244 = vadd.f32 %v5231, %v5243
  %v5245 = vpop.f32.mrf.mxu0
  %5246 = vdwg.mxu0
  %5247 = vmatpush.bf16.msra.mxu0 %v4485
  %5248 = vmatpush.bf16.msra.mxu0 %v4477
  %5249 = vmatpush.bf16.msra.mxu0 %v4469
  %5250 = vmatpush.bf16.msra.mxu0 %v4461
  %5251 = vmatpush.bf16.msra.mxu0 %v4453
  %5252 = vmatpush.bf16.msra.mxu0 %v4445
  %5253 = vmatpush.bf16.msra.mxu0 %v4437
  %5254 = vmatpush.bf16.msra.mxu0 %v4429
  %5255 = vmatmul.bf16.gmra.mxu0 %v3633
  %v5256 = vpop.f32.mrf.mxu0
  %v5257 = vadd.f32 %v3645, %v5256
  %v5258 = vpop.f32.mrf.mxu0
  %5259 = vdwg.mxu0
  %5260 = vmatpush.bf16.msra.mxu0 %v4549
  %5261 = vmatpush.bf16.msra.mxu0 %v4541
  %5262 = vmatpush.bf16.msra.mxu0 %v4533
  %5263 = vmatpush.bf16.msra.mxu0 %v4525
  %5264 = vmatpush.bf16.msra.mxu0 %v4517
  %5265 = vmatpush.bf16.msra.mxu0 %v4509
  %5266 = vmatpush.bf16.msra.mxu0 %v4501
  %5267 = vmatpush.bf16.msra.mxu0 %v4493
  %5268 = vmatmul.bf16.gmra.mxu0 %v3634
  %v5269 = vpop.f32.mrf.mxu0
  %v5270 = vadd.f32 %v5257, %v5269
  %v5271 = vpop.f32.mrf.mxu0
  %5272 = vdwg.mxu0
  %5273 = vmatpush.bf16.msra.mxu0 %v4613
  %5274 = vmatpush.bf16.msra.mxu0 %v4605
  %5275 = vmatpush.bf16.msra.mxu0 %v4597
  %5276 = vmatpush.bf16.msra.mxu0 %v4589
  %5277 = vmatpush.bf16.msra.mxu0 %v4581
  %5278 = vmatpush.bf16.msra.mxu0 %v4573
  %5279 = vmatpush.bf16.msra.mxu0 %v4565
  %5280 = vmatpush.bf16.msra.mxu0 %v4557
  %5281 = vmatmul.bf16.gmra.mxu0 %v3635
  %v5282 = vpop.f32.mrf.mxu0
  %v5283 = vadd.f32 %v5270, %v5282
  %v5284 = vpop.f32.mrf.mxu0
  %5285 = vdwg.mxu0
  %5286 = vmatpush.bf16.msra.mxu0 %v4677
  %5287 = vmatpush.bf16.msra.mxu0 %v4669
  %5288 = vmatpush.bf16.msra.mxu0 %v4661
  %5289 = vmatpush.bf16.msra.mxu0 %v4653
  %5290 = vmatpush.bf16.msra.mxu0 %v4645
  %5291 = vmatpush.bf16.msra.mxu0 %v4637
  %5292 = vmatpush.bf16.msra.mxu0 %v4629
  %5293 = vmatpush.bf16.msra.mxu0 %v4621
  %5294 = vmatmul.bf16.gmra.mxu0 %v3636
  %v5295 = vpop.f32.mrf.mxu0
  %v5296 = vadd.f32 %v5283, %v5295
  %v5297 = vpop.f32.mrf.mxu0
  %5298 = vdwg.mxu0
  %5299 = vmatpush.bf16.msra.mxu0 %v4486
  %5300 = vmatpush.bf16.msra.mxu0 %v4478
  %5301 = vmatpush.bf16.msra.mxu0 %v4470
  %5302 = vmatpush.bf16.msra.mxu0 %v4462
  %5303 = vmatpush.bf16.msra.mxu0 %v4454
  %5304 = vmatpush.bf16.msra.mxu0 %v4446
  %5305 = vmatpush.bf16.msra.mxu0 %v4438
  %5306 = vmatpush.bf16.msra.mxu0 %v4430
  %5307 = vmatmul.bf16.gmra.mxu0 %v3633
  %v5308 = vpop.f32.mrf.mxu0
  %v5309 = vadd.f32 %v3646, %v5308
  %v5310 = vpop.f32.mrf.mxu0
  %5311 = vdwg.mxu0
  %5312 = vmatpush.bf16.msra.mxu0 %v4550
  %5313 = vmatpush.bf16.msra.mxu0 %v4542
  %5314 = vmatpush.bf16.msra.mxu0 %v4534
  %5315 = vmatpush.bf16.msra.mxu0 %v4526
  %5316 = vmatpush.bf16.msra.mxu0 %v4518
  %5317 = vmatpush.bf16.msra.mxu0 %v4510
  %5318 = vmatpush.bf16.msra.mxu0 %v4502
  %5319 = vmatpush.bf16.msra.mxu0 %v4494
  %5320 = vmatmul.bf16.gmra.mxu0 %v3634
  %v5321 = vpop.f32.mrf.mxu0
  %v5322 = vadd.f32 %v5309, %v5321
  %v5323 = vpop.f32.mrf.mxu0
  %5324 = vdwg.mxu0
  %5325 = vmatpush.bf16.msra.mxu0 %v4614
  %5326 = vmatpush.bf16.msra.mxu0 %v4606
  %5327 = vmatpush.bf16.msra.mxu0 %v4598
  %5328 = vmatpush.bf16.msra.mxu0 %v4590
  %5329 = vmatpush.bf16.msra.mxu0 %v4582
  %5330 = vmatpush.bf16.msra.mxu0 %v4574
  %5331 = vmatpush.bf16.msra.mxu0 %v4566
  %5332 = vmatpush.bf16.msra.mxu0 %v4558
  %5333 = vmatmul.bf16.gmra.mxu0 %v3635
  %v5334 = vpop.f32.mrf.mxu0
  %v5335 = vadd.f32 %v5322, %v5334
  %v5336 = vpop.f32.mrf.mxu0
  %5337 = vdwg.mxu0
  %5338 = vmatpush.bf16.msra.mxu0 %v4678
  %5339 = vmatpush.bf16.msra.mxu0 %v4670
  %5340 = vmatpush.bf16.msra.mxu0 %v4662
  %5341 = vmatpush.bf16.msra.mxu0 %v4654
  %5342 = vmatpush.bf16.msra.mxu0 %v4646
  %5343 = vmatpush.bf16.msra.mxu0 %v4638
  %5344 = vmatpush.bf16.msra.mxu0 %v4630
  %5345 = vmatpush.bf16.msra.mxu0 %v4622
  %5346 = vmatmul.bf16.gmra.mxu0 %v3636
  %v5347 = vpop.f32.mrf.mxu0
  %v5348 = vadd.f32 %v5335, %v5347
  %v5349 = vpop.f32.mrf.mxu0
  %5350 = vdwg.mxu0
  %s5351 = sshll.u32 %s3374, 4
  %5352 = dma.done %s717, %s5351
  %v5353 = vld [vmem:[#allocation3 + $0x800] sm:$0xff]
  %v5354 = vld [vmem:[#allocation3 + $0x808] sm:$0xff]
  %v5355 = vld [vmem:[#allocation3 + $0x810] sm:$0xff]
  %v5356 = vld [vmem:[#allocation3 + $0x818] sm:$0xff]
  %v5357 = vld [vmem:[#allocation3 + $0x820] sm:$0xff]
  %v5358 = vld [vmem:[#allocation3 + $0x828] sm:$0xff]
  %v5359 = vld [vmem:[#allocation3 + $0x830] sm:$0xff]
  %v5360 = vld [vmem:[#allocation3 + $0x838] sm:$0xff]
  %v5361 = vld [vmem:[#allocation3 + $0x840] sm:$0xff]
  %v5362 = vld [vmem:[#allocation3 + $0x848] sm:$0xff]
  %v5363 = vld [vmem:[#allocation3 + $0x850] sm:$0xff]
  %v5364 = vld [vmem:[#allocation3 + $0x858] sm:$0xff]
  %v5365 = vld [vmem:[#allocation3 + $0x860] sm:$0xff]
  %v5366 = vld [vmem:[#allocation3 + $0x868] sm:$0xff]
  %v5367 = vld [vmem:[#allocation3 + $0x870] sm:$0xff]
  %v5368 = vld [vmem:[#allocation3 + $0x878] sm:$0xff]
  %v5369 = vld [vmem:[#allocation3 + $0x880] sm:$0xff]
  %v5370 = vld [vmem:[#allocation3 + $0x888] sm:$0xff]
  %v5371 = vld [vmem:[#allocation3 + $0x890] sm:$0xff]
  %v5372 = vld [vmem:[#allocation3 + $0x898] sm:$0xff]
  %v5373 = vld [vmem:[#allocation3 + $0x8a0] sm:$0xff]
  %v5374 = vld [vmem:[#allocation3 + $0x8a8] sm:$0xff]
  %v5375 = vld [vmem:[#allocation3 + $0x8b0] sm:$0xff]
  %v5376 = vld [vmem:[#allocation3 + $0x8b8] sm:$0xff]
  %v5377 = vld [vmem:[#allocation3 + $0x8c0] sm:$0xff]
  %v5378 = vld [vmem:[#allocation3 + $0x8c8] sm:$0xff]
  %v5379 = vld [vmem:[#allocation3 + $0x8d0] sm:$0xff]
  %v5380 = vld [vmem:[#allocation3 + $0x8d8] sm:$0xff]
  %v5381 = vld [vmem:[#allocation3 + $0x8e0] sm:$0xff]
  %v5382 = vld [vmem:[#allocation3 + $0x8e8] sm:$0xff]
  %v5383 = vld [vmem:[#allocation3 + $0x8f0] sm:$0xff]
  %v5384 = vld [vmem:[#allocation3 + $0x8f8] sm:$0xff]
  %v5385 = vld [vmem:[#allocation3 + $0x900] sm:$0xff]
  %v5386 = vld [vmem:[#allocation3 + $0x908] sm:$0xff]
  %v5387 = vld [vmem:[#allocation3 + $0x910] sm:$0xff]
  %v5388 = vld [vmem:[#allocation3 + $0x918] sm:$0xff]
  %v5389 = vld [vmem:[#allocation3 + $0x920] sm:$0xff]
  %v5390 = vld [vmem:[#allocation3 + $0x928] sm:$0xff]
  %v5391 = vld [vmem:[#allocation3 + $0x930] sm:$0xff]
  %v5392 = vld [vmem:[#allocation3 + $0x938] sm:$0xff]
  %v5393 = vld [vmem:[#allocation3 + $0x940] sm:$0xff]
  %v5394 = vld [vmem:[#allocation3 + $0x948] sm:$0xff]
  %v5395 = vld [vmem:[#allocation3 + $0x950] sm:$0xff]
  %v5396 = vld [vmem:[#allocation3 + $0x958] sm:$0xff]
  %v5397 = vld [vmem:[#allocation3 + $0x960] sm:$0xff]
  %v5398 = vld [vmem:[#allocation3 + $0x968] sm:$0xff]
  %v5399 = vld [vmem:[#allocation3 + $0x970] sm:$0xff]
  %v5400 = vld [vmem:[#allocation3 + $0x978] sm:$0xff]
  %v5401 = vld [vmem:[#allocation3 + $0x980] sm:$0xff]
  %v5402 = vld [vmem:[#allocation3 + $0x988] sm:$0xff]
  %v5403 = vld [vmem:[#allocation3 + $0x990] sm:$0xff]
  %v5404 = vld [vmem:[#allocation3 + $0x998] sm:$0xff]
  %v5405 = vld [vmem:[#allocation3 + $0x9a0] sm:$0xff]
  %v5406 = vld [vmem:[#allocation3 + $0x9a8] sm:$0xff]
  %v5407 = vld [vmem:[#allocation3 + $0x9b0] sm:$0xff]
  %v5408 = vld [vmem:[#allocation3 + $0x9b8] sm:$0xff]
  %v5409 = vld [vmem:[#allocation3 + $0x9c0] sm:$0xff]
  %v5410 = vld [vmem:[#allocation3 + $0x9c8] sm:$0xff]
  %v5411 = vld [vmem:[#allocation3 + $0x9d0] sm:$0xff]
  %v5412 = vld [vmem:[#allocation3 + $0x9d8] sm:$0xff]
  %v5413 = vld [vmem:[#allocation3 + $0x9e0] sm:$0xff]
  %v5414 = vld [vmem:[#allocation3 + $0x9e8] sm:$0xff]
  %v5415 = vld [vmem:[#allocation3 + $0x9f0] sm:$0xff]
  %v5416 = vld [vmem:[#allocation3 + $0x9f8] sm:$0xff]
  %v5417 = vld [vmem:[#allocation3 + $0xa00] sm:$0xff]
  %v5418 = vld [vmem:[#allocation3 + $0xa08] sm:$0xff]
  %v5419 = vld [vmem:[#allocation3 + $0xa10] sm:$0xff]
  %v5420 = vld [vmem:[#allocation3 + $0xa18] sm:$0xff]
  %v5421 = vld [vmem:[#allocation3 + $0xa20] sm:$0xff]
  %v5422 = vld [vmem:[#allocation3 + $0xa28] sm:$0xff]
  %v5423 = vld [vmem:[#allocation3 + $0xa30] sm:$0xff]
  %v5424 = vld [vmem:[#allocation3 + $0xa38] sm:$0xff]
  %v5425 = vld [vmem:[#allocation3 + $0xa40] sm:$0xff]
  %v5426 = vld [vmem:[#allocation3 + $0xa48] sm:$0xff]
  %v5427 = vld [vmem:[#allocation3 + $0xa50] sm:$0xff]
  %v5428 = vld [vmem:[#allocation3 + $0xa58] sm:$0xff]
  %v5429 = vld [vmem:[#allocation3 + $0xa60] sm:$0xff]
  %v5430 = vld [vmem:[#allocation3 + $0xa68] sm:$0xff]
  %v5431 = vld [vmem:[#allocation3 + $0xa70] sm:$0xff]
  %v5432 = vld [vmem:[#allocation3 + $0xa78] sm:$0xff]
  %v5433 = vld [vmem:[#allocation3 + $0xa80] sm:$0xff]
  %v5434 = vld [vmem:[#allocation3 + $0xa88] sm:$0xff]
  %v5435 = vld [vmem:[#allocation3 + $0xa90] sm:$0xff]
  %v5436 = vld [vmem:[#allocation3 + $0xa98] sm:$0xff]
  %v5437 = vld [vmem:[#allocation3 + $0xaa0] sm:$0xff]
  %v5438 = vld [vmem:[#allocation3 + $0xaa8] sm:$0xff]
  %v5439 = vld [vmem:[#allocation3 + $0xab0] sm:$0xff]
  %v5440 = vld [vmem:[#allocation3 + $0xab8] sm:$0xff]
  %v5441 = vld [vmem:[#allocation3 + $0xac0] sm:$0xff]
  %v5442 = vld [vmem:[#allocation3 + $0xac8] sm:$0xff]
  %v5443 = vld [vmem:[#allocation3 + $0xad0] sm:$0xff]
  %v5444 = vld [vmem:[#allocation3 + $0xad8] sm:$0xff]
  %v5445 = vld [vmem:[#allocation3 + $0xae0] sm:$0xff]
  %v5446 = vld [vmem:[#allocation3 + $0xae8] sm:$0xff]
  %v5447 = vld [vmem:[#allocation3 + $0xaf0] sm:$0xff]
  %v5448 = vld [vmem:[#allocation3 + $0xaf8] sm:$0xff]
  %v5449 = vld [vmem:[#allocation3 + $0xb00] sm:$0xff]
  %v5450 = vld [vmem:[#allocation3 + $0xb08] sm:$0xff]
  %v5451 = vld [vmem:[#allocation3 + $0xb10] sm:$0xff]
  %v5452 = vld [vmem:[#allocation3 + $0xb18] sm:$0xff]
  %v5453 = vld [vmem:[#allocation3 + $0xb20] sm:$0xff]
  %v5454 = vld [vmem:[#allocation3 + $0xb28] sm:$0xff]
  %v5455 = vld [vmem:[#allocation3 + $0xb30] sm:$0xff]
  %v5456 = vld [vmem:[#allocation3 + $0xb38] sm:$0xff]
  %v5457 = vld [vmem:[#allocation3 + $0xb40] sm:$0xff]
  %v5458 = vld [vmem:[#allocation3 + $0xb48] sm:$0xff]
  %v5459 = vld [vmem:[#allocation3 + $0xb50] sm:$0xff]
  %v5460 = vld [vmem:[#allocation3 + $0xb58] sm:$0xff]
  %v5461 = vld [vmem:[#allocation3 + $0xb60] sm:$0xff]
  %v5462 = vld [vmem:[#allocation3 + $0xb68] sm:$0xff]
  %v5463 = vld [vmem:[#allocation3 + $0xb70] sm:$0xff]
  %v5464 = vld [vmem:[#allocation3 + $0xb78] sm:$0xff]
  %v5465 = vld [vmem:[#allocation3 + $0xb80] sm:$0xff]
  %v5466 = vld [vmem:[#allocation3 + $0xb88] sm:$0xff]
  %v5467 = vld [vmem:[#allocation3 + $0xb90] sm:$0xff]
  %v5468 = vld [vmem:[#allocation3 + $0xb98] sm:$0xff]
  %v5469 = vld [vmem:[#allocation3 + $0xba0] sm:$0xff]
  %v5470 = vld [vmem:[#allocation3 + $0xba8] sm:$0xff]
  %v5471 = vld [vmem:[#allocation3 + $0xbb0] sm:$0xff]
  %v5472 = vld [vmem:[#allocation3 + $0xbb8] sm:$0xff]
  %v5473 = vld [vmem:[#allocation3 + $0xbc0] sm:$0xff]
  %v5474 = vld [vmem:[#allocation3 + $0xbc8] sm:$0xff]
  %v5475 = vld [vmem:[#allocation3 + $0xbd0] sm:$0xff]
  %v5476 = vld [vmem:[#allocation3 + $0xbd8] sm:$0xff]
  %v5477 = vld [vmem:[#allocation3 + $0xbe0] sm:$0xff]
  %v5478 = vld [vmem:[#allocation3 + $0xbe8] sm:$0xff]
  %v5479 = vld [vmem:[#allocation3 + $0xbf0] sm:$0xff]
  %v5480 = vld [vmem:[#allocation3 + $0xbf8] sm:$0xff]
  %v5481 = vld [vmem:[#allocation3 + $0xc00] sm:$0xff]
  %v5482 = vld [vmem:[#allocation3 + $0xc08] sm:$0xff]
  %v5483 = vld [vmem:[#allocation3 + $0xc10] sm:$0xff]
  %v5484 = vld [vmem:[#allocation3 + $0xc18] sm:$0xff]
  %v5485 = vld [vmem:[#allocation3 + $0xc20] sm:$0xff]
  %v5486 = vld [vmem:[#allocation3 + $0xc28] sm:$0xff]
  %v5487 = vld [vmem:[#allocation3 + $0xc30] sm:$0xff]
  %v5488 = vld [vmem:[#allocation3 + $0xc38] sm:$0xff]
  %v5489 = vld [vmem:[#allocation3 + $0xc40] sm:$0xff]
  %v5490 = vld [vmem:[#allocation3 + $0xc48] sm:$0xff]
  %v5491 = vld [vmem:[#allocation3 + $0xc50] sm:$0xff]
  %v5492 = vld [vmem:[#allocation3 + $0xc58] sm:$0xff]
  %v5493 = vld [vmem:[#allocation3 + $0xc60] sm:$0xff]
  %v5494 = vld [vmem:[#allocation3 + $0xc68] sm:$0xff]
  %v5495 = vld [vmem:[#allocation3 + $0xc70] sm:$0xff]
  %v5496 = vld [vmem:[#allocation3 + $0xc78] sm:$0xff]
  %v5497 = vld [vmem:[#allocation3 + $0xc80] sm:$0xff]
  %v5498 = vld [vmem:[#allocation3 + $0xc88] sm:$0xff]
  %v5499 = vld [vmem:[#allocation3 + $0xc90] sm:$0xff]
  %v5500 = vld [vmem:[#allocation3 + $0xc98] sm:$0xff]
  %v5501 = vld [vmem:[#allocation3 + $0xca0] sm:$0xff]
  %v5502 = vld [vmem:[#allocation3 + $0xca8] sm:$0xff]
  %v5503 = vld [vmem:[#allocation3 + $0xcb0] sm:$0xff]
  %v5504 = vld [vmem:[#allocation3 + $0xcb8] sm:$0xff]
  %v5505 = vld [vmem:[#allocation3 + $0xcc0] sm:$0xff]
  %v5506 = vld [vmem:[#allocation3 + $0xcc8] sm:$0xff]
  %v5507 = vld [vmem:[#allocation3 + $0xcd0] sm:$0xff]
  %v5508 = vld [vmem:[#allocation3 + $0xcd8] sm:$0xff]
  %v5509 = vld [vmem:[#allocation3 + $0xce0] sm:$0xff]
  %v5510 = vld [vmem:[#allocation3 + $0xce8] sm:$0xff]
  %v5511 = vld [vmem:[#allocation3 + $0xcf0] sm:$0xff]
  %v5512 = vld [vmem:[#allocation3 + $0xcf8] sm:$0xff]
  %v5513 = vld [vmem:[#allocation3 + $0xd00] sm:$0xff]
  %v5514 = vld [vmem:[#allocation3 + $0xd08] sm:$0xff]
  %v5515 = vld [vmem:[#allocation3 + $0xd10] sm:$0xff]
  %v5516 = vld [vmem:[#allocation3 + $0xd18] sm:$0xff]
  %v5517 = vld [vmem:[#allocation3 + $0xd20] sm:$0xff]
  %v5518 = vld [vmem:[#allocation3 + $0xd28] sm:$0xff]
  %v5519 = vld [vmem:[#allocation3 + $0xd30] sm:$0xff]
  %v5520 = vld [vmem:[#allocation3 + $0xd38] sm:$0xff]
  %v5521 = vld [vmem:[#allocation3 + $0xd40] sm:$0xff]
  %v5522 = vld [vmem:[#allocation3 + $0xd48] sm:$0xff]
  %v5523 = vld [vmem:[#allocation3 + $0xd50] sm:$0xff]
  %v5524 = vld [vmem:[#allocation3 + $0xd58] sm:$0xff]
  %v5525 = vld [vmem:[#allocation3 + $0xd60] sm:$0xff]
  %v5526 = vld [vmem:[#allocation3 + $0xd68] sm:$0xff]
  %v5527 = vld [vmem:[#allocation3 + $0xd70] sm:$0xff]
  %v5528 = vld [vmem:[#allocation3 + $0xd78] sm:$0xff]
  %v5529 = vld [vmem:[#allocation3 + $0xd80] sm:$0xff]
  %v5530 = vld [vmem:[#allocation3 + $0xd88] sm:$0xff]
  %v5531 = vld [vmem:[#allocation3 + $0xd90] sm:$0xff]
  %v5532 = vld [vmem:[#allocation3 + $0xd98] sm:$0xff]
  %v5533 = vld [vmem:[#allocation3 + $0xda0] sm:$0xff]
  %v5534 = vld [vmem:[#allocation3 + $0xda8] sm:$0xff]
  %v5535 = vld [vmem:[#allocation3 + $0xdb0] sm:$0xff]
  %v5536 = vld [vmem:[#allocation3 + $0xdb8] sm:$0xff]
  %v5537 = vld [vmem:[#allocation3 + $0xdc0] sm:$0xff]
  %v5538 = vld [vmem:[#allocation3 + $0xdc8] sm:$0xff]
  %v5539 = vld [vmem:[#allocation3 + $0xdd0] sm:$0xff]
  %v5540 = vld [vmem:[#allocation3 + $0xdd8] sm:$0xff]
  %v5541 = vld [vmem:[#allocation3 + $0xde0] sm:$0xff]
  %v5542 = vld [vmem:[#allocation3 + $0xde8] sm:$0xff]
  %v5543 = vld [vmem:[#allocation3 + $0xdf0] sm:$0xff]
  %v5544 = vld [vmem:[#allocation3 + $0xdf8] sm:$0xff]
  %v5545 = vld [vmem:[#allocation3 + $0xe00] sm:$0xff]
  %v5546 = vld [vmem:[#allocation3 + $0xe08] sm:$0xff]
  %v5547 = vld [vmem:[#allocation3 + $0xe10] sm:$0xff]
  %v5548 = vld [vmem:[#allocation3 + $0xe18] sm:$0xff]
  %v5549 = vld [vmem:[#allocation3 + $0xe20] sm:$0xff]
  %v5550 = vld [vmem:[#allocation3 + $0xe28] sm:$0xff]
  %v5551 = vld [vmem:[#allocation3 + $0xe30] sm:$0xff]
  %v5552 = vld [vmem:[#allocation3 + $0xe38] sm:$0xff]
  %v5553 = vld [vmem:[#allocation3 + $0xe40] sm:$0xff]
  %v5554 = vld [vmem:[#allocation3 + $0xe48] sm:$0xff]
  %v5555 = vld [vmem:[#allocation3 + $0xe50] sm:$0xff]
  %v5556 = vld [vmem:[#allocation3 + $0xe58] sm:$0xff]
  %v5557 = vld [vmem:[#allocation3 + $0xe60] sm:$0xff]
  %v5558 = vld [vmem:[#allocation3 + $0xe68] sm:$0xff]
  %v5559 = vld [vmem:[#allocation3 + $0xe70] sm:$0xff]
  %v5560 = vld [vmem:[#allocation3 + $0xe78] sm:$0xff]
  %v5561 = vld [vmem:[#allocation3 + $0xe80] sm:$0xff]
  %v5562 = vld [vmem:[#allocation3 + $0xe88] sm:$0xff]
  %v5563 = vld [vmem:[#allocation3 + $0xe90] sm:$0xff]
  %v5564 = vld [vmem:[#allocation3 + $0xe98] sm:$0xff]
  %v5565 = vld [vmem:[#allocation3 + $0xea0] sm:$0xff]
  %v5566 = vld [vmem:[#allocation3 + $0xea8] sm:$0xff]
  %v5567 = vld [vmem:[#allocation3 + $0xeb0] sm:$0xff]
  %v5568 = vld [vmem:[#allocation3 + $0xeb8] sm:$0xff]
  %v5569 = vld [vmem:[#allocation3 + $0xec0] sm:$0xff]
  %v5570 = vld [vmem:[#allocation3 + $0xec8] sm:$0xff]
  %v5571 = vld [vmem:[#allocation3 + $0xed0] sm:$0xff]
  %v5572 = vld [vmem:[#allocation3 + $0xed8] sm:$0xff]
  %v5573 = vld [vmem:[#allocation3 + $0xee0] sm:$0xff]
  %v5574 = vld [vmem:[#allocation3 + $0xee8] sm:$0xff]
  %v5575 = vld [vmem:[#allocation3 + $0xef0] sm:$0xff]
  %v5576 = vld [vmem:[#allocation3 + $0xef8] sm:$0xff]
  %v5577 = vld [vmem:[#allocation3 + $0xf00] sm:$0xff]
  %v5578 = vld [vmem:[#allocation3 + $0xf08] sm:$0xff]
  %v5579 = vld [vmem:[#allocation3 + $0xf10] sm:$0xff]
  %v5580 = vld [vmem:[#allocation3 + $0xf18] sm:$0xff]
  %v5581 = vld [vmem:[#allocation3 + $0xf20] sm:$0xff]
  %v5582 = vld [vmem:[#allocation3 + $0xf28] sm:$0xff]
  %v5583 = vld [vmem:[#allocation3 + $0xf30] sm:$0xff]
  %v5584 = vld [vmem:[#allocation3 + $0xf38] sm:$0xff]
  %v5585 = vld [vmem:[#allocation3 + $0xf40] sm:$0xff]
  %v5586 = vld [vmem:[#allocation3 + $0xf48] sm:$0xff]
  %v5587 = vld [vmem:[#allocation3 + $0xf50] sm:$0xff]
  %v5588 = vld [vmem:[#allocation3 + $0xf58] sm:$0xff]
  %v5589 = vld [vmem:[#allocation3 + $0xf60] sm:$0xff]
  %v5590 = vld [vmem:[#allocation3 + $0xf68] sm:$0xff]
  %v5591 = vld [vmem:[#allocation3 + $0xf70] sm:$0xff]
  %v5592 = vld [vmem:[#allocation3 + $0xf78] sm:$0xff]
  %v5593 = vld [vmem:[#allocation3 + $0xf80] sm:$0xff]
  %v5594 = vld [vmem:[#allocation3 + $0xf88] sm:$0xff]
  %v5595 = vld [vmem:[#allocation3 + $0xf90] sm:$0xff]
  %v5596 = vld [vmem:[#allocation3 + $0xf98] sm:$0xff]
  %v5597 = vld [vmem:[#allocation3 + $0xfa0] sm:$0xff]
  %v5598 = vld [vmem:[#allocation3 + $0xfa8] sm:$0xff]
  %v5599 = vld [vmem:[#allocation3 + $0xfb0] sm:$0xff]
  %v5600 = vld [vmem:[#allocation3 + $0xfb8] sm:$0xff]
  %v5601 = vld [vmem:[#allocation3 + $0xfc0] sm:$0xff]
  %v5602 = vld [vmem:[#allocation3 + $0xfc8] sm:$0xff]
  %v5603 = vld [vmem:[#allocation3 + $0xfd0] sm:$0xff]
  %v5604 = vld [vmem:[#allocation3 + $0xfd8] sm:$0xff]
  %v5605 = vld [vmem:[#allocation3 + $0xfe0] sm:$0xff]
  %v5606 = vld [vmem:[#allocation3 + $0xfe8] sm:$0xff]
  %v5607 = vld [vmem:[#allocation3 + $0xff0] sm:$0xff]
  %v5608 = vld [vmem:[#allocation3 + $0xff8] sm:$0xff]
  %v5609 = vpack.c.bf16 %v3331, %v3331
  %v5610 = vpack.c.bf16 %v3344, %v3344
  %v5611 = vpack.c.bf16 %v3357, %v3357
  %v5612 = vpack.c.bf16 %v3370, %v3370
  %v5869 = vunpack.c.l.b16 %v5353
  %v5870 = vunpack.c.h.b16 %v5353
  %v5871 = vunpack.c.l.b16 %v5354
  %v5872 = vunpack.c.h.b16 %v5354
  %v5873 = vunpack.c.l.b16 %v5355
  %v5874 = vunpack.c.h.b16 %v5355
  %v5875 = vunpack.c.l.b16 %v5356
  %v5876 = vunpack.c.h.b16 %v5356
  %v5877 = vunpack.c.l.b16 %v5357
  %v5878 = vunpack.c.h.b16 %v5357
  %v5879 = vunpack.c.l.b16 %v5358
  %v5880 = vunpack.c.h.b16 %v5358
  %v5881 = vunpack.c.l.b16 %v5359
  %v5882 = vunpack.c.h.b16 %v5359
  %v5883 = vunpack.c.l.b16 %v5360
  %v5884 = vunpack.c.h.b16 %v5360
  %v5885 = vunpack.c.l.b16 %v5361
  %v5886 = vunpack.c.h.b16 %v5361
  %v5887 = vunpack.c.l.b16 %v5362
  %v5888 = vunpack.c.h.b16 %v5362
  %v5889 = vunpack.c.l.b16 %v5363
  %v5890 = vunpack.c.h.b16 %v5363
  %v5891 = vunpack.c.l.b16 %v5364
  %v5892 = vunpack.c.h.b16 %v5364
  %v5893 = vunpack.c.l.b16 %v5365
  %v5894 = vunpack.c.h.b16 %v5365
  %v5895 = vunpack.c.l.b16 %v5366
  %v5896 = vunpack.c.h.b16 %v5366
  %v5897 = vunpack.c.l.b16 %v5367
  %v5898 = vunpack.c.h.b16 %v5367
  %v5899 = vunpack.c.l.b16 %v5368
  %v5900 = vunpack.c.h.b16 %v5368
  %v5901 = vunpack.c.l.b16 %v5369
  %v5902 = vunpack.c.h.b16 %v5369
  %v5903 = vunpack.c.l.b16 %v5370
  %v5904 = vunpack.c.h.b16 %v5370
  %v5905 = vunpack.c.l.b16 %v5371
  %v5906 = vunpack.c.h.b16 %v5371
  %v5907 = vunpack.c.l.b16 %v5372
  %v5908 = vunpack.c.h.b16 %v5372
  %v5909 = vunpack.c.l.b16 %v5373
  %v5910 = vunpack.c.h.b16 %v5373
  %v5911 = vunpack.c.l.b16 %v5374
  %v5912 = vunpack.c.h.b16 %v5374
  %v5913 = vunpack.c.l.b16 %v5375
  %v5914 = vunpack.c.h.b16 %v5375
  %v5915 = vunpack.c.l.b16 %v5376
  %v5916 = vunpack.c.h.b16 %v5376
  %v5917 = vunpack.c.l.b16 %v5377
  %v5918 = vunpack.c.h.b16 %v5377
  %v5919 = vunpack.c.l.b16 %v5378
  %v5920 = vunpack.c.h.b16 %v5378
  %v5921 = vunpack.c.l.b16 %v5379
  %v5922 = vunpack.c.h.b16 %v5379
  %v5923 = vunpack.c.l.b16 %v5380
  %v5924 = vunpack.c.h.b16 %v5380
  %v5925 = vunpack.c.l.b16 %v5381
  %v5926 = vunpack.c.h.b16 %v5381
  %v5927 = vunpack.c.l.b16 %v5382
  %v5928 = vunpack.c.h.b16 %v5382
  %v5929 = vunpack.c.l.b16 %v5383
  %v5930 = vunpack.c.h.b16 %v5383
  %v5931 = vunpack.c.l.b16 %v5384
  %v5932 = vunpack.c.h.b16 %v5384
  %v5933 = vunpack.c.l.b16 %v5385
  %v5934 = vunpack.c.h.b16 %v5385
  %v5935 = vunpack.c.l.b16 %v5386
  %v5936 = vunpack.c.h.b16 %v5386
  %v5937 = vunpack.c.l.b16 %v5387
  %v5938 = vunpack.c.h.b16 %v5387
  %v5939 = vunpack.c.l.b16 %v5388
  %v5940 = vunpack.c.h.b16 %v5388
  %v5941 = vunpack.c.l.b16 %v5389
  %v5942 = vunpack.c.h.b16 %v5389
  %v5943 = vunpack.c.l.b16 %v5390
  %v5944 = vunpack.c.h.b16 %v5390
  %v5945 = vunpack.c.l.b16 %v5391
  %v5946 = vunpack.c.h.b16 %v5391
  %v5947 = vunpack.c.l.b16 %v5392
  %v5948 = vunpack.c.h.b16 %v5392
  %v5949 = vunpack.c.l.b16 %v5393
  %v5950 = vunpack.c.h.b16 %v5393
  %v5951 = vunpack.c.l.b16 %v5394
  %v5952 = vunpack.c.h.b16 %v5394
  %v5953 = vunpack.c.l.b16 %v5395
  %v5954 = vunpack.c.h.b16 %v5395
  %v5955 = vunpack.c.l.b16 %v5396
  %v5956 = vunpack.c.h.b16 %v5396
  %v5957 = vunpack.c.l.b16 %v5397
  %v5958 = vunpack.c.h.b16 %v5397
  %v5959 = vunpack.c.l.b16 %v5398
  %v5960 = vunpack.c.h.b16 %v5398
  %v5961 = vunpack.c.l.b16 %v5399
  %v5962 = vunpack.c.h.b16 %v5399
  %v5963 = vunpack.c.l.b16 %v5400
  %v5964 = vunpack.c.h.b16 %v5400
  %v5965 = vunpack.c.l.b16 %v5401
  %v5966 = vunpack.c.h.b16 %v5401
  %v5967 = vunpack.c.l.b16 %v5402
  %v5968 = vunpack.c.h.b16 %v5402
  %v5969 = vunpack.c.l.b16 %v5403
  %v5970 = vunpack.c.h.b16 %v5403
  %v5971 = vunpack.c.l.b16 %v5404
  %v5972 = vunpack.c.h.b16 %v5404
  %v5973 = vunpack.c.l.b16 %v5405
  %v5974 = vunpack.c.h.b16 %v5405
  %v5975 = vunpack.c.l.b16 %v5406
  %v5976 = vunpack.c.h.b16 %v5406
  %v5977 = vunpack.c.l.b16 %v5407
  %v5978 = vunpack.c.h.b16 %v5407
  %v5979 = vunpack.c.l.b16 %v5408
  %v5980 = vunpack.c.h.b16 %v5408
  %v5981 = vunpack.c.l.b16 %v5409
  %v5982 = vunpack.c.h.b16 %v5409
  %v5983 = vunpack.c.l.b16 %v5410
  %v5984 = vunpack.c.h.b16 %v5410
  %v5985 = vunpack.c.l.b16 %v5411
  %v5986 = vunpack.c.h.b16 %v5411
  %v5987 = vunpack.c.l.b16 %v5412
  %v5988 = vunpack.c.h.b16 %v5412
  %v5989 = vunpack.c.l.b16 %v5413
  %v5990 = vunpack.c.h.b16 %v5413
  %v5991 = vunpack.c.l.b16 %v5414
  %v5992 = vunpack.c.h.b16 %v5414
  %v5993 = vunpack.c.l.b16 %v5415
  %v5994 = vunpack.c.h.b16 %v5415
  %v5995 = vunpack.c.l.b16 %v5416
  %v5996 = vunpack.c.h.b16 %v5416
  %v5997 = vunpack.c.l.b16 %v5417
  %v5998 = vunpack.c.h.b16 %v5417
  %v5999 = vunpack.c.l.b16 %v5418
  %v6000 = vunpack.c.h.b16 %v5418
  %v6001 = vunpack.c.l.b16 %v5419
  %v6002 = vunpack.c.h.b16 %v5419
  %v6003 = vunpack.c.l.b16 %v5420
  %v6004 = vunpack.c.h.b16 %v5420
  %v6005 = vunpack.c.l.b16 %v5421
  %v6006 = vunpack.c.h.b16 %v5421
  %v6007 = vunpack.c.l.b16 %v5422
  %v6008 = vunpack.c.h.b16 %v5422
  %v6009 = vunpack.c.l.b16 %v5423
  %v6010 = vunpack.c.h.b16 %v5423
  %v6011 = vunpack.c.l.b16 %v5424
  %v6012 = vunpack.c.h.b16 %v5424
  %v6013 = vunpack.c.l.b16 %v5425
  %v6014 = vunpack.c.h.b16 %v5425
  %v6015 = vunpack.c.l.b16 %v5426
  %v6016 = vunpack.c.h.b16 %v5426
  %v6017 = vunpack.c.l.b16 %v5427
  %v6018 = vunpack.c.h.b16 %v5427
  %v6019 = vunpack.c.l.b16 %v5428
  %v6020 = vunpack.c.h.b16 %v5428
  %v6021 = vunpack.c.l.b16 %v5429
  %v6022 = vunpack.c.h.b16 %v5429
  %v6023 = vunpack.c.l.b16 %v5430
  %v6024 = vunpack.c.h.b16 %v5430
  %v6025 = vunpack.c.l.b16 %v5431
  %v6026 = vunpack.c.h.b16 %v5431
  %v6027 = vunpack.c.l.b16 %v5432
  %v6028 = vunpack.c.h.b16 %v5432
  %v6029 = vunpack.c.l.b16 %v5433
  %v6030 = vunpack.c.h.b16 %v5433
  %v6031 = vunpack.c.l.b16 %v5434
  %v6032 = vunpack.c.h.b16 %v5434
  %v6033 = vunpack.c.l.b16 %v5435
  %v6034 = vunpack.c.h.b16 %v5435
  %v6035 = vunpack.c.l.b16 %v5436
  %v6036 = vunpack.c.h.b16 %v5436
  %v6037 = vunpack.c.l.b16 %v5437
  %v6038 = vunpack.c.h.b16 %v5437
  %v6039 = vunpack.c.l.b16 %v5438
  %v6040 = vunpack.c.h.b16 %v5438
  %v6041 = vunpack.c.l.b16 %v5439
  %v6042 = vunpack.c.h.b16 %v5439
  %v6043 = vunpack.c.l.b16 %v5440
  %v6044 = vunpack.c.h.b16 %v5440
  %v6045 = vunpack.c.l.b16 %v5441
  %v6046 = vunpack.c.h.b16 %v5441
  %v6047 = vunpack.c.l.b16 %v5442
  %v6048 = vunpack.c.h.b16 %v5442
  %v6049 = vunpack.c.l.b16 %v5443
  %v6050 = vunpack.c.h.b16 %v5443
  %v6051 = vunpack.c.l.b16 %v5444
  %v6052 = vunpack.c.h.b16 %v5444
  %v6053 = vunpack.c.l.b16 %v5445
  %v6054 = vunpack.c.h.b16 %v5445
  %v6055 = vunpack.c.l.b16 %v5446
  %v6056 = vunpack.c.h.b16 %v5446
  %v6057 = vunpack.c.l.b16 %v5447
  %v6058 = vunpack.c.h.b16 %v5447
  %v6059 = vunpack.c.l.b16 %v5448
  %v6060 = vunpack.c.h.b16 %v5448
  %v6061 = vunpack.c.l.b16 %v5449
  %v6062 = vunpack.c.h.b16 %v5449
  %v6063 = vunpack.c.l.b16 %v5450
  %v6064 = vunpack.c.h.b16 %v5450
  %v6065 = vunpack.c.l.b16 %v5451
  %v6066 = vunpack.c.h.b16 %v5451
  %v6067 = vunpack.c.l.b16 %v5452
  %v6068 = vunpack.c.h.b16 %v5452
  %v6069 = vunpack.c.l.b16 %v5453
  %v6070 = vunpack.c.h.b16 %v5453
  %v6071 = vunpack.c.l.b16 %v5454
  %v6072 = vunpack.c.h.b16 %v5454
  %v6073 = vunpack.c.l.b16 %v5455
  %v6074 = vunpack.c.h.b16 %v5455
  %v6075 = vunpack.c.l.b16 %v5456
  %v6076 = vunpack.c.h.b16 %v5456
  %v6077 = vunpack.c.l.b16 %v5457
  %v6078 = vunpack.c.h.b16 %v5457
  %v6079 = vunpack.c.l.b16 %v5458
  %v6080 = vunpack.c.h.b16 %v5458
  %v6081 = vunpack.c.l.b16 %v5459
  %v6082 = vunpack.c.h.b16 %v5459
  %v6083 = vunpack.c.l.b16 %v5460
  %v6084 = vunpack.c.h.b16 %v5460
  %v6085 = vunpack.c.l.b16 %v5461
  %v6086 = vunpack.c.h.b16 %v5461
  %v6087 = vunpack.c.l.b16 %v5462
  %v6088 = vunpack.c.h.b16 %v5462
  %v6089 = vunpack.c.l.b16 %v5463
  %v6090 = vunpack.c.h.b16 %v5463
  %v6091 = vunpack.c.l.b16 %v5464
  %v6092 = vunpack.c.h.b16 %v5464
  %v6093 = vunpack.c.l.b16 %v5465
  %v6094 = vunpack.c.h.b16 %v5465
  %v6095 = vunpack.c.l.b16 %v5466
  %v6096 = vunpack.c.h.b16 %v5466
  %v6097 = vunpack.c.l.b16 %v5467
  %v6098 = vunpack.c.h.b16 %v5467
  %v6099 = vunpack.c.l.b16 %v5468
  %v6100 = vunpack.c.h.b16 %v5468
  %v6101 = vunpack.c.l.b16 %v5469
  %v6102 = vunpack.c.h.b16 %v5469
  %v6103 = vunpack.c.l.b16 %v5470
  %v6104 = vunpack.c.h.b16 %v5470
  %v6105 = vunpack.c.l.b16 %v5471
  %v6106 = vunpack.c.h.b16 %v5471
  %v6107 = vunpack.c.l.b16 %v5472
  %v6108 = vunpack.c.h.b16 %v5472
  %v6109 = vunpack.c.l.b16 %v5473
  %v6110 = vunpack.c.h.b16 %v5473
  %v6111 = vunpack.c.l.b16 %v5474
  %v6112 = vunpack.c.h.b16 %v5474
  %v6113 = vunpack.c.l.b16 %v5475
  %v6114 = vunpack.c.h.b16 %v5475
  %v6115 = vunpack.c.l.b16 %v5476
  %v6116 = vunpack.c.h.b16 %v5476
  %v6117 = vunpack.c.l.b16 %v5477
  %v6118 = vunpack.c.h.b16 %v5477
  %v6119 = vunpack.c.l.b16 %v5478
  %v6120 = vunpack.c.h.b16 %v5478
  %v6121 = vunpack.c.l.b16 %v5479
  %v6122 = vunpack.c.h.b16 %v5479
  %v6123 = vunpack.c.l.b16 %v5480
  %v6124 = vunpack.c.h.b16 %v5480
  %v6125 = vunpack.c.l.b16 %v5481
  %v6126 = vunpack.c.h.b16 %v5481
  %v6127 = vunpack.c.l.b16 %v5482
  %v6128 = vunpack.c.h.b16 %v5482
  %v6129 = vunpack.c.l.b16 %v5483
  %v6130 = vunpack.c.h.b16 %v5483
  %v6131 = vunpack.c.l.b16 %v5484
  %v6132 = vunpack.c.h.b16 %v5484
  %v6133 = vunpack.c.l.b16 %v5485
  %v6134 = vunpack.c.h.b16 %v5485
  %v6135 = vunpack.c.l.b16 %v5486
  %v6136 = vunpack.c.h.b16 %v5486
  %v6137 = vunpack.c.l.b16 %v5487
  %v6138 = vunpack.c.h.b16 %v5487
  %v6139 = vunpack.c.l.b16 %v5488
  %v6140 = vunpack.c.h.b16 %v5488
  %v6141 = vunpack.c.l.b16 %v5489
  %v6142 = vunpack.c.h.b16 %v5489
  %v6143 = vunpack.c.l.b16 %v5490
  %v6144 = vunpack.c.h.b16 %v5490
  %v6145 = vunpack.c.l.b16 %v5491
  %v6146 = vunpack.c.h.b16 %v5491
  %v6147 = vunpack.c.l.b16 %v5492
  %v6148 = vunpack.c.h.b16 %v5492
  %v6149 = vunpack.c.l.b16 %v5493
  %v6150 = vunpack.c.h.b16 %v5493
  %v6151 = vunpack.c.l.b16 %v5494
  %v6152 = vunpack.c.h.b16 %v5494
  %v6153 = vunpack.c.l.b16 %v5495
  %v6154 = vunpack.c.h.b16 %v5495
  %v6155 = vunpack.c.l.b16 %v5496
  %v6156 = vunpack.c.h.b16 %v5496
  %v6157 = vunpack.c.l.b16 %v5497
  %v6158 = vunpack.c.h.b16 %v5497
  %v6159 = vunpack.c.l.b16 %v5498
  %v6160 = vunpack.c.h.b16 %v5498
  %v6161 = vunpack.c.l.b16 %v5499
  %v6162 = vunpack.c.h.b16 %v5499
  %v6163 = vunpack.c.l.b16 %v5500
  %v6164 = vunpack.c.h.b16 %v5500
  %v6165 = vunpack.c.l.b16 %v5501
  %v6166 = vunpack.c.h.b16 %v5501
  %v6167 = vunpack.c.l.b16 %v5502
  %v6168 = vunpack.c.h.b16 %v5502
  %v6169 = vunpack.c.l.b16 %v5503
  %v6170 = vunpack.c.h.b16 %v5503
  %v6171 = vunpack.c.l.b16 %v5504
  %v6172 = vunpack.c.h.b16 %v5504
  %v6173 = vunpack.c.l.b16 %v5505
  %v6174 = vunpack.c.h.b16 %v5505
  %v6175 = vunpack.c.l.b16 %v5506
  %v6176 = vunpack.c.h.b16 %v5506
  %v6177 = vunpack.c.l.b16 %v5507
  %v6178 = vunpack.c.h.b16 %v5507
  %v6179 = vunpack.c.l.b16 %v5508
  %v6180 = vunpack.c.h.b16 %v5508
  %v6181 = vunpack.c.l.b16 %v5509
  %v6182 = vunpack.c.h.b16 %v5509
  %v6183 = vunpack.c.l.b16 %v5510
  %v6184 = vunpack.c.h.b16 %v5510
  %v6185 = vunpack.c.l.b16 %v5511
  %v6186 = vunpack.c.h.b16 %v5511
  %v6187 = vunpack.c.l.b16 %v5512
  %v6188 = vunpack.c.h.b16 %v5512
  %v6189 = vunpack.c.l.b16 %v5513
  %v6190 = vunpack.c.h.b16 %v5513
  %v6191 = vunpack.c.l.b16 %v5514
  %v6192 = vunpack.c.h.b16 %v5514
  %v6193 = vunpack.c.l.b16 %v5515
  %v6194 = vunpack.c.h.b16 %v5515
  %v6195 = vunpack.c.l.b16 %v5516
  %v6196 = vunpack.c.h.b16 %v5516
  %v6197 = vunpack.c.l.b16 %v5517
  %v6198 = vunpack.c.h.b16 %v5517
  %v6199 = vunpack.c.l.b16 %v5518
  %v6200 = vunpack.c.h.b16 %v5518
  %v6201 = vunpack.c.l.b16 %v5519
  %v6202 = vunpack.c.h.b16 %v5519
  %v6203 = vunpack.c.l.b16 %v5520
  %v6204 = vunpack.c.h.b16 %v5520
  %v6205 = vunpack.c.l.b16 %v5521
  %v6206 = vunpack.c.h.b16 %v5521
  %v6207 = vunpack.c.l.b16 %v5522
  %v6208 = vunpack.c.h.b16 %v5522
  %v6209 = vunpack.c.l.b16 %v5523
  %v6210 = vunpack.c.h.b16 %v5523
  %v6211 = vunpack.c.l.b16 %v5524
  %v6212 = vunpack.c.h.b16 %v5524
  %v6213 = vunpack.c.l.b16 %v5525
  %v6214 = vunpack.c.h.b16 %v5525
  %v6215 = vunpack.c.l.b16 %v5526
  %v6216 = vunpack.c.h.b16 %v5526
  %v6217 = vunpack.c.l.b16 %v5527
  %v6218 = vunpack.c.h.b16 %v5527
  %v6219 = vunpack.c.l.b16 %v5528
  %v6220 = vunpack.c.h.b16 %v5528
  %v6221 = vunpack.c.l.b16 %v5529
  %v6222 = vunpack.c.h.b16 %v5529
  %v6223 = vunpack.c.l.b16 %v5530
  %v6224 = vunpack.c.h.b16 %v5530
  %v6225 = vunpack.c.l.b16 %v5531
  %v6226 = vunpack.c.h.b16 %v5531
  %v6227 = vunpack.c.l.b16 %v5532
  %v6228 = vunpack.c.h.b16 %v5532
  %v6229 = vunpack.c.l.b16 %v5533
  %v6230 = vunpack.c.h.b16 %v5533
  %v6231 = vunpack.c.l.b16 %v5534
  %v6232 = vunpack.c.h.b16 %v5534
  %v6233 = vunpack.c.l.b16 %v5535
  %v6234 = vunpack.c.h.b16 %v5535
  %v6235 = vunpack.c.l.b16 %v5536
  %v6236 = vunpack.c.h.b16 %v5536
  %v6237 = vunpack.c.l.b16 %v5537
  %v6238 = vunpack.c.h.b16 %v5537
  %v6239 = vunpack.c.l.b16 %v5538
  %v6240 = vunpack.c.h.b16 %v5538
  %v6241 = vunpack.c.l.b16 %v5539
  %v6242 = vunpack.c.h.b16 %v5539
  %v6243 = vunpack.c.l.b16 %v5540
  %v6244 = vunpack.c.h.b16 %v5540
  %v6245 = vunpack.c.l.b16 %v5541
  %v6246 = vunpack.c.h.b16 %v5541
  %v6247 = vunpack.c.l.b16 %v5542
  %v6248 = vunpack.c.h.b16 %v5542
  %v6249 = vunpack.c.l.b16 %v5543
  %v6250 = vunpack.c.h.b16 %v5543
  %v6251 = vunpack.c.l.b16 %v5544
  %v6252 = vunpack.c.h.b16 %v5544
  %v6253 = vunpack.c.l.b16 %v5545
  %v6254 = vunpack.c.h.b16 %v5545
  %v6255 = vunpack.c.l.b16 %v5546
  %v6256 = vunpack.c.h.b16 %v5546
  %v6257 = vunpack.c.l.b16 %v5547
  %v6258 = vunpack.c.h.b16 %v5547
  %v6259 = vunpack.c.l.b16 %v5548
  %v6260 = vunpack.c.h.b16 %v5548
  %v6261 = vunpack.c.l.b16 %v5549
  %v6262 = vunpack.c.h.b16 %v5549
  %v6263 = vunpack.c.l.b16 %v5550
  %v6264 = vunpack.c.h.b16 %v5550
  %v6265 = vunpack.c.l.b16 %v5551
  %v6266 = vunpack.c.h.b16 %v5551
  %v6267 = vunpack.c.l.b16 %v5552
  %v6268 = vunpack.c.h.b16 %v5552
  %v6269 = vunpack.c.l.b16 %v5553
  %v6270 = vunpack.c.h.b16 %v5553
  %v6271 = vunpack.c.l.b16 %v5554
  %v6272 = vunpack.c.h.b16 %v5554
  %v6273 = vunpack.c.l.b16 %v5555
  %v6274 = vunpack.c.h.b16 %v5555
  %v6275 = vunpack.c.l.b16 %v5556
  %v6276 = vunpack.c.h.b16 %v5556
  %v6277 = vunpack.c.l.b16 %v5557
  %v6278 = vunpack.c.h.b16 %v5557
  %v6279 = vunpack.c.l.b16 %v5558
  %v6280 = vunpack.c.h.b16 %v5558
  %v6281 = vunpack.c.l.b16 %v5559
  %v6282 = vunpack.c.h.b16 %v5559
  %v6283 = vunpack.c.l.b16 %v5560
  %v6284 = vunpack.c.h.b16 %v5560
  %v6285 = vunpack.c.l.b16 %v5561
  %v6286 = vunpack.c.h.b16 %v5561
  %v6287 = vunpack.c.l.b16 %v5562
  %v6288 = vunpack.c.h.b16 %v5562
  %v6289 = vunpack.c.l.b16 %v5563
  %v6290 = vunpack.c.h.b16 %v5563
  %v6291 = vunpack.c.l.b16 %v5564
  %v6292 = vunpack.c.h.b16 %v5564
  %v6293 = vunpack.c.l.b16 %v5565
  %v6294 = vunpack.c.h.b16 %v5565
  %v6295 = vunpack.c.l.b16 %v5566
  %v6296 = vunpack.c.h.b16 %v5566
  %v6297 = vunpack.c.l.b16 %v5567
  %v6298 = vunpack.c.h.b16 %v5567
  %v6299 = vunpack.c.l.b16 %v5568
  %v6300 = vunpack.c.h.b16 %v5568
  %v6301 = vunpack.c.l.b16 %v5569
  %v6302 = vunpack.c.h.b16 %v5569
  %v6303 = vunpack.c.l.b16 %v5570
  %v6304 = vunpack.c.h.b16 %v5570
  %v6305 = vunpack.c.l.b16 %v5571
  %v6306 = vunpack.c.h.b16 %v5571
  %v6307 = vunpack.c.l.b16 %v5572
  %v6308 = vunpack.c.h.b16 %v5572
  %v6309 = vunpack.c.l.b16 %v5573
  %v6310 = vunpack.c.h.b16 %v5573
  %v6311 = vunpack.c.l.b16 %v5574
  %v6312 = vunpack.c.h.b16 %v5574
  %v6313 = vunpack.c.l.b16 %v5575
  %v6314 = vunpack.c.h.b16 %v5575
  %v6315 = vunpack.c.l.b16 %v5576
  %v6316 = vunpack.c.h.b16 %v5576
  %v6317 = vunpack.c.l.b16 %v5577
  %v6318 = vunpack.c.h.b16 %v5577
  %v6319 = vunpack.c.l.b16 %v5578
  %v6320 = vunpack.c.h.b16 %v5578
  %v6321 = vunpack.c.l.b16 %v5579
  %v6322 = vunpack.c.h.b16 %v5579
  %v6323 = vunpack.c.l.b16 %v5580
  %v6324 = vunpack.c.h.b16 %v5580
  %v6325 = vunpack.c.l.b16 %v5581
  %v6326 = vunpack.c.h.b16 %v5581
  %v6327 = vunpack.c.l.b16 %v5582
  %v6328 = vunpack.c.h.b16 %v5582
  %v6329 = vunpack.c.l.b16 %v5583
  %v6330 = vunpack.c.h.b16 %v5583
  %v6331 = vunpack.c.l.b16 %v5584
  %v6332 = vunpack.c.h.b16 %v5584
  %v6333 = vunpack.c.l.b16 %v5585
  %v6334 = vunpack.c.h.b16 %v5585
  %v6335 = vunpack.c.l.b16 %v5586
  %v6336 = vunpack.c.h.b16 %v5586
  %v6337 = vunpack.c.l.b16 %v5587
  %v6338 = vunpack.c.h.b16 %v5587
  %v6339 = vunpack.c.l.b16 %v5588
  %v6340 = vunpack.c.h.b16 %v5588
  %v6341 = vunpack.c.l.b16 %v5589
  %v6342 = vunpack.c.h.b16 %v5589
  %v6343 = vunpack.c.l.b16 %v5590
  %v6344 = vunpack.c.h.b16 %v5590
  %v6345 = vunpack.c.l.b16 %v5591
  %v6346 = vunpack.c.h.b16 %v5591
  %v6347 = vunpack.c.l.b16 %v5592
  %v6348 = vunpack.c.h.b16 %v5592
  %v6349 = vunpack.c.l.b16 %v5593
  %v6350 = vunpack.c.h.b16 %v5593
  %v6351 = vunpack.c.l.b16 %v5594
  %v6352 = vunpack.c.h.b16 %v5594
  %v6353 = vunpack.c.l.b16 %v5595
  %v6354 = vunpack.c.h.b16 %v5595
  %v6355 = vunpack.c.l.b16 %v5596
  %v6356 = vunpack.c.h.b16 %v5596
  %v6357 = vunpack.c.l.b16 %v5597
  %v6358 = vunpack.c.h.b16 %v5597
  %v6359 = vunpack.c.l.b16 %v5598
  %v6360 = vunpack.c.h.b16 %v5598
  %v6361 = vunpack.c.l.b16 %v5599
  %v6362 = vunpack.c.h.b16 %v5599
  %v6363 = vunpack.c.l.b16 %v5600
  %v6364 = vunpack.c.h.b16 %v5600
  %v6365 = vunpack.c.l.b16 %v5601
  %v6366 = vunpack.c.h.b16 %v5601
  %v6367 = vunpack.c.l.b16 %v5602
  %v6368 = vunpack.c.h.b16 %v5602
  %v6369 = vunpack.c.l.b16 %v5603
  %v6370 = vunpack.c.h.b16 %v5603
  %v6371 = vunpack.c.l.b16 %v5604
  %v6372 = vunpack.c.h.b16 %v5604
  %v6373 = vunpack.c.l.b16 %v5605
  %v6374 = vunpack.c.h.b16 %v5605
  %v6375 = vunpack.c.l.b16 %v5606
  %v6376 = vunpack.c.h.b16 %v5606
  %v6377 = vunpack.c.l.b16 %v5607
  %v6378 = vunpack.c.h.b16 %v5607
  %v6379 = vunpack.c.l.b16 %v5608
  %v6380 = vunpack.c.h.b16 %v5608
  %v6381 = vpack.c.b16 %v5877, %v5869
  %v6382 = vpack.c.b16 %v5878, %v5870
  %v6383 = vpack.c.b16 %v5879, %v5871
  %v6384 = vpack.c.b16 %v5880, %v5872
  %v6385 = vpack.c.b16 %v5881, %v5873
  %v6386 = vpack.c.b16 %v5882, %v5874
  %v6387 = vpack.c.b16 %v5883, %v5875
  %v6388 = vpack.c.b16 %v5884, %v5876
  %v6389 = vpack.c.b16 %v5893, %v5885
  %v6390 = vpack.c.b16 %v5894, %v5886
  %v6391 = vpack.c.b16 %v5895, %v5887
  %v6392 = vpack.c.b16 %v5896, %v5888
  %v6393 = vpack.c.b16 %v5897, %v5889
  %v6394 = vpack.c.b16 %v5898, %v5890
  %v6395 = vpack.c.b16 %v5899, %v5891
  %v6396 = vpack.c.b16 %v5900, %v5892
  %v6397 = vpack.c.b16 %v5909, %v5901
  %v6398 = vpack.c.b16 %v5910, %v5902
  %v6399 = vpack.c.b16 %v5911, %v5903
  %v6400 = vpack.c.b16 %v5912, %v5904
  %v6401 = vpack.c.b16 %v5913, %v5905
  %v6402 = vpack.c.b16 %v5914, %v5906
  %v6403 = vpack.c.b16 %v5915, %v5907
  %v6404 = vpack.c.b16 %v5916, %v5908
  %v6405 = vpack.c.b16 %v5925, %v5917
  %v6406 = vpack.c.b16 %v5926, %v5918
  %v6407 = vpack.c.b16 %v5927, %v5919
  %v6408 = vpack.c.b16 %v5928, %v5920
  %v6409 = vpack.c.b16 %v5929, %v5921
  %v6410 = vpack.c.b16 %v5930, %v5922
  %v6411 = vpack.c.b16 %v5931, %v5923
  %v6412 = vpack.c.b16 %v5932, %v5924
  %v6413 = vpack.c.b16 %v5941, %v5933
  %v6414 = vpack.c.b16 %v5942, %v5934
  %v6415 = vpack.c.b16 %v5943, %v5935
  %v6416 = vpack.c.b16 %v5944, %v5936
  %v6417 = vpack.c.b16 %v5945, %v5937
  %v6418 = vpack.c.b16 %v5946, %v5938
  %v6419 = vpack.c.b16 %v5947, %v5939
  %v6420 = vpack.c.b16 %v5948, %v5940
  %v6421 = vpack.c.b16 %v5957, %v5949
  %v6422 = vpack.c.b16 %v5958, %v5950
  %v6423 = vpack.c.b16 %v5959, %v5951
  %v6424 = vpack.c.b16 %v5960, %v5952
  %v6425 = vpack.c.b16 %v5961, %v5953
  %v6426 = vpack.c.b16 %v5962, %v5954
  %v6427 = vpack.c.b16 %v5963, %v5955
  %v6428 = vpack.c.b16 %v5964, %v5956
  %v6429 = vpack.c.b16 %v5973, %v5965
  %v6430 = vpack.c.b16 %v5974, %v5966
  %v6431 = vpack.c.b16 %v5975, %v5967
  %v6432 = vpack.c.b16 %v5976, %v5968
  %v6433 = vpack.c.b16 %v5977, %v5969
  %v6434 = vpack.c.b16 %v5978, %v5970
  %v6435 = vpack.c.b16 %v5979, %v5971
  %v6436 = vpack.c.b16 %v5980, %v5972
  %v6437 = vpack.c.b16 %v5989, %v5981
  %v6438 = vpack.c.b16 %v5990, %v5982
  %v6439 = vpack.c.b16 %v5991, %v5983
  %v6440 = vpack.c.b16 %v5992, %v5984
  %v6441 = vpack.c.b16 %v5993, %v5985
  %v6442 = vpack.c.b16 %v5994, %v5986
  %v6443 = vpack.c.b16 %v5995, %v5987
  %v6444 = vpack.c.b16 %v5996, %v5988
  %v6445 = vpack.c.b16 %v6005, %v5997
  %v6446 = vpack.c.b16 %v6006, %v5998
  %v6447 = vpack.c.b16 %v6007, %v5999
  %v6448 = vpack.c.b16 %v6008, %v6000
  %v6449 = vpack.c.b16 %v6009, %v6001
  %v6450 = vpack.c.b16 %v6010, %v6002
  %v6451 = vpack.c.b16 %v6011, %v6003
  %v6452 = vpack.c.b16 %v6012, %v6004
  %v6453 = vpack.c.b16 %v6021, %v6013
  %v6454 = vpack.c.b16 %v6022, %v6014
  %v6455 = vpack.c.b16 %v6023, %v6015
  %v6456 = vpack.c.b16 %v6024, %v6016
  %v6457 = vpack.c.b16 %v6025, %v6017
  %v6458 = vpack.c.b16 %v6026, %v6018
  %v6459 = vpack.c.b16 %v6027, %v6019
  %v6460 = vpack.c.b16 %v6028, %v6020
  %v6461 = vpack.c.b16 %v6037, %v6029
  %v6462 = vpack.c.b16 %v6038, %v6030
  %v6463 = vpack.c.b16 %v6039, %v6031
  %v6464 = vpack.c.b16 %v6040, %v6032
  %v6465 = vpack.c.b16 %v6041, %v6033
  %v6466 = vpack.c.b16 %v6042, %v6034
  %v6467 = vpack.c.b16 %v6043, %v6035
  %v6468 = vpack.c.b16 %v6044, %v6036
  %v6469 = vpack.c.b16 %v6053, %v6045
  %v6470 = vpack.c.b16 %v6054, %v6046
  %v6471 = vpack.c.b16 %v6055, %v6047
  %v6472 = vpack.c.b16 %v6056, %v6048
  %v6473 = vpack.c.b16 %v6057, %v6049
  %v6474 = vpack.c.b16 %v6058, %v6050
  %v6475 = vpack.c.b16 %v6059, %v6051
  %v6476 = vpack.c.b16 %v6060, %v6052
  %v6477 = vpack.c.b16 %v6069, %v6061
  %v6478 = vpack.c.b16 %v6070, %v6062
  %v6479 = vpack.c.b16 %v6071, %v6063
  %v6480 = vpack.c.b16 %v6072, %v6064
  %v6481 = vpack.c.b16 %v6073, %v6065
  %v6482 = vpack.c.b16 %v6074, %v6066
  %v6483 = vpack.c.b16 %v6075, %v6067
  %v6484 = vpack.c.b16 %v6076, %v6068
  %v6485 = vpack.c.b16 %v6085, %v6077
  %v6486 = vpack.c.b16 %v6086, %v6078
  %v6487 = vpack.c.b16 %v6087, %v6079
  %v6488 = vpack.c.b16 %v6088, %v6080
  %v6489 = vpack.c.b16 %v6089, %v6081
  %v6490 = vpack.c.b16 %v6090, %v6082
  %v6491 = vpack.c.b16 %v6091, %v6083
  %v6492 = vpack.c.b16 %v6092, %v6084
  %v6493 = vpack.c.b16 %v6101, %v6093
  %v6494 = vpack.c.b16 %v6102, %v6094
  %v6495 = vpack.c.b16 %v6103, %v6095
  %v6496 = vpack.c.b16 %v6104, %v6096
  %v6497 = vpack.c.b16 %v6105, %v6097
  %v6498 = vpack.c.b16 %v6106, %v6098
  %v6499 = vpack.c.b16 %v6107, %v6099
  %v6500 = vpack.c.b16 %v6108, %v6100
  %v6501 = vpack.c.b16 %v6117, %v6109
  %v6502 = vpack.c.b16 %v6118, %v6110
  %v6503 = vpack.c.b16 %v6119, %v6111
  %v6504 = vpack.c.b16 %v6120, %v6112
  %v6505 = vpack.c.b16 %v6121, %v6113
  %v6506 = vpack.c.b16 %v6122, %v6114
  %v6507 = vpack.c.b16 %v6123, %v6115
  %v6508 = vpack.c.b16 %v6124, %v6116
  %v6509 = vpack.c.b16 %v6133, %v6125
  %v6510 = vpack.c.b16 %v6134, %v6126
  %v6511 = vpack.c.b16 %v6135, %v6127
  %v6512 = vpack.c.b16 %v6136, %v6128
  %v6513 = vpack.c.b16 %v6137, %v6129
  %v6514 = vpack.c.b16 %v6138, %v6130
  %v6515 = vpack.c.b16 %v6139, %v6131
  %v6516 = vpack.c.b16 %v6140, %v6132
  %v6517 = vpack.c.b16 %v6149, %v6141
  %v6518 = vpack.c.b16 %v6150, %v6142
  %v6519 = vpack.c.b16 %v6151, %v6143
  %v6520 = vpack.c.b16 %v6152, %v6144
  %v6521 = vpack.c.b16 %v6153, %v6145
  %v6522 = vpack.c.b16 %v6154, %v6146
  %v6523 = vpack.c.b16 %v6155, %v6147
  %v6524 = vpack.c.b16 %v6156, %v6148
  %v6525 = vpack.c.b16 %v6165, %v6157
  %v6526 = vpack.c.b16 %v6166, %v6158
  %v6527 = vpack.c.b16 %v6167, %v6159
  %v6528 = vpack.c.b16 %v6168, %v6160
  %v6529 = vpack.c.b16 %v6169, %v6161
  %v6530 = vpack.c.b16 %v6170, %v6162
  %v6531 = vpack.c.b16 %v6171, %v6163
  %v6532 = vpack.c.b16 %v6172, %v6164
  %v6533 = vpack.c.b16 %v6181, %v6173
  %v6534 = vpack.c.b16 %v6182, %v6174
  %v6535 = vpack.c.b16 %v6183, %v6175
  %v6536 = vpack.c.b16 %v6184, %v6176
  %v6537 = vpack.c.b16 %v6185, %v6177
  %v6538 = vpack.c.b16 %v6186, %v6178
  %v6539 = vpack.c.b16 %v6187, %v6179
  %v6540 = vpack.c.b16 %v6188, %v6180
  %v6541 = vpack.c.b16 %v6197, %v6189
  %v6542 = vpack.c.b16 %v6198, %v6190
  %v6543 = vpack.c.b16 %v6199, %v6191
  %v6544 = vpack.c.b16 %v6200, %v6192
  %v6545 = vpack.c.b16 %v6201, %v6193
  %v6546 = vpack.c.b16 %v6202, %v6194
  %v6547 = vpack.c.b16 %v6203, %v6195
  %v6548 = vpack.c.b16 %v6204, %v6196
  %v6549 = vpack.c.b16 %v6213, %v6205
  %v6550 = vpack.c.b16 %v6214, %v6206
  %v6551 = vpack.c.b16 %v6215, %v6207
  %v6552 = vpack.c.b16 %v6216, %v6208
  %v6553 = vpack.c.b16 %v6217, %v6209
  %v6554 = vpack.c.b16 %v6218, %v6210
  %v6555 = vpack.c.b16 %v6219, %v6211
  %v6556 = vpack.c.b16 %v6220, %v6212
  %v6557 = vpack.c.b16 %v6229, %v6221
  %v6558 = vpack.c.b16 %v6230, %v6222
  %v6559 = vpack.c.b16 %v6231, %v6223
  %v6560 = vpack.c.b16 %v6232, %v6224
  %v6561 = vpack.c.b16 %v6233, %v6225
  %v6562 = vpack.c.b16 %v6234, %v6226
  %v6563 = vpack.c.b16 %v6235, %v6227
  %v6564 = vpack.c.b16 %v6236, %v6228
  %v6565 = vpack.c.b16 %v6245, %v6237
  %v6566 = vpack.c.b16 %v6246, %v6238
  %v6567 = vpack.c.b16 %v6247, %v6239
  %v6568 = vpack.c.b16 %v6248, %v6240
  %v6569 = vpack.c.b16 %v6249, %v6241
  %v6570 = vpack.c.b16 %v6250, %v6242
  %v6571 = vpack.c.b16 %v6251, %v6243
  %v6572 = vpack.c.b16 %v6252, %v6244
  %v6573 = vpack.c.b16 %v6261, %v6253
  %v6574 = vpack.c.b16 %v6262, %v6254
  %v6575 = vpack.c.b16 %v6263, %v6255
  %v6576 = vpack.c.b16 %v6264, %v6256
  %v6577 = vpack.c.b16 %v6265, %v6257
  %v6578 = vpack.c.b16 %v6266, %v6258
  %v6579 = vpack.c.b16 %v6267, %v6259
  %v6580 = vpack.c.b16 %v6268, %v6260
  %v6581 = vpack.c.b16 %v6277, %v6269
  %v6582 = vpack.c.b16 %v6278, %v6270
  %v6583 = vpack.c.b16 %v6279, %v6271
  %v6584 = vpack.c.b16 %v6280, %v6272
  %v6585 = vpack.c.b16 %v6281, %v6273
  %v6586 = vpack.c.b16 %v6282, %v6274
  %v6587 = vpack.c.b16 %v6283, %v6275
  %v6588 = vpack.c.b16 %v6284, %v6276
  %v6589 = vpack.c.b16 %v6293, %v6285
  %v6590 = vpack.c.b16 %v6294, %v6286
  %v6591 = vpack.c.b16 %v6295, %v6287
  %v6592 = vpack.c.b16 %v6296, %v6288
  %v6593 = vpack.c.b16 %v6297, %v6289
  %v6594 = vpack.c.b16 %v6298, %v6290
  %v6595 = vpack.c.b16 %v6299, %v6291
  %v6596 = vpack.c.b16 %v6300, %v6292
  %v6597 = vpack.c.b16 %v6309, %v6301
  %v6598 = vpack.c.b16 %v6310, %v6302
  %v6599 = vpack.c.b16 %v6311, %v6303
  %v6600 = vpack.c.b16 %v6312, %v6304
  %v6601 = vpack.c.b16 %v6313, %v6305
  %v6602 = vpack.c.b16 %v6314, %v6306
  %v6603 = vpack.c.b16 %v6315, %v6307
  %v6604 = vpack.c.b16 %v6316, %v6308
  %v6605 = vpack.c.b16 %v6325, %v6317
  %v6606 = vpack.c.b16 %v6326, %v6318
  %v6607 = vpack.c.b16 %v6327, %v6319
  %v6608 = vpack.c.b16 %v6328, %v6320
  %v6609 = vpack.c.b16 %v6329, %v6321
  %v6610 = vpack.c.b16 %v6330, %v6322
  %v6611 = vpack.c.b16 %v6331, %v6323
  %v6612 = vpack.c.b16 %v6332, %v6324
  %v6613 = vpack.c.b16 %v6341, %v6333
  %v6614 = vpack.c.b16 %v6342, %v6334
  %v6615 = vpack.c.b16 %v6343, %v6335
  %v6616 = vpack.c.b16 %v6344, %v6336
  %v6617 = vpack.c.b16 %v6345, %v6337
  %v6618 = vpack.c.b16 %v6346, %v6338
  %v6619 = vpack.c.b16 %v6347, %v6339
  %v6620 = vpack.c.b16 %v6348, %v6340
  %v6621 = vpack.c.b16 %v6357, %v6349
  %v6622 = vpack.c.b16 %v6358, %v6350
  %v6623 = vpack.c.b16 %v6359, %v6351
  %v6624 = vpack.c.b16 %v6360, %v6352
  %v6625 = vpack.c.b16 %v6361, %v6353
  %v6626 = vpack.c.b16 %v6362, %v6354
  %v6627 = vpack.c.b16 %v6363, %v6355
  %v6628 = vpack.c.b16 %v6364, %v6356
  %v6629 = vpack.c.b16 %v6373, %v6365
  %v6630 = vpack.c.b16 %v6374, %v6366
  %v6631 = vpack.c.b16 %v6375, %v6367
  %v6632 = vpack.c.b16 %v6376, %v6368
  %v6633 = vpack.c.b16 %v6377, %v6369
  %v6634 = vpack.c.b16 %v6378, %v6370
  %v6635 = vpack.c.b16 %v6379, %v6371
  %v6636 = vpack.c.b16 %v6380, %v6372
  %6893 = vmatpush.bf16.msra.mxu0 %v6437
  %6894 = vmatpush.bf16.msra.mxu0 %v6429
  %6895 = vmatpush.bf16.msra.mxu0 %v6421
  %6896 = vmatpush.bf16.msra.mxu0 %v6413
  %6897 = vmatpush.bf16.msra.mxu0 %v6405
  %6898 = vmatpush.bf16.msra.mxu0 %v6397
  %6899 = vmatpush.bf16.msra.mxu0 %v6389
  %6900 = vmatpush.bf16.msra.mxu0 %v6381
  %6901 = vmatmul.bf16.gmra.mxu0 %v5609
  %v6902 = vpop.f32.mrf.mxu0
  %v6903 = vadd.f32 0.0, %v6902
  %v6904 = vpop.f32.mrf.mxu0
  %6905 = vdwg.mxu0
  %6906 = vmatpush.bf16.msra.mxu0 %v6501
  %6907 = vmatpush.bf16.msra.mxu0 %v6493
  %6908 = vmatpush.bf16.msra.mxu0 %v6485
  %6909 = vmatpush.bf16.msra.mxu0 %v6477
  %6910 = vmatpush.bf16.msra.mxu0 %v6469
  %6911 = vmatpush.bf16.msra.mxu0 %v6461
  %6912 = vmatpush.bf16.msra.mxu0 %v6453
  %6913 = vmatpush.bf16.msra.mxu0 %v6445
  %6914 = vmatmul.bf16.gmra.mxu0 %v5610
  %v6915 = vpop.f32.mrf.mxu0
  %v6916 = vadd.f32 %v6903, %v6915
  %v6917 = vpop.f32.mrf.mxu0
  %6918 = vdwg.mxu0
  %6919 = vmatpush.bf16.msra.mxu0 %v6565
  %6920 = vmatpush.bf16.msra.mxu0 %v6557
  %6921 = vmatpush.bf16.msra.mxu0 %v6549
  %6922 = vmatpush.bf16.msra.mxu0 %v6541
  %6923 = vmatpush.bf16.msra.mxu0 %v6533
  %6924 = vmatpush.bf16.msra.mxu0 %v6525
  %6925 = vmatpush.bf16.msra.mxu0 %v6517
  %6926 = vmatpush.bf16.msra.mxu0 %v6509
  %6927 = vmatmul.bf16.gmra.mxu0 %v5611
  %v6928 = vpop.f32.mrf.mxu0
  %v6929 = vadd.f32 %v6916, %v6928
  %v6930 = vpop.f32.mrf.mxu0
  %6931 = vdwg.mxu0
  %6932 = vmatpush.bf16.msra.mxu0 %v6629
  %6933 = vmatpush.bf16.msra.mxu0 %v6621
  %6934 = vmatpush.bf16.msra.mxu0 %v6613
  %6935 = vmatpush.bf16.msra.mxu0 %v6605
  %6936 = vmatpush.bf16.msra.mxu0 %v6597
  %6937 = vmatpush.bf16.msra.mxu0 %v6589
  %6938 = vmatpush.bf16.msra.mxu0 %v6581
  %6939 = vmatpush.bf16.msra.mxu0 %v6573
  %6940 = vmatmul.bf16.gmra.mxu0 %v5612
  %v6941 = vpop.f32.mrf.mxu0
  %v6942 = vadd.f32 %v6929, %v6941
  %v6943 = vpop.f32.mrf.mxu0
  %6944 = vdwg.mxu0
  %6945 = vmatpush.bf16.msra.mxu0 %v6438
  %6946 = vmatpush.bf16.msra.mxu0 %v6430
  %6947 = vmatpush.bf16.msra.mxu0 %v6422
  %6948 = vmatpush.bf16.msra.mxu0 %v6414
  %6949 = vmatpush.bf16.msra.mxu0 %v6406
  %6950 = vmatpush.bf16.msra.mxu0 %v6398
  %6951 = vmatpush.bf16.msra.mxu0 %v6390
  %6952 = vmatpush.bf16.msra.mxu0 %v6382
  %6953 = vmatmul.bf16.gmra.mxu0 %v5609
  %v6954 = vpop.f32.mrf.mxu0
  %v6955 = vadd.f32 0.0, %v6954
  %v6956 = vpop.f32.mrf.mxu0
  %6957 = vdwg.mxu0
  %6958 = vmatpush.bf16.msra.mxu0 %v6502
  %6959 = vmatpush.bf16.msra.mxu0 %v6494
  %6960 = vmatpush.bf16.msra.mxu0 %v6486
  %6961 = vmatpush.bf16.msra.mxu0 %v6478
  %6962 = vmatpush.bf16.msra.mxu0 %v6470
  %6963 = vmatpush.bf16.msra.mxu0 %v6462
  %6964 = vmatpush.bf16.msra.mxu0 %v6454
  %6965 = vmatpush.bf16.msra.mxu0 %v6446
  %6966 = vmatmul.bf16.gmra.mxu0 %v5610
  %v6967 = vpop.f32.mrf.mxu0
  %v6968 = vadd.f32 %v6955, %v6967
  %v6969 = vpop.f32.mrf.mxu0
  %6970 = vdwg.mxu0
  %6971 = vmatpush.bf16.msra.mxu0 %v6566
  %6972 = vmatpush.bf16.msra.mxu0 %v6558
  %6973 = vmatpush.bf16.msra.mxu0 %v6550
  %6974 = vmatpush.bf16.msra.mxu0 %v6542
  %6975 = vmatpush.bf16.msra.mxu0 %v6534
  %6976 = vmatpush.bf16.msra.mxu0 %v6526
  %6977 = vmatpush.bf16.msra.mxu0 %v6518
  %6978 = vmatpush.bf16.msra.mxu0 %v6510
  %6979 = vmatmul.bf16.gmra.mxu0 %v5611
  %v6980 = vpop.f32.mrf.mxu0
  %v6981 = vadd.f32 %v6968, %v6980
  %v6982 = vpop.f32.mrf.mxu0
  %6983 = vdwg.mxu0
  %6984 = vmatpush.bf16.msra.mxu0 %v6630
  %6985 = vmatpush.bf16.msra.mxu0 %v6622
  %6986 = vmatpush.bf16.msra.mxu0 %v6614
  %6987 = vmatpush.bf16.msra.mxu0 %v6606
  %6988 = vmatpush.bf16.msra.mxu0 %v6598
  %6989 = vmatpush.bf16.msra.mxu0 %v6590
  %6990 = vmatpush.bf16.msra.mxu0 %v6582
  %6991 = vmatpush.bf16.msra.mxu0 %v6574
  %6992 = vmatmul.bf16.gmra.mxu0 %v5612
  %v6993 = vpop.f32.mrf.mxu0
  %v6994 = vadd.f32 %v6981, %v6993
  %v6995 = vpop.f32.mrf.mxu0
  %6996 = vdwg.mxu0
  %6997 = vmatpush.bf16.msra.mxu0 %v6439
  %6998 = vmatpush.bf16.msra.mxu0 %v6431
  %6999 = vmatpush.bf16.msra.mxu0 %v6423
  %7000 = vmatpush.bf16.msra.mxu0 %v6415
  %7001 = vmatpush.bf16.msra.mxu0 %v6407
  %7002 = vmatpush.bf16.msra.mxu0 %v6399
  %7003 = vmatpush.bf16.msra.mxu0 %v6391
  %7004 = vmatpush.bf16.msra.mxu0 %v6383
  %7005 = vmatmul.bf16.gmra.mxu0 %v5609
  %v7006 = vpop.f32.mrf.mxu0
  %v7007 = vadd.f32 0.0, %v7006
  %v7008 = vpop.f32.mrf.mxu0
  %7009 = vdwg.mxu0
  %7010 = vmatpush.bf16.msra.mxu0 %v6503
  %7011 = vmatpush.bf16.msra.mxu0 %v6495
  %7012 = vmatpush.bf16.msra.mxu0 %v6487
  %7013 = vmatpush.bf16.msra.mxu0 %v6479
  %7014 = vmatpush.bf16.msra.mxu0 %v6471
  %7015 = vmatpush.bf16.msra.mxu0 %v6463
  %7016 = vmatpush.bf16.msra.mxu0 %v6455
  %7017 = vmatpush.bf16.msra.mxu0 %v6447
  %7018 = vmatmul.bf16.gmra.mxu0 %v5610
  %v7019 = vpop.f32.mrf.mxu0
  %v7020 = vadd.f32 %v7007, %v7019
  %v7021 = vpop.f32.mrf.mxu0
  %7022 = vdwg.mxu0
  %7023 = vmatpush.bf16.msra.mxu0 %v6567
  %7024 = vmatpush.bf16.msra.mxu0 %v6559
  %7025 = vmatpush.bf16.msra.mxu0 %v6551
  %7026 = vmatpush.bf16.msra.mxu0 %v6543
  %7027 = vmatpush.bf16.msra.mxu0 %v6535
  %7028 = vmatpush.bf16.msra.mxu0 %v6527
  %7029 = vmatpush.bf16.msra.mxu0 %v6519
  %7030 = vmatpush.bf16.msra.mxu0 %v6511
  %7031 = vmatmul.bf16.gmra.mxu0 %v5611
  %v7032 = vpop.f32.mrf.mxu0
  %v7033 = vadd.f32 %v7020, %v7032
  %v7034 = vpop.f32.mrf.mxu0
  %7035 = vdwg.mxu0
  %7036 = vmatpush.bf16.msra.mxu0 %v6631
  %7037 = vmatpush.bf16.msra.mxu0 %v6623
  %7038 = vmatpush.bf16.msra.mxu0 %v6615
  %7039 = vmatpush.bf16.msra.mxu0 %v6607
  %7040 = vmatpush.bf16.msra.mxu0 %v6599
  %7041 = vmatpush.bf16.msra.mxu0 %v6591
  %7042 = vmatpush.bf16.msra.mxu0 %v6583
  %7043 = vmatpush.bf16.msra.mxu0 %v6575
  %7044 = vmatmul.bf16.gmra.mxu0 %v5612
  %v7045 = vpop.f32.mrf.mxu0
  %v7046 = vadd.f32 %v7033, %v7045
  %v7047 = vpop.f32.mrf.mxu0
  %7048 = vdwg.mxu0
  %7049 = vmatpush.bf16.msra.mxu0 %v6440
  %7050 = vmatpush.bf16.msra.mxu0 %v6432
  %7051 = vmatpush.bf16.msra.mxu0 %v6424
  %7052 = vmatpush.bf16.msra.mxu0 %v6416
  %7053 = vmatpush.bf16.msra.mxu0 %v6408
  %7054 = vmatpush.bf16.msra.mxu0 %v6400
  %7055 = vmatpush.bf16.msra.mxu0 %v6392
  %7056 = vmatpush.bf16.msra.mxu0 %v6384
  %7057 = vmatmul.bf16.gmra.mxu0 %v5609
  %v7058 = vpop.f32.mrf.mxu0
  %v7059 = vadd.f32 0.0, %v7058
  %v7060 = vpop.f32.mrf.mxu0
  %7061 = vdwg.mxu0
  %7062 = vmatpush.bf16.msra.mxu0 %v6504
  %7063 = vmatpush.bf16.msra.mxu0 %v6496
  %7064 = vmatpush.bf16.msra.mxu0 %v6488
  %7065 = vmatpush.bf16.msra.mxu0 %v6480
  %7066 = vmatpush.bf16.msra.mxu0 %v6472
  %7067 = vmatpush.bf16.msra.mxu0 %v6464
  %7068 = vmatpush.bf16.msra.mxu0 %v6456
  %7069 = vmatpush.bf16.msra.mxu0 %v6448
  %7070 = vmatmul.bf16.gmra.mxu0 %v5610
  %v7071 = vpop.f32.mrf.mxu0
  %v7072 = vadd.f32 %v7059, %v7071
  %v7073 = vpop.f32.mrf.mxu0
  %7074 = vdwg.mxu0
  %7075 = vmatpush.bf16.msra.mxu0 %v6568
  %7076 = vmatpush.bf16.msra.mxu0 %v6560
  %7077 = vmatpush.bf16.msra.mxu0 %v6552
  %7078 = vmatpush.bf16.msra.mxu0 %v6544
  %7079 = vmatpush.bf16.msra.mxu0 %v6536
  %7080 = vmatpush.bf16.msra.mxu0 %v6528
  %7081 = vmatpush.bf16.msra.mxu0 %v6520
  %7082 = vmatpush.bf16.msra.mxu0 %v6512
  %7083 = vmatmul.bf16.gmra.mxu0 %v5611
  %v7084 = vpop.f32.mrf.mxu0
  %v7085 = vadd.f32 %v7072, %v7084
  %v7086 = vpop.f32.mrf.mxu0
  %7087 = vdwg.mxu0
  %7088 = vmatpush.bf16.msra.mxu0 %v6632
  %7089 = vmatpush.bf16.msra.mxu0 %v6624
  %7090 = vmatpush.bf16.msra.mxu0 %v6616
  %7091 = vmatpush.bf16.msra.mxu0 %v6608
  %7092 = vmatpush.bf16.msra.mxu0 %v6600
  %7093 = vmatpush.bf16.msra.mxu0 %v6592
  %7094 = vmatpush.bf16.msra.mxu0 %v6584
  %7095 = vmatpush.bf16.msra.mxu0 %v6576
  %7096 = vmatmul.bf16.gmra.mxu0 %v5612
  %v7097 = vpop.f32.mrf.mxu0
  %v7098 = vadd.f32 %v7085, %v7097
  %v7099 = vpop.f32.mrf.mxu0
  %7100 = vdwg.mxu0
  %7101 = vmatpush.bf16.msra.mxu0 %v6441
  %7102 = vmatpush.bf16.msra.mxu0 %v6433
  %7103 = vmatpush.bf16.msra.mxu0 %v6425
  %7104 = vmatpush.bf16.msra.mxu0 %v6417
  %7105 = vmatpush.bf16.msra.mxu0 %v6409
  %7106 = vmatpush.bf16.msra.mxu0 %v6401
  %7107 = vmatpush.bf16.msra.mxu0 %v6393
  %7108 = vmatpush.bf16.msra.mxu0 %v6385
  %7109 = vmatmul.bf16.gmra.mxu0 %v5609
  %v7110 = vpop.f32.mrf.mxu0
  %v7111 = vadd.f32 0.0, %v7110
  %v7112 = vpop.f32.mrf.mxu0
  %7113 = vdwg.mxu0
  %7114 = vmatpush.bf16.msra.mxu0 %v6505
  %7115 = vmatpush.bf16.msra.mxu0 %v6497
  %7116 = vmatpush.bf16.msra.mxu0 %v6489
  %7117 = vmatpush.bf16.msra.mxu0 %v6481
  %7118 = vmatpush.bf16.msra.mxu0 %v6473
  %7119 = vmatpush.bf16.msra.mxu0 %v6465
  %7120 = vmatpush.bf16.msra.mxu0 %v6457
  %7121 = vmatpush.bf16.msra.mxu0 %v6449
  %7122 = vmatmul.bf16.gmra.mxu0 %v5610
  %v7123 = vpop.f32.mrf.mxu0
  %v7124 = vadd.f32 %v7111, %v7123
  %v7125 = vpop.f32.mrf.mxu0
  %7126 = vdwg.mxu0
  %7127 = vmatpush.bf16.msra.mxu0 %v6569
  %7128 = vmatpush.bf16.msra.mxu0 %v6561
  %7129 = vmatpush.bf16.msra.mxu0 %v6553
  %7130 = vmatpush.bf16.msra.mxu0 %v6545
  %7131 = vmatpush.bf16.msra.mxu0 %v6537
  %7132 = vmatpush.bf16.msra.mxu0 %v6529
  %7133 = vmatpush.bf16.msra.mxu0 %v6521
  %7134 = vmatpush.bf16.msra.mxu0 %v6513
  %7135 = vmatmul.bf16.gmra.mxu0 %v5611
  %v7136 = vpop.f32.mrf.mxu0
  %v7137 = vadd.f32 %v7124, %v7136
  %v7138 = vpop.f32.mrf.mxu0
  %7139 = vdwg.mxu0
  %7140 = vmatpush.bf16.msra.mxu0 %v6633
  %7141 = vmatpush.bf16.msra.mxu0 %v6625
  %7142 = vmatpush.bf16.msra.mxu0 %v6617
  %7143 = vmatpush.bf16.msra.mxu0 %v6609
  %7144 = vmatpush.bf16.msra.mxu0 %v6601
  %7145 = vmatpush.bf16.msra.mxu0 %v6593
  %7146 = vmatpush.bf16.msra.mxu0 %v6585
  %7147 = vmatpush.bf16.msra.mxu0 %v6577
  %7148 = vmatmul.bf16.gmra.mxu0 %v5612
  %v7149 = vpop.f32.mrf.mxu0
  %v7150 = vadd.f32 %v7137, %v7149
  %v7151 = vpop.f32.mrf.mxu0
  %7152 = vdwg.mxu0
  %7153 = vmatpush.bf16.msra.mxu0 %v6442
  %7154 = vmatpush.bf16.msra.mxu0 %v6434
  %7155 = vmatpush.bf16.msra.mxu0 %v6426
  %7156 = vmatpush.bf16.msra.mxu0 %v6418
  %7157 = vmatpush.bf16.msra.mxu0 %v6410
  %7158 = vmatpush.bf16.msra.mxu0 %v6402
  %7159 = vmatpush.bf16.msra.mxu0 %v6394
  %7160 = vmatpush.bf16.msra.mxu0 %v6386
  %7161 = vmatmul.bf16.gmra.mxu0 %v5609
  %v7162 = vpop.f32.mrf.mxu0
  %v7163 = vadd.f32 0.0, %v7162
  %v7164 = vpop.f32.mrf.mxu0
  %7165 = vdwg.mxu0
  %7166 = vmatpush.bf16.msra.mxu0 %v6506
  %7167 = vmatpush.bf16.msra.mxu0 %v6498
  %7168 = vmatpush.bf16.msra.mxu0 %v6490
  %7169 = vmatpush.bf16.msra.mxu0 %v6482
  %7170 = vmatpush.bf16.msra.mxu0 %v6474
  %7171 = vmatpush.bf16.msra.mxu0 %v6466
  %7172 = vmatpush.bf16.msra.mxu0 %v6458
  %7173 = vmatpush.bf16.msra.mxu0 %v6450
  %7174 = vmatmul.bf16.gmra.mxu0 %v5610
  %v7175 = vpop.f32.mrf.mxu0
  %v7176 = vadd.f32 %v7163, %v7175
  %v7177 = vpop.f32.mrf.mxu0
  %7178 = vdwg.mxu0
  %7179 = vmatpush.bf16.msra.mxu0 %v6570
  %7180 = vmatpush.bf16.msra.mxu0 %v6562
  %7181 = vmatpush.bf16.msra.mxu0 %v6554
  %7182 = vmatpush.bf16.msra.mxu0 %v6546
  %7183 = vmatpush.bf16.msra.mxu0 %v6538
  %7184 = vmatpush.bf16.msra.mxu0 %v6530
  %7185 = vmatpush.bf16.msra.mxu0 %v6522
  %7186 = vmatpush.bf16.msra.mxu0 %v6514
  %7187 = vmatmul.bf16.gmra.mxu0 %v5611
  %v7188 = vpop.f32.mrf.mxu0
  %v7189 = vadd.f32 %v7176, %v7188
  %v7190 = vpop.f32.mrf.mxu0
  %7191 = vdwg.mxu0
  %7192 = vmatpush.bf16.msra.mxu0 %v6634
  %7193 = vmatpush.bf16.msra.mxu0 %v6626
  %7194 = vmatpush.bf16.msra.mxu0 %v6618
  %7195 = vmatpush.bf16.msra.mxu0 %v6610
  %7196 = vmatpush.bf16.msra.mxu0 %v6602
  %7197 = vmatpush.bf16.msra.mxu0 %v6594
  %7198 = vmatpush.bf16.msra.mxu0 %v6586
  %7199 = vmatpush.bf16.msra.mxu0 %v6578
  %7200 = vmatmul.bf16.gmra.mxu0 %v5612
  %v7201 = vpop.f32.mrf.mxu0
  %v7202 = vadd.f32 %v7189, %v7201
  %v7203 = vpop.f32.mrf.mxu0
  %7204 = vdwg.mxu0
  %7205 = vmatpush.bf16.msra.mxu0 %v6443
  %7206 = vmatpush.bf16.msra.mxu0 %v6435
  %7207 = vmatpush.bf16.msra.mxu0 %v6427
  %7208 = vmatpush.bf16.msra.mxu0 %v6419
  %7209 = vmatpush.bf16.msra.mxu0 %v6411
  %7210 = vmatpush.bf16.msra.mxu0 %v6403
  %7211 = vmatpush.bf16.msra.mxu0 %v6395
  %7212 = vmatpush.bf16.msra.mxu0 %v6387
  %7213 = vmatmul.bf16.gmra.mxu0 %v5609
  %v7214 = vpop.f32.mrf.mxu0
  %v7215 = vadd.f32 0.0, %v7214
  %v7216 = vpop.f32.mrf.mxu0
  %7217 = vdwg.mxu0
  %7218 = vmatpush.bf16.msra.mxu0 %v6507
  %7219 = vmatpush.bf16.msra.mxu0 %v6499
  %7220 = vmatpush.bf16.msra.mxu0 %v6491
  %7221 = vmatpush.bf16.msra.mxu0 %v6483
  %7222 = vmatpush.bf16.msra.mxu0 %v6475
  %7223 = vmatpush.bf16.msra.mxu0 %v6467
  %7224 = vmatpush.bf16.msra.mxu0 %v6459
  %7225 = vmatpush.bf16.msra.mxu0 %v6451
  %7226 = vmatmul.bf16.gmra.mxu0 %v5610
  %v7227 = vpop.f32.mrf.mxu0
  %v7228 = vadd.f32 %v7215, %v7227
  %v7229 = vpop.f32.mrf.mxu0
  %7230 = vdwg.mxu0
  %7231 = vmatpush.bf16.msra.mxu0 %v6571
  %7232 = vmatpush.bf16.msra.mxu0 %v6563
  %7233 = vmatpush.bf16.msra.mxu0 %v6555
  %7234 = vmatpush.bf16.msra.mxu0 %v6547
  %7235 = vmatpush.bf16.msra.mxu0 %v6539
  %7236 = vmatpush.bf16.msra.mxu0 %v6531
  %7237 = vmatpush.bf16.msra.mxu0 %v6523
  %7238 = vmatpush.bf16.msra.mxu0 %v6515
  %7239 = vmatmul.bf16.gmra.mxu0 %v5611
  %v7240 = vpop.f32.mrf.mxu0
  %v7241 = vadd.f32 %v7228, %v7240
  %v7242 = vpop.f32.mrf.mxu0
  %7243 = vdwg.mxu0
  %7244 = vmatpush.bf16.msra.mxu0 %v6635
  %7245 = vmatpush.bf16.msra.mxu0 %v6627
  %7246 = vmatpush.bf16.msra.mxu0 %v6619
  %7247 = vmatpush.bf16.msra.mxu0 %v6611
  %7248 = vmatpush.bf16.msra.mxu0 %v6603
  %7249 = vmatpush.bf16.msra.mxu0 %v6595
  %7250 = vmatpush.bf16.msra.mxu0 %v6587
  %7251 = vmatpush.bf16.msra.mxu0 %v6579
  %7252 = vmatmul.bf16.gmra.mxu0 %v5612
  %v7253 = vpop.f32.mrf.mxu0
  %v7254 = vadd.f32 %v7241, %v7253
  %v7255 = vpop.f32.mrf.mxu0
  %7256 = vdwg.mxu0
  %7257 = vmatpush.bf16.msra.mxu0 %v6444
  %7258 = vmatpush.bf16.msra.mxu0 %v6436
  %7259 = vmatpush.bf16.msra.mxu0 %v6428
  %7260 = vmatpush.bf16.msra.mxu0 %v6420
  %7261 = vmatpush.bf16.msra.mxu0 %v6412
  %7262 = vmatpush.bf16.msra.mxu0 %v6404
  %7263 = vmatpush.bf16.msra.mxu0 %v6396
  %7264 = vmatpush.bf16.msra.mxu0 %v6388
  %7265 = vmatmul.bf16.gmra.mxu0 %v5609
  %v7266 = vpop.f32.mrf.mxu0
  %v7267 = vadd.f32 0.0, %v7266
  %v7268 = vpop.f32.mrf.mxu0
  %7269 = vdwg.mxu0
  %7270 = vmatpush.bf16.msra.mxu0 %v6508
  %7271 = vmatpush.bf16.msra.mxu0 %v6500
  %7272 = vmatpush.bf16.msra.mxu0 %v6492
  %7273 = vmatpush.bf16.msra.mxu0 %v6484
  %7274 = vmatpush.bf16.msra.mxu0 %v6476
  %7275 = vmatpush.bf16.msra.mxu0 %v6468
  %7276 = vmatpush.bf16.msra.mxu0 %v6460
  %7277 = vmatpush.bf16.msra.mxu0 %v6452
  %7278 = vmatmul.bf16.gmra.mxu0 %v5610
  %v7279 = vpop.f32.mrf.mxu0
  %v7280 = vadd.f32 %v7267, %v7279
  %v7281 = vpop.f32.mrf.mxu0
  %7282 = vdwg.mxu0
  %7283 = vmatpush.bf16.msra.mxu0 %v6572
  %7284 = vmatpush.bf16.msra.mxu0 %v6564
  %7285 = vmatpush.bf16.msra.mxu0 %v6556
  %7286 = vmatpush.bf16.msra.mxu0 %v6548
  %7287 = vmatpush.bf16.msra.mxu0 %v6540
  %7288 = vmatpush.bf16.msra.mxu0 %v6532
  %7289 = vmatpush.bf16.msra.mxu0 %v6524
  %7290 = vmatpush.bf16.msra.mxu0 %v6516
  %7291 = vmatmul.bf16.gmra.mxu0 %v5611
  %v7292 = vpop.f32.mrf.mxu0
  %v7293 = vadd.f32 %v7280, %v7292
  %v7294 = vpop.f32.mrf.mxu0
  %7295 = vdwg.mxu0
  %7296 = vmatpush.bf16.msra.mxu0 %v6636
  %7297 = vmatpush.bf16.msra.mxu0 %v6628
  %7298 = vmatpush.bf16.msra.mxu0 %v6620
  %7299 = vmatpush.bf16.msra.mxu0 %v6612
  %7300 = vmatpush.bf16.msra.mxu0 %v6604
  %7301 = vmatpush.bf16.msra.mxu0 %v6596
  %7302 = vmatpush.bf16.msra.mxu0 %v6588
  %7303 = vmatpush.bf16.msra.mxu0 %v6580
  %7304 = vmatmul.bf16.gmra.mxu0 %v5612
  %v7305 = vpop.f32.mrf.mxu0
  %v7306 = vadd.f32 %v7293, %v7305
  %v7307 = vpop.f32.mrf.mxu0
  %7308 = vdwg.mxu0
  %v7309 = vadd.f32 %v4984, %v6942
  %v7310 = vadd.f32 %v5036, %v6994
  %v7311 = vadd.f32 %v5088, %v7046
  %v7312 = vadd.f32 %v5140, %v7098
  %v7313 = vadd.f32 %v5192, %v7150
  %v7314 = vadd.f32 %v5244, %v7202
  %v7315 = vadd.f32 %v5296, %v7254
  %v7316 = vadd.f32 %v5348, %v7306
  %s7317 = smul.u32 4, 128
  %s7318 = smul.u32 %s7317, 1
  %s7319 = sshll.u32 %s7318, 4
  %7320 = dma.done %s1246, %s7319
  %v7321 = vld [vmem:[#allocation4] sm:$0xf]
  %v7322 = vld [vmem:[#allocation4 + $0x4] sm:$0xf]
  %v7323 = vld [vmem:[#allocation4 + $0x8] sm:$0xf]
  %v7324 = vld [vmem:[#allocation4 + $0xc] sm:$0xf]
  %v7325 = vld [vmem:[#allocation4 + $0x10] sm:$0xf]
  %v7326 = vld [vmem:[#allocation4 + $0x14] sm:$0xf]
  %v7327 = vld [vmem:[#allocation4 + $0x18] sm:$0xf]
  %v7328 = vld [vmem:[#allocation4 + $0x1c] sm:$0xf]
  %v7329 = vld [vmem:[#allocation4 + $0x20] sm:$0xf]
  %v7330 = vld [vmem:[#allocation4 + $0x24] sm:$0xf]
  %v7331 = vld [vmem:[#allocation4 + $0x28] sm:$0xf]
  %v7332 = vld [vmem:[#allocation4 + $0x2c] sm:$0xf]
  %v7333 = vld [vmem:[#allocation4 + $0x30] sm:$0xf]
  %v7334 = vld [vmem:[#allocation4 + $0x34] sm:$0xf]
  %v7335 = vld [vmem:[#allocation4 + $0x38] sm:$0xf]
  %v7336 = vld [vmem:[#allocation4 + $0x3c] sm:$0xf]
  %v7337 = vld [vmem:[#allocation4 + $0x40] sm:$0xf]
  %v7338 = vld [vmem:[#allocation4 + $0x44] sm:$0xf]
  %v7339 = vld [vmem:[#allocation4 + $0x48] sm:$0xf]
  %v7340 = vld [vmem:[#allocation4 + $0x4c] sm:$0xf]
  %v7341 = vld [vmem:[#allocation4 + $0x50] sm:$0xf]
  %v7342 = vld [vmem:[#allocation4 + $0x54] sm:$0xf]
  %v7343 = vld [vmem:[#allocation4 + $0x58] sm:$0xf]
  %v7344 = vld [vmem:[#allocation4 + $0x5c] sm:$0xf]
  %v7345 = vld [vmem:[#allocation4 + $0x60] sm:$0xf]
  %v7346 = vld [vmem:[#allocation4 + $0x64] sm:$0xf]
  %v7347 = vld [vmem:[#allocation4 + $0x68] sm:$0xf]
  %v7348 = vld [vmem:[#allocation4 + $0x6c] sm:$0xf]
  %v7349 = vld [vmem:[#allocation4 + $0x70] sm:$0xf]
  %v7350 = vld [vmem:[#allocation4 + $0x74] sm:$0xf]
  %v7351 = vld [vmem:[#allocation4 + $0x78] sm:$0xf]
  %v7352 = vld [vmem:[#allocation4 + $0x7c] sm:$0xf]
  %v7353 = vld [vmem:[#allocation4 + $0x80] sm:$0xf]
  %v7354 = vld [vmem:[#allocation4 + $0x84] sm:$0xf]
  %v7355 = vld [vmem:[#allocation4 + $0x88] sm:$0xf]
  %v7356 = vld [vmem:[#allocation4 + $0x8c] sm:$0xf]
  %v7357 = vld [vmem:[#allocation4 + $0x90] sm:$0xf]
  %v7358 = vld [vmem:[#allocation4 + $0x94] sm:$0xf]
  %v7359 = vld [vmem:[#allocation4 + $0x98] sm:$0xf]
  %v7360 = vld [vmem:[#allocation4 + $0x9c] sm:$0xf]
  %v7361 = vld [vmem:[#allocation4 + $0xa0] sm:$0xf]
  %v7362 = vld [vmem:[#allocation4 + $0xa4] sm:$0xf]
  %v7363 = vld [vmem:[#allocation4 + $0xa8] sm:$0xf]
  %v7364 = vld [vmem:[#allocation4 + $0xac] sm:$0xf]
  %v7365 = vld [vmem:[#allocation4 + $0xb0] sm:$0xf]
  %v7366 = vld [vmem:[#allocation4 + $0xb4] sm:$0xf]
  %v7367 = vld [vmem:[#allocation4 + $0xb8] sm:$0xf]
  %v7368 = vld [vmem:[#allocation4 + $0xbc] sm:$0xf]
  %v7369 = vld [vmem:[#allocation4 + $0xc0] sm:$0xf]
  %v7370 = vld [vmem:[#allocation4 + $0xc4] sm:$0xf]
  %v7371 = vld [vmem:[#allocation4 + $0xc8] sm:$0xf]
  %v7372 = vld [vmem:[#allocation4 + $0xcc] sm:$0xf]
  %v7373 = vld [vmem:[#allocation4 + $0xd0] sm:$0xf]
  %v7374 = vld [vmem:[#allocation4 + $0xd4] sm:$0xf]
  %v7375 = vld [vmem:[#allocation4 + $0xd8] sm:$0xf]
  %v7376 = vld [vmem:[#allocation4 + $0xdc] sm:$0xf]
  %v7377 = vld [vmem:[#allocation4 + $0xe0] sm:$0xf]
  %v7378 = vld [vmem:[#allocation4 + $0xe4] sm:$0xf]
  %v7379 = vld [vmem:[#allocation4 + $0xe8] sm:$0xf]
  %v7380 = vld [vmem:[#allocation4 + $0xec] sm:$0xf]
  %v7381 = vld [vmem:[#allocation4 + $0xf0] sm:$0xf]
  %v7382 = vld [vmem:[#allocation4 + $0xf4] sm:$0xf]
  %v7383 = vld [vmem:[#allocation4 + $0xf8] sm:$0xf]
  %v7384 = vld [vmem:[#allocation4 + $0xfc] sm:$0xf]
  %v7385 = vld [vmem:[#allocation4 + $0x100] sm:$0xf]
  %v7386 = vld [vmem:[#allocation4 + $0x104] sm:$0xf]
  %v7387 = vld [vmem:[#allocation4 + $0x108] sm:$0xf]
  %v7388 = vld [vmem:[#allocation4 + $0x10c] sm:$0xf]
  %v7389 = vld [vmem:[#allocation4 + $0x110] sm:$0xf]
  %v7390 = vld [vmem:[#allocation4 + $0x114] sm:$0xf]
  %v7391 = vld [vmem:[#allocation4 + $0x118] sm:$0xf]
  %v7392 = vld [vmem:[#allocation4 + $0x11c] sm:$0xf]
  %v7393 = vld [vmem:[#allocation4 + $0x120] sm:$0xf]
  %v7394 = vld [vmem:[#allocation4 + $0x124] sm:$0xf]
  %v7395 = vld [vmem:[#allocation4 + $0x128] sm:$0xf]
  %v7396 = vld [vmem:[#allocation4 + $0x12c] sm:$0xf]
  %v7397 = vld [vmem:[#allocation4 + $0x130] sm:$0xf]
  %v7398 = vld [vmem:[#allocation4 + $0x134] sm:$0xf]
  %v7399 = vld [vmem:[#allocation4 + $0x138] sm:$0xf]
  %v7400 = vld [vmem:[#allocation4 + $0x13c] sm:$0xf]
  %v7401 = vld [vmem:[#allocation4 + $0x140] sm:$0xf]
  %v7402 = vld [vmem:[#allocation4 + $0x144] sm:$0xf]
  %v7403 = vld [vmem:[#allocation4 + $0x148] sm:$0xf]
  %v7404 = vld [vmem:[#allocation4 + $0x14c] sm:$0xf]
  %v7405 = vld [vmem:[#allocation4 + $0x150] sm:$0xf]
  %v7406 = vld [vmem:[#allocation4 + $0x154] sm:$0xf]
  %v7407 = vld [vmem:[#allocation4 + $0x158] sm:$0xf]
  %v7408 = vld [vmem:[#allocation4 + $0x15c] sm:$0xf]
  %v7409 = vld [vmem:[#allocation4 + $0x160] sm:$0xf]
  %v7410 = vld [vmem:[#allocation4 + $0x164] sm:$0xf]
  %v7411 = vld [vmem:[#allocation4 + $0x168] sm:$0xf]
  %v7412 = vld [vmem:[#allocation4 + $0x16c] sm:$0xf]
  %v7413 = vld [vmem:[#allocation4 + $0x170] sm:$0xf]
  %v7414 = vld [vmem:[#allocation4 + $0x174] sm:$0xf]
  %v7415 = vld [vmem:[#allocation4 + $0x178] sm:$0xf]
  %v7416 = vld [vmem:[#allocation4 + $0x17c] sm:$0xf]
  %v7417 = vld [vmem:[#allocation4 + $0x180] sm:$0xf]
  %v7418 = vld [vmem:[#allocation4 + $0x184] sm:$0xf]
  %v7419 = vld [vmem:[#allocation4 + $0x188] sm:$0xf]
  %v7420 = vld [vmem:[#allocation4 + $0x18c] sm:$0xf]
  %v7421 = vld [vmem:[#allocation4 + $0x190] sm:$0xf]
  %v7422 = vld [vmem:[#allocation4 + $0x194] sm:$0xf]
  %v7423 = vld [vmem:[#allocation4 + $0x198] sm:$0xf]
  %v7424 = vld [vmem:[#allocation4 + $0x19c] sm:$0xf]
  %v7425 = vld [vmem:[#allocation4 + $0x1a0] sm:$0xf]
  %v7426 = vld [vmem:[#allocation4 + $0x1a4] sm:$0xf]
  %v7427 = vld [vmem:[#allocation4 + $0x1a8] sm:$0xf]
  %v7428 = vld [vmem:[#allocation4 + $0x1ac] sm:$0xf]
  %v7429 = vld [vmem:[#allocation4 + $0x1b0] sm:$0xf]
  %v7430 = vld [vmem:[#allocation4 + $0x1b4] sm:$0xf]
  %v7431 = vld [vmem:[#allocation4 + $0x1b8] sm:$0xf]
  %v7432 = vld [vmem:[#allocation4 + $0x1bc] sm:$0xf]
  %v7433 = vld [vmem:[#allocation4 + $0x1c0] sm:$0xf]
  %v7434 = vld [vmem:[#allocation4 + $0x1c4] sm:$0xf]
  %v7435 = vld [vmem:[#allocation4 + $0x1c8] sm:$0xf]
  %v7436 = vld [vmem:[#allocation4 + $0x1cc] sm:$0xf]
  %v7437 = vld [vmem:[#allocation4 + $0x1d0] sm:$0xf]
  %v7438 = vld [vmem:[#allocation4 + $0x1d4] sm:$0xf]
  %v7439 = vld [vmem:[#allocation4 + $0x1d8] sm:$0xf]
  %v7440 = vld [vmem:[#allocation4 + $0x1dc] sm:$0xf]
  %v7441 = vld [vmem:[#allocation4 + $0x1e0] sm:$0xf]
  %v7442 = vld [vmem:[#allocation4 + $0x1e4] sm:$0xf]
  %v7443 = vld [vmem:[#allocation4 + $0x1e8] sm:$0xf]
  %v7444 = vld [vmem:[#allocation4 + $0x1ec] sm:$0xf]
  %v7445 = vld [vmem:[#allocation4 + $0x1f0] sm:$0xf]
  %v7446 = vld [vmem:[#allocation4 + $0x1f4] sm:$0xf]
  %v7447 = vld [vmem:[#allocation4 + $0x1f8] sm:$0xf]
  %v7448 = vld [vmem:[#allocation4 + $0x1fc] sm:$0xf]
  %v7449 = vpack.c.bf16 %v7309, %v7309
  %v7450 = vpack.c.bf16 %v7310, %v7310
  %v7451 = vpack.c.bf16 %v7311, %v7311
  %v7452 = vpack.c.bf16 %v7312, %v7312
  %v7453 = vpack.c.bf16 %v7313, %v7313
  %v7454 = vpack.c.bf16 %v7314, %v7314
  %v7455 = vpack.c.bf16 %v7315, %v7315
  %v7456 = vpack.c.bf16 %v7316, %v7316
  %v7457 = vld [vmem:[%s13] sm:$0x1]
  %v7459 = vperm.slane %v7457, 0
  %v7589 = vunpack.c.l.b16 %v7321
  %v7590 = vunpack.c.l.b16 %v7322
  %v7591 = vunpack.c.l.b16 %v7323
  %v7592 = vunpack.c.l.b16 %v7324
  %v7593 = vunpack.c.l.b16 %v7325
  %v7594 = vunpack.c.l.b16 %v7326
  %v7595 = vunpack.c.l.b16 %v7327
  %v7596 = vunpack.c.l.b16 %v7328
  %v7597 = vunpack.c.l.b16 %v7329
  %v7598 = vunpack.c.l.b16 %v7330
  %v7599 = vunpack.c.l.b16 %v7331
  %v7600 = vunpack.c.l.b16 %v7332
  %v7601 = vunpack.c.l.b16 %v7333
  %v7602 = vunpack.c.l.b16 %v7334
  %v7603 = vunpack.c.l.b16 %v7335
  %v7604 = vunpack.c.l.b16 %v7336
  %v7605 = vunpack.c.l.b16 %v7337
  %v7606 = vunpack.c.l.b16 %v7338
  %v7607 = vunpack.c.l.b16 %v7339
  %v7608 = vunpack.c.l.b16 %v7340
  %v7609 = vunpack.c.l.b16 %v7341
  %v7610 = vunpack.c.l.b16 %v7342
  %v7611 = vunpack.c.l.b16 %v7343
  %v7612 = vunpack.c.l.b16 %v7344
  %v7613 = vunpack.c.l.b16 %v7345
  %v7614 = vunpack.c.l.b16 %v7346
  %v7615 = vunpack.c.l.b16 %v7347
  %v7616 = vunpack.c.l.b16 %v7348
  %v7617 = vunpack.c.l.b16 %v7349
  %v7618 = vunpack.c.l.b16 %v7350
  %v7619 = vunpack.c.l.b16 %v7351
  %v7620 = vunpack.c.l.b16 %v7352
  %v7621 = vunpack.c.l.b16 %v7353
  %v7622 = vunpack.c.l.b16 %v7354
  %v7623 = vunpack.c.l.b16 %v7355
  %v7624 = vunpack.c.l.b16 %v7356
  %v7625 = vunpack.c.l.b16 %v7357
  %v7626 = vunpack.c.l.b16 %v7358
  %v7627 = vunpack.c.l.b16 %v7359
  %v7628 = vunpack.c.l.b16 %v7360
  %v7629 = vunpack.c.l.b16 %v7361
  %v7630 = vunpack.c.l.b16 %v7362
  %v7631 = vunpack.c.l.b16 %v7363
  %v7632 = vunpack.c.l.b16 %v7364
  %v7633 = vunpack.c.l.b16 %v7365
  %v7634 = vunpack.c.l.b16 %v7366
  %v7635 = vunpack.c.l.b16 %v7367
  %v7636 = vunpack.c.l.b16 %v7368
  %v7637 = vunpack.c.l.b16 %v7369
  %v7638 = vunpack.c.l.b16 %v7370
  %v7639 = vunpack.c.l.b16 %v7371
  %v7640 = vunpack.c.l.b16 %v7372
  %v7641 = vunpack.c.l.b16 %v7373
  %v7642 = vunpack.c.l.b16 %v7374
  %v7643 = vunpack.c.l.b16 %v7375
  %v7644 = vunpack.c.l.b16 %v7376
  %v7645 = vunpack.c.l.b16 %v7377
  %v7646 = vunpack.c.l.b16 %v7378
  %v7647 = vunpack.c.l.b16 %v7379
  %v7648 = vunpack.c.l.b16 %v7380
  %v7649 = vunpack.c.l.b16 %v7381
  %v7650 = vunpack.c.l.b16 %v7382
  %v7651 = vunpack.c.l.b16 %v7383
  %v7652 = vunpack.c.l.b16 %v7384
  %v7653 = vunpack.c.l.b16 %v7385
  %v7654 = vunpack.c.l.b16 %v7386
  %v7655 = vunpack.c.l.b16 %v7387
  %v7656 = vunpack.c.l.b16 %v7388
  %v7657 = vunpack.c.l.b16 %v7389
  %v7658 = vunpack.c.l.b16 %v7390
  %v7659 = vunpack.c.l.b16 %v7391
  %v7660 = vunpack.c.l.b16 %v7392
  %v7661 = vunpack.c.l.b16 %v7393
  %v7662 = vunpack.c.l.b16 %v7394
  %v7663 = vunpack.c.l.b16 %v7395
  %v7664 = vunpack.c.l.b16 %v7396
  %v7665 = vunpack.c.l.b16 %v7397
  %v7666 = vunpack.c.l.b16 %v7398
  %v7667 = vunpack.c.l.b16 %v7399
  %v7668 = vunpack.c.l.b16 %v7400
  %v7669 = vunpack.c.l.b16 %v7401
  %v7670 = vunpack.c.l.b16 %v7402
  %v7671 = vunpack.c.l.b16 %v7403
  %v7672 = vunpack.c.l.b16 %v7404
  %v7673 = vunpack.c.l.b16 %v7405
  %v7674 = vunpack.c.l.b16 %v7406
  %v7675 = vunpack.c.l.b16 %v7407
  %v7676 = vunpack.c.l.b16 %v7408
  %v7677 = vunpack.c.l.b16 %v7409
  %v7678 = vunpack.c.l.b16 %v7410
  %v7679 = vunpack.c.l.b16 %v7411
  %v7680 = vunpack.c.l.b16 %v7412
  %v7681 = vunpack.c.l.b16 %v7413
  %v7682 = vunpack.c.l.b16 %v7414
  %v7683 = vunpack.c.l.b16 %v7415
  %v7684 = vunpack.c.l.b16 %v7416
  %v7685 = vunpack.c.l.b16 %v7417
  %v7686 = vunpack.c.l.b16 %v7418
  %v7687 = vunpack.c.l.b16 %v7419
  %v7688 = vunpack.c.l.b16 %v7420
  %v7689 = vunpack.c.l.b16 %v7421
  %v7690 = vunpack.c.l.b16 %v7422
  %v7691 = vunpack.c.l.b16 %v7423
  %v7692 = vunpack.c.l.b16 %v7424
  %v7693 = vunpack.c.l.b16 %v7425
  %v7694 = vunpack.c.l.b16 %v7426
  %v7695 = vunpack.c.l.b16 %v7427
  %v7696 = vunpack.c.l.b16 %v7428
  %v7697 = vunpack.c.l.b16 %v7429
  %v7698 = vunpack.c.l.b16 %v7430
  %v7699 = vunpack.c.l.b16 %v7431
  %v7700 = vunpack.c.l.b16 %v7432
  %v7701 = vunpack.c.l.b16 %v7433
  %v7702 = vunpack.c.l.b16 %v7434
  %v7703 = vunpack.c.l.b16 %v7435
  %v7704 = vunpack.c.l.b16 %v7436
  %v7705 = vunpack.c.l.b16 %v7437
  %v7706 = vunpack.c.l.b16 %v7438
  %v7707 = vunpack.c.l.b16 %v7439
  %v7708 = vunpack.c.l.b16 %v7440
  %v7709 = vunpack.c.l.b16 %v7441
  %v7710 = vunpack.c.l.b16 %v7442
  %v7711 = vunpack.c.l.b16 %v7443
  %v7712 = vunpack.c.l.b16 %v7444
  %v7713 = vunpack.c.l.b16 %v7445
  %v7714 = vunpack.c.l.b16 %v7446
  %v7715 = vunpack.c.l.b16 %v7447
  %v7716 = vunpack.c.l.b16 %v7448
  %v7717 = vpack.c.b16 %v7590, %v7589
  %v7718 = vpack.c.b16 %v7592, %v7591
  %v7719 = vpack.c.b16 %v7594, %v7593
  %v7720 = vpack.c.b16 %v7596, %v7595
  %v7721 = vpack.c.b16 %v7598, %v7597
  %v7722 = vpack.c.b16 %v7600, %v7599
  %v7723 = vpack.c.b16 %v7602, %v7601
  %v7724 = vpack.c.b16 %v7604, %v7603
  %v7725 = vpack.c.b16 %v7606, %v7605
  %v7726 = vpack.c.b16 %v7608, %v7607
  %v7727 = vpack.c.b16 %v7610, %v7609
  %v7728 = vpack.c.b16 %v7612, %v7611
  %v7729 = vpack.c.b16 %v7614, %v7613
  %v7730 = vpack.c.b16 %v7616, %v7615
  %v7731 = vpack.c.b16 %v7618, %v7617
  %v7732 = vpack.c.b16 %v7620, %v7619
  %v7733 = vpack.c.b16 %v7622, %v7621
  %v7734 = vpack.c.b16 %v7624, %v7623
  %v7735 = vpack.c.b16 %v7626, %v7625
  %v7736 = vpack.c.b16 %v7628, %v7627
  %v7737 = vpack.c.b16 %v7630, %v7629
  %v7738 = vpack.c.b16 %v7632, %v7631
  %v7739 = vpack.c.b16 %v7634, %v7633
  %v7740 = vpack.c.b16 %v7636, %v7635
  %v7741 = vpack.c.b16 %v7638, %v7637
  %v7742 = vpack.c.b16 %v7640, %v7639
  %v7743 = vpack.c.b16 %v7642, %v7641
  %v7744 = vpack.c.b16 %v7644, %v7643
  %v7745 = vpack.c.b16 %v7646, %v7645
  %v7746 = vpack.c.b16 %v7648, %v7647
  %v7747 = vpack.c.b16 %v7650, %v7649
  %v7748 = vpack.c.b16 %v7652, %v7651
  %v7749 = vpack.c.b16 %v7654, %v7653
  %v7750 = vpack.c.b16 %v7656, %v7655
  %v7751 = vpack.c.b16 %v7658, %v7657
  %v7752 = vpack.c.b16 %v7660, %v7659
  %v7753 = vpack.c.b16 %v7662, %v7661
  %v7754 = vpack.c.b16 %v7664, %v7663
  %v7755 = vpack.c.b16 %v7666, %v7665
  %v7756 = vpack.c.b16 %v7668, %v7667
  %v7757 = vpack.c.b16 %v7670, %v7669
  %v7758 = vpack.c.b16 %v7672, %v7671
  %v7759 = vpack.c.b16 %v7674, %v7673
  %v7760 = vpack.c.b16 %v7676, %v7675
  %v7761 = vpack.c.b16 %v7678, %v7677
  %v7762 = vpack.c.b16 %v7680, %v7679
  %v7763 = vpack.c.b16 %v7682, %v7681
  %v7764 = vpack.c.b16 %v7684, %v7683
  %v7765 = vpack.c.b16 %v7686, %v7685
  %v7766 = vpack.c.b16 %v7688, %v7687
  %v7767 = vpack.c.b16 %v7690, %v7689
  %v7768 = vpack.c.b16 %v7692, %v7691
  %v7769 = vpack.c.b16 %v7694, %v7693
  %v7770 = vpack.c.b16 %v7696, %v7695
  %v7771 = vpack.c.b16 %v7698, %v7697
  %v7772 = vpack.c.b16 %v7700, %v7699
  %v7773 = vpack.c.b16 %v7702, %v7701
  %v7774 = vpack.c.b16 %v7704, %v7703
  %v7775 = vpack.c.b16 %v7706, %v7705
  %v7776 = vpack.c.b16 %v7708, %v7707
  %v7777 = vpack.c.b16 %v7710, %v7709
  %v7778 = vpack.c.b16 %v7712, %v7711
  %v7779 = vpack.c.b16 %v7714, %v7713
  %v7780 = vpack.c.b16 %v7716, %v7715
  %7845 = vmatpush.bf16.msra.mxu0 %v7724
  %7846 = vmatpush.bf16.msra.mxu0 %v7723
  %7847 = vmatpush.bf16.msra.mxu0 %v7722
  %7848 = vmatpush.bf16.msra.mxu0 %v7721
  %7849 = vmatpush.bf16.msra.mxu0 %v7720
  %7850 = vmatpush.bf16.msra.mxu0 %v7719
  %7851 = vmatpush.bf16.msra.mxu0 %v7718
  %7852 = vmatpush.bf16.msra.mxu0 %v7717
  %7853 = vmatmul.bf16.gmra.mxu0 %v7449
  %v7854 = vpop.f32.mrf.mxu0
  %v7855 = vadd.f32 %v7459, %v7854
  %v7856 = vpop.f32.mrf.mxu0
  %7857 = vdwg.mxu0
  %7858 = vmatpush.bf16.msra.mxu0 %v7732
  %7859 = vmatpush.bf16.msra.mxu0 %v7731
  %7860 = vmatpush.bf16.msra.mxu0 %v7730
  %7861 = vmatpush.bf16.msra.mxu0 %v7729
  %7862 = vmatpush.bf16.msra.mxu0 %v7728
  %7863 = vmatpush.bf16.msra.mxu0 %v7727
  %7864 = vmatpush.bf16.msra.mxu0 %v7726
  %7865 = vmatpush.bf16.msra.mxu0 %v7725
  %7866 = vmatmul.bf16.gmra.mxu0 %v7450
  %v7867 = vpop.f32.mrf.mxu0
  %v7868 = vadd.f32 %v7855, %v7867
  %v7869 = vpop.f32.mrf.mxu0
  %7870 = vdwg.mxu0
  %7871 = vmatpush.bf16.msra.mxu0 %v7740
  %7872 = vmatpush.bf16.msra.mxu0 %v7739
  %7873 = vmatpush.bf16.msra.mxu0 %v7738
  %7874 = vmatpush.bf16.msra.mxu0 %v7737
  %7875 = vmatpush.bf16.msra.mxu0 %v7736
  %7876 = vmatpush.bf16.msra.mxu0 %v7735
  %7877 = vmatpush.bf16.msra.mxu0 %v7734
  %7878 = vmatpush.bf16.msra.mxu0 %v7733
  %7879 = vmatmul.bf16.gmra.mxu0 %v7451
  %v7880 = vpop.f32.mrf.mxu0
  %v7881 = vadd.f32 %v7868, %v7880
  %v7882 = vpop.f32.mrf.mxu0
  %7883 = vdwg.mxu0
  %7884 = vmatpush.bf16.msra.mxu0 %v7748
  %7885 = vmatpush.bf16.msra.mxu0 %v7747
  %7886 = vmatpush.bf16.msra.mxu0 %v7746
  %7887 = vmatpush.bf16.msra.mxu0 %v7745
  %7888 = vmatpush.bf16.msra.mxu0 %v7744
  %7889 = vmatpush.bf16.msra.mxu0 %v7743
  %7890 = vmatpush.bf16.msra.mxu0 %v7742
  %7891 = vmatpush.bf16.msra.mxu0 %v7741
  %7892 = vmatmul.bf16.gmra.mxu0 %v7452
  %v7893 = vpop.f32.mrf.mxu0
  %v7894 = vadd.f32 %v7881, %v7893
  %v7895 = vpop.f32.mrf.mxu0
  %7896 = vdwg.mxu0
  %7897 = vmatpush.bf16.msra.mxu0 %v7756
  %7898 = vmatpush.bf16.msra.mxu0 %v7755
  %7899 = vmatpush.bf16.msra.mxu0 %v7754
  %7900 = vmatpush.bf16.msra.mxu0 %v7753
  %7901 = vmatpush.bf16.msra.mxu0 %v7752
  %7902 = vmatpush.bf16.msra.mxu0 %v7751
  %7903 = vmatpush.bf16.msra.mxu0 %v7750
  %7904 = vmatpush.bf16.msra.mxu0 %v7749
  %7905 = vmatmul.bf16.gmra.mxu0 %v7453
  %v7906 = vpop.f32.mrf.mxu0
  %v7907 = vadd.f32 %v7894, %v7906
  %v7908 = vpop.f32.mrf.mxu0
  %7909 = vdwg.mxu0
  %7910 = vmatpush.bf16.msra.mxu0 %v7764
  %7911 = vmatpush.bf16.msra.mxu0 %v7763
  %7912 = vmatpush.bf16.msra.mxu0 %v7762
  %7913 = vmatpush.bf16.msra.mxu0 %v7761
  %7914 = vmatpush.bf16.msra.mxu0 %v7760
  %7915 = vmatpush.bf16.msra.mxu0 %v7759
  %7916 = vmatpush.bf16.msra.mxu0 %v7758
  %7917 = vmatpush.bf16.msra.mxu0 %v7757
  %7918 = vmatmul.bf16.gmra.mxu0 %v7454
  %v7919 = vpop.f32.mrf.mxu0
  %v7920 = vadd.f32 %v7907, %v7919
  %v7921 = vpop.f32.mrf.mxu0
  %7922 = vdwg.mxu0
  %7923 = vmatpush.bf16.msra.mxu0 %v7772
  %7924 = vmatpush.bf16.msra.mxu0 %v7771
  %7925 = vmatpush.bf16.msra.mxu0 %v7770
  %7926 = vmatpush.bf16.msra.mxu0 %v7769
  %7927 = vmatpush.bf16.msra.mxu0 %v7768
  %7928 = vmatpush.bf16.msra.mxu0 %v7767
  %7929 = vmatpush.bf16.msra.mxu0 %v7766
  %7930 = vmatpush.bf16.msra.mxu0 %v7765
  %7931 = vmatmul.bf16.gmra.mxu0 %v7455
  %v7932 = vpop.f32.mrf.mxu0
  %v7933 = vadd.f32 %v7920, %v7932
  %v7934 = vpop.f32.mrf.mxu0
  %7935 = vdwg.mxu0
  %7936 = vmatpush.bf16.msra.mxu0 %v7780
  %7937 = vmatpush.bf16.msra.mxu0 %v7779
  %7938 = vmatpush.bf16.msra.mxu0 %v7778
  %7939 = vmatpush.bf16.msra.mxu0 %v7777
  %7940 = vmatpush.bf16.msra.mxu0 %v7776
  %7941 = vmatpush.bf16.msra.mxu0 %v7775
  %7942 = vmatpush.bf16.msra.mxu0 %v7774
  %7943 = vmatpush.bf16.msra.mxu0 %v7773
  %7944 = vmatmul.bf16.gmra.mxu0 %v7456
  %v7945 = vpop.f32.mrf.mxu0
  %v7946 = vadd.f32 %v7933, %v7945
  %v7947 = vpop.f32.mrf.mxu0
  %7948 = vdwg.mxu0
  %7949 = vst [vmem:[%s14] sm:$0xff] %v7946
  // Predicated region
  $region122: #{worker_act_net_forward.1} parent=0 // pred_check
    _
  $region123: #{worker_act_net_forward.1} parent=0 // pred_check_branch
    %7951 = sbr.rel (0) target = $region125
  $region124: #{worker_act_net_forward.1} parent=0 // pred_region
    _
  $region125: #{worker_act_net_forward.1} parent=0 // pred_fallthru
    _
  // Predicated region
  $region126: #{worker_act_net_forward.1} parent=0 // pred_check
    _
  $region127: #{worker_act_net_forward.1} parent=0 // pred_check_branch
    %7953 = sbr.rel (0) target = $region129
  $region128: #{worker_act_net_forward.1} parent=0 // pred_region
    _
  $region129: #{worker_act_net_forward.1} parent=0 // pred_fallthru
    _
  %7954 = vsyncmov [#allocation5]
  %s7955 = vpop.sfrf %7954
  %p7956 = scmp.eq.s32.totalorder %s7955, 0
  %p7957 = pneg %p7956
  %7959 = shalt.err (%p7957)
  %s7960 = scalar_lea.sflag [#allocation5], 1
  %7961 = vsyncmov %s7960
  %s7962 = vpop.sfrf %7961
  %p7963 = scmp.eq.s32.totalorder %s7962, 0
  %p7964 = pneg %p7963
  %7966 = shalt.err (%p7964)
  %s7967 = scalar_lea.sflag [#allocation5], 2
  %7968 = vsyncmov %s7967
  %s7969 = vpop.sfrf %7968
  %p7970 = scmp.eq.s32.totalorder %s7969, 0
  %p7971 = pneg %p7970
  %7973 = shalt.err (%p7971)
  %s7974 = scalar_lea.sflag [#allocation5], 3
  %7975 = vsyncmov %s7974
  %s7976 = vpop.sfrf %7975
  %p7977 = scmp.eq.s32.totalorder %s7976, 0
  %p7978 = pneg %p7977
  %7980 = shalt.err (%p7978)

</llo_original>
